<compile_context>
chip_gen: v7x
topology: tpu7x:2x2x1
jax: 0.10.0
libtpu: 0.0.40
codegen_flags: <defaults>
</compile_context>

<pallas_src>
import math
import numpy as np
import jax
import jax.numpy as jnp
from jax import lax
from jax.experimental import pallas as pl
from jax.experimental.pallas import tpu as pltpu


# ---------------------------------------------------------------------------
# Shared math helpers (used by the kernel body AND the pure-JAX reference)
# ---------------------------------------------------------------------------
def _mish(x):
    # x * tanh(softplus(x)); stable softplus = max(x, 0) + log1p(exp(-|x|))
    sp = jnp.maximum(x, 0.0) + jnp.log1p(jnp.exp(-jnp.abs(x)))
    return x * jnp.tanh(sp)


# ---------------------------------------------------------------------------
# Host-side constant operators (built once at parameter-construction time)
# ---------------------------------------------------------------------------
def _conv3x3_gather(Hi, Wi, upsample):
    """(9, Hi*Wi, Ho*Wo) 0/1 gather matrices for the taps of a 3x3 SAME conv.

    If `upsample`, the nearest x2 upsample is folded in, so taps read directly
    from the Hi x Wi source and the upsampled map never materialises.
    """
    if upsample:
        Ho, Wo = 2 * Hi, 2 * Wi
    else:
        Ho, Wo = Hi, Wi
    Si, So = Hi * Wi, Ho * Wo
    yo, xo = np.divmod(np.arange(So), Wo)
    mats = []
    for ky in range(3):
        for kx in range(3):
            yi = yo + ky - 1
            xi = xo + kx - 1
            valid = (yi >= 0) & (yi < Ho) & (xi >= 0) & (xi < Wo)
            yc = np.clip(yi, 0, Ho - 1)
            xc = np.clip(xi, 0, Wo - 1)
            if upsample:
                src = (yc // 2) * Wi + (xc // 2)
            else:
                src = yc * Wi + xc
            g = np.zeros((Si, So), np.float32)
            g[src, np.arange(So)] = valid.astype(np.float32)
            mats.append(g)
    return np.stack(mats, axis=0)


def _unflatten_operators(C0, S0):
    """0/1 operators for the MXU-based unflatten (1, C0*S0) -> (C0, S0)."""
    D0 = C0 * S0
    f = np.arange(D0)
    sel = (f[None, :] // S0 == np.arange(C0)[:, None]).astype(np.float32)  # (C0, D0)
    prm = (f[:, None] % S0 == np.arange(S0)[None, :]).astype(np.float32)   # (D0, S0)
    return sel, prm


# ---------------------------------------------------------------------------
# In-kernel building blocks
# ---------------------------------------------------------------------------
def _instance_norm(y, w_ref, b_ref):
    # y: (C, H*W); per-channel stats over the spatial lanes; biased var, eps=1e-5
    mean = jnp.mean(y, axis=1, keepdims=True)
    yc = y - mean
    var = jnp.mean(yc * yc, axis=1, keepdims=True)        # two-pass variance
    return yc * lax.rsqrt(var + 1e-5) * w_ref[...] + b_ref[...]


def _conv3x3(xb, gat_ref, w_ref, b_ref):
    # xb: (Cin, Sin) bf16. gat_ref: (9, Sin, S) 0/1 bf16. w_ref: (Cout, 9*Cin) bf16.
    # Tap maps are gathered on the MXU and stacked along aligned sublanes so the
    # conv itself is one lane-dense matmul with K = 9*Cin.
    taps = [jnp.dot(xb, gat_ref[t], preferred_element_type=jnp.float32)
            for t in range(9)]
    patches = jnp.concatenate(taps, axis=0).astype(jnp.bfloat16)   # (9*Cin, S)
    return jnp.dot(w_ref[...], patches,
                   preferred_element_type=jnp.float32) + b_ref[...]


def _make_kernel(level_dims):
    nl = len(level_dims)
    NFIX = 9

    def kernel(*refs):
        (eps_ref, mu_ref, ls_ref, w0_ref, b0_ref, lng_ref, lnb_ref,
         sel_ref, prm_ref) = refs[:NFIX]
        lrefs = refs[NFIX:NFIX + 12 * nl]
        orefs = refs[NFIX + 12 * nl:]

        # ---- reparam + initial Linear + Mish + LayerNorm (lane-dense (1, D0)) ----
        z = mu_ref[...] + jnp.exp(ls_ref[...]) * eps_ref[0]                 # (1, L)
        h = jnp.dot(z.astype(jnp.bfloat16), w0_ref[...],
                    preferred_element_type=jnp.float32) + b0_ref[...]       # (1, D0)
        h = _mish(h)
        mean = jnp.mean(h, axis=-1, keepdims=True)
        hc = h - mean
        var = jnp.mean(hc * hc, axis=-1, keepdims=True)                     # two-pass
        h = hc * lax.rsqrt(var + 1e-5) * lng_ref[...] + lnb_ref[...]

        # ---- unflatten (1, C0*16) -> (C0, 16): channels on sublanes, spatial on
        #      lanes.  Done as mask-select + 0/1 permutation matmul on the MXU to
        #      avoid a lane->sublane value reshape inside the kernel. ----
        x = jnp.dot((sel_ref[...] * h).astype(jnp.bfloat16), prm_ref[...],
                    preferred_element_type=jnp.float32)                     # (C0, 16)

        # ---- pyramid levels, all in (C, H*W) layout; inter-level features never
        #      leave VMEM/vregs ----
        for l in range(nl):
            (g1_ref, w1_ref, b1_ref, nw1_ref, nb1_ref,
             g2_ref, w2_ref, b2_ref, nw2_ref, nb2_ref,
             wr_ref, br_ref) = lrefs[12 * l:12 * (l + 1)]
            # conv1: nearest x2 upsample folded into the tap gather matrices
            y = _conv3x3(x.astype(jnp.bfloat16), g1_ref, w1_ref, b1_ref)    # (Cout, S)
            y = _instance_norm(_mish(y), nw1_ref, nb1_ref)
            # conv2: same-resolution 3x3 conv (shift + boundary-mask gathers)
            y = _instance_norm(
                _mish(_conv3x3(y.astype(jnp.bfloat16), g2_ref, w2_ref, b2_ref)),
                nw2_ref, nb2_ref)
            # to_rgb 1x1 conv + tanh; (3, H*W) store is lane-dense in space
            rgb = jnp.dot(wr_ref[...], y.astype(jnp.bfloat16),
                          preferred_element_type=jnp.float32) + br_ref[...]
            orefs[l][0] = jnp.tanh(rgb)
            x = y

    return kernel


# ---------------------------------------------------------------------------
# pallas_call wrapper (single fused call)
# ---------------------------------------------------------------------------
def forward_pallas(model, eps):
    N, L = eps.shape
    eps3 = eps.reshape(N, 1, L)

    def const_spec(a):
        return pl.BlockSpec(a.shape, lambda n, _nd=a.ndim: (0,) * _nd)

    inputs = [eps3, model.mu, model.log_sigma, model.w0, model.b0,
              model.ln_g, model.ln_b, model.sel, model.prm]
    in_specs = [pl.BlockSpec((1, 1, L), lambda n: (n, 0, 0))]
    in_specs += [const_spec(a) for a in inputs[1:]]
    for params in model.level_params:
        for a in params:
            inputs.append(a)
            in_specs.append(const_spec(a))

    out_shapes, out_specs = [], []
    for (Hi, Wi, _ci, _co) in model.level_dims:
        S = (2 * Hi) * (2 * Wi)
        out_shapes.append(jax.ShapeDtypeStruct((N, 3, S), jnp.float32))
        out_specs.append(pl.BlockSpec((1, 3, S), lambda n: (n, 0, 0)))

    outs = pl.pallas_call(
        _make_kernel(model.level_dims),
        out_shape=tuple(out_shapes),
        grid=(N,),
        in_specs=in_specs,
        out_specs=tuple(out_specs),
        compiler_params=pltpu.CompilerParams(
            dimension_semantics=("parallel",),
            # scaling guard; raise (and tile spatially) if resolution grows
            vmem_limit_bytes=32 * 1024 * 1024,
        ),
    )(*inputs)

    return [o.reshape(N, 3, 2 * Hi, 2 * Wi)
            for (Hi, Wi, _ci, _co), o in zip(model.level_dims, outs)]


# ---------------------------------------------------------------------------
# Model: deterministic parameter construction + forward
# ---------------------------------------------------------------------------
class StableFlowGeneratorPallas:
    def __init__(self, latent_dim=32, resolution=16, dim=16, seed=0):
        self.latent_dim = latent_dim
        self.resolution = resolution
        self.num_levels = int(math.log2(resolution)) - 2
        self.initial_channels = dim * 4

        C0 = self.initial_channels
        L = latent_dim
        D0 = 4 * 4 * C0

        key = jax.random.PRNGKey(seed)
        keys = iter(jax.random.split(key, 4 + 10 * self.num_levels))

        # nn.Parameter zeros (as in the PyTorch __init__)
        self.mu = jnp.zeros((1, L), jnp.float32)
        self.log_sigma = jnp.zeros((1, L), jnp.float32)

        # initial Linear + LayerNorm([C0, 4, 4]); columns / affine in (c, h, w) order
        s = 1.0 / math.sqrt(L)
        self.w0 = jax.random.uniform(next(keys), (L, D0), jnp.float32, -s, s
                                     ).astype(jnp.bfloat16)
        self.b0 = jax.random.uniform(next(keys), (1, D0), jnp.float32, -s, s)
        self.ln_g = 1.0 + 0.1 * jax.random.normal(next(keys), (1, D0), jnp.float32)
        self.ln_b = 0.1 * jax.random.normal(next(keys), (1, D0), jnp.float32)

        # constant operators for the in-kernel unflatten (1, C0*16) -> (C0, 16)
        sel, prm = _unflatten_operators(C0, 16)
        self.sel = jnp.asarray(sel, jnp.float32)
        self.prm = jnp.asarray(prm, jnp.bfloat16)

        # per-level params: gather matrices + im2col-layout conv weights
        self.level_dims = []
        self.level_params = []
        in_ch = C0
        Hi = Wi = 4
        for _ in range(self.num_levels):
            out_ch = max(dim, in_ch // 2)
            Ho, Wo = 2 * Hi, 2 * Wi
            gat1 = jnp.asarray(_conv3x3_gather(Hi, Wi, True), jnp.bfloat16)   # (9,Si,S)
            gat2 = jnp.asarray(_conv3x3_gather(Ho, Wo, False), jnp.bfloat16)  # (9,S,S)
            s1 = 1.0 / math.sqrt(9 * in_ch)
            w1 = jax.random.uniform(next(keys), (out_ch, 3, 3, in_ch), jnp.float32,
                                    -s1, s1)
            b1 = jax.random.uniform(next(keys), (out_ch, 1), jnp.float32, -s1, s1)
            nw1 = 1.0 + 0.1 * jax.random.normal(next(keys), (out_ch, 1), jnp.float32)
            nb1 = 0.1 * jax.random.normal(next(keys), (out_ch, 1), jnp.float32)
            s2 = 1.0 / math.sqrt(9 * out_ch)
            w2 = jax.random.uniform(next(keys), (out_ch, 3, 3, out_ch), jnp.float32,
                                    -s2, s2)
            b2 = jax.random.uniform(next(keys), (out_ch, 1), jnp.float32, -s2, s2)
            nw2 = 1.0 + 0.1 * jax.random.normal(next(keys), (out_ch, 1), jnp.float32)
            nb2 = 0.1 * jax.random.normal(next(keys), (out_ch, 1), jnp.float32)
            sr = 1.0 / math.sqrt(out_ch)
            wrgb = jax.random.uniform(next(keys), (3, out_ch), jnp.float32, -sr, sr)
            brgb = jax.random.uniform(next(keys), (3, 1), jnp.float32, -sr, sr)
            self.level_params.append((
                gat1,
                w1.reshape(out_ch, 9 * in_ch).astype(jnp.bfloat16),  # cols (ky,kx,cin)
                b1, nw1, nb1,
                gat2,
                w2.reshape(out_ch, 9 * out_ch).astype(jnp.bfloat16),
                b2, nw2, nb2,
                wrgb.astype(jnp.bfloat16), brgb,
            ))
            self.level_dims.append((Hi, Wi, in_ch, out_ch))
            in_ch = out_ch
            Hi, Wi = Ho, Wo

        self._forward = jax.jit(lambda e: forward_pallas(self, e))

    def __call__(self, eps):
        return self._forward(eps)


# ---------------------------------------------------------------------------
# Pure-JAX reference (same parameters, same bf16 operand rounding)
# ---------------------------------------------------------------------------
def _ref_conv3x3(x, wmat, b):
    # x: (N, C, H, W); wmat: (Cout, 9*C) bf16 with columns ordered (ky, kx, cin)
    N, C, H, W = x.shape
    xp = jnp.pad(x, ((0, 0), (0, 0), (1, 1), (1, 1)))
    taps = [xp[:, :, ky:ky + H, kx:kx + W] for ky in range(3) for kx in range(3)]
    patches = jnp.concatenate(taps, axis=1).reshape(N, 9 * C, H * W)
    out = jnp.einsum('ok,nks->nos', wmat, patches.astype(jnp.bfloat16),
                     preferred_element_type=jnp.float32)
    return out.reshape(N, -1, H, W) + b.reshape(1, -1, 1, 1)


def _ref_instance_norm(x, w, b):
    mean = jnp.mean(x, axis=(2, 3), keepdims=True)
    xc = x - mean
    var = jnp.mean(xc * xc, axis=(2, 3), keepdims=True)
    return xc * lax.rsqrt(var + 1e-5) * w.reshape(1, -1, 1, 1) + b.reshape(1, -1, 1, 1)


def reference_forward(model, eps):
    N = eps.shape[0]
    C0 = model.initial_channels
    z = model.mu + jnp.exp(model.log_sigma) * eps
    h = jnp.dot(z.astype(jnp.bfloat16), model.w0,
                preferred_element_type=jnp.float32) + model.b0
    h = _mish(h)
    mean = jnp.mean(h, axis=-1, keepdims=True)
    hc = h - mean
    var = jnp.mean(hc * hc, axis=-1, keepdims=True)
    h = hc * lax.rsqrt(var + 1e-5) * model.ln_g + model.ln_b
    x = h.reshape(N, C0, 4, 4)
    images = []
    for (_Hi, _Wi, _ci, _co), p in zip(model.level_dims, model.level_params):
        (_g1, w1, b1, nw1, nb1, _g2, w2, b2, nw2, nb2, wrgb, brgb) = p
        xb = x.astype(jnp.bfloat16).astype(jnp.float32)
        xu = jnp.repeat(jnp.repeat(xb, 2, axis=2), 2, axis=3)      # nearest x2
        y = _ref_instance_norm(_mish(_ref_conv3x3(xu, w1, b1)), nw1, nb1)
        y = _ref_instance_norm(_mish(_ref_conv3x3(y, w2, b2)), nw2, nb2)
        rgb = jnp.einsum('oc,nchw->nohw', wrgb, y.astype(jnp.bfloat16),
                         preferred_element_type=jnp.float32) + brgb.reshape(1, 3, 1, 1)
        images.append(jnp.tanh(rgb))
        x = y
    return images


if __name__ == "__main__":
    # small shapes: latent=32, resolution=16, dim=16 -> 2 levels (8x8 and 16x16)
    model = StableFlowGeneratorPallas(latent_dim=32, resolution=16, dim=16, seed=0)
    eps = jax.random.normal(jax.random.PRNGKey(0), (2, 32), jnp.float32)

    images = model(eps)
    images = [jax.block_until_ready(img) for img in images]

    expected = [(2, 3, 8, 8), (2, 3, 16, 16)]
    assert [tuple(img.shape) for img in images] == expected, \
        [tuple(img.shape) for img in images]
    assert all(bool(jnp.all(jnp.isfinite(img))) for img in images)
    assert all(bool(jnp.all(jnp.abs(img) <= 1.0)) for img in images)  # tanh range

    # pure-JAX reference check (loose tolerance: the two pipelines round slightly
    # different f32 intermediates to bf16 before each MXU matmul)
    refs = reference_forward(model, eps)
    for img, ref in zip(images, refs):
        err = float(jnp.max(jnp.abs(img - ref)))
        assert err < 5e-2, f"max |pallas - reference| = {err}"

    print("KERNEL_OK")
</pallas_src>

<mosaic_0001>
module attributes {stable_mosaic.version = 11 : i64} {
  func.func @kernel(%arg0: i32, %arg1: memref<1x1x32xf32, #tpu.memory_space<vmem>>, %arg2: memref<1x32xf32, #tpu.memory_space<vmem>>, %arg3: memref<1x32xf32, #tpu.memory_space<vmem>>, %arg4: memref<32x1024xbf16, #tpu.memory_space<vmem>>, %arg5: memref<1x1024xf32, #tpu.memory_space<vmem>>, %arg6: memref<1x1024xf32, #tpu.memory_space<vmem>>, %arg7: memref<1x1024xf32, #tpu.memory_space<vmem>>, %arg8: memref<64x1024xf32, #tpu.memory_space<vmem>>, %arg9: memref<1024x16xbf16, #tpu.memory_space<vmem>>, %arg10: memref<9x16x64xbf16, #tpu.memory_space<vmem>>, %arg11: memref<32x576xbf16, #tpu.memory_space<vmem>>, %arg12: memref<32x1xf32, #tpu.memory_space<vmem>>, %arg13: memref<32x1xf32, #tpu.memory_space<vmem>>, %arg14: memref<32x1xf32, #tpu.memory_space<vmem>>, %arg15: memref<9x64x64xbf16, #tpu.memory_space<vmem>>, %arg16: memref<32x288xbf16, #tpu.memory_space<vmem>>, %arg17: memref<32x1xf32, #tpu.memory_space<vmem>>, %arg18: memref<32x1xf32, #tpu.memory_space<vmem>>, %arg19: memref<32x1xf32, #tpu.memory_space<vmem>>, %arg20: memref<3x32xbf16, #tpu.memory_space<vmem>>, %arg21: memref<3x1xf32, #tpu.memory_space<vmem>>, %arg22: memref<9x64x256xbf16, #tpu.memory_space<vmem>>, %arg23: memref<16x288xbf16, #tpu.memory_space<vmem>>, %arg24: memref<16x1xf32, #tpu.memory_space<vmem>>, %arg25: memref<16x1xf32, #tpu.memory_space<vmem>>, %arg26: memref<16x1xf32, #tpu.memory_space<vmem>>, %arg27: memref<9x256x256xbf16, #tpu.memory_space<vmem>>, %arg28: memref<16x144xbf16, #tpu.memory_space<vmem>>, %arg29: memref<16x1xf32, #tpu.memory_space<vmem>>, %arg30: memref<16x1xf32, #tpu.memory_space<vmem>>, %arg31: memref<16x1xf32, #tpu.memory_space<vmem>>, %arg32: memref<3x16xbf16, #tpu.memory_space<vmem>>, %arg33: memref<3x1xf32, #tpu.memory_space<vmem>>, %arg34: memref<1x3x64xf32, #tpu.memory_space<vmem>>, %arg35: memref<1x3x256xf32, #tpu.memory_space<vmem>>) attributes {dimension_semantics = [#tpu.dimension_semantics<parallel>], iteration_bounds = array<i64: 2>, scalar_prefetch = 0 : i64, scratch_operands = 0 : i64, tpu.core_type = #tpu.core_type<tc>, window_params = [{transform_indices = @transform_0, window_bounds = array<i64: 1, 1, 32>}, {pipeline_mode = #tpu.pipeline_mode<synchronous>, transform_indices = @transform_1, window_bounds = array<i64: 1, 32>}, {pipeline_mode = #tpu.pipeline_mode<synchronous>, transform_indices = @transform_2, window_bounds = array<i64: 1, 32>}, {pipeline_mode = #tpu.pipeline_mode<synchronous>, transform_indices = @transform_3, window_bounds = array<i64: 32, 1024>}, {pipeline_mode = #tpu.pipeline_mode<synchronous>, transform_indices = @transform_4, window_bounds = array<i64: 1, 1024>}, {pipeline_mode = #tpu.pipeline_mode<synchronous>, transform_indices = @transform_5, window_bounds = array<i64: 1, 1024>}, {pipeline_mode = #tpu.pipeline_mode<synchronous>, transform_indices = @transform_6, window_bounds = array<i64: 1, 1024>}, {pipeline_mode = #tpu.pipeline_mode<synchronous>, transform_indices = @transform_7, window_bounds = array<i64: 64, 1024>}, {pipeline_mode = #tpu.pipeline_mode<synchronous>, transform_indices = @transform_8, window_bounds = array<i64: 1024, 16>}, {pipeline_mode = #tpu.pipeline_mode<synchronous>, transform_indices = @transform_9, window_bounds = array<i64: 9, 16, 64>}, {pipeline_mode = #tpu.pipeline_mode<synchronous>, transform_indices = @transform_10, window_bounds = array<i64: 32, 576>}, {pipeline_mode = #tpu.pipeline_mode<synchronous>, transform_indices = @transform_11, window_bounds = array<i64: 32, 1>}, {pipeline_mode = #tpu.pipeline_mode<synchronous>, transform_indices = @transform_12, window_bounds = array<i64: 32, 1>}, {pipeline_mode = #tpu.pipeline_mode<synchronous>, transform_indices = @transform_13, window_bounds = array<i64: 32, 1>}, {pipeline_mode = #tpu.pipeline_mode<synchronous>, transform_indices = @transform_14, window_bounds = array<i64: 9, 64, 64>}, {pipeline_mode = #tpu.pipeline_mode<synchronous>, transform_indices = @transform_15, window_bounds = array<i64: 32, 288>}, {pipeline_mode = #tpu.pipeline_mode<synchronous>, transform_indices = @transform_16, window_bounds = array<i64: 32, 1>}, {pipeline_mode = #tpu.pipeline_mode<synchronous>, transform_indices = @transform_17, window_bounds = array<i64: 32, 1>}, {pipeline_mode = #tpu.pipeline_mode<synchronous>, transform_indices = @transform_18, window_bounds = array<i64: 32, 1>}, {pipeline_mode = #tpu.pipeline_mode<synchronous>, transform_indices = @transform_19, window_bounds = array<i64: 3, 32>}, {pipeline_mode = #tpu.pipeline_mode<synchronous>, transform_indices = @transform_20, window_bounds = array<i64: 3, 1>}, {pipeline_mode = #tpu.pipeline_mode<synchronous>, transform_indices = @transform_21, window_bounds = array<i64: 9, 64, 256>}, {pipeline_mode = #tpu.pipeline_mode<synchronous>, transform_indices = @transform_22, window_bounds = array<i64: 16, 288>}, {pipeline_mode = #tpu.pipeline_mode<synchronous>, transform_indices = @transform_23, window_bounds = array<i64: 16, 1>}, {pipeline_mode = #tpu.pipeline_mode<synchronous>, transform_indices = @transform_24, window_bounds = array<i64: 16, 1>}, {pipeline_mode = #tpu.pipeline_mode<synchronous>, transform_indices = @transform_25, window_bounds = array<i64: 16, 1>}, {pipeline_mode = #tpu.pipeline_mode<synchronous>, transform_indices = @transform_26, window_bounds = array<i64: 9, 256, 256>}, {pipeline_mode = #tpu.pipeline_mode<synchronous>, transform_indices = @transform_27, window_bounds = array<i64: 16, 144>}, {pipeline_mode = #tpu.pipeline_mode<synchronous>, transform_indices = @transform_28, window_bounds = array<i64: 16, 1>}, {pipeline_mode = #tpu.pipeline_mode<synchronous>, transform_indices = @transform_29, window_bounds = array<i64: 16, 1>}, {pipeline_mode = #tpu.pipeline_mode<synchronous>, transform_indices = @transform_30, window_bounds = array<i64: 16, 1>}, {pipeline_mode = #tpu.pipeline_mode<synchronous>, transform_indices = @transform_31, window_bounds = array<i64: 3, 16>}, {pipeline_mode = #tpu.pipeline_mode<synchronous>, transform_indices = @transform_32, window_bounds = array<i64: 3, 1>}, {transform_indices = @transform_33, window_bounds = array<i64: 1, 3, 64>}, {transform_indices = @transform_34, window_bounds = array<i64: 1, 3, 256>}]} {
    %c0 = arith.constant 0 : index
    %c0_0 = arith.constant 0 : index
    %0 = vector.load %arg2[%c0, %c0_0] : memref<1x32xf32, #tpu.memory_space<vmem>>, vector<1x32xf32>
    %c0_1 = arith.constant 0 : index
    %c0_2 = arith.constant 0 : index
    %1 = vector.load %arg3[%c0_1, %c0_2] : memref<1x32xf32, #tpu.memory_space<vmem>>, vector<1x32xf32>
    %2 = math.exp %1 : vector<1x32xf32>
    %c0_3 = arith.constant 0 : index
    %c0_4 = arith.constant 0 : index
    %c0_5 = arith.constant 0 : index
    %3 = vector.load %arg1[%c0_3, %c0_4, %c0_5] : memref<1x1x32xf32, #tpu.memory_space<vmem>>, vector<1x1x32xf32>
    %4 = vector.shape_cast %3 : vector<1x1x32xf32> to vector<1x32xf32>
    %5 = arith.mulf %2, %4 : vector<1x32xf32>
    %6 = arith.addf %0, %5 : vector<1x32xf32>
    %7 = arith.truncf %6 : vector<1x32xf32> to vector<1x32xbf16>
    %c0_6 = arith.constant 0 : index
    %c0_7 = arith.constant 0 : index
    %8 = vector.load %arg4[%c0_6, %c0_7] : memref<32x1024xbf16, #tpu.memory_space<vmem>>, vector<32x1024xbf16>
    %cst = arith.constant dense<0.000000e+00> : vector<1x1024xf32>
    %9 = tpu.matmul %7, %8, %cst {dimension_numbers = #tpu.dot_dimension_numbers<[1], [0], [0], [1], [0, 0, 1, 1], [], []>} : vector<1x32xbf16>, vector<32x1024xbf16>, vector<1x1024xf32> -> vector<1x1024xf32>
    %c0_8 = arith.constant 0 : index
    %c0_9 = arith.constant 0 : index
    %10 = vector.load %arg5[%c0_8, %c0_9] : memref<1x1024xf32, #tpu.memory_space<vmem>>, vector<1x1024xf32>
    %11 = arith.addf %9, %10 : vector<1x1024xf32>
    %cst_10 = arith.constant 0.000000e+00 : f32
    %12 = vector.broadcast %cst_10 : f32 to vector<1x1024xf32>
    %13 = arith.maximumf %11, %12 : vector<1x1024xf32>
    %14 = math.absf %11 : vector<1x1024xf32>
    %cst_11 = arith.constant 0.000000e+00 : f32
    %15 = vector.broadcast %cst_11 : f32 to vector<1x1024xf32>
    %16 = arith.subf %15, %14 : vector<1x1024xf32>
    %17 = math.exp %16 : vector<1x1024xf32>
    %18 = math.log1p %17 : vector<1x1024xf32>
    %19 = arith.addf %13, %18 : vector<1x1024xf32>
    %20 = math.tanh %19 : vector<1x1024xf32>
    %21 = arith.mulf %11, %20 : vector<1x1024xf32>
    %cst_12 = arith.constant dense<0.000000e+00> : vector<1xf32>
    %22 = vector.multi_reduction <add>, %21, %cst_12 [1] : vector<1x1024xf32> to vector<1xf32>
    %23 = vector.shape_cast %22 : vector<1xf32> to vector<1x1xf32>
    %cst_13 = arith.constant 1.024000e+03 : f32
    %24 = vector.broadcast %cst_13 : f32 to vector<1x1xf32>
    %25 = arith.divf %23, %24 : vector<1x1xf32>
    %26 = vector.broadcast %25 : vector<1x1xf32> to vector<1x1024xf32>
    %27 = arith.subf %21, %26 : vector<1x1024xf32>
    %28 = arith.mulf %27, %27 : vector<1x1024xf32>
    %cst_14 = arith.constant dense<0.000000e+00> : vector<1xf32>
    %29 = vector.multi_reduction <add>, %28, %cst_14 [1] : vector<1x1024xf32> to vector<1xf32>
    %30 = vector.shape_cast %29 : vector<1xf32> to vector<1x1xf32>
    %cst_15 = arith.constant 1.024000e+03 : f32
    %31 = vector.broadcast %cst_15 : f32 to vector<1x1xf32>
    %32 = arith.divf %30, %31 : vector<1x1xf32>
    %cst_16 = arith.constant 9.99999974E-6 : f32
    %33 = vector.broadcast %cst_16 : f32 to vector<1x1xf32>
    %34 = arith.addf %32, %33 : vector<1x1xf32>
    %35 = math.rsqrt %34 : vector<1x1xf32>
    %36 = vector.broadcast %35 : vector<1x1xf32> to vector<1x1024xf32>
    %37 = arith.mulf %27, %36 : vector<1x1024xf32>
    %c0_17 = arith.constant 0 : index
    %c0_18 = arith.constant 0 : index
    %38 = vector.load %arg6[%c0_17, %c0_18] : memref<1x1024xf32, #tpu.memory_space<vmem>>, vector<1x1024xf32>
    %39 = arith.mulf %37, %38 : vector<1x1024xf32>
    %c0_19 = arith.constant 0 : index
    %c0_20 = arith.constant 0 : index
    %40 = vector.load %arg7[%c0_19, %c0_20] : memref<1x1024xf32, #tpu.memory_space<vmem>>, vector<1x1024xf32>
    %41 = arith.addf %39, %40 : vector<1x1024xf32>
    %c0_21 = arith.constant 0 : index
    %c0_22 = arith.constant 0 : index
    %42 = vector.load %arg8[%c0_21, %c0_22] : memref<64x1024xf32, #tpu.memory_space<vmem>>, vector<64x1024xf32>
    %43 = vector.broadcast %41 : vector<1x1024xf32> to vector<64x1024xf32>
    %44 = arith.mulf %42, %43 : vector<64x1024xf32>
    %45 = arith.truncf %44 : vector<64x1024xf32> to vector<64x1024xbf16>
    %c0_23 = arith.constant 0 : index
    %c0_24 = arith.constant 0 : index
    %46 = vector.load %arg9[%c0_23, %c0_24] : memref<1024x16xbf16, #tpu.memory_space<vmem>>, vector<1024x16xbf16>
    %cst_25 = arith.constant dense<0.000000e+00> : vector<64x16xf32>
    %47 = tpu.matmul %45, %46, %cst_25 {dimension_numbers = #tpu.dot_dimension_numbers<[1], [0], [0], [1], [0, 0, 1, 1], [], []>} : vector<64x1024xbf16>, vector<1024x16xbf16>, vector<64x16xf32> -> vector<64x16xf32>
    %48 = arith.truncf %47 : vector<64x16xf32> to vector<64x16xbf16>
    %c0_26 = arith.constant 0 : index
    %c0_27 = arith.constant 0 : index
    %c0_28 = arith.constant 0 : index
    %49 = vector.load %arg10[%c0_26, %c0_27, %c0_28] : memref<9x16x64xbf16, #tpu.memory_space<vmem>>, vector<1x16x64xbf16>
    %50 = vector.shape_cast %49 : vector<1x16x64xbf16> to vector<16x64xbf16>
    %cst_29 = arith.constant dense<0.000000e+00> : vector<64x64xf32>
    %51 = tpu.matmul %48, %50, %cst_29 {dimension_numbers = #tpu.dot_dimension_numbers<[1], [0], [0], [1], [0, 0, 1, 1], [], []>} : vector<64x16xbf16>, vector<16x64xbf16>, vector<64x64xf32> -> vector<64x64xf32>
    %c1 = arith.constant 1 : index
    %c0_30 = arith.constant 0 : index
    %c0_31 = arith.constant 0 : index
    %52 = vector.load %arg10[%c1, %c0_30, %c0_31] : memref<9x16x64xbf16, #tpu.memory_space<vmem>>, vector<1x16x64xbf16>
    %53 = vector.shape_cast %52 : vector<1x16x64xbf16> to vector<16x64xbf16>
    %cst_32 = arith.constant dense<0.000000e+00> : vector<64x64xf32>
    %54 = tpu.matmul %48, %53, %cst_32 {dimension_numbers = #tpu.dot_dimension_numbers<[1], [0], [0], [1], [0, 0, 1, 1], [], []>} : vector<64x16xbf16>, vector<16x64xbf16>, vector<64x64xf32> -> vector<64x64xf32>
    %c2 = arith.constant 2 : index
    %c0_33 = arith.constant 0 : index
    %c0_34 = arith.constant 0 : index
    %55 = vector.load %arg10[%c2, %c0_33, %c0_34] : memref<9x16x64xbf16, #tpu.memory_space<vmem>>, vector<1x16x64xbf16>
    %56 = vector.shape_cast %55 : vector<1x16x64xbf16> to vector<16x64xbf16>
    %cst_35 = arith.constant dense<0.000000e+00> : vector<64x64xf32>
    %57 = tpu.matmul %48, %56, %cst_35 {dimension_numbers = #tpu.dot_dimension_numbers<[1], [0], [0], [1], [0, 0, 1, 1], [], []>} : vector<64x16xbf16>, vector<16x64xbf16>, vector<64x64xf32> -> vector<64x64xf32>
    %c3 = arith.constant 3 : index
    %c0_36 = arith.constant 0 : index
    %c0_37 = arith.constant 0 : index
    %58 = vector.load %arg10[%c3, %c0_36, %c0_37] : memref<9x16x64xbf16, #tpu.memory_space<vmem>>, vector<1x16x64xbf16>
    %59 = vector.shape_cast %58 : vector<1x16x64xbf16> to vector<16x64xbf16>
    %cst_38 = arith.constant dense<0.000000e+00> : vector<64x64xf32>
    %60 = tpu.matmul %48, %59, %cst_38 {dimension_numbers = #tpu.dot_dimension_numbers<[1], [0], [0], [1], [0, 0, 1, 1], [], []>} : vector<64x16xbf16>, vector<16x64xbf16>, vector<64x64xf32> -> vector<64x64xf32>
    %c4 = arith.constant 4 : index
    %c0_39 = arith.constant 0 : index
    %c0_40 = arith.constant 0 : index
    %61 = vector.load %arg10[%c4, %c0_39, %c0_40] : memref<9x16x64xbf16, #tpu.memory_space<vmem>>, vector<1x16x64xbf16>
    %62 = vector.shape_cast %61 : vector<1x16x64xbf16> to vector<16x64xbf16>
    %cst_41 = arith.constant dense<0.000000e+00> : vector<64x64xf32>
    %63 = tpu.matmul %48, %62, %cst_41 {dimension_numbers = #tpu.dot_dimension_numbers<[1], [0], [0], [1], [0, 0, 1, 1], [], []>} : vector<64x16xbf16>, vector<16x64xbf16>, vector<64x64xf32> -> vector<64x64xf32>
    %c5 = arith.constant 5 : index
    %c0_42 = arith.constant 0 : index
    %c0_43 = arith.constant 0 : index
    %64 = vector.load %arg10[%c5, %c0_42, %c0_43] : memref<9x16x64xbf16, #tpu.memory_space<vmem>>, vector<1x16x64xbf16>
    %65 = vector.shape_cast %64 : vector<1x16x64xbf16> to vector<16x64xbf16>
    %cst_44 = arith.constant dense<0.000000e+00> : vector<64x64xf32>
    %66 = tpu.matmul %48, %65, %cst_44 {dimension_numbers = #tpu.dot_dimension_numbers<[1], [0], [0], [1], [0, 0, 1, 1], [], []>} : vector<64x16xbf16>, vector<16x64xbf16>, vector<64x64xf32> -> vector<64x64xf32>
    %c6 = arith.constant 6 : index
    %c0_45 = arith.constant 0 : index
    %c0_46 = arith.constant 0 : index
    %67 = vector.load %arg10[%c6, %c0_45, %c0_46] : memref<9x16x64xbf16, #tpu.memory_space<vmem>>, vector<1x16x64xbf16>
    %68 = vector.shape_cast %67 : vector<1x16x64xbf16> to vector<16x64xbf16>
    %cst_47 = arith.constant dense<0.000000e+00> : vector<64x64xf32>
    %69 = tpu.matmul %48, %68, %cst_47 {dimension_numbers = #tpu.dot_dimension_numbers<[1], [0], [0], [1], [0, 0, 1, 1], [], []>} : vector<64x16xbf16>, vector<16x64xbf16>, vector<64x64xf32> -> vector<64x64xf32>
    %c7 = arith.constant 7 : index
    %c0_48 = arith.constant 0 : index
    %c0_49 = arith.constant 0 : index
    %70 = vector.load %arg10[%c7, %c0_48, %c0_49] : memref<9x16x64xbf16, #tpu.memory_space<vmem>>, vector<1x16x64xbf16>
    %71 = vector.shape_cast %70 : vector<1x16x64xbf16> to vector<16x64xbf16>
    %cst_50 = arith.constant dense<0.000000e+00> : vector<64x64xf32>
    %72 = tpu.matmul %48, %71, %cst_50 {dimension_numbers = #tpu.dot_dimension_numbers<[1], [0], [0], [1], [0, 0, 1, 1], [], []>} : vector<64x16xbf16>, vector<16x64xbf16>, vector<64x64xf32> -> vector<64x64xf32>
    %c8 = arith.constant 8 : index
    %c0_51 = arith.constant 0 : index
    %c0_52 = arith.constant 0 : index
    %73 = vector.load %arg10[%c8, %c0_51, %c0_52] : memref<9x16x64xbf16, #tpu.memory_space<vmem>>, vector<1x16x64xbf16>
    %74 = vector.shape_cast %73 : vector<1x16x64xbf16> to vector<16x64xbf16>
    %cst_53 = arith.constant dense<0.000000e+00> : vector<64x64xf32>
    %75 = tpu.matmul %48, %74, %cst_53 {dimension_numbers = #tpu.dot_dimension_numbers<[1], [0], [0], [1], [0, 0, 1, 1], [], []>} : vector<64x16xbf16>, vector<16x64xbf16>, vector<64x64xf32> -> vector<64x64xf32>
    %76 = tpu.concatenate %51, %54, %57, %60, %63, %66, %69, %72, %75 in 0 : vector<64x64xf32>, vector<64x64xf32>, vector<64x64xf32>, vector<64x64xf32>, vector<64x64xf32>, vector<64x64xf32>, vector<64x64xf32>, vector<64x64xf32>, vector<64x64xf32> -> vector<576x64xf32>
    %77 = arith.truncf %76 : vector<576x64xf32> to vector<576x64xbf16>
    %c0_54 = arith.constant 0 : index
    %c0_55 = arith.constant 0 : index
    %78 = vector.load %arg11[%c0_54, %c0_55] : memref<32x576xbf16, #tpu.memory_space<vmem>>, vector<32x576xbf16>
    %cst_56 = arith.constant dense<0.000000e+00> : vector<32x64xf32>
    %79 = tpu.matmul %78, %77, %cst_56 {dimension_numbers = #tpu.dot_dimension_numbers<[1], [0], [0], [1], [0, 0, 1, 1], [], []>} : vector<32x576xbf16>, vector<576x64xbf16>, vector<32x64xf32> -> vector<32x64xf32>
    %c0_57 = arith.constant 0 : index
    %c0_58 = arith.constant 0 : index
    %80 = vector.load %arg12[%c0_57, %c0_58] : memref<32x1xf32, #tpu.memory_space<vmem>>, vector<32x1xf32>
    %81 = vector.broadcast %80 : vector<32x1xf32> to vector<32x64xf32>
    %82 = arith.addf %79, %81 : vector<32x64xf32>
    %cst_59 = arith.constant 0.000000e+00 : f32
    %83 = vector.broadcast %cst_59 : f32 to vector<32x64xf32>
    %84 = arith.maximumf %82, %83 : vector<32x64xf32>
    %85 = math.absf %82 : vector<32x64xf32>
    %cst_60 = arith.constant 0.000000e+00 : f32
    %86 = vector.broadcast %cst_60 : f32 to vector<32x64xf32>
    %87 = arith.subf %86, %85 : vector<32x64xf32>
    %88 = math.exp %87 : vector<32x64xf32>
    %89 = math.log1p %88 : vector<32x64xf32>
    %90 = arith.addf %84, %89 : vector<32x64xf32>
    %91 = math.tanh %90 : vector<32x64xf32>
    %92 = arith.mulf %82, %91 : vector<32x64xf32>
    %cst_61 = arith.constant dense<0.000000e+00> : vector<32xf32>
    %93 = vector.multi_reduction <add>, %92, %cst_61 [1] : vector<32x64xf32> to vector<32xf32>
    %94 = vector.shape_cast %93 : vector<32xf32> to vector<32x1xf32>
    %cst_62 = arith.constant 6.400000e+01 : f32
    %95 = vector.broadcast %cst_62 : f32 to vector<32x1xf32>
    %96 = arith.divf %94, %95 : vector<32x1xf32>
    %97 = vector.broadcast %96 : vector<32x1xf32> to vector<32x64xf32>
    %98 = arith.subf %92, %97 : vector<32x64xf32>
    %99 = arith.mulf %98, %98 : vector<32x64xf32>
    %cst_63 = arith.constant dense<0.000000e+00> : vector<32xf32>
    %100 = vector.multi_reduction <add>, %99, %cst_63 [1] : vector<32x64xf32> to vector<32xf32>
    %101 = vector.shape_cast %100 : vector<32xf32> to vector<32x1xf32>
    %cst_64 = arith.constant 6.400000e+01 : f32
    %102 = vector.broadcast %cst_64 : f32 to vector<32x1xf32>
    %103 = arith.divf %101, %102 : vector<32x1xf32>
    %cst_65 = arith.constant 9.99999974E-6 : f32
    %104 = vector.broadcast %cst_65 : f32 to vector<32x1xf32>
    %105 = arith.addf %103, %104 : vector<32x1xf32>
    %106 = math.rsqrt %105 : vector<32x1xf32>
    %107 = vector.broadcast %106 : vector<32x1xf32> to vector<32x64xf32>
    %108 = arith.mulf %98, %107 : vector<32x64xf32>
    %c0_66 = arith.constant 0 : index
    %c0_67 = arith.constant 0 : index
    %109 = vector.load %arg13[%c0_66, %c0_67] : memref<32x1xf32, #tpu.memory_space<vmem>>, vector<32x1xf32>
    %110 = vector.broadcast %109 : vector<32x1xf32> to vector<32x64xf32>
    %111 = arith.mulf %108, %110 : vector<32x64xf32>
    %c0_68 = arith.constant 0 : index
    %c0_69 = arith.constant 0 : index
    %112 = vector.load %arg14[%c0_68, %c0_69] : memref<32x1xf32, #tpu.memory_space<vmem>>, vector<32x1xf32>
    %113 = vector.broadcast %112 : vector<32x1xf32> to vector<32x64xf32>
    %114 = arith.addf %111, %113 : vector<32x64xf32>
    %115 = arith.truncf %114 : vector<32x64xf32> to vector<32x64xbf16>
    %c0_70 = arith.constant 0 : index
    %c0_71 = arith.constant 0 : index
    %c0_72 = arith.constant 0 : index
    %116 = vector.load %arg15[%c0_70, %c0_71, %c0_72] : memref<9x64x64xbf16, #tpu.memory_space<vmem>>, vector<1x64x64xbf16>
    %117 = vector.shape_cast %116 : vector<1x64x64xbf16> to vector<64x64xbf16>
    %cst_73 = arith.constant dense<0.000000e+00> : vector<32x64xf32>
    %118 = tpu.matmul %115, %117, %cst_73 {dimension_numbers = #tpu.dot_dimension_numbers<[1], [0], [0], [1], [0, 0, 1, 1], [], []>} : vector<32x64xbf16>, vector<64x64xbf16>, vector<32x64xf32> -> vector<32x64xf32>
    %c1_74 = arith.constant 1 : index
    %c0_75 = arith.constant 0 : index
    %c0_76 = arith.constant 0 : index
    %119 = vector.load %arg15[%c1_74, %c0_75, %c0_76] : memref<9x64x64xbf16, #tpu.memory_space<vmem>>, vector<1x64x64xbf16>
    %120 = vector.shape_cast %119 : vector<1x64x64xbf16> to vector<64x64xbf16>
    %cst_77 = arith.constant dense<0.000000e+00> : vector<32x64xf32>
    %121 = tpu.matmul %115, %120, %cst_77 {dimension_numbers = #tpu.dot_dimension_numbers<[1], [0], [0], [1], [0, 0, 1, 1], [], []>} : vector<32x64xbf16>, vector<64x64xbf16>, vector<32x64xf32> -> vector<32x64xf32>
    %c2_78 = arith.constant 2 : index
    %c0_79 = arith.constant 0 : index
    %c0_80 = arith.constant 0 : index
    %122 = vector.load %arg15[%c2_78, %c0_79, %c0_80] : memref<9x64x64xbf16, #tpu.memory_space<vmem>>, vector<1x64x64xbf16>
    %123 = vector.shape_cast %122 : vector<1x64x64xbf16> to vector<64x64xbf16>
    %cst_81 = arith.constant dense<0.000000e+00> : vector<32x64xf32>
    %124 = tpu.matmul %115, %123, %cst_81 {dimension_numbers = #tpu.dot_dimension_numbers<[1], [0], [0], [1], [0, 0, 1, 1], [], []>} : vector<32x64xbf16>, vector<64x64xbf16>, vector<32x64xf32> -> vector<32x64xf32>
    %c3_82 = arith.constant 3 : index
    %c0_83 = arith.constant 0 : index
    %c0_84 = arith.constant 0 : index
    %125 = vector.load %arg15[%c3_82, %c0_83, %c0_84] : memref<9x64x64xbf16, #tpu.memory_space<vmem>>, vector<1x64x64xbf16>
    %126 = vector.shape_cast %125 : vector<1x64x64xbf16> to vector<64x64xbf16>
    %cst_85 = arith.constant dense<0.000000e+00> : vector<32x64xf32>
    %127 = tpu.matmul %115, %126, %cst_85 {dimension_numbers = #tpu.dot_dimension_numbers<[1], [0], [0], [1], [0, 0, 1, 1], [], []>} : vector<32x64xbf16>, vector<64x64xbf16>, vector<32x64xf32> -> vector<32x64xf32>
    %c4_86 = arith.constant 4 : index
    %c0_87 = arith.constant 0 : index
    %c0_88 = arith.constant 0 : index
    %128 = vector.load %arg15[%c4_86, %c0_87, %c0_88] : memref<9x64x64xbf16, #tpu.memory_space<vmem>>, vector<1x64x64xbf16>
    %129 = vector.shape_cast %128 : vector<1x64x64xbf16> to vector<64x64xbf16>
    %cst_89 = arith.constant dense<0.000000e+00> : vector<32x64xf32>
    %130 = tpu.matmul %115, %129, %cst_89 {dimension_numbers = #tpu.dot_dimension_numbers<[1], [0], [0], [1], [0, 0, 1, 1], [], []>} : vector<32x64xbf16>, vector<64x64xbf16>, vector<32x64xf32> -> vector<32x64xf32>
    %c5_90 = arith.constant 5 : index
    %c0_91 = arith.constant 0 : index
    %c0_92 = arith.constant 0 : index
    %131 = vector.load %arg15[%c5_90, %c0_91, %c0_92] : memref<9x64x64xbf16, #tpu.memory_space<vmem>>, vector<1x64x64xbf16>
    %132 = vector.shape_cast %131 : vector<1x64x64xbf16> to vector<64x64xbf16>
    %cst_93 = arith.constant dense<0.000000e+00> : vector<32x64xf32>
    %133 = tpu.matmul %115, %132, %cst_93 {dimension_numbers = #tpu.dot_dimension_numbers<[1], [0], [0], [1], [0, 0, 1, 1], [], []>} : vector<32x64xbf16>, vector<64x64xbf16>, vector<32x64xf32> -> vector<32x64xf32>
    %c6_94 = arith.constant 6 : index
    %c0_95 = arith.constant 0 : index
    %c0_96 = arith.constant 0 : index
    %134 = vector.load %arg15[%c6_94, %c0_95, %c0_96] : memref<9x64x64xbf16, #tpu.memory_space<vmem>>, vector<1x64x64xbf16>
    %135 = vector.shape_cast %134 : vector<1x64x64xbf16> to vector<64x64xbf16>
    %cst_97 = arith.constant dense<0.000000e+00> : vector<32x64xf32>
    %136 = tpu.matmul %115, %135, %cst_97 {dimension_numbers = #tpu.dot_dimension_numbers<[1], [0], [0], [1], [0, 0, 1, 1], [], []>} : vector<32x64xbf16>, vector<64x64xbf16>, vector<32x64xf32> -> vector<32x64xf32>
    %c7_98 = arith.constant 7 : index
    %c0_99 = arith.constant 0 : index
    %c0_100 = arith.constant 0 : index
    %137 = vector.load %arg15[%c7_98, %c0_99, %c0_100] : memref<9x64x64xbf16, #tpu.memory_space<vmem>>, vector<1x64x64xbf16>
    %138 = vector.shape_cast %137 : vector<1x64x64xbf16> to vector<64x64xbf16>
    %cst_101 = arith.constant dense<0.000000e+00> : vector<32x64xf32>
    %139 = tpu.matmul %115, %138, %cst_101 {dimension_numbers = #tpu.dot_dimension_numbers<[1], [0], [0], [1], [0, 0, 1, 1], [], []>} : vector<32x64xbf16>, vector<64x64xbf16>, vector<32x64xf32> -> vector<32x64xf32>
    %c8_102 = arith.constant 8 : index
    %c0_103 = arith.constant 0 : index
    %c0_104 = arith.constant 0 : index
    %140 = vector.load %arg15[%c8_102, %c0_103, %c0_104] : memref<9x64x64xbf16, #tpu.memory_space<vmem>>, vector<1x64x64xbf16>
    %141 = vector.shape_cast %140 : vector<1x64x64xbf16> to vector<64x64xbf16>
    %cst_105 = arith.constant dense<0.000000e+00> : vector<32x64xf32>
    %142 = tpu.matmul %115, %141, %cst_105 {dimension_numbers = #tpu.dot_dimension_numbers<[1], [0], [0], [1], [0, 0, 1, 1], [], []>} : vector<32x64xbf16>, vector<64x64xbf16>, vector<32x64xf32> -> vector<32x64xf32>
    %143 = tpu.concatenate %118, %121, %124, %127, %130, %133, %136, %139, %142 in 0 : vector<32x64xf32>, vector<32x64xf32>, vector<32x64xf32>, vector<32x64xf32>, vector<32x64xf32>, vector<32x64xf32>, vector<32x64xf32>, vector<32x64xf32>, vector<32x64xf32> -> vector<288x64xf32>
    %144 = arith.truncf %143 : vector<288x64xf32> to vector<288x64xbf16>
    %c0_106 = arith.constant 0 : index
    %c0_107 = arith.constant 0 : index
    %145 = vector.load %arg16[%c0_106, %c0_107] : memref<32x288xbf16, #tpu.memory_space<vmem>>, vector<32x288xbf16>
    %cst_108 = arith.constant dense<0.000000e+00> : vector<32x64xf32>
    %146 = tpu.matmul %145, %144, %cst_108 {dimension_numbers = #tpu.dot_dimension_numbers<[1], [0], [0], [1], [0, 0, 1, 1], [], []>} : vector<32x288xbf16>, vector<288x64xbf16>, vector<32x64xf32> -> vector<32x64xf32>
    %c0_109 = arith.constant 0 : index
    %c0_110 = arith.constant 0 : index
    %147 = vector.load %arg17[%c0_109, %c0_110] : memref<32x1xf32, #tpu.memory_space<vmem>>, vector<32x1xf32>
    %148 = vector.broadcast %147 : vector<32x1xf32> to vector<32x64xf32>
    %149 = arith.addf %146, %148 : vector<32x64xf32>
    %cst_111 = arith.constant 0.000000e+00 : f32
    %150 = vector.broadcast %cst_111 : f32 to vector<32x64xf32>
    %151 = arith.maximumf %149, %150 : vector<32x64xf32>
    %152 = math.absf %149 : vector<32x64xf32>
    %cst_112 = arith.constant 0.000000e+00 : f32
    %153 = vector.broadcast %cst_112 : f32 to vector<32x64xf32>
    %154 = arith.subf %153, %152 : vector<32x64xf32>
    %155 = math.exp %154 : vector<32x64xf32>
    %156 = math.log1p %155 : vector<32x64xf32>
    %157 = arith.addf %151, %156 : vector<32x64xf32>
    %158 = math.tanh %157 : vector<32x64xf32>
    %159 = arith.mulf %149, %158 : vector<32x64xf32>
    %cst_113 = arith.constant dense<0.000000e+00> : vector<32xf32>
    %160 = vector.multi_reduction <add>, %159, %cst_113 [1] : vector<32x64xf32> to vector<32xf32>
    %161 = vector.shape_cast %160 : vector<32xf32> to vector<32x1xf32>
    %cst_114 = arith.constant 6.400000e+01 : f32
    %162 = vector.broadcast %cst_114 : f32 to vector<32x1xf32>
    %163 = arith.divf %161, %162 : vector<32x1xf32>
    %164 = vector.broadcast %163 : vector<32x1xf32> to vector<32x64xf32>
    %165 = arith.subf %159, %164 : vector<32x64xf32>
    %166 = arith.mulf %165, %165 : vector<32x64xf32>
    %cst_115 = arith.constant dense<0.000000e+00> : vector<32xf32>
    %167 = vector.multi_reduction <add>, %166, %cst_115 [1] : vector<32x64xf32> to vector<32xf32>
    %168 = vector.shape_cast %167 : vector<32xf32> to vector<32x1xf32>
    %cst_116 = arith.constant 6.400000e+01 : f32
    %169 = vector.broadcast %cst_116 : f32 to vector<32x1xf32>
    %170 = arith.divf %168, %169 : vector<32x1xf32>
    %cst_117 = arith.constant 9.99999974E-6 : f32
    %171 = vector.broadcast %cst_117 : f32 to vector<32x1xf32>
    %172 = arith.addf %170, %171 : vector<32x1xf32>
    %173 = math.rsqrt %172 : vector<32x1xf32>
    %174 = vector.broadcast %173 : vector<32x1xf32> to vector<32x64xf32>
    %175 = arith.mulf %165, %174 : vector<32x64xf32>
    %c0_118 = arith.constant 0 : index
    %c0_119 = arith.constant 0 : index
    %176 = vector.load %arg18[%c0_118, %c0_119] : memref<32x1xf32, #tpu.memory_space<vmem>>, vector<32x1xf32>
    %177 = vector.broadcast %176 : vector<32x1xf32> to vector<32x64xf32>
    %178 = arith.mulf %175, %177 : vector<32x64xf32>
    %c0_120 = arith.constant 0 : index
    %c0_121 = arith.constant 0 : index
    %179 = vector.load %arg19[%c0_120, %c0_121] : memref<32x1xf32, #tpu.memory_space<vmem>>, vector<32x1xf32>
    %180 = vector.broadcast %179 : vector<32x1xf32> to vector<32x64xf32>
    %181 = arith.addf %178, %180 : vector<32x64xf32>
    %c0_122 = arith.constant 0 : index
    %c0_123 = arith.constant 0 : index
    %182 = vector.load %arg20[%c0_122, %c0_123] : memref<3x32xbf16, #tpu.memory_space<vmem>>, vector<3x32xbf16>
    %183 = arith.truncf %181 : vector<32x64xf32> to vector<32x64xbf16>
    %cst_124 = arith.constant dense<0.000000e+00> : vector<3x64xf32>
    %184 = tpu.matmul %182, %183, %cst_124 {dimension_numbers = #tpu.dot_dimension_numbers<[1], [0], [0], [1], [0, 0, 1, 1], [], []>} : vector<3x32xbf16>, vector<32x64xbf16>, vector<3x64xf32> -> vector<3x64xf32>
    %c0_125 = arith.constant 0 : index
    %c0_126 = arith.constant 0 : index
    %185 = vector.load %arg21[%c0_125, %c0_126] : memref<3x1xf32, #tpu.memory_space<vmem>>, vector<3x1xf32>
    %186 = vector.broadcast %185 : vector<3x1xf32> to vector<3x64xf32>
    %187 = arith.addf %184, %186 : vector<3x64xf32>
    %188 = math.tanh %187 : vector<3x64xf32>
    %c0_127 = arith.constant 0 : index
    %c0_128 = arith.constant 0 : index
    %c0_129 = arith.constant 0 : index
    %189 = vector.load %arg34[%c0_127, %c0_128, %c0_129] : memref<1x3x64xf32, #tpu.memory_space<vmem>>, vector<1x3x64xf32>
    %190 = vector.shape_cast %189 : vector<1x3x64xf32> to vector<3x64xf32>
    %191 = vector.shape_cast %188 : vector<3x64xf32> to vector<1x3x64xf32>
    tpu.vector_store %arg34[%c0_127, %c0_128, %c0_129], %191 {strides = array<i32>} : memref<1x3x64xf32, #tpu.memory_space<vmem>>, vector<1x3x64xf32>,
    %192 = arith.truncf %181 : vector<32x64xf32> to vector<32x64xbf16>
    %c0_130 = arith.constant 0 : index
    %c0_131 = arith.constant 0 : index
    %c0_132 = arith.constant 0 : index
    %193 = vector.load %arg22[%c0_130, %c0_131, %c0_132] : memref<9x64x256xbf16, #tpu.memory_space<vmem>>, vector<1x64x256xbf16>
    %194 = vector.shape_cast %193 : vector<1x64x256xbf16> to vector<64x256xbf16>
    %cst_133 = arith.constant dense<0.000000e+00> : vector<32x256xf32>
    %195 = tpu.matmul %192, %194, %cst_133 {dimension_numbers = #tpu.dot_dimension_numbers<[1], [0], [0], [1], [0, 0, 1, 1], [], []>} : vector<32x64xbf16>, vector<64x256xbf16>, vector<32x256xf32> -> vector<32x256xf32>
    %c1_134 = arith.constant 1 : index
    %c0_135 = arith.constant 0 : index
    %c0_136 = arith.constant 0 : index
    %196 = vector.load %arg22[%c1_134, %c0_135, %c0_136] : memref<9x64x256xbf16, #tpu.memory_space<vmem>>, vector<1x64x256xbf16>
    %197 = vector.shape_cast %196 : vector<1x64x256xbf16> to vector<64x256xbf16>
    %cst_137 = arith.constant dense<0.000000e+00> : vector<32x256xf32>
    %198 = tpu.matmul %192, %197, %cst_137 {dimension_numbers = #tpu.dot_dimension_numbers<[1], [0], [0], [1], [0, 0, 1, 1], [], []>} : vector<32x64xbf16>, vector<64x256xbf16>, vector<32x256xf32> -> vector<32x256xf32>
    %c2_138 = arith.constant 2 : index
    %c0_139 = arith.constant 0 : index
    %c0_140 = arith.constant 0 : index
    %199 = vector.load %arg22[%c2_138, %c0_139, %c0_140] : memref<9x64x256xbf16, #tpu.memory_space<vmem>>, vector<1x64x256xbf16>
    %200 = vector.shape_cast %199 : vector<1x64x256xbf16> to vector<64x256xbf16>
    %cst_141 = arith.constant dense<0.000000e+00> : vector<32x256xf32>
    %201 = tpu.matmul %192, %200, %cst_141 {dimension_numbers = #tpu.dot_dimension_numbers<[1], [0], [0], [1], [0, 0, 1, 1], [], []>} : vector<32x64xbf16>, vector<64x256xbf16>, vector<32x256xf32> -> vector<32x256xf32>
    %c3_142 = arith.constant 3 : index
    %c0_143 = arith.constant 0 : index
    %c0_144 = arith.constant 0 : index
    %202 = vector.load %arg22[%c3_142, %c0_143, %c0_144] : memref<9x64x256xbf16, #tpu.memory_space<vmem>>, vector<1x64x256xbf16>
    %203 = vector.shape_cast %202 : vector<1x64x256xbf16> to vector<64x256xbf16>
    %cst_145 = arith.constant dense<0.000000e+00> : vector<32x256xf32>
    %204 = tpu.matmul %192, %203, %cst_145 {dimension_numbers = #tpu.dot_dimension_numbers<[1], [0], [0], [1], [0, 0, 1, 1], [], []>} : vector<32x64xbf16>, vector<64x256xbf16>, vector<32x256xf32> -> vector<32x256xf32>
    %c4_146 = arith.constant 4 : index
    %c0_147 = arith.constant 0 : index
    %c0_148 = arith.constant 0 : index
    %205 = vector.load %arg22[%c4_146, %c0_147, %c0_148] : memref<9x64x256xbf16, #tpu.memory_space<vmem>>, vector<1x64x256xbf16>
    %206 = vector.shape_cast %205 : vector<1x64x256xbf16> to vector<64x256xbf16>
    %cst_149 = arith.constant dense<0.000000e+00> : vector<32x256xf32>
    %207 = tpu.matmul %192, %206, %cst_149 {dimension_numbers = #tpu.dot_dimension_numbers<[1], [0], [0], [1], [0, 0, 1, 1], [], []>} : vector<32x64xbf16>, vector<64x256xbf16>, vector<32x256xf32> -> vector<32x256xf32>
    %c5_150 = arith.constant 5 : index
    %c0_151 = arith.constant 0 : index
    %c0_152 = arith.constant 0 : index
    %208 = vector.load %arg22[%c5_150, %c0_151, %c0_152] : memref<9x64x256xbf16, #tpu.memory_space<vmem>>, vector<1x64x256xbf16>
    %209 = vector.shape_cast %208 : vector<1x64x256xbf16> to vector<64x256xbf16>
    %cst_153 = arith.constant dense<0.000000e+00> : vector<32x256xf32>
    %210 = tpu.matmul %192, %209, %cst_153 {dimension_numbers = #tpu.dot_dimension_numbers<[1], [0], [0], [1], [0, 0, 1, 1], [], []>} : vector<32x64xbf16>, vector<64x256xbf16>, vector<32x256xf32> -> vector<32x256xf32>
    %c6_154 = arith.constant 6 : index
    %c0_155 = arith.constant 0 : index
    %c0_156 = arith.constant 0 : index
    %211 = vector.load %arg22[%c6_154, %c0_155, %c0_156] : memref<9x64x256xbf16, #tpu.memory_space<vmem>>, vector<1x64x256xbf16>
    %212 = vector.shape_cast %211 : vector<1x64x256xbf16> to vector<64x256xbf16>
    %cst_157 = arith.constant dense<0.000000e+00> : vector<32x256xf32>
    %213 = tpu.matmul %192, %212, %cst_157 {dimension_numbers = #tpu.dot_dimension_numbers<[1], [0], [0], [1], [0, 0, 1, 1], [], []>} : vector<32x64xbf16>, vector<64x256xbf16>, vector<32x256xf32> -> vector<32x256xf32>
    %c7_158 = arith.constant 7 : index
    %c0_159 = arith.constant 0 : index
    %c0_160 = arith.constant 0 : index
    %214 = vector.load %arg22[%c7_158, %c0_159, %c0_160] : memref<9x64x256xbf16, #tpu.memory_space<vmem>>, vector<1x64x256xbf16>
    %215 = vector.shape_cast %214 : vector<1x64x256xbf16> to vector<64x256xbf16>
    %cst_161 = arith.constant dense<0.000000e+00> : vector<32x256xf32>
    %216 = tpu.matmul %192, %215, %cst_161 {dimension_numbers = #tpu.dot_dimension_numbers<[1], [0], [0], [1], [0, 0, 1, 1], [], []>} : vector<32x64xbf16>, vector<64x256xbf16>, vector<32x256xf32> -> vector<32x256xf32>
    %c8_162 = arith.constant 8 : index
    %c0_163 = arith.constant 0 : index
    %c0_164 = arith.constant 0 : index
    %217 = vector.load %arg22[%c8_162, %c0_163, %c0_164] : memref<9x64x256xbf16, #tpu.memory_space<vmem>>, vector<1x64x256xbf16>
    %218 = vector.shape_cast %217 : vector<1x64x256xbf16> to vector<64x256xbf16>
    %cst_165 = arith.constant dense<0.000000e+00> : vector<32x256xf32>
    %219 = tpu.matmul %192, %218, %cst_165 {dimension_numbers = #tpu.dot_dimension_numbers<[1], [0], [0], [1], [0, 0, 1, 1], [], []>} : vector<32x64xbf16>, vector<64x256xbf16>, vector<32x256xf32> -> vector<32x256xf32>
    %220 = tpu.concatenate %195, %198, %201, %204, %207, %210, %213, %216, %219 in 0 : vector<32x256xf32>, vector<32x256xf32>, vector<32x256xf32>, vector<32x256xf32>, vector<32x256xf32>, vector<32x256xf32>, vector<32x256xf32>, vector<32x256xf32>, vector<32x256xf32> -> vector<288x256xf32>
    %221 = arith.truncf %220 : vector<288x256xf32> to vector<288x256xbf16>
    %c0_166 = arith.constant 0 : index
    %c0_167 = arith.constant 0 : index
    %222 = vector.load %arg23[%c0_166, %c0_167] : memref<16x288xbf16, #tpu.memory_space<vmem>>, vector<16x288xbf16>
    %cst_168 = arith.constant dense<0.000000e+00> : vector<16x256xf32>
    %223 = tpu.matmul %222, %221, %cst_168 {dimension_numbers = #tpu.dot_dimension_numbers<[1], [0], [0], [1], [0, 0, 1, 1], [], []>} : vector<16x288xbf16>, vector<288x256xbf16>, vector<16x256xf32> -> vector<16x256xf32>
    %c0_169 = arith.constant 0 : index
    %c0_170 = arith.constant 0 : index
    %224 = vector.load %arg24[%c0_169, %c0_170] : memref<16x1xf32, #tpu.memory_space<vmem>>, vector<16x1xf32>
    %225 = vector.broadcast %224 : vector<16x1xf32> to vector<16x256xf32>
    %226 = arith.addf %223, %225 : vector<16x256xf32>
    %cst_171 = arith.constant 0.000000e+00 : f32
    %227 = vector.broadcast %cst_171 : f32 to vector<16x256xf32>
    %228 = arith.maximumf %226, %227 : vector<16x256xf32>
    %229 = math.absf %226 : vector<16x256xf32>
    %cst_172 = arith.constant 0.000000e+00 : f32
    %230 = vector.broadcast %cst_172 : f32 to vector<16x256xf32>
    %231 = arith.subf %230, %229 : vector<16x256xf32>
    %232 = math.exp %231 : vector<16x256xf32>
    %233 = math.log1p %232 : vector<16x256xf32>
    %234 = arith.addf %228, %233 : vector<16x256xf32>
    %235 = math.tanh %234 : vector<16x256xf32>
    %236 = arith.mulf %226, %235 : vector<16x256xf32>
    %cst_173 = arith.constant dense<0.000000e+00> : vector<16xf32>
    %237 = vector.multi_reduction <add>, %236, %cst_173 [1] : vector<16x256xf32> to vector<16xf32>
    %238 = vector.shape_cast %237 : vector<16xf32> to vector<16x1xf32>
    %cst_174 = arith.constant 2.560000e+02 : f32
    %239 = vector.broadcast %cst_174 : f32 to vector<16x1xf32>
    %240 = arith.divf %238, %239 : vector<16x1xf32>
    %241 = vector.broadcast %240 : vector<16x1xf32> to vector<16x256xf32>
    %242 = arith.subf %236, %241 : vector<16x256xf32>
    %243 = arith.mulf %242, %242 : vector<16x256xf32>
    %cst_175 = arith.constant dense<0.000000e+00> : vector<16xf32>
    %244 = vector.multi_reduction <add>, %243, %cst_175 [1] : vector<16x256xf32> to vector<16xf32>
    %245 = vector.shape_cast %244 : vector<16xf32> to vector<16x1xf32>
    %cst_176 = arith.constant 2.560000e+02 : f32
    %246 = vector.broadcast %cst_176 : f32 to vector<16x1xf32>
    %247 = arith.divf %245, %246 : vector<16x1xf32>
    %cst_177 = arith.constant 9.99999974E-6 : f32
    %248 = vector.broadcast %cst_177 : f32 to vector<16x1xf32>
    %249 = arith.addf %247, %248 : vector<16x1xf32>
    %250 = math.rsqrt %249 : vector<16x1xf32>
    %251 = vector.broadcast %250 : vector<16x1xf32> to vector<16x256xf32>
    %252 = arith.mulf %242, %251 : vector<16x256xf32>
    %c0_178 = arith.constant 0 : index
    %c0_179 = arith.constant 0 : index
    %253 = vector.load %arg25[%c0_178, %c0_179] : memref<16x1xf32, #tpu.memory_space<vmem>>, vector<16x1xf32>
    %254 = vector.broadcast %253 : vector<16x1xf32> to vector<16x256xf32>
    %255 = arith.mulf %252, %254 : vector<16x256xf32>
    %c0_180 = arith.constant 0 : index
    %c0_181 = arith.constant 0 : index
    %256 = vector.load %arg26[%c0_180, %c0_181] : memref<16x1xf32, #tpu.memory_space<vmem>>, vector<16x1xf32>
    %257 = vector.broadcast %256 : vector<16x1xf32> to vector<16x256xf32>
    %258 = arith.addf %255, %257 : vector<16x256xf32>
    %259 = arith.truncf %258 : vector<16x256xf32> to vector<16x256xbf16>
    %c0_182 = arith.constant 0 : index
    %c0_183 = arith.constant 0 : index
    %c0_184 = arith.constant 0 : index
    %260 = vector.load %arg27[%c0_182, %c0_183, %c0_184] : memref<9x256x256xbf16, #tpu.memory_space<vmem>>, vector<1x256x256xbf16>
    %261 = vector.shape_cast %260 : vector<1x256x256xbf16> to vector<256x256xbf16>
    %cst_185 = arith.constant dense<0.000000e+00> : vector<16x256xf32>
    %262 = tpu.matmul %259, %261, %cst_185 {dimension_numbers = #tpu.dot_dimension_numbers<[1], [0], [0], [1], [0, 0, 1, 1], [], []>} : vector<16x256xbf16>, vector<256x256xbf16>, vector<16x256xf32> -> vector<16x256xf32>
    %c1_186 = arith.constant 1 : index
    %c0_187 = arith.constant 0 : index
    %c0_188 = arith.constant 0 : index
    %263 = vector.load %arg27[%c1_186, %c0_187, %c0_188] : memref<9x256x256xbf16, #tpu.memory_space<vmem>>, vector<1x256x256xbf16>
    %264 = vector.shape_cast %263 : vector<1x256x256xbf16> to vector<256x256xbf16>
    %cst_189 = arith.constant dense<0.000000e+00> : vector<16x256xf32>
    %265 = tpu.matmul %259, %264, %cst_189 {dimension_numbers = #tpu.dot_dimension_numbers<[1], [0], [0], [1], [0, 0, 1, 1], [], []>} : vector<16x256xbf16>, vector<256x256xbf16>, vector<16x256xf32> -> vector<16x256xf32>
    %c2_190 = arith.constant 2 : index
    %c0_191 = arith.constant 0 : index
    %c0_192 = arith.constant 0 : index
    %266 = vector.load %arg27[%c2_190, %c0_191, %c0_192] : memref<9x256x256xbf16, #tpu.memory_space<vmem>>, vector<1x256x256xbf16>
    %267 = vector.shape_cast %266 : vector<1x256x256xbf16> to vector<256x256xbf16>
    %cst_193 = arith.constant dense<0.000000e+00> : vector<16x256xf32>
    %268 = tpu.matmul %259, %267, %cst_193 {dimension_numbers = #tpu.dot_dimension_numbers<[1], [0], [0], [1], [0, 0, 1, 1], [], []>} : vector<16x256xbf16>, vector<256x256xbf16>, vector<16x256xf32> -> vector<16x256xf32>
    %c3_194 = arith.constant 3 : index
    %c0_195 = arith.constant 0 : index
    %c0_196 = arith.constant 0 : index
    %269 = vector.load %arg27[%c3_194, %c0_195, %c0_196] : memref<9x256x256xbf16, #tpu.memory_space<vmem>>, vector<1x256x256xbf16>
    %270 = vector.shape_cast %269 : vector<1x256x256xbf16> to vector<256x256xbf16>
    %cst_197 = arith.constant dense<0.000000e+00> : vector<16x256xf32>
    %271 = tpu.matmul %259, %270, %cst_197 {dimension_numbers = #tpu.dot_dimension_numbers<[1], [0], [0], [1], [0, 0, 1, 1], [], []>} : vector<16x256xbf16>, vector<256x256xbf16>, vector<16x256xf32> -> vector<16x256xf32>
    %c4_198 = arith.constant 4 : index
    %c0_199 = arith.constant 0 : index
    %c0_200 = arith.constant 0 : index
    %272 = vector.load %arg27[%c4_198, %c0_199, %c0_200] : memref<9x256x256xbf16, #tpu.memory_space<vmem>>, vector<1x256x256xbf16>
    %273 = vector.shape_cast %272 : vector<1x256x256xbf16> to vector<256x256xbf16>
    %cst_201 = arith.constant dense<0.000000e+00> : vector<16x256xf32>
    %274 = tpu.matmul %259, %273, %cst_201 {dimension_numbers = #tpu.dot_dimension_numbers<[1], [0], [0], [1], [0, 0, 1, 1], [], []>} : vector<16x256xbf16>, vector<256x256xbf16>, vector<16x256xf32> -> vector<16x256xf32>
    %c5_202 = arith.constant 5 : index
    %c0_203 = arith.constant 0 : index
    %c0_204 = arith.constant 0 : index
    %275 = vector.load %arg27[%c5_202, %c0_203, %c0_204] : memref<9x256x256xbf16, #tpu.memory_space<vmem>>, vector<1x256x256xbf16>
    %276 = vector.shape_cast %275 : vector<1x256x256xbf16> to vector<256x256xbf16>
    %cst_205 = arith.constant dense<0.000000e+00> : vector<16x256xf32>
    %277 = tpu.matmul %259, %276, %cst_205 {dimension_numbers = #tpu.dot_dimension_numbers<[1], [0], [0], [1], [0, 0, 1, 1], [], []>} : vector<16x256xbf16>, vector<256x256xbf16>, vector<16x256xf32> -> vector<16x256xf32>
    %c6_206 = arith.constant 6 : index
    %c0_207 = arith.constant 0 : index
    %c0_208 = arith.constant 0 : index
    %278 = vector.load %arg27[%c6_206, %c0_207, %c0_208] : memref<9x256x256xbf16, #tpu.memory_space<vmem>>, vector<1x256x256xbf16>
    %279 = vector.shape_cast %278 : vector<1x256x256xbf16> to vector<256x256xbf16>
    %cst_209 = arith.constant dense<0.000000e+00> : vector<16x256xf32>
    %280 = tpu.matmul %259, %279, %cst_209 {dimension_numbers = #tpu.dot_dimension_numbers<[1], [0], [0], [1], [0, 0, 1, 1], [], []>} : vector<16x256xbf16>, vector<256x256xbf16>, vector<16x256xf32> -> vector<16x256xf32>
    %c7_210 = arith.constant 7 : index
    %c0_211 = arith.constant 0 : index
    %c0_212 = arith.constant 0 : index
    %281 = vector.load %arg27[%c7_210, %c0_211, %c0_212] : memref<9x256x256xbf16, #tpu.memory_space<vmem>>, vector<1x256x256xbf16>
    %282 = vector.shape_cast %281 : vector<1x256x256xbf16> to vector<256x256xbf16>
    %cst_213 = arith.constant dense<0.000000e+00> : vector<16x256xf32>
    %283 = tpu.matmul %259, %282, %cst_213 {dimension_numbers = #tpu.dot_dimension_numbers<[1], [0], [0], [1], [0, 0, 1, 1], [], []>} : vector<16x256xbf16>, vector<256x256xbf16>, vector<16x256xf32> -> vector<16x256xf32>
    %c8_214 = arith.constant 8 : index
    %c0_215 = arith.constant 0 : index
    %c0_216 = arith.constant 0 : index
    %284 = vector.load %arg27[%c8_214, %c0_215, %c0_216] : memref<9x256x256xbf16, #tpu.memory_space<vmem>>, vector<1x256x256xbf16>
    %285 = vector.shape_cast %284 : vector<1x256x256xbf16> to vector<256x256xbf16>
    %cst_217 = arith.constant dense<0.000000e+00> : vector<16x256xf32>
    %286 = tpu.matmul %259, %285, %cst_217 {dimension_numbers = #tpu.dot_dimension_numbers<[1], [0], [0], [1], [0, 0, 1, 1], [], []>} : vector<16x256xbf16>, vector<256x256xbf16>, vector<16x256xf32> -> vector<16x256xf32>
    %287 = tpu.concatenate %262, %265, %268, %271, %274, %277, %280, %283, %286 in 0 : vector<16x256xf32>, vector<16x256xf32>, vector<16x256xf32>, vector<16x256xf32>, vector<16x256xf32>, vector<16x256xf32>, vector<16x256xf32>, vector<16x256xf32>, vector<16x256xf32> -> vector<144x256xf32>
    %288 = arith.truncf %287 : vector<144x256xf32> to vector<144x256xbf16>
    %c0_218 = arith.constant 0 : index
    %c0_219 = arith.constant 0 : index
    %289 = vector.load %arg28[%c0_218, %c0_219] : memref<16x144xbf16, #tpu.memory_space<vmem>>, vector<16x144xbf16>
    %cst_220 = arith.constant dense<0.000000e+00> : vector<16x256xf32>
    %290 = tpu.matmul %289, %288, %cst_220 {dimension_numbers = #tpu.dot_dimension_numbers<[1], [0], [0], [1], [0, 0, 1, 1], [], []>} : vector<16x144xbf16>, vector<144x256xbf16>, vector<16x256xf32> -> vector<16x256xf32>
    %c0_221 = arith.constant 0 : index
    %c0_222 = arith.constant 0 : index
    %291 = vector.load %arg29[%c0_221, %c0_222] : memref<16x1xf32, #tpu.memory_space<vmem>>, vector<16x1xf32>
    %292 = vector.broadcast %291 : vector<16x1xf32> to vector<16x256xf32>
    %293 = arith.addf %290, %292 : vector<16x256xf32>
    %cst_223 = arith.constant 0.000000e+00 : f32
    %294 = vector.broadcast %cst_223 : f32 to vector<16x256xf32>
    %295 = arith.maximumf %293, %294 : vector<16x256xf32>
    %296 = math.absf %293 : vector<16x256xf32>
    %cst_224 = arith.constant 0.000000e+00 : f32
    %297 = vector.broadcast %cst_224 : f32 to vector<16x256xf32>
    %298 = arith.subf %297, %296 : vector<16x256xf32>
    %299 = math.exp %298 : vector<16x256xf32>
    %300 = math.log1p %299 : vector<16x256xf32>
    %301 = arith.addf %295, %300 : vector<16x256xf32>
    %302 = math.tanh %301 : vector<16x256xf32>
    %303 = arith.mulf %293, %302 : vector<16x256xf32>
    %cst_225 = arith.constant dense<0.000000e+00> : vector<16xf32>
    %304 = vector.multi_reduction <add>, %303, %cst_225 [1] : vector<16x256xf32> to vector<16xf32>
    %305 = vector.shape_cast %304 : vector<16xf32> to vector<16x1xf32>
    %cst_226 = arith.constant 2.560000e+02 : f32
    %306 = vector.broadcast %cst_226 : f32 to vector<16x1xf32>
    %307 = arith.divf %305, %306 : vector<16x1xf32>
    %308 = vector.broadcast %307 : vector<16x1xf32> to vector<16x256xf32>
    %309 = arith.subf %303, %308 : vector<16x256xf32>
    %310 = arith.mulf %309, %309 : vector<16x256xf32>
    %cst_227 = arith.constant dense<0.000000e+00> : vector<16xf32>
    %311 = vector.multi_reduction <add>, %310, %cst_227 [1] : vector<16x256xf32> to vector<16xf32>
    %312 = vector.shape_cast %311 : vector<16xf32> to vector<16x1xf32>
    %cst_228 = arith.constant 2.560000e+02 : f32
    %313 = vector.broadcast %cst_228 : f32 to vector<16x1xf32>
    %314 = arith.divf %312, %313 : vector<16x1xf32>
    %cst_229 = arith.constant 9.99999974E-6 : f32
    %315 = vector.broadcast %cst_229 : f32 to vector<16x1xf32>
    %316 = arith.addf %314, %315 : vector<16x1xf32>
    %317 = math.rsqrt %316 : vector<16x1xf32>
    %318 = vector.broadcast %317 : vector<16x1xf32> to vector<16x256xf32>
    %319 = arith.mulf %309, %318 : vector<16x256xf32>
    %c0_230 = arith.constant 0 : index
    %c0_231 = arith.constant 0 : index
    %320 = vector.load %arg30[%c0_230, %c0_231] : memref<16x1xf32, #tpu.memory_space<vmem>>, vector<16x1xf32>
    %321 = vector.broadcast %320 : vector<16x1xf32> to vector<16x256xf32>
    %322 = arith.mulf %319, %321 : vector<16x256xf32>
    %c0_232 = arith.constant 0 : index
    %c0_233 = arith.constant 0 : index
    %323 = vector.load %arg31[%c0_232, %c0_233] : memref<16x1xf32, #tpu.memory_space<vmem>>, vector<16x1xf32>
    %324 = vector.broadcast %323 : vector<16x1xf32> to vector<16x256xf32>
    %325 = arith.addf %322, %324 : vector<16x256xf32>
    %c0_234 = arith.constant 0 : index
    %c0_235 = arith.constant 0 : index
    %326 = vector.load %arg32[%c0_234, %c0_235] : memref<3x16xbf16, #tpu.memory_space<vmem>>, vector<3x16xbf16>
    %327 = arith.truncf %325 : vector<16x256xf32> to vector<16x256xbf16>
    %cst_236 = arith.constant dense<0.000000e+00> : vector<3x256xf32>
    %328 = tpu.matmul %326, %327, %cst_236 {dimension_numbers = #tpu.dot_dimension_numbers<[1], [0], [0], [1], [0, 0, 1, 1], [], []>} : vector<3x16xbf16>, vector<16x256xbf16>, vector<3x256xf32> -> vector<3x256xf32>
    %c0_237 = arith.constant 0 : index
    %c0_238 = arith.constant 0 : index
    %329 = vector.load %arg33[%c0_237, %c0_238] : memref<3x1xf32, #tpu.memory_space<vmem>>, vector<3x1xf32>
    %330 = vector.broadcast %329 : vector<3x1xf32> to vector<3x256xf32>
    %331 = arith.addf %328, %330 : vector<3x256xf32>
    %332 = math.tanh %331 : vector<3x256xf32>
    %c0_239 = arith.constant 0 : index
    %c0_240 = arith.constant 0 : index
    %c0_241 = arith.constant 0 : index
    %333 = vector.load %arg35[%c0_239, %c0_240, %c0_241] : memref<1x3x256xf32, #tpu.memory_space<vmem>>, vector<1x3x256xf32>
    %334 = vector.shape_cast %333 : vector<1x3x256xf32> to vector<3x256xf32>
    %335 = vector.shape_cast %332 : vector<3x256xf32> to vector<1x3x256xf32>
    tpu.vector_store %arg35[%c0_239, %c0_240, %c0_241], %335 {strides = array<i32>} : memref<1x3x256xf32, #tpu.memory_space<vmem>>, vector<1x3x256xf32>,
    return
  }
  func.func @transform_0(%arg0: i32) -> (i32, i32, i32) {
    %c0_i32 = arith.constant 0 : i32
    %c0_i32_0 = arith.constant 0 : i32
    %c0_i32_1 = arith.constant 0 : i32
    return %arg0, %c0_i32, %c0_i32_0 : i32, i32, i32
  }
  func.func @transform_1(%arg0: i32) -> (i32, i32) {
    %c0_i32 = arith.constant 0 : i32
    %c0_i32_0 = arith.constant 0 : i32
    %c0_i32_1 = arith.constant 0 : i32
    return %c0_i32, %c0_i32_0 : i32, i32
  }
  func.func @transform_2(%arg0: i32) -> (i32, i32) {
    %c0_i32 = arith.constant 0 : i32
    %c0_i32_0 = arith.constant 0 : i32
    %c0_i32_1 = arith.constant 0 : i32
    return %c0_i32, %c0_i32_0 : i32, i32
  }
  func.func @transform_3(%arg0: i32) -> (i32, i32) {
    %c0_i32 = arith.constant 0 : i32
    %c0_i32_0 = arith.constant 0 : i32
    %c0_i32_1 = arith.constant 0 : i32
    return %c0_i32, %c0_i32_0 : i32, i32
  }
  func.func @transform_4(%arg0: i32) -> (i32, i32) {
    %c0_i32 = arith.constant 0 : i32
    %c0_i32_0 = arith.constant 0 : i32
    %c0_i32_1 = arith.constant 0 : i32
    return %c0_i32, %c0_i32_0 : i32, i32
  }
  func.func @transform_5(%arg0: i32) -> (i32, i32) {
    %c0_i32 = arith.constant 0 : i32
    %c0_i32_0 = arith.constant 0 : i32
    %c0_i32_1 = arith.constant 0 : i32
    return %c0_i32, %c0_i32_0 : i32, i32
  }
  func.func @transform_6(%arg0: i32) -> (i32, i32) {
    %c0_i32 = arith.constant 0 : i32
    %c0_i32_0 = arith.constant 0 : i32
    %c0_i32_1 = arith.constant 0 : i32
    return %c0_i32, %c0_i32_0 : i32, i32
  }
  func.func @transform_7(%arg0: i32) -> (i32, i32) {
    %c0_i32 = arith.constant 0 : i32
    %c0_i32_0 = arith.constant 0 : i32
    %c0_i32_1 = arith.constant 0 : i32
    return %c0_i32, %c0_i32_0 : i32, i32
  }
  func.func @transform_8(%arg0: i32) -> (i32, i32) {
    %c0_i32 = arith.constant 0 : i32
    %c0_i32_0 = arith.constant 0 : i32
    %c0_i32_1 = arith.constant 0 : i32
    return %c0_i32, %c0_i32_0 : i32, i32
  }
  func.func @transform_9(%arg0: i32) -> (i32, i32, i32) {
    %c0_i32 = arith.constant 0 : i32
    %c0_i32_0 = arith.constant 0 : i32
    %c0_i32_1 = arith.constant 0 : i32
    %c0_i32_2 = arith.constant 0 : i32
    return %c0_i32, %c0_i32_0, %c0_i32_1 : i32, i32, i32
  }
  func.func @transform_10(%arg0: i32) -> (i32, i32) {
    %c0_i32 = arith.constant 0 : i32
    %c0_i32_0 = arith.constant 0 : i32
    %c0_i32_1 = arith.constant 0 : i32
    return %c0_i32, %c0_i32_0 : i32, i32
  }
  func.func @transform_11(%arg0: i32) -> (i32, i32) {
    %c0_i32 = arith.constant 0 : i32
    %c0_i32_0 = arith.constant 0 : i32
    %c0_i32_1 = arith.constant 0 : i32
    return %c0_i32, %c0_i32_0 : i32, i32
  }
  func.func @transform_12(%arg0: i32) -> (i32, i32) {
    %c0_i32 = arith.constant 0 : i32
    %c0_i32_0 = arith.constant 0 : i32
    %c0_i32_1 = arith.constant 0 : i32
    return %c0_i32, %c0_i32_0 : i32, i32
  }
  func.func @transform_13(%arg0: i32) -> (i32, i32) {
    %c0_i32 = arith.constant 0 : i32
    %c0_i32_0 = arith.constant 0 : i32
    %c0_i32_1 = arith.constant 0 : i32
    return %c0_i32, %c0_i32_0 : i32, i32
  }
  func.func @transform_14(%arg0: i32) -> (i32, i32, i32) {
    %c0_i32 = arith.constant 0 : i32
    %c0_i32_0 = arith.constant 0 : i32
    %c0_i32_1 = arith.constant 0 : i32
    %c0_i32_2 = arith.constant 0 : i32
    return %c0_i32, %c0_i32_0, %c0_i32_1 : i32, i32, i32
  }
  func.func @transform_15(%arg0: i32) -> (i32, i32) {
    %c0_i32 = arith.constant 0 : i32
    %c0_i32_0 = arith.constant 0 : i32
    %c0_i32_1 = arith.constant 0 : i32
    return %c0_i32, %c0_i32_0 : i32, i32
  }
  func.func @transform_16(%arg0: i32) -> (i32, i32) {
    %c0_i32 = arith.constant 0 : i32
    %c0_i32_0 = arith.constant 0 : i32
    %c0_i32_1 = arith.constant 0 : i32
    return %c0_i32, %c0_i32_0 : i32, i32
  }
  func.func @transform_17(%arg0: i32) -> (i32, i32) {
    %c0_i32 = arith.constant 0 : i32
    %c0_i32_0 = arith.constant 0 : i32
    %c0_i32_1 = arith.constant 0 : i32
    return %c0_i32, %c0_i32_0 : i32, i32
  }
  func.func @transform_18(%arg0: i32) -> (i32, i32) {
    %c0_i32 = arith.constant 0 : i32
    %c0_i32_0 = arith.constant 0 : i32
    %c0_i32_1 = arith.constant 0 : i32
    return %c0_i32, %c0_i32_0 : i32, i32
  }
  func.func @transform_19(%arg0: i32) -> (i32, i32) {
    %c0_i32 = arith.constant 0 : i32
    %c0_i32_0 = arith.constant 0 : i32
    %c0_i32_1 = arith.constant 0 : i32
    return %c0_i32, %c0_i32_0 : i32, i32
  }
  func.func @transform_20(%arg0: i32) -> (i32, i32) {
    %c0_i32 = arith.constant 0 : i32
    %c0_i32_0 = arith.constant 0 : i32
    %c0_i32_1 = arith.constant 0 : i32
    return %c0_i32, %c0_i32_0 : i32, i32
  }
  func.func @transform_21(%arg0: i32) -> (i32, i32, i32) {
    %c0_i32 = arith.constant 0 : i32
    %c0_i32_0 = arith.constant 0 : i32
    %c0_i32_1 = arith.constant 0 : i32
    %c0_i32_2 = arith.constant 0 : i32
    return %c0_i32, %c0_i32_0, %c0_i32_1 : i32, i32, i32
  }
  func.func @transform_22(%arg0: i32) -> (i32, i32) {
    %c0_i32 = arith.constant 0 : i32
    %c0_i32_0 = arith.constant 0 : i32
    %c0_i32_1 = arith.constant 0 : i32
    return %c0_i32, %c0_i32_0 : i32, i32
  }
  func.func @transform_23(%arg0: i32) -> (i32, i32) {
    %c0_i32 = arith.constant 0 : i32
    %c0_i32_0 = arith.constant 0 : i32
    %c0_i32_1 = arith.constant 0 : i32
    return %c0_i32, %c0_i32_0 : i32, i32
  }
  func.func @transform_24(%arg0: i32) -> (i32, i32) {
    %c0_i32 = arith.constant 0 : i32
    %c0_i32_0 = arith.constant 0 : i32
    %c0_i32_1 = arith.constant 0 : i32
    return %c0_i32, %c0_i32_0 : i32, i32
  }
  func.func @transform_25(%arg0: i32) -> (i32, i32) {
    %c0_i32 = arith.constant 0 : i32
    %c0_i32_0 = arith.constant 0 : i32
    %c0_i32_1 = arith.constant 0 : i32
    return %c0_i32, %c0_i32_0 : i32, i32
  }
  func.func @transform_26(%arg0: i32) -> (i32, i32, i32) {
    %c0_i32 = arith.constant 0 : i32
    %c0_i32_0 = arith.constant 0 : i32
    %c0_i32_1 = arith.constant 0 : i32
    %c0_i32_2 = arith.constant 0 : i32
    return %c0_i32, %c0_i32_0, %c0_i32_1 : i32, i32, i32
  }
  func.func @transform_27(%arg0: i32) -> (i32, i32) {
    %c0_i32 = arith.constant 0 : i32
    %c0_i32_0 = arith.constant 0 : i32
    %c0_i32_1 = arith.constant 0 : i32
    return %c0_i32, %c0_i32_0 : i32, i32
  }
  func.func @transform_28(%arg0: i32) -> (i32, i32) {
    %c0_i32 = arith.constant 0 : i32
    %c0_i32_0 = arith.constant 0 : i32
    %c0_i32_1 = arith.constant 0 : i32
    return %c0_i32, %c0_i32_0 : i32, i32
  }
  func.func @transform_29(%arg0: i32) -> (i32, i32) {
    %c0_i32 = arith.constant 0 : i32
    %c0_i32_0 = arith.constant 0 : i32
    %c0_i32_1 = arith.constant 0 : i32
    return %c0_i32, %c0_i32_0 : i32, i32
  }
  func.func @transform_30(%arg0: i32) -> (i32, i32) {
    %c0_i32 = arith.constant 0 : i32
    %c0_i32_0 = arith.constant 0 : i32
    %c0_i32_1 = arith.constant 0 : i32
    return %c0_i32, %c0_i32_0 : i32, i32
  }
  func.func @transform_31(%arg0: i32) -> (i32, i32) {
    %c0_i32 = arith.constant 0 : i32
    %c0_i32_0 = arith.constant 0 : i32
    %c0_i32_1 = arith.constant 0 : i32
    return %c0_i32, %c0_i32_0 : i32, i32
  }
  func.func @transform_32(%arg0: i32) -> (i32, i32) {
    %c0_i32 = arith.constant 0 : i32
    %c0_i32_0 = arith.constant 0 : i32
    %c0_i32_1 = arith.constant 0 : i32
    return %c0_i32, %c0_i32_0 : i32, i32
  }
  func.func @transform_33(%arg0: i32) -> (i32, i32, i32) {
    %c0_i32 = arith.constant 0 : i32
    %c0_i32_0 = arith.constant 0 : i32
    %c0_i32_1 = arith.constant 0 : i32
    return %arg0, %c0_i32, %c0_i32_0 : i32, i32, i32
  }
  func.func @transform_34(%arg0: i32) -> (i32, i32, i32) {
    %c0_i32 = arith.constant 0 : i32
    %c0_i32_0 = arith.constant 0 : i32
    %c0_i32_1 = arith.constant 0 : i32
    return %arg0, %c0_i32, %c0_i32_0 : i32, i32, i32
  }
}

</mosaic_0001>

<llo_original>
// kernel: _lambda_.1
$region0: #{_lambda_.1}
  #allocation0 [shape = 'u32[]', space=smem, size = 0x4, offset = 0x4, fixed_abs, tag = 'smem constant byte address 0x4 - core index']
  #allocation1 [shape = 'u32[144,128]{1,0:T(1,128)}', space=vmem, size = 0x12000, scoped, tag = 'internal scratch']
  %s0 = inlined_call_operand.smem [shape: u32[35], index: -1, kind: input, shape index: {}]
  %s1 = sld [smem:[%s0]]
  %s2 = scalar_lea.smem %s0, 1
  %s3 = sld [smem:[%s2]]
  %s4 = scalar_lea.smem %s0, 2
  %s5 = sld [smem:[%s4]]
  %s6 = scalar_lea.smem %s0, 3
  %s7 = sld [smem:[%s6]]
  %s8 = scalar_lea.smem %s0, 4
  %s9 = sld [smem:[%s8]]
  %s10 = scalar_lea.smem %s0, 5
  %s11 = sld [smem:[%s10]]
  %s12 = scalar_lea.smem %s0, 6
  %s13 = sld [smem:[%s12]]
  %s14 = scalar_lea.smem %s0, 7
  %s15 = sld [smem:[%s14]]
  %s16 = scalar_lea.smem %s0, 8
  %s17 = sld [smem:[%s16]]
  %s18 = scalar_lea.smem %s0, 9
  %s19 = sld [smem:[%s18]]
  %s20 = scalar_lea.smem %s0, 10
  %s21 = sld [smem:[%s20]]
  %s22 = scalar_lea.smem %s0, 11
  %s23 = sld [smem:[%s22]]
  %s24 = scalar_lea.smem %s0, 12
  %s25 = sld [smem:[%s24]]
  %s26 = scalar_lea.smem %s0, 13
  %s27 = sld [smem:[%s26]]
  %s28 = scalar_lea.smem %s0, 14
  %s29 = sld [smem:[%s28]]
  %s30 = scalar_lea.smem %s0, 15
  %s31 = sld [smem:[%s30]]
  %s32 = scalar_lea.smem %s0, 16
  %s33 = sld [smem:[%s32]]
  %s34 = scalar_lea.smem %s0, 17
  %s35 = sld [smem:[%s34]]
  %s36 = scalar_lea.smem %s0, 18
  %s37 = sld [smem:[%s36]]
  %s38 = scalar_lea.smem %s0, 19
  %s39 = sld [smem:[%s38]]
  %s40 = scalar_lea.smem %s0, 20
  %s41 = sld [smem:[%s40]]
  %s42 = scalar_lea.smem %s0, 21
  %s43 = sld [smem:[%s42]]
  %s44 = scalar_lea.smem %s0, 22
  %s45 = sld [smem:[%s44]]
  %s46 = scalar_lea.smem %s0, 23
  %s47 = sld [smem:[%s46]]
  %s48 = scalar_lea.smem %s0, 24
  %s49 = sld [smem:[%s48]]
  %s50 = scalar_lea.smem %s0, 25
  %s51 = sld [smem:[%s50]]
  %s52 = scalar_lea.smem %s0, 26
  %s53 = sld [smem:[%s52]]
  %s54 = scalar_lea.smem %s0, 27
  %s55 = sld [smem:[%s54]]
  %s56 = scalar_lea.smem %s0, 28
  %s57 = sld [smem:[%s56]]
  %s58 = scalar_lea.smem %s0, 29
  %s59 = sld [smem:[%s58]]
  %s60 = scalar_lea.smem %s0, 30
  %s61 = sld [smem:[%s60]]
  %s62 = scalar_lea.smem %s0, 31
  %s63 = sld [smem:[%s62]]
  %s64 = scalar_lea.smem %s0, 32
  %s65 = sld [smem:[%s64]]
  %s66 = scalar_lea.smem %s0, 33
  %s67 = sld [smem:[%s66]]
  %s68 = scalar_lea.smem %s0, 34
  %s69 = sld [smem:[%s68]]
  %70 = xla_tuple %s67, %s69
  %s71 = sld [smem:[#allocation0]]
  $region173: #{_lambda_.1} parent=0
    _
  %s73 = ssub.s32 1, %s71
  %s74 = scalar_select 0, %s73, %s71
  loop: start=0, step=1, limit=4
  $region2: #{_lambda_.1} parent=0 // loop_pre_header
    _
  $region3: #{_lambda_.1} parent=0 // loop_header
    %s76 = sphi 0, %s80
    %p77 = scmp.ge.s32.totalorder %s76, 4
    %s86 = sphi 0, %s88
    %s89 = sphi 0, %s86
    %s90 = sphi 0, %s89
    %s106 = sphi 0, %s90
    %s110 = sphi 0, %s110
    %s112 = sphi 0, %s110
    %s113 = sphi 0, %s112
    %s127 = sphi 0, %s113
    %s131 = sphi 0, %s131
    %s133 = sphi 0, %s131
    %s134 = sphi 0, %s133
    %s148 = sphi 0, %s134
    %s152 = sphi 0, %s152
    %s154 = sphi 0, %s152
    %s155 = sphi 0, %s154
    %s169 = sphi 0, %s155
    %s173 = sphi 0, %s173
    %s175 = sphi 0, %s173
    %s176 = sphi 0, %s175
    %s190 = sphi 0, %s176
    %s194 = sphi 0, %s194
    %s196 = sphi 0, %s194
    %s197 = sphi 0, %s196
    %s211 = sphi 0, %s197
    %s215 = sphi 0, %s215
    %s217 = sphi 0, %s215
    %s218 = sphi 0, %s217
    %s232 = sphi 0, %s218
    %s236 = sphi 0, %s236
    %s238 = sphi 0, %s236
    %s239 = sphi 0, %s238
    %s253 = sphi 0, %s239
    %s257 = sphi 0, %s257
    %s259 = sphi 0, %s257
    %s260 = sphi 0, %s259
    %s274 = sphi 0, %s260
    %s278 = sphi 0, %s278
    %s280 = sphi 0, %s278
    %s281 = sphi 0, %s280
    %s295 = sphi 0, %s281
    %s299 = sphi 0, %s299
    %s301 = sphi 0, %s299
    %s302 = sphi 0, %s301
    %s316 = sphi 0, %s302
    %s320 = sphi 0, %s320
    %s322 = sphi 0, %s320
    %s323 = sphi 0, %s322
    %s337 = sphi 0, %s323
    %s341 = sphi 0, %s341
    %s343 = sphi 0, %s341
    %s344 = sphi 0, %s343
    %s358 = sphi 0, %s344
    %s362 = sphi 0, %s362
    %s364 = sphi 0, %s362
    %s365 = sphi 0, %s364
    %s379 = sphi 0, %s365
    %s383 = sphi 0, %s383
    %s385 = sphi 0, %s383
    %s386 = sphi 0, %s385
    %s400 = sphi 0, %s386
    %s404 = sphi 0, %s404
    %s406 = sphi 0, %s404
    %s407 = sphi 0, %s406
    %s421 = sphi 0, %s407
    %s425 = sphi 0, %s425
    %s427 = sphi 0, %s425
    %s428 = sphi 0, %s427
    %s442 = sphi 0, %s428
    %s446 = sphi 0, %s446
    %s448 = sphi 0, %s446
    %s449 = sphi 0, %s448
    %s463 = sphi 0, %s449
    %s467 = sphi 0, %s467
    %s469 = sphi 0, %s467
    %s470 = sphi 0, %s469
    %s484 = sphi 0, %s470
    %s488 = sphi 0, %s488
    %s490 = sphi 0, %s488
    %s491 = sphi 0, %s490
    %s505 = sphi 0, %s491
    %s509 = sphi 0, %s509
    %s511 = sphi 0, %s509
    %s512 = sphi 0, %s511
    %s526 = sphi 0, %s512
    %s530 = sphi 0, %s530
    %s532 = sphi 0, %s530
    %s533 = sphi 0, %s532
    %s547 = sphi 0, %s533
    %s551 = sphi 0, %s551
    %s553 = sphi 0, %s551
    %s554 = sphi 0, %s553
    %s568 = sphi 0, %s554
    %s572 = sphi 0, %s572
    %s574 = sphi 0, %s572
    %s575 = sphi 0, %s574
    %s589 = sphi 0, %s575
    %s593 = sphi 0, %s593
    %s595 = sphi 0, %s593
    %s596 = sphi 0, %s595
    %s610 = sphi 0, %s596
    %s614 = sphi 0, %s614
    %s616 = sphi 0, %s614
    %s617 = sphi 0, %s616
    %s631 = sphi 0, %s617
    %s635 = sphi 0, %s635
    %s637 = sphi 0, %s635
    %s638 = sphi 0, %s637
    %s652 = sphi 0, %s638
    %s656 = sphi 0, %s656
    %s658 = sphi 0, %s656
    %s659 = sphi 0, %s658
    %s673 = sphi 0, %s659
    %s677 = sphi 0, %s677
    %s679 = sphi 0, %s677
    %s680 = sphi 0, %s679
    %s694 = sphi 0, %s680
    %s698 = sphi 0, %s698
    %s700 = sphi 0, %s698
    %s701 = sphi 0, %s700
    %s715 = sphi 0, %s701
    %s719 = sphi 0, %s719
    %s721 = sphi 0, %s719
    %s722 = sphi 0, %s721
    %s736 = sphi 0, %s722
    %s740 = sphi 0, %s740
    %s742 = sphi 0, %s740
    %s743 = sphi 0, %s742
    %s757 = sphi 0, %s743
    %s761 = sphi 0, %s761
    %s763 = sphi 0, %s761
    %s764 = sphi 0, %s763
    %s778 = sphi 0, %s764
    %s784 = sphi 0, %s786
    %s787 = sphi 0, %s784
    %s788 = sphi 0, %s787
    %s804 = sphi 0, %s788
    %s810 = sphi 0, %s812
    %s813 = sphi 0, %s810
    %s814 = sphi 0, %s813
    %s830 = sphi 0, %s814
  $region4: #{_lambda_.1} parent=0 // loop_header_branch
    %79 = sbr.rel (%p77) target = $region8
  $region5: #{_lambda_.1} parent=0 // loop_body
    %s81 = ssub.s32 %s76, 1
    %s82 = ssub.s32 %s76, 2
    %s83 = sadd.s32 %s76, 1
    %s84 = ssub.s32 %s76, %s83
    %p85 = scmp.eq.s32.totalorder %s84, 0
    %s87 = sadd.s32 %s86, 1
    %s88 = scalar_select %p85, %s86, %s87
    %p91 = pneg %p85
    %p92 = scmp.eq.s32.totalorder %s76, 1
    %p93 = por %p91, %p92
    %p94 = scmp.ne.s32.totalorder %s86, %s89
    %p95 = scmp.eq.s32.totalorder %s76, 0
    %p96 = por %p94, %p95
    %p97 = scmp.ne.s32.totalorder %s86, %s89
    %p98 = scmp.eq.s32.totalorder %s81, 1
    %p99 = por %p97, %p98
    %p100 = scmp.ne.s32.totalorder %s89, %s90
    %p101 = scmp.eq.s32.totalorder %s81, 0
    %p102 = por %p100, %p101
    %p103 = scmp.ne.s32.totalorder %s89, %s90
    %p104 = scmp.eq.s32.totalorder %s82, 1
    %p105 = por %p103, %p104
    %p107 = scmp.ne.s32.totalorder %s90, %s106
    %p108 = scmp.eq.s32.totalorder %s82, 0
    %p109 = por %p107, %p108
    %s111 = sadd.s32 %s110, 1
    %p114 = scmp.eq.s32.totalorder %s76, 1
    %p115 = scmp.ne.s32.totalorder %s110, %s112
    %p116 = scmp.eq.s32.totalorder %s76, 0
    %p117 = por %p115, %p116
    %p118 = scmp.ne.s32.totalorder %s110, %s112
    %p119 = scmp.eq.s32.totalorder %s81, 1
    %p120 = por %p118, %p119
    %p121 = scmp.ne.s32.totalorder %s112, %s113
    %p122 = scmp.eq.s32.totalorder %s81, 0
    %p123 = por %p121, %p122
    %p124 = scmp.ne.s32.totalorder %s112, %s113
    %p125 = scmp.eq.s32.totalorder %s82, 1
    %p126 = por %p124, %p125
    %p128 = scmp.ne.s32.totalorder %s113, %s127
    %p129 = scmp.eq.s32.totalorder %s82, 0
    %p130 = por %p128, %p129
    %s132 = sadd.s32 %s131, 1
    %p135 = scmp.eq.s32.totalorder %s76, 1
    %p136 = scmp.ne.s32.totalorder %s131, %s133
    %p137 = scmp.eq.s32.totalorder %s76, 0
    %p138 = por %p136, %p137
    %p139 = scmp.ne.s32.totalorder %s131, %s133
    %p140 = scmp.eq.s32.totalorder %s81, 1
    %p141 = por %p139, %p140
    %p142 = scmp.ne.s32.totalorder %s133, %s134
    %p143 = scmp.eq.s32.totalorder %s81, 0
    %p144 = por %p142, %p143
    %p145 = scmp.ne.s32.totalorder %s133, %s134
    %p146 = scmp.eq.s32.totalorder %s82, 1
    %p147 = por %p145, %p146
    %p149 = scmp.ne.s32.totalorder %s134, %s148
    %p150 = scmp.eq.s32.totalorder %s82, 0
    %p151 = por %p149, %p150
    %s153 = sadd.s32 %s152, 1
    %p156 = scmp.eq.s32.totalorder %s76, 1
    %p157 = scmp.ne.s32.totalorder %s152, %s154
    %p158 = scmp.eq.s32.totalorder %s76, 0
    %p159 = por %p157, %p158
    %p160 = scmp.ne.s32.totalorder %s152, %s154
    %p161 = scmp.eq.s32.totalorder %s81, 1
    %p162 = por %p160, %p161
    %p163 = scmp.ne.s32.totalorder %s154, %s155
    %p164 = scmp.eq.s32.totalorder %s81, 0
    %p165 = por %p163, %p164
    %p166 = scmp.ne.s32.totalorder %s154, %s155
    %p167 = scmp.eq.s32.totalorder %s82, 1
    %p168 = por %p166, %p167
    %p170 = scmp.ne.s32.totalorder %s155, %s169
    %p171 = scmp.eq.s32.totalorder %s82, 0
    %p172 = por %p170, %p171
    %s174 = sadd.s32 %s173, 1
    %p177 = scmp.eq.s32.totalorder %s76, 1
    %p178 = scmp.ne.s32.totalorder %s173, %s175
    %p179 = scmp.eq.s32.totalorder %s76, 0
    %p180 = por %p178, %p179
    %p181 = scmp.ne.s32.totalorder %s173, %s175
    %p182 = scmp.eq.s32.totalorder %s81, 1
    %p183 = por %p181, %p182
    %p184 = scmp.ne.s32.totalorder %s175, %s176
    %p185 = scmp.eq.s32.totalorder %s81, 0
    %p186 = por %p184, %p185
    %p187 = scmp.ne.s32.totalorder %s175, %s176
    %p188 = scmp.eq.s32.totalorder %s82, 1
    %p189 = por %p187, %p188
    %p191 = scmp.ne.s32.totalorder %s176, %s190
    %p192 = scmp.eq.s32.totalorder %s82, 0
    %p193 = por %p191, %p192
    %s195 = sadd.s32 %s194, 1
    %p198 = scmp.eq.s32.totalorder %s76, 1
    %p199 = scmp.ne.s32.totalorder %s194, %s196
    %p200 = scmp.eq.s32.totalorder %s76, 0
    %p201 = por %p199, %p200
    %p202 = scmp.ne.s32.totalorder %s194, %s196
    %p203 = scmp.eq.s32.totalorder %s81, 1
    %p204 = por %p202, %p203
    %p205 = scmp.ne.s32.totalorder %s196, %s197
    %p206 = scmp.eq.s32.totalorder %s81, 0
    %p207 = por %p205, %p206
    %p208 = scmp.ne.s32.totalorder %s196, %s197
    %p209 = scmp.eq.s32.totalorder %s82, 1
    %p210 = por %p208, %p209
    %p212 = scmp.ne.s32.totalorder %s197, %s211
    %p213 = scmp.eq.s32.totalorder %s82, 0
    %p214 = por %p212, %p213
    %s216 = sadd.s32 %s215, 1
    %p219 = scmp.eq.s32.totalorder %s76, 1
    %p220 = scmp.ne.s32.totalorder %s215, %s217
    %p221 = scmp.eq.s32.totalorder %s76, 0
    %p222 = por %p220, %p221
    %p223 = scmp.ne.s32.totalorder %s215, %s217
    %p224 = scmp.eq.s32.totalorder %s81, 1
    %p225 = por %p223, %p224
    %p226 = scmp.ne.s32.totalorder %s217, %s218
    %p227 = scmp.eq.s32.totalorder %s81, 0
    %p228 = por %p226, %p227
    %p229 = scmp.ne.s32.totalorder %s217, %s218
    %p230 = scmp.eq.s32.totalorder %s82, 1
    %p231 = por %p229, %p230
    %p233 = scmp.ne.s32.totalorder %s218, %s232
    %p234 = scmp.eq.s32.totalorder %s82, 0
    %p235 = por %p233, %p234
    %s237 = sadd.s32 %s236, 1
    %p240 = scmp.eq.s32.totalorder %s76, 1
    %p241 = scmp.ne.s32.totalorder %s236, %s238
    %p242 = scmp.eq.s32.totalorder %s76, 0
    %p243 = por %p241, %p242
    %p244 = scmp.ne.s32.totalorder %s236, %s238
    %p245 = scmp.eq.s32.totalorder %s81, 1
    %p246 = por %p244, %p245
    %p247 = scmp.ne.s32.totalorder %s238, %s239
    %p248 = scmp.eq.s32.totalorder %s81, 0
    %p249 = por %p247, %p248
    %p250 = scmp.ne.s32.totalorder %s238, %s239
    %p251 = scmp.eq.s32.totalorder %s82, 1
    %p252 = por %p250, %p251
    %p254 = scmp.ne.s32.totalorder %s239, %s253
    %p255 = scmp.eq.s32.totalorder %s82, 0
    %p256 = por %p254, %p255
    %s258 = sadd.s32 %s257, 1
    %p261 = scmp.eq.s32.totalorder %s76, 1
    %p262 = scmp.ne.s32.totalorder %s257, %s259
    %p263 = scmp.eq.s32.totalorder %s76, 0
    %p264 = por %p262, %p263
    %p265 = scmp.ne.s32.totalorder %s257, %s259
    %p266 = scmp.eq.s32.totalorder %s81, 1
    %p267 = por %p265, %p266
    %p268 = scmp.ne.s32.totalorder %s259, %s260
    %p269 = scmp.eq.s32.totalorder %s81, 0
    %p270 = por %p268, %p269
    %p271 = scmp.ne.s32.totalorder %s259, %s260
    %p272 = scmp.eq.s32.totalorder %s82, 1
    %p273 = por %p271, %p272
    %p275 = scmp.ne.s32.totalorder %s260, %s274
    %p276 = scmp.eq.s32.totalorder %s82, 0
    %p277 = por %p275, %p276
    %s279 = sadd.s32 %s278, 1
    %p282 = scmp.eq.s32.totalorder %s76, 1
    %p283 = scmp.ne.s32.totalorder %s278, %s280
    %p284 = scmp.eq.s32.totalorder %s76, 0
    %p285 = por %p283, %p284
    %p286 = scmp.ne.s32.totalorder %s278, %s280
    %p287 = scmp.eq.s32.totalorder %s81, 1
    %p288 = por %p286, %p287
    %p289 = scmp.ne.s32.totalorder %s280, %s281
    %p290 = scmp.eq.s32.totalorder %s81, 0
    %p291 = por %p289, %p290
    %p292 = scmp.ne.s32.totalorder %s280, %s281
    %p293 = scmp.eq.s32.totalorder %s82, 1
    %p294 = por %p292, %p293
    %p296 = scmp.ne.s32.totalorder %s281, %s295
    %p297 = scmp.eq.s32.totalorder %s82, 0
    %p298 = por %p296, %p297
    %s300 = sadd.s32 %s299, 1
    %p303 = scmp.eq.s32.totalorder %s76, 1
    %p304 = scmp.ne.s32.totalorder %s299, %s301
    %p305 = scmp.eq.s32.totalorder %s76, 0
    %p306 = por %p304, %p305
    %p307 = scmp.ne.s32.totalorder %s299, %s301
    %p308 = scmp.eq.s32.totalorder %s81, 1
    %p309 = por %p307, %p308
    %p310 = scmp.ne.s32.totalorder %s301, %s302
    %p311 = scmp.eq.s32.totalorder %s81, 0
    %p312 = por %p310, %p311
    %p313 = scmp.ne.s32.totalorder %s301, %s302
    %p314 = scmp.eq.s32.totalorder %s82, 1
    %p315 = por %p313, %p314
    %p317 = scmp.ne.s32.totalorder %s302, %s316
    %p318 = scmp.eq.s32.totalorder %s82, 0
    %p319 = por %p317, %p318
    %s321 = sadd.s32 %s320, 1
    %p324 = scmp.eq.s32.totalorder %s76, 1
    %p325 = scmp.ne.s32.totalorder %s320, %s322
    %p326 = scmp.eq.s32.totalorder %s76, 0
    %p327 = por %p325, %p326
    %p328 = scmp.ne.s32.totalorder %s320, %s322
    %p329 = scmp.eq.s32.totalorder %s81, 1
    %p330 = por %p328, %p329
    %p331 = scmp.ne.s32.totalorder %s322, %s323
    %p332 = scmp.eq.s32.totalorder %s81, 0
    %p333 = por %p331, %p332
    %p334 = scmp.ne.s32.totalorder %s322, %s323
    %p335 = scmp.eq.s32.totalorder %s82, 1
    %p336 = por %p334, %p335
    %p338 = scmp.ne.s32.totalorder %s323, %s337
    %p339 = scmp.eq.s32.totalorder %s82, 0
    %p340 = por %p338, %p339
    %s342 = sadd.s32 %s341, 1
    %p345 = scmp.eq.s32.totalorder %s76, 1
    %p346 = scmp.ne.s32.totalorder %s341, %s343
    %p347 = scmp.eq.s32.totalorder %s76, 0
    %p348 = por %p346, %p347
    %p349 = scmp.ne.s32.totalorder %s341, %s343
    %p350 = scmp.eq.s32.totalorder %s81, 1
    %p351 = por %p349, %p350
    %p352 = scmp.ne.s32.totalorder %s343, %s344
    %p353 = scmp.eq.s32.totalorder %s81, 0
    %p354 = por %p352, %p353
    %p355 = scmp.ne.s32.totalorder %s343, %s344
    %p356 = scmp.eq.s32.totalorder %s82, 1
    %p357 = por %p355, %p356
    %p359 = scmp.ne.s32.totalorder %s344, %s358
    %p360 = scmp.eq.s32.totalorder %s82, 0
    %p361 = por %p359, %p360
    %s363 = sadd.s32 %s362, 1
    %p366 = scmp.eq.s32.totalorder %s76, 1
    %p367 = scmp.ne.s32.totalorder %s362, %s364
    %p368 = scmp.eq.s32.totalorder %s76, 0
    %p369 = por %p367, %p368
    %p370 = scmp.ne.s32.totalorder %s362, %s364
    %p371 = scmp.eq.s32.totalorder %s81, 1
    %p372 = por %p370, %p371
    %p373 = scmp.ne.s32.totalorder %s364, %s365
    %p374 = scmp.eq.s32.totalorder %s81, 0
    %p375 = por %p373, %p374
    %p376 = scmp.ne.s32.totalorder %s364, %s365
    %p377 = scmp.eq.s32.totalorder %s82, 1
    %p378 = por %p376, %p377
    %p380 = scmp.ne.s32.totalorder %s365, %s379
    %p381 = scmp.eq.s32.totalorder %s82, 0
    %p382 = por %p380, %p381
    %s384 = sadd.s32 %s383, 1
    %p387 = scmp.eq.s32.totalorder %s76, 1
    %p388 = scmp.ne.s32.totalorder %s383, %s385
    %p389 = scmp.eq.s32.totalorder %s76, 0
    %p390 = por %p388, %p389
    %p391 = scmp.ne.s32.totalorder %s383, %s385
    %p392 = scmp.eq.s32.totalorder %s81, 1
    %p393 = por %p391, %p392
    %p394 = scmp.ne.s32.totalorder %s385, %s386
    %p395 = scmp.eq.s32.totalorder %s81, 0
    %p396 = por %p394, %p395
    %p397 = scmp.ne.s32.totalorder %s385, %s386
    %p398 = scmp.eq.s32.totalorder %s82, 1
    %p399 = por %p397, %p398
    %p401 = scmp.ne.s32.totalorder %s386, %s400
    %p402 = scmp.eq.s32.totalorder %s82, 0
    %p403 = por %p401, %p402
    %s405 = sadd.s32 %s404, 1
    %p408 = scmp.eq.s32.totalorder %s76, 1
    %p409 = scmp.ne.s32.totalorder %s404, %s406
    %p410 = scmp.eq.s32.totalorder %s76, 0
    %p411 = por %p409, %p410
    %p412 = scmp.ne.s32.totalorder %s404, %s406
    %p413 = scmp.eq.s32.totalorder %s81, 1
    %p414 = por %p412, %p413
    %p415 = scmp.ne.s32.totalorder %s406, %s407
    %p416 = scmp.eq.s32.totalorder %s81, 0
    %p417 = por %p415, %p416
    %p418 = scmp.ne.s32.totalorder %s406, %s407
    %p419 = scmp.eq.s32.totalorder %s82, 1
    %p420 = por %p418, %p419
    %p422 = scmp.ne.s32.totalorder %s407, %s421
    %p423 = scmp.eq.s32.totalorder %s82, 0
    %p424 = por %p422, %p423
    %s426 = sadd.s32 %s425, 1
    %p429 = scmp.eq.s32.totalorder %s76, 1
    %p430 = scmp.ne.s32.totalorder %s425, %s427
    %p431 = scmp.eq.s32.totalorder %s76, 0
    %p432 = por %p430, %p431
    %p433 = scmp.ne.s32.totalorder %s425, %s427
    %p434 = scmp.eq.s32.totalorder %s81, 1
    %p435 = por %p433, %p434
    %p436 = scmp.ne.s32.totalorder %s427, %s428
    %p437 = scmp.eq.s32.totalorder %s81, 0
    %p438 = por %p436, %p437
    %p439 = scmp.ne.s32.totalorder %s427, %s428
    %p440 = scmp.eq.s32.totalorder %s82, 1
    %p441 = por %p439, %p440
    %p443 = scmp.ne.s32.totalorder %s428, %s442
    %p444 = scmp.eq.s32.totalorder %s82, 0
    %p445 = por %p443, %p444
    %s447 = sadd.s32 %s446, 1
    %p450 = scmp.eq.s32.totalorder %s76, 1
    %p451 = scmp.ne.s32.totalorder %s446, %s448
    %p452 = scmp.eq.s32.totalorder %s76, 0
    %p453 = por %p451, %p452
    %p454 = scmp.ne.s32.totalorder %s446, %s448
    %p455 = scmp.eq.s32.totalorder %s81, 1
    %p456 = por %p454, %p455
    %p457 = scmp.ne.s32.totalorder %s448, %s449
    %p458 = scmp.eq.s32.totalorder %s81, 0
    %p459 = por %p457, %p458
    %p460 = scmp.ne.s32.totalorder %s448, %s449
    %p461 = scmp.eq.s32.totalorder %s82, 1
    %p462 = por %p460, %p461
    %p464 = scmp.ne.s32.totalorder %s449, %s463
    %p465 = scmp.eq.s32.totalorder %s82, 0
    %p466 = por %p464, %p465
    %s468 = sadd.s32 %s467, 1
    %p471 = scmp.eq.s32.totalorder %s76, 1
    %p472 = scmp.ne.s32.totalorder %s467, %s469
    %p473 = scmp.eq.s32.totalorder %s76, 0
    %p474 = por %p472, %p473
    %p475 = scmp.ne.s32.totalorder %s467, %s469
    %p476 = scmp.eq.s32.totalorder %s81, 1
    %p477 = por %p475, %p476
    %p478 = scmp.ne.s32.totalorder %s469, %s470
    %p479 = scmp.eq.s32.totalorder %s81, 0
    %p480 = por %p478, %p479
    %p481 = scmp.ne.s32.totalorder %s469, %s470
    %p482 = scmp.eq.s32.totalorder %s82, 1
    %p483 = por %p481, %p482
    %p485 = scmp.ne.s32.totalorder %s470, %s484
    %p486 = scmp.eq.s32.totalorder %s82, 0
    %p487 = por %p485, %p486
    %s489 = sadd.s32 %s488, 1
    %p492 = scmp.eq.s32.totalorder %s76, 1
    %p493 = scmp.ne.s32.totalorder %s488, %s490
    %p494 = scmp.eq.s32.totalorder %s76, 0
    %p495 = por %p493, %p494
    %p496 = scmp.ne.s32.totalorder %s488, %s490
    %p497 = scmp.eq.s32.totalorder %s81, 1
    %p498 = por %p496, %p497
    %p499 = scmp.ne.s32.totalorder %s490, %s491
    %p500 = scmp.eq.s32.totalorder %s81, 0
    %p501 = por %p499, %p500
    %p502 = scmp.ne.s32.totalorder %s490, %s491
    %p503 = scmp.eq.s32.totalorder %s82, 1
    %p504 = por %p502, %p503
    %p506 = scmp.ne.s32.totalorder %s491, %s505
    %p507 = scmp.eq.s32.totalorder %s82, 0
    %p508 = por %p506, %p507
    %s510 = sadd.s32 %s509, 1
    %p513 = scmp.eq.s32.totalorder %s76, 1
    %p514 = scmp.ne.s32.totalorder %s509, %s511
    %p515 = scmp.eq.s32.totalorder %s76, 0
    %p516 = por %p514, %p515
    %p517 = scmp.ne.s32.totalorder %s509, %s511
    %p518 = scmp.eq.s32.totalorder %s81, 1
    %p519 = por %p517, %p518
    %p520 = scmp.ne.s32.totalorder %s511, %s512
    %p521 = scmp.eq.s32.totalorder %s81, 0
    %p522 = por %p520, %p521
    %p523 = scmp.ne.s32.totalorder %s511, %s512
    %p524 = scmp.eq.s32.totalorder %s82, 1
    %p525 = por %p523, %p524
    %p527 = scmp.ne.s32.totalorder %s512, %s526
    %p528 = scmp.eq.s32.totalorder %s82, 0
    %p529 = por %p527, %p528
    %s531 = sadd.s32 %s530, 1
    %p534 = scmp.eq.s32.totalorder %s76, 1
    %p535 = scmp.ne.s32.totalorder %s530, %s532
    %p536 = scmp.eq.s32.totalorder %s76, 0
    %p537 = por %p535, %p536
    %p538 = scmp.ne.s32.totalorder %s530, %s532
    %p539 = scmp.eq.s32.totalorder %s81, 1
    %p540 = por %p538, %p539
    %p541 = scmp.ne.s32.totalorder %s532, %s533
    %p542 = scmp.eq.s32.totalorder %s81, 0
    %p543 = por %p541, %p542
    %p544 = scmp.ne.s32.totalorder %s532, %s533
    %p545 = scmp.eq.s32.totalorder %s82, 1
    %p546 = por %p544, %p545
    %p548 = scmp.ne.s32.totalorder %s533, %s547
    %p549 = scmp.eq.s32.totalorder %s82, 0
    %p550 = por %p548, %p549
    %s552 = sadd.s32 %s551, 1
    %p555 = scmp.eq.s32.totalorder %s76, 1
    %p556 = scmp.ne.s32.totalorder %s551, %s553
    %p557 = scmp.eq.s32.totalorder %s76, 0
    %p558 = por %p556, %p557
    %p559 = scmp.ne.s32.totalorder %s551, %s553
    %p560 = scmp.eq.s32.totalorder %s81, 1
    %p561 = por %p559, %p560
    %p562 = scmp.ne.s32.totalorder %s553, %s554
    %p563 = scmp.eq.s32.totalorder %s81, 0
    %p564 = por %p562, %p563
    %p565 = scmp.ne.s32.totalorder %s553, %s554
    %p566 = scmp.eq.s32.totalorder %s82, 1
    %p567 = por %p565, %p566
    %p569 = scmp.ne.s32.totalorder %s554, %s568
    %p570 = scmp.eq.s32.totalorder %s82, 0
    %p571 = por %p569, %p570
    %s573 = sadd.s32 %s572, 1
    %p576 = scmp.eq.s32.totalorder %s76, 1
    %p577 = scmp.ne.s32.totalorder %s572, %s574
    %p578 = scmp.eq.s32.totalorder %s76, 0
    %p579 = por %p577, %p578
    %p580 = scmp.ne.s32.totalorder %s572, %s574
    %p581 = scmp.eq.s32.totalorder %s81, 1
    %p582 = por %p580, %p581
    %p583 = scmp.ne.s32.totalorder %s574, %s575
    %p584 = scmp.eq.s32.totalorder %s81, 0
    %p585 = por %p583, %p584
    %p586 = scmp.ne.s32.totalorder %s574, %s575
    %p587 = scmp.eq.s32.totalorder %s82, 1
    %p588 = por %p586, %p587
    %p590 = scmp.ne.s32.totalorder %s575, %s589
    %p591 = scmp.eq.s32.totalorder %s82, 0
    %p592 = por %p590, %p591
    %s594 = sadd.s32 %s593, 1
    %p597 = scmp.eq.s32.totalorder %s76, 1
    %p598 = scmp.ne.s32.totalorder %s593, %s595
    %p599 = scmp.eq.s32.totalorder %s76, 0
    %p600 = por %p598, %p599
    %p601 = scmp.ne.s32.totalorder %s593, %s595
    %p602 = scmp.eq.s32.totalorder %s81, 1
    %p603 = por %p601, %p602
    %p604 = scmp.ne.s32.totalorder %s595, %s596
    %p605 = scmp.eq.s32.totalorder %s81, 0
    %p606 = por %p604, %p605
    %p607 = scmp.ne.s32.totalorder %s595, %s596
    %p608 = scmp.eq.s32.totalorder %s82, 1
    %p609 = por %p607, %p608
    %p611 = scmp.ne.s32.totalorder %s596, %s610
    %p612 = scmp.eq.s32.totalorder %s82, 0
    %p613 = por %p611, %p612
    %s615 = sadd.s32 %s614, 1
    %p618 = scmp.eq.s32.totalorder %s76, 1
    %p619 = scmp.ne.s32.totalorder %s614, %s616
    %p620 = scmp.eq.s32.totalorder %s76, 0
    %p621 = por %p619, %p620
    %p622 = scmp.ne.s32.totalorder %s614, %s616
    %p623 = scmp.eq.s32.totalorder %s81, 1
    %p624 = por %p622, %p623
    %p625 = scmp.ne.s32.totalorder %s616, %s617
    %p626 = scmp.eq.s32.totalorder %s81, 0
    %p627 = por %p625, %p626
    %p628 = scmp.ne.s32.totalorder %s616, %s617
    %p629 = scmp.eq.s32.totalorder %s82, 1
    %p630 = por %p628, %p629
    %p632 = scmp.ne.s32.totalorder %s617, %s631
    %p633 = scmp.eq.s32.totalorder %s82, 0
    %p634 = por %p632, %p633
    %s636 = sadd.s32 %s635, 1
    %p639 = scmp.eq.s32.totalorder %s76, 1
    %p640 = scmp.ne.s32.totalorder %s635, %s637
    %p641 = scmp.eq.s32.totalorder %s76, 0
    %p642 = por %p640, %p641
    %p643 = scmp.ne.s32.totalorder %s635, %s637
    %p644 = scmp.eq.s32.totalorder %s81, 1
    %p645 = por %p643, %p644
    %p646 = scmp.ne.s32.totalorder %s637, %s638
    %p647 = scmp.eq.s32.totalorder %s81, 0
    %p648 = por %p646, %p647
    %p649 = scmp.ne.s32.totalorder %s637, %s638
    %p650 = scmp.eq.s32.totalorder %s82, 1
    %p651 = por %p649, %p650
    %p653 = scmp.ne.s32.totalorder %s638, %s652
    %p654 = scmp.eq.s32.totalorder %s82, 0
    %p655 = por %p653, %p654
    %s657 = sadd.s32 %s656, 1
    %p660 = scmp.eq.s32.totalorder %s76, 1
    %p661 = scmp.ne.s32.totalorder %s656, %s658
    %p662 = scmp.eq.s32.totalorder %s76, 0
    %p663 = por %p661, %p662
    %p664 = scmp.ne.s32.totalorder %s656, %s658
    %p665 = scmp.eq.s32.totalorder %s81, 1
    %p666 = por %p664, %p665
    %p667 = scmp.ne.s32.totalorder %s658, %s659
    %p668 = scmp.eq.s32.totalorder %s81, 0
    %p669 = por %p667, %p668
    %p670 = scmp.ne.s32.totalorder %s658, %s659
    %p671 = scmp.eq.s32.totalorder %s82, 1
    %p672 = por %p670, %p671
    %p674 = scmp.ne.s32.totalorder %s659, %s673
    %p675 = scmp.eq.s32.totalorder %s82, 0
    %p676 = por %p674, %p675
    %s678 = sadd.s32 %s677, 1
    %p681 = scmp.eq.s32.totalorder %s76, 1
    %p682 = scmp.ne.s32.totalorder %s677, %s679
    %p683 = scmp.eq.s32.totalorder %s76, 0
    %p684 = por %p682, %p683
    %p685 = scmp.ne.s32.totalorder %s677, %s679
    %p686 = scmp.eq.s32.totalorder %s81, 1
    %p687 = por %p685, %p686
    %p688 = scmp.ne.s32.totalorder %s679, %s680
    %p689 = scmp.eq.s32.totalorder %s81, 0
    %p690 = por %p688, %p689
    %p691 = scmp.ne.s32.totalorder %s679, %s680
    %p692 = scmp.eq.s32.totalorder %s82, 1
    %p693 = por %p691, %p692
    %p695 = scmp.ne.s32.totalorder %s680, %s694
    %p696 = scmp.eq.s32.totalorder %s82, 0
    %p697 = por %p695, %p696
    %s699 = sadd.s32 %s698, 1
    %p702 = scmp.eq.s32.totalorder %s76, 1
    %p703 = scmp.ne.s32.totalorder %s698, %s700
    %p704 = scmp.eq.s32.totalorder %s76, 0
    %p705 = por %p703, %p704
    %p706 = scmp.ne.s32.totalorder %s698, %s700
    %p707 = scmp.eq.s32.totalorder %s81, 1
    %p708 = por %p706, %p707
    %p709 = scmp.ne.s32.totalorder %s700, %s701
    %p710 = scmp.eq.s32.totalorder %s81, 0
    %p711 = por %p709, %p710
    %p712 = scmp.ne.s32.totalorder %s700, %s701
    %p713 = scmp.eq.s32.totalorder %s82, 1
    %p714 = por %p712, %p713
    %p716 = scmp.ne.s32.totalorder %s701, %s715
    %p717 = scmp.eq.s32.totalorder %s82, 0
    %p718 = por %p716, %p717
    %s720 = sadd.s32 %s719, 1
    %p723 = scmp.eq.s32.totalorder %s76, 1
    %p724 = scmp.ne.s32.totalorder %s719, %s721
    %p725 = scmp.eq.s32.totalorder %s76, 0
    %p726 = por %p724, %p725
    %p727 = scmp.ne.s32.totalorder %s719, %s721
    %p728 = scmp.eq.s32.totalorder %s81, 1
    %p729 = por %p727, %p728
    %p730 = scmp.ne.s32.totalorder %s721, %s722
    %p731 = scmp.eq.s32.totalorder %s81, 0
    %p732 = por %p730, %p731
    %p733 = scmp.ne.s32.totalorder %s721, %s722
    %p734 = scmp.eq.s32.totalorder %s82, 1
    %p735 = por %p733, %p734
    %p737 = scmp.ne.s32.totalorder %s722, %s736
    %p738 = scmp.eq.s32.totalorder %s82, 0
    %p739 = por %p737, %p738
    %s741 = sadd.s32 %s740, 1
    %p744 = scmp.eq.s32.totalorder %s76, 1
    %p745 = scmp.ne.s32.totalorder %s740, %s742
    %p746 = scmp.eq.s32.totalorder %s76, 0
    %p747 = por %p745, %p746
    %p748 = scmp.ne.s32.totalorder %s740, %s742
    %p749 = scmp.eq.s32.totalorder %s81, 1
    %p750 = por %p748, %p749
    %p751 = scmp.ne.s32.totalorder %s742, %s743
    %p752 = scmp.eq.s32.totalorder %s81, 0
    %p753 = por %p751, %p752
    %p754 = scmp.ne.s32.totalorder %s742, %s743
    %p755 = scmp.eq.s32.totalorder %s82, 1
    %p756 = por %p754, %p755
    %p758 = scmp.ne.s32.totalorder %s743, %s757
    %p759 = scmp.eq.s32.totalorder %s82, 0
    %p760 = por %p758, %p759
    %s762 = sadd.s32 %s761, 1
    %p765 = scmp.eq.s32.totalorder %s76, 1
    %p766 = scmp.ne.s32.totalorder %s761, %s763
    %p767 = scmp.eq.s32.totalorder %s76, 0
    %p768 = por %p766, %p767
    %p769 = scmp.ne.s32.totalorder %s761, %s763
    %p770 = scmp.eq.s32.totalorder %s81, 1
    %p771 = por %p769, %p770
    %p772 = scmp.ne.s32.totalorder %s763, %s764
    %p773 = scmp.eq.s32.totalorder %s81, 0
    %p774 = por %p772, %p773
    %p775 = scmp.ne.s32.totalorder %s763, %s764
    %p776 = scmp.eq.s32.totalorder %s82, 1
    %p777 = por %p775, %p776
    %p779 = scmp.ne.s32.totalorder %s764, %s778
    %p780 = scmp.eq.s32.totalorder %s82, 0
    %p781 = por %p779, %p780
    %s782 = ssub.s32 %s76, %s83
    %p783 = scmp.eq.s32.totalorder %s782, 0
    %s785 = sadd.s32 %s784, 1
    %s786 = scalar_select %p783, %s784, %s785
    %p789 = pneg %p783
    %p790 = scmp.eq.s32.totalorder %s76, 1
    %p791 = por %p789, %p790
    %p792 = scmp.ne.s32.totalorder %s784, %s787
    %p793 = scmp.eq.s32.totalorder %s76, 0
    %p794 = por %p792, %p793
    %p795 = scmp.ne.s32.totalorder %s784, %s787
    %p796 = scmp.eq.s32.totalorder %s81, 1
    %p797 = por %p795, %p796
    %p798 = scmp.ne.s32.totalorder %s787, %s788
    %p799 = scmp.eq.s32.totalorder %s81, 0
    %p800 = por %p798, %p799
    %p801 = scmp.ne.s32.totalorder %s787, %s788
    %p802 = scmp.eq.s32.totalorder %s82, 1
    %p803 = por %p801, %p802
    %p805 = scmp.ne.s32.totalorder %s788, %s804
    %p806 = scmp.eq.s32.totalorder %s82, 0
    %p807 = por %p805, %p806
    %s808 = ssub.s32 %s76, %s83
    %p809 = scmp.eq.s32.totalorder %s808, 0
    %s811 = sadd.s32 %s810, 1
    %s812 = scalar_select %p809, %s810, %s811
    %p815 = pneg %p809
    %p816 = scmp.eq.s32.totalorder %s76, 1
    %p817 = por %p815, %p816
    %p818 = scmp.ne.s32.totalorder %s810, %s813
    %p819 = scmp.eq.s32.totalorder %s76, 0
    %p820 = por %p818, %p819
    %p821 = scmp.ne.s32.totalorder %s810, %s813
    %p822 = scmp.eq.s32.totalorder %s81, 1
    %p823 = por %p821, %p822
    %p824 = scmp.ne.s32.totalorder %s813, %s814
    %p825 = scmp.eq.s32.totalorder %s81, 0
    %p826 = por %p824, %p825
    %p827 = scmp.ne.s32.totalorder %s813, %s814
    %p828 = scmp.eq.s32.totalorder %s82, 1
    %p829 = por %p827, %p828
    %p831 = scmp.ne.s32.totalorder %s814, %s830
    %p832 = scmp.eq.s32.totalorder %s82, 0
    %p833 = por %p831, %p832
    %p834 = scmp.le.s32.totalorder 1, %s76
    %p835 = scmp.lt.s32.totalorder %s76, 3
    %p836 = pnand %p834, %p835
    %p837 = pneg %p836
    // Predicated region
    $region9: #{_lambda_.1} parent=5 // pred_check
      _
    $region10: #{_lambda_.1} parent=5 // pred_check_branch
      %839 = sbr.rel (%p836) target = $region12
    $region11: #{_lambda_.1} parent=5 // pred_region
      %s840 = ssub.s32 %s76, 1
      // Predicated region
      $region13: #{_lambda_.1} parent=11 // pred_check
        %p841 = pneg %p123
      $region14: #{_lambda_.1} parent=11 // pred_check_branch
        %843 = sbr.rel (%p841) target = $region16
      $region15: #{_lambda_.1} parent=11 // pred_region
        _
      $region16: #{_lambda_.1} parent=11 // pred_fallthru
        _
      // Predicated region
      $region17: #{_lambda_.1} parent=11 // pred_check
        %p844 = pneg %p144
      $region18: #{_lambda_.1} parent=11 // pred_check_branch
        %846 = sbr.rel (%p844) target = $region20
      $region19: #{_lambda_.1} parent=11 // pred_region
        _
      $region20: #{_lambda_.1} parent=11 // pred_fallthru
        _
      // Predicated region
      $region21: #{_lambda_.1} parent=11 // pred_check
        %p847 = pneg %p165
      $region22: #{_lambda_.1} parent=11 // pred_check_branch
        %849 = sbr.rel (%p847) target = $region24
      $region23: #{_lambda_.1} parent=11 // pred_region
        _
      $region24: #{_lambda_.1} parent=11 // pred_fallthru
        _
      // Predicated region
      $region25: #{_lambda_.1} parent=11 // pred_check
        %p850 = pneg %p186
      $region26: #{_lambda_.1} parent=11 // pred_check_branch
        %852 = sbr.rel (%p850) target = $region28
      $region27: #{_lambda_.1} parent=11 // pred_region
        _
      $region28: #{_lambda_.1} parent=11 // pred_fallthru
        _
      // Predicated region
      $region29: #{_lambda_.1} parent=11 // pred_check
        %p853 = pneg %p207
      $region30: #{_lambda_.1} parent=11 // pred_check_branch
        %855 = sbr.rel (%p853) target = $region32
      $region31: #{_lambda_.1} parent=11 // pred_region
        _
      $region32: #{_lambda_.1} parent=11 // pred_fallthru
        _
      // Predicated region
      $region33: #{_lambda_.1} parent=11 // pred_check
        %p856 = pneg %p228
      $region34: #{_lambda_.1} parent=11 // pred_check_branch
        %858 = sbr.rel (%p856) target = $region36
      $region35: #{_lambda_.1} parent=11 // pred_region
        _
      $region36: #{_lambda_.1} parent=11 // pred_fallthru
        _
      // Predicated region
      $region37: #{_lambda_.1} parent=11 // pred_check
        %p859 = pneg %p249
      $region38: #{_lambda_.1} parent=11 // pred_check_branch
        %861 = sbr.rel (%p859) target = $region40
      $region39: #{_lambda_.1} parent=11 // pred_region
        _
      $region40: #{_lambda_.1} parent=11 // pred_fallthru
        _
      // Predicated region
      $region41: #{_lambda_.1} parent=11 // pred_check
        %p862 = pneg %p270
      $region42: #{_lambda_.1} parent=11 // pred_check_branch
        %864 = sbr.rel (%p862) target = $region44
      $region43: #{_lambda_.1} parent=11 // pred_region
        _
      $region44: #{_lambda_.1} parent=11 // pred_fallthru
        _
      // Predicated region
      $region45: #{_lambda_.1} parent=11 // pred_check
        %p865 = pneg %p291
      $region46: #{_lambda_.1} parent=11 // pred_check_branch
        %867 = sbr.rel (%p865) target = $region48
      $region47: #{_lambda_.1} parent=11 // pred_region
        _
      $region48: #{_lambda_.1} parent=11 // pred_fallthru
        _
      // Predicated region
      $region49: #{_lambda_.1} parent=11 // pred_check
        %p868 = pneg %p312
      $region50: #{_lambda_.1} parent=11 // pred_check_branch
        %870 = sbr.rel (%p868) target = $region52
      $region51: #{_lambda_.1} parent=11 // pred_region
        _
      $region52: #{_lambda_.1} parent=11 // pred_fallthru
        _
      // Predicated region
      $region53: #{_lambda_.1} parent=11 // pred_check
        %p871 = pneg %p333
      $region54: #{_lambda_.1} parent=11 // pred_check_branch
        %873 = sbr.rel (%p871) target = $region56
      $region55: #{_lambda_.1} parent=11 // pred_region
        _
      $region56: #{_lambda_.1} parent=11 // pred_fallthru
        _
      // Predicated region
      $region57: #{_lambda_.1} parent=11 // pred_check
        %p874 = pneg %p354
      $region58: #{_lambda_.1} parent=11 // pred_check_branch
        %876 = sbr.rel (%p874) target = $region60
      $region59: #{_lambda_.1} parent=11 // pred_region
        _
      $region60: #{_lambda_.1} parent=11 // pred_fallthru
        _
      // Predicated region
      $region61: #{_lambda_.1} parent=11 // pred_check
        %p877 = pneg %p375
      $region62: #{_lambda_.1} parent=11 // pred_check_branch
        %879 = sbr.rel (%p877) target = $region64
      $region63: #{_lambda_.1} parent=11 // pred_region
        _
      $region64: #{_lambda_.1} parent=11 // pred_fallthru
        _
      // Predicated region
      $region65: #{_lambda_.1} parent=11 // pred_check
        %p880 = pneg %p396
      $region66: #{_lambda_.1} parent=11 // pred_check_branch
        %882 = sbr.rel (%p880) target = $region68
      $region67: #{_lambda_.1} parent=11 // pred_region
        _
      $region68: #{_lambda_.1} parent=11 // pred_fallthru
        _
      // Predicated region
      $region69: #{_lambda_.1} parent=11 // pred_check
        %p883 = pneg %p417
      $region70: #{_lambda_.1} parent=11 // pred_check_branch
        %885 = sbr.rel (%p883) target = $region72
      $region71: #{_lambda_.1} parent=11 // pred_region
        _
      $region72: #{_lambda_.1} parent=11 // pred_fallthru
        _
      // Predicated region
      $region73: #{_lambda_.1} parent=11 // pred_check
        %p886 = pneg %p438
      $region74: #{_lambda_.1} parent=11 // pred_check_branch
        %888 = sbr.rel (%p886) target = $region76
      $region75: #{_lambda_.1} parent=11 // pred_region
        _
      $region76: #{_lambda_.1} parent=11 // pred_fallthru
        _
      // Predicated region
      $region77: #{_lambda_.1} parent=11 // pred_check
        %p889 = pneg %p459
      $region78: #{_lambda_.1} parent=11 // pred_check_branch
        %891 = sbr.rel (%p889) target = $region80
      $region79: #{_lambda_.1} parent=11 // pred_region
        _
      $region80: #{_lambda_.1} parent=11 // pred_fallthru
        _
      // Predicated region
      $region81: #{_lambda_.1} parent=11 // pred_check
        %p892 = pneg %p480
      $region82: #{_lambda_.1} parent=11 // pred_check_branch
        %894 = sbr.rel (%p892) target = $region84
      $region83: #{_lambda_.1} parent=11 // pred_region
        _
      $region84: #{_lambda_.1} parent=11 // pred_fallthru
        _
      // Predicated region
      $region85: #{_lambda_.1} parent=11 // pred_check
        %p895 = pneg %p501
      $region86: #{_lambda_.1} parent=11 // pred_check_branch
        %897 = sbr.rel (%p895) target = $region88
      $region87: #{_lambda_.1} parent=11 // pred_region
        _
      $region88: #{_lambda_.1} parent=11 // pred_fallthru
        _
      // Predicated region
      $region89: #{_lambda_.1} parent=11 // pred_check
        %p898 = pneg %p522
      $region90: #{_lambda_.1} parent=11 // pred_check_branch
        %900 = sbr.rel (%p898) target = $region92
      $region91: #{_lambda_.1} parent=11 // pred_region
        _
      $region92: #{_lambda_.1} parent=11 // pred_fallthru
        _
      // Predicated region
      $region93: #{_lambda_.1} parent=11 // pred_check
        %p901 = pneg %p543
      $region94: #{_lambda_.1} parent=11 // pred_check_branch
        %903 = sbr.rel (%p901) target = $region96
      $region95: #{_lambda_.1} parent=11 // pred_region
        _
      $region96: #{_lambda_.1} parent=11 // pred_fallthru
        _
      // Predicated region
      $region97: #{_lambda_.1} parent=11 // pred_check
        %p904 = pneg %p564
      $region98: #{_lambda_.1} parent=11 // pred_check_branch
        %906 = sbr.rel (%p904) target = $region100
      $region99: #{_lambda_.1} parent=11 // pred_region
        _
      $region100: #{_lambda_.1} parent=11 // pred_fallthru
        _
      // Predicated region
      $region101: #{_lambda_.1} parent=11 // pred_check
        %p907 = pneg %p585
      $region102: #{_lambda_.1} parent=11 // pred_check_branch
        %909 = sbr.rel (%p907) target = $region104
      $region103: #{_lambda_.1} parent=11 // pred_region
        _
      $region104: #{_lambda_.1} parent=11 // pred_fallthru
        _
      // Predicated region
      $region105: #{_lambda_.1} parent=11 // pred_check
        %p910 = pneg %p606
      $region106: #{_lambda_.1} parent=11 // pred_check_branch
        %912 = sbr.rel (%p910) target = $region108
      $region107: #{_lambda_.1} parent=11 // pred_region
        _
      $region108: #{_lambda_.1} parent=11 // pred_fallthru
        _
      // Predicated region
      $region109: #{_lambda_.1} parent=11 // pred_check
        %p913 = pneg %p627
      $region110: #{_lambda_.1} parent=11 // pred_check_branch
        %915 = sbr.rel (%p913) target = $region112
      $region111: #{_lambda_.1} parent=11 // pred_region
        _
      $region112: #{_lambda_.1} parent=11 // pred_fallthru
        _
      // Predicated region
      $region113: #{_lambda_.1} parent=11 // pred_check
        %p916 = pneg %p648
      $region114: #{_lambda_.1} parent=11 // pred_check_branch
        %918 = sbr.rel (%p916) target = $region116
      $region115: #{_lambda_.1} parent=11 // pred_region
        _
      $region116: #{_lambda_.1} parent=11 // pred_fallthru
        _
      // Predicated region
      $region117: #{_lambda_.1} parent=11 // pred_check
        %p919 = pneg %p669
      $region118: #{_lambda_.1} parent=11 // pred_check_branch
        %921 = sbr.rel (%p919) target = $region120
      $region119: #{_lambda_.1} parent=11 // pred_region
        _
      $region120: #{_lambda_.1} parent=11 // pred_fallthru
        _
      // Predicated region
      $region121: #{_lambda_.1} parent=11 // pred_check
        %p922 = pneg %p690
      $region122: #{_lambda_.1} parent=11 // pred_check_branch
        %924 = sbr.rel (%p922) target = $region124
      $region123: #{_lambda_.1} parent=11 // pred_region
        _
      $region124: #{_lambda_.1} parent=11 // pred_fallthru
        _
      // Predicated region
      $region125: #{_lambda_.1} parent=11 // pred_check
        %p925 = pneg %p711
      $region126: #{_lambda_.1} parent=11 // pred_check_branch
        %927 = sbr.rel (%p925) target = $region128
      $region127: #{_lambda_.1} parent=11 // pred_region
        _
      $region128: #{_lambda_.1} parent=11 // pred_fallthru
        _
      // Predicated region
      $region129: #{_lambda_.1} parent=11 // pred_check
        %p928 = pneg %p732
      $region130: #{_lambda_.1} parent=11 // pred_check_branch
        %930 = sbr.rel (%p928) target = $region132
      $region131: #{_lambda_.1} parent=11 // pred_region
        _
      $region132: #{_lambda_.1} parent=11 // pred_fallthru
        _
      // Predicated region
      $region133: #{_lambda_.1} parent=11 // pred_check
        %p931 = pneg %p753
      $region134: #{_lambda_.1} parent=11 // pred_check_branch
        %933 = sbr.rel (%p931) target = $region136
      $region135: #{_lambda_.1} parent=11 // pred_region
        _
      $region136: #{_lambda_.1} parent=11 // pred_fallthru
        _
      // Predicated region
      $region137: #{_lambda_.1} parent=11 // pred_check
        %p934 = pneg %p774
      $region138: #{_lambda_.1} parent=11 // pred_check_branch
        %936 = sbr.rel (%p934) target = $region140
      $region139: #{_lambda_.1} parent=11 // pred_region
        _
      $region140: #{_lambda_.1} parent=11 // pred_fallthru
        _
    $region12: #{_lambda_.1} parent=5 // pred_fallthru
      _
    %p937 = scmp.lt.s32.totalorder %s76, 2
    // Predicated region
    $region141: #{_lambda_.1} parent=5 // pred_check
      %p938 = pneg %p937
    $region142: #{_lambda_.1} parent=5 // pred_check_branch
      %940 = sbr.rel (%p938) target = $region144
    $region143: #{_lambda_.1} parent=5 // pred_region
      // Predicated region
      $region145: #{_lambda_.1} parent=143 // pred_check
        %p941 = pneg %p96
      $region146: #{_lambda_.1} parent=143 // pred_check_branch
        %943 = sbr.rel (%p941) target = $region148
      $region147: #{_lambda_.1} parent=143 // pred_region
        %p944 = scmp.lt.s32.totalorder %s76, 1
        %s945 = scalar_select %p944, %s76, 1
        %s946 = scalar_lea.vmem %s1, %s945
      $region148: #{_lambda_.1} parent=143 // pred_fallthru
        _
    $region144: #{_lambda_.1} parent=5 // pred_fallthru
      _
    %p947 = scmp.le.s32.totalorder 1, %s76
    %p948 = scmp.lt.s32.totalorder %s76, 3
    %p949 = pnand %p947, %p948
    %p950 = pneg %p949
    // Predicated region
    $region149: #{_lambda_.1} parent=5 // pred_check
      _
    $region150: #{_lambda_.1} parent=5 // pred_check_branch
      %952 = sbr.rel (%p949) target = $region152
    $region151: #{_lambda_.1} parent=5 // pred_region
      %s953 = ssub.s32 %s76, 1
      %p954 = scmp.lt.s32.totalorder %s81, 1
      %s955 = scalar_select %p954, %s81, 1
      %s956 = scalar_lea.vmem %s1, %s955
      %p957 = pneg %p102
      %p958 = pneg %p99
      %p959 = pneg %p123
      %p960 = pneg %p120
      %p961 = pneg %p144
      %p962 = pneg %p141
      %p963 = pneg %p165
      %p964 = pneg %p162
      %p965 = pneg %p186
      %p966 = pneg %p183
      %p967 = pneg %p207
      %p968 = pneg %p204
      %p969 = pneg %p228
      %p970 = pneg %p225
      %p971 = pneg %p249
      %p972 = pneg %p246
      %p973 = pneg %p270
      %p974 = pneg %p267
      %p975 = pneg %p291
      %p976 = pneg %p288
      %p977 = pneg %p312
      %p978 = pneg %p309
      %p979 = pneg %p333
      %p980 = pneg %p330
      %p981 = pneg %p354
      %p982 = pneg %p351
      %p983 = pneg %p375
      %p984 = pneg %p372
      %p985 = pneg %p396
      %p986 = pneg %p393
      %p987 = pneg %p417
      %p988 = pneg %p414
      %p989 = pneg %p438
      %p990 = pneg %p435
      %p991 = pneg %p459
      %p992 = pneg %p456
      %p993 = pneg %p480
      %p994 = pneg %p477
      %p995 = pneg %p501
      %p996 = pneg %p498
      %p997 = pneg %p522
      %p998 = pneg %p519
      %p999 = pneg %p543
      %p1000 = pneg %p540
      %p1001 = pneg %p564
      %p1002 = pneg %p561
      %p1003 = pneg %p585
      %p1004 = pneg %p582
      %p1005 = pneg %p606
      %p1006 = pneg %p603
      %p1007 = pneg %p627
      %p1008 = pneg %p624
      %p1009 = pneg %p648
      %p1010 = pneg %p645
      %p1011 = pneg %p669
      %p1012 = pneg %p666
      %p1013 = pneg %p690
      %p1014 = pneg %p687
      %p1015 = pneg %p711
      %p1016 = pneg %p708
      %p1017 = pneg %p732
      %p1018 = pneg %p729
      %p1019 = pneg %p753
      %p1020 = pneg %p750
      %p1021 = pneg %p774
      %p1022 = pneg %p771
      %p1023 = pneg %p800
      %p1024 = pneg %p797
      %p1025 = scmp.lt.s32.totalorder %s81, 1
      %s1026 = scalar_select %p1025, %s81, 1
      %s1027 = smul.addr %s1026, 4
      %s1028 = scalar_lea.vmem %s67, %s1027
      %p1029 = pneg %p826
      %p1030 = pneg %p823
      %p1031 = scmp.lt.s32.totalorder %s81, 1
      %s1032 = scalar_select %p1031, %s81, 1
      %s1033 = smul.addr %s1032, 2
      %s1034 = smul.addr %s1033, 4
      %s1035 = scalar_lea.vmem %s69, %s1034
      %p1036 = scmp.lt.s32.totalorder %s81, 1
      %s1037 = scalar_select %p1036, %s81, 1
      %s1038 = scalar_lea.vmem %s1, %s1037
      %p1039 = scmp.lt.s32.totalorder %s81, 1
      %s1040 = scalar_select %p1039, %s81, 1
      %s1041 = smul.addr %s1040, 4
      %s1042 = scalar_lea.vmem %s67, %s1041
      %p1043 = scmp.lt.s32.totalorder %s81, 1
      %s1044 = scalar_select %p1043, %s81, 1
      %s1045 = smul.addr %s1044, 2
      %s1046 = smul.addr %s1045, 4
      %s1047 = scalar_lea.vmem %s69, %s1046
      %v1049 = vld [vmem:[%s3] sm:$0x1]
      %v1050 = vld [vmem:[%s5] sm:$0x1]
      %v1051 = vmul.f32 %v1050, 1.442695
      %v1052 = vpow.pop %v1051
      %v1053 = vld [vmem:[%s1038] sm:$0x1]
      %v1054 = vmul.f32 %v1052, %v1053
      %v1055 = vadd.f32 %v1049, %v1054
      %v1056 = vpack.c.bf16 %v1055, %v1055
      %v1057 = vld [vmem:[%s7] sm:$0xff]
      %v1058 = vld [vmem:[%s7 + $0x8] sm:$0xff]
      %v1059 = vld [vmem:[%s7 + $0x10] sm:$0xff]
      %v1060 = vld [vmem:[%s7 + $0x18] sm:$0xff]
      %v1061 = vld [vmem:[%s7 + $0x20] sm:$0xff]
      %v1062 = vld [vmem:[%s7 + $0x28] sm:$0xff]
      %v1063 = vld [vmem:[%s7 + $0x30] sm:$0xff]
      %v1064 = vld [vmem:[%s7 + $0x38] sm:$0xff]
      %v1065 = vld [vmem:[%s7 + $0x40] sm:$0xff]
      %v1066 = vld [vmem:[%s7 + $0x48] sm:$0xff]
      %v1067 = vld [vmem:[%s7 + $0x50] sm:$0xff]
      %v1068 = vld [vmem:[%s7 + $0x58] sm:$0xff]
      %v1069 = vld [vmem:[%s7 + $0x60] sm:$0xff]
      %v1070 = vld [vmem:[%s7 + $0x68] sm:$0xff]
      %v1071 = vld [vmem:[%s7 + $0x70] sm:$0xff]
      %v1072 = vld [vmem:[%s7 + $0x78] sm:$0xff]
      %v1073 = vld [vmem:[%s9] sm:$0xff]
      %v1090 = vunpack.c.l.b16 %v1057
      %v1091 = vunpack.c.h.b16 %v1057
      %v1092 = vunpack.c.l.b16 %v1058
      %v1093 = vunpack.c.h.b16 %v1058
      %v1094 = vunpack.c.l.b16 %v1059
      %v1095 = vunpack.c.h.b16 %v1059
      %v1096 = vunpack.c.l.b16 %v1060
      %v1097 = vunpack.c.h.b16 %v1060
      %v1098 = vunpack.c.l.b16 %v1061
      %v1099 = vunpack.c.h.b16 %v1061
      %v1100 = vunpack.c.l.b16 %v1062
      %v1101 = vunpack.c.h.b16 %v1062
      %v1102 = vunpack.c.l.b16 %v1063
      %v1103 = vunpack.c.h.b16 %v1063
      %v1104 = vunpack.c.l.b16 %v1064
      %v1105 = vunpack.c.h.b16 %v1064
      %v1106 = vunpack.c.l.b16 %v1065
      %v1107 = vunpack.c.h.b16 %v1065
      %v1108 = vunpack.c.l.b16 %v1066
      %v1109 = vunpack.c.h.b16 %v1066
      %v1110 = vunpack.c.l.b16 %v1067
      %v1111 = vunpack.c.h.b16 %v1067
      %v1112 = vunpack.c.l.b16 %v1068
      %v1113 = vunpack.c.h.b16 %v1068
      %v1114 = vunpack.c.l.b16 %v1069
      %v1115 = vunpack.c.h.b16 %v1069
      %v1116 = vunpack.c.l.b16 %v1070
      %v1117 = vunpack.c.h.b16 %v1070
      %v1118 = vunpack.c.l.b16 %v1071
      %v1119 = vunpack.c.h.b16 %v1071
      %v1120 = vunpack.c.l.b16 %v1072
      %v1121 = vunpack.c.h.b16 %v1072
      %v1122 = vpack.c.b16 %v1098, %v1090
      %v1123 = vpack.c.b16 %v1099, %v1091
      %v1124 = vpack.c.b16 %v1100, %v1092
      %v1125 = vpack.c.b16 %v1101, %v1093
      %v1126 = vpack.c.b16 %v1102, %v1094
      %v1127 = vpack.c.b16 %v1103, %v1095
      %v1128 = vpack.c.b16 %v1104, %v1096
      %v1129 = vpack.c.b16 %v1105, %v1097
      %v1130 = vpack.c.b16 %v1114, %v1106
      %v1131 = vpack.c.b16 %v1115, %v1107
      %v1132 = vpack.c.b16 %v1116, %v1108
      %v1133 = vpack.c.b16 %v1117, %v1109
      %v1134 = vpack.c.b16 %v1118, %v1110
      %v1135 = vpack.c.b16 %v1119, %v1111
      %v1136 = vpack.c.b16 %v1120, %v1112
      %v1137 = vpack.c.b16 %v1121, %v1113
      %v1155 = vlaneseq
      %v1156 = vshrl.u32 %v1155, 7
      %v1157 = vsub.s32 0, %v1156
      %v1158 = vrot.slane %v1073, %v1157
      %v1159 = vlaneseq
      %v1160 = vshrl.u32 %v1159, 7
      %v1161 = vsub.s32 1, %v1160
      %v1162 = vrot.slane %v1073, %v1161
      %v1163 = vlaneseq
      %v1164 = vshrl.u32 %v1163, 7
      %v1165 = vsub.s32 2, %v1164
      %v1166 = vrot.slane %v1073, %v1165
      %v1167 = vlaneseq
      %v1168 = vshrl.u32 %v1167, 7
      %v1169 = vsub.s32 3, %v1168
      %v1170 = vrot.slane %v1073, %v1169
      %v1171 = vlaneseq
      %v1172 = vshrl.u32 %v1171, 7
      %v1173 = vsub.s32 4, %v1172
      %v1174 = vrot.slane %v1073, %v1173
      %v1175 = vlaneseq
      %v1176 = vshrl.u32 %v1175, 7
      %v1177 = vsub.s32 5, %v1176
      %v1178 = vrot.slane %v1073, %v1177
      %v1179 = vlaneseq
      %v1180 = vshrl.u32 %v1179, 7
      %v1181 = vsub.s32 6, %v1180
      %v1182 = vrot.slane %v1073, %v1181
      %v1183 = vlaneseq
      %v1184 = vshrl.u32 %v1183, 7
      %v1185 = vsub.s32 7, %v1184
      %v1186 = vrot.slane %v1073, %v1185
      %vm1195 = vcmask 261120
      %v1197 = vsel %vm1195, %v1056, 0
      %1199 = vmatprep.subr.bf16.mxu0 %v1123
      %1200 = vmatpush1.bf16.msra.mxu0 %v1122
      %1201 = vmatprep.subr.bf16.mxu0 %v1131
      %1202 = vmatpush1.bf16.msra.mxu0 %v1130
      %1203 = vmatprep.subr.bf16.mxu0 0
      %1204 = vmatpush1.bf16.msra.mxu0 0
      %1205 = vmatprep.subr.bf16.mxu0 0
      %1206 = vmatpush1.bf16.msra.mxu0 0
      %1207 = vmatprep.subr.bf16.mxu0 0
      %1208 = vmatpush1.bf16.msra.mxu0 0
      %1209 = vmatprep.subr.bf16.mxu0 0
      %1210 = vmatpush1.bf16.msra.mxu0 0
      %1211 = vmatprep.subr.bf16.mxu0 0
      %1212 = vmatpush1.bf16.msra.mxu0 0
      %1213 = vmatprep.subr.bf16.mxu0 0
      %1214 = vmatpush1.bf16.msra.mxu0 0
      %1215 = vmatprep.subr.bf16.mxu0 0
      %1216 = vmatpush1.bf16.msra.mxu0 0
      %1217 = vmatprep.subr.bf16.mxu0 0
      %1218 = vmatpush1.bf16.msra.mxu0 0
      %1219 = vmatprep.subr.bf16.mxu0 0
      %1220 = vmatpush1.bf16.msra.mxu0 0
      %1221 = vmatprep.subr.bf16.mxu0 0
      %1222 = vmatpush1.bf16.msra.mxu0 0
      %1223 = vmatprep.subr.bf16.mxu0 0
      %1224 = vmatpush1.bf16.msra.mxu0 0
      %1225 = vmatprep.subr.bf16.mxu0 0
      %1226 = vmatpush1.bf16.msra.mxu0 0
      %1227 = vmatprep.subr.bf16.mxu0 0
      %1228 = vmatpush1.bf16.msra.mxu0 0
      %1229 = vmatprep.subr.bf16.mxu0 0
      %1230 = vmatpush1.bf16.msra.mxu0 0
      %1231 = vmatprep.mubr.bf16.mxu0 0
      %1232 = vmatmul.mubr.bf16.gmra.mrb[0].mxu0 %v1197
      %v1233 = vpop.f32.mrb[0].mxu0
      %v1234 = vadd.f32 %v1158, %v1233
      %v1235 = vpop.f32.mrb[0].mxu0
      %v1236 = vadd.f32 %v1162, %v1235
      %v1237 = vpop.f32.mrb[0].mxu0
      %v1238 = vpop.f32.mrb[0].mxu0
      %1239 = vdwg.mxu0
      %1240 = vmatprep.subr.bf16.mxu0 %v1125
      %1241 = vmatpush1.bf16.msra.mxu0 %v1124
      %1242 = vmatprep.subr.bf16.mxu0 %v1133
      %1243 = vmatpush1.bf16.msra.mxu0 %v1132
      %1244 = vmatprep.subr.bf16.mxu0 0
      %1245 = vmatpush1.bf16.msra.mxu0 0
      %1246 = vmatprep.subr.bf16.mxu0 0
      %1247 = vmatpush1.bf16.msra.mxu0 0
      %1248 = vmatprep.subr.bf16.mxu0 0
      %1249 = vmatpush1.bf16.msra.mxu0 0
      %1250 = vmatprep.subr.bf16.mxu0 0
      %1251 = vmatpush1.bf16.msra.mxu0 0
      %1252 = vmatprep.subr.bf16.mxu0 0
      %1253 = vmatpush1.bf16.msra.mxu0 0
      %1254 = vmatprep.subr.bf16.mxu0 0
      %1255 = vmatpush1.bf16.msra.mxu0 0
      %1256 = vmatprep.subr.bf16.mxu0 0
      %1257 = vmatpush1.bf16.msra.mxu0 0
      %1258 = vmatprep.subr.bf16.mxu0 0
      %1259 = vmatpush1.bf16.msra.mxu0 0
      %1260 = vmatprep.subr.bf16.mxu0 0
      %1261 = vmatpush1.bf16.msra.mxu0 0
      %1262 = vmatprep.subr.bf16.mxu0 0
      %1263 = vmatpush1.bf16.msra.mxu0 0
      %1264 = vmatprep.subr.bf16.mxu0 0
      %1265 = vmatpush1.bf16.msra.mxu0 0
      %1266 = vmatprep.subr.bf16.mxu0 0
      %1267 = vmatpush1.bf16.msra.mxu0 0
      %1268 = vmatprep.subr.bf16.mxu0 0
      %1269 = vmatpush1.bf16.msra.mxu0 0
      %1270 = vmatprep.subr.bf16.mxu0 0
      %1271 = vmatpush1.bf16.msra.mxu0 0
      %1272 = vmatprep.mubr.bf16.mxu0 0
      %1273 = vmatmul.mubr.bf16.gmra.mrb[0].mxu0 %v1197
      %v1274 = vpop.f32.mrb[0].mxu0
      %v1275 = vadd.f32 %v1166, %v1274
      %v1276 = vpop.f32.mrb[0].mxu0
      %v1277 = vadd.f32 %v1170, %v1276
      %v1278 = vpop.f32.mrb[0].mxu0
      %v1279 = vpop.f32.mrb[0].mxu0
      %1280 = vdwg.mxu0
      %1281 = vmatprep.subr.bf16.mxu0 %v1127
      %1282 = vmatpush1.bf16.msra.mxu0 %v1126
      %1283 = vmatprep.subr.bf16.mxu0 %v1135
      %1284 = vmatpush1.bf16.msra.mxu0 %v1134
      %1285 = vmatprep.subr.bf16.mxu0 0
      %1286 = vmatpush1.bf16.msra.mxu0 0
      %1287 = vmatprep.subr.bf16.mxu0 0
      %1288 = vmatpush1.bf16.msra.mxu0 0
      %1289 = vmatprep.subr.bf16.mxu0 0
      %1290 = vmatpush1.bf16.msra.mxu0 0
      %1291 = vmatprep.subr.bf16.mxu0 0
      %1292 = vmatpush1.bf16.msra.mxu0 0
      %1293 = vmatprep.subr.bf16.mxu0 0
      %1294 = vmatpush1.bf16.msra.mxu0 0
      %1295 = vmatprep.subr.bf16.mxu0 0
      %1296 = vmatpush1.bf16.msra.mxu0 0
      %1297 = vmatprep.subr.bf16.mxu0 0
      %1298 = vmatpush1.bf16.msra.mxu0 0
      %1299 = vmatprep.subr.bf16.mxu0 0
      %1300 = vmatpush1.bf16.msra.mxu0 0
      %1301 = vmatprep.subr.bf16.mxu0 0
      %1302 = vmatpush1.bf16.msra.mxu0 0
      %1303 = vmatprep.subr.bf16.mxu0 0
      %1304 = vmatpush1.bf16.msra.mxu0 0
      %1305 = vmatprep.subr.bf16.mxu0 0
      %1306 = vmatpush1.bf16.msra.mxu0 0
      %1307 = vmatprep.subr.bf16.mxu0 0
      %1308 = vmatpush1.bf16.msra.mxu0 0
      %1309 = vmatprep.subr.bf16.mxu0 0
      %1310 = vmatpush1.bf16.msra.mxu0 0
      %1311 = vmatprep.subr.bf16.mxu0 0
      %1312 = vmatpush1.bf16.msra.mxu0 0
      %1313 = vmatprep.mubr.bf16.mxu0 0
      %1314 = vmatmul.mubr.bf16.gmra.mrb[0].mxu0 %v1197
      %v1315 = vpop.f32.mrb[0].mxu0
      %v1316 = vadd.f32 %v1174, %v1315
      %v1317 = vpop.f32.mrb[0].mxu0
      %v1318 = vadd.f32 %v1178, %v1317
      %v1319 = vpop.f32.mrb[0].mxu0
      %v1320 = vpop.f32.mrb[0].mxu0
      %1321 = vdwg.mxu0
      %1322 = vmatprep.subr.bf16.mxu0 %v1129
      %1323 = vmatpush1.bf16.msra.mxu0 %v1128
      %1324 = vmatprep.subr.bf16.mxu0 %v1137
      %1325 = vmatpush1.bf16.msra.mxu0 %v1136
      %1326 = vmatprep.subr.bf16.mxu0 0
      %1327 = vmatpush1.bf16.msra.mxu0 0
      %1328 = vmatprep.subr.bf16.mxu0 0
      %1329 = vmatpush1.bf16.msra.mxu0 0
      %1330 = vmatprep.subr.bf16.mxu0 0
      %1331 = vmatpush1.bf16.msra.mxu0 0
      %1332 = vmatprep.subr.bf16.mxu0 0
      %1333 = vmatpush1.bf16.msra.mxu0 0
      %1334 = vmatprep.subr.bf16.mxu0 0
      %1335 = vmatpush1.bf16.msra.mxu0 0
      %1336 = vmatprep.subr.bf16.mxu0 0
      %1337 = vmatpush1.bf16.msra.mxu0 0
      %1338 = vmatprep.subr.bf16.mxu0 0
      %1339 = vmatpush1.bf16.msra.mxu0 0
      %1340 = vmatprep.subr.bf16.mxu0 0
      %1341 = vmatpush1.bf16.msra.mxu0 0
      %1342 = vmatprep.subr.bf16.mxu0 0
      %1343 = vmatpush1.bf16.msra.mxu0 0
      %1344 = vmatprep.subr.bf16.mxu0 0
      %1345 = vmatpush1.bf16.msra.mxu0 0
      %1346 = vmatprep.subr.bf16.mxu0 0
      %1347 = vmatpush1.bf16.msra.mxu0 0
      %1348 = vmatprep.subr.bf16.mxu0 0
      %1349 = vmatpush1.bf16.msra.mxu0 0
      %1350 = vmatprep.subr.bf16.mxu0 0
      %1351 = vmatpush1.bf16.msra.mxu0 0
      %1352 = vmatprep.subr.bf16.mxu0 0
      %1353 = vmatpush1.bf16.msra.mxu0 0
      %1354 = vmatprep.mubr.bf16.mxu0 0
      %1355 = vmatmul.mubr.bf16.gmra.mrb[0].mxu0 %v1197
      %v1356 = vpop.f32.mrb[0].mxu0
      %v1357 = vadd.f32 %v1182, %v1356
      %v1358 = vpop.f32.mrb[0].mxu0
      %v1359 = vadd.f32 %v1186, %v1358
      %v1360 = vpop.f32.mrb[0].mxu0
      %v1361 = vpop.f32.mrb[0].mxu0
      %1362 = vdwg.mxu0
      %v1363 = vmax.f32 %v1234, 0.0
      %v1364 = vmax.f32 %v1236, 0.0
      %v1365 = vmax.f32 %v1275, 0.0
      %v1366 = vmax.f32 %v1277, 0.0
      %v1367 = vmax.f32 %v1316, 0.0
      %v1368 = vmax.f32 %v1318, 0.0
      %v1369 = vmax.f32 %v1357, 0.0
      %v1370 = vmax.f32 %v1359, 0.0
      %v1371 = vand.u32 2147483647, %v1234
      %v1372 = vand.u32 2147483647, %v1236
      %v1373 = vand.u32 2147483647, %v1275
      %v1374 = vand.u32 2147483647, %v1277
      %v1375 = vand.u32 2147483647, %v1316
      %v1376 = vand.u32 2147483647, %v1318
      %v1377 = vand.u32 2147483647, %v1357
      %v1378 = vand.u32 2147483647, %v1359
      %v1379 = vsub.f32 0.0, %v1371
      %v1380 = vsub.f32 0.0, %v1372
      %v1381 = vsub.f32 0.0, %v1373
      %v1382 = vsub.f32 0.0, %v1374
      %v1383 = vsub.f32 0.0, %v1375
      %v1384 = vsub.f32 0.0, %v1376
      %v1385 = vsub.f32 0.0, %v1377
      %v1386 = vsub.f32 0.0, %v1378
      %v1387 = vmul.f32 %v1379, 1.442695
      %v1388 = vpow.pop %v1387
      %v1389 = vmul.f32 %v1380, 1.442695
      %v1390 = vpow.pop %v1389
      %v1391 = vmul.f32 %v1381, 1.442695
      %v1392 = vpow.pop %v1391
      %v1393 = vmul.f32 %v1382, 1.442695
      %v1394 = vpow.pop %v1393
      %v1395 = vmul.f32 %v1383, 1.442695
      %v1396 = vpow.pop %v1395
      %v1397 = vmul.f32 %v1384, 1.442695
      %v1398 = vpow.pop %v1397
      %v1399 = vmul.f32 %v1385, 1.442695
      %v1400 = vpow.pop %v1399
      %v1401 = vmul.f32 %v1386, 1.442695
      %v1402 = vpow.pop %v1401
      %v1403 = vadd.f32 %v1388, 1.0
      %v1404 = vlog2.pop %v1403
      %v1405 = vmul.f32 %v1404, 0.6931472
      %v1406 = vmul.f32 -0.5, %v1388
      %v1407 = vadd.f32 %v1406, 1.0
      %v1408 = vmul.f32 %v1407, %v1388
      %v1409 = vand.u32 2147483647, %v1388
      %vm1410 = vcmp.lt.f32.partialorder %v1409, 0.0004427343
      %v1411 = vsel %vm1410, %v1408, %v1405
      %v1412 = vadd.f32 %v1390, 1.0
      %v1413 = vlog2.pop %v1412
      %v1414 = vmul.f32 %v1413, 0.6931472
      %v1415 = vmul.f32 -0.5, %v1390
      %v1416 = vadd.f32 %v1415, 1.0
      %v1417 = vmul.f32 %v1416, %v1390
      %v1418 = vand.u32 2147483647, %v1390
      %vm1419 = vcmp.lt.f32.partialorder %v1418, 0.0004427343
      %v1420 = vsel %vm1419, %v1417, %v1414
      %v1421 = vadd.f32 %v1392, 1.0
      %v1422 = vlog2.pop %v1421
      %v1423 = vmul.f32 %v1422, 0.6931472
      %v1424 = vmul.f32 -0.5, %v1392
      %v1425 = vadd.f32 %v1424, 1.0
      %v1426 = vmul.f32 %v1425, %v1392
      %v1427 = vand.u32 2147483647, %v1392
      %vm1428 = vcmp.lt.f32.partialorder %v1427, 0.0004427343
      %v1429 = vsel %vm1428, %v1426, %v1423
      %v1430 = vadd.f32 %v1394, 1.0
      %v1431 = vlog2.pop %v1430
      %v1432 = vmul.f32 %v1431, 0.6931472
      %v1433 = vmul.f32 -0.5, %v1394
      %v1434 = vadd.f32 %v1433, 1.0
      %v1435 = vmul.f32 %v1434, %v1394
      %v1436 = vand.u32 2147483647, %v1394
      %vm1437 = vcmp.lt.f32.partialorder %v1436, 0.0004427343
      %v1438 = vsel %vm1437, %v1435, %v1432
      %v1439 = vadd.f32 %v1396, 1.0
      %v1440 = vlog2.pop %v1439
      %v1441 = vmul.f32 %v1440, 0.6931472
      %v1442 = vmul.f32 -0.5, %v1396
      %v1443 = vadd.f32 %v1442, 1.0
      %v1444 = vmul.f32 %v1443, %v1396
      %v1445 = vand.u32 2147483647, %v1396
      %vm1446 = vcmp.lt.f32.partialorder %v1445, 0.0004427343
      %v1447 = vsel %vm1446, %v1444, %v1441
      %v1448 = vadd.f32 %v1398, 1.0
      %v1449 = vlog2.pop %v1448
      %v1450 = vmul.f32 %v1449, 0.6931472
      %v1451 = vmul.f32 -0.5, %v1398
      %v1452 = vadd.f32 %v1451, 1.0
      %v1453 = vmul.f32 %v1452, %v1398
      %v1454 = vand.u32 2147483647, %v1398
      %vm1455 = vcmp.lt.f32.partialorder %v1454, 0.0004427343
      %v1456 = vsel %vm1455, %v1453, %v1450
      %v1457 = vadd.f32 %v1400, 1.0
      %v1458 = vlog2.pop %v1457
      %v1459 = vmul.f32 %v1458, 0.6931472
      %v1460 = vmul.f32 -0.5, %v1400
      %v1461 = vadd.f32 %v1460, 1.0
      %v1462 = vmul.f32 %v1461, %v1400
      %v1463 = vand.u32 2147483647, %v1400
      %vm1464 = vcmp.lt.f32.partialorder %v1463, 0.0004427343
      %v1465 = vsel %vm1464, %v1462, %v1459
      %v1466 = vadd.f32 %v1402, 1.0
      %v1467 = vlog2.pop %v1466
      %v1468 = vmul.f32 %v1467, 0.6931472
      %v1469 = vmul.f32 -0.5, %v1402
      %v1470 = vadd.f32 %v1469, 1.0
      %v1471 = vmul.f32 %v1470, %v1402
      %v1472 = vand.u32 2147483647, %v1402
      %vm1473 = vcmp.lt.f32.partialorder %v1472, 0.0004427343
      %v1474 = vsel %vm1473, %v1471, %v1468
      %v1475 = vadd.f32 %v1363, %v1411
      %v1476 = vadd.f32 %v1364, %v1420
      %v1477 = vadd.f32 %v1365, %v1429
      %v1478 = vadd.f32 %v1366, %v1438
      %v1479 = vadd.f32 %v1367, %v1447
      %v1480 = vadd.f32 %v1368, %v1456
      %v1481 = vadd.f32 %v1369, %v1465
      %v1482 = vadd.f32 %v1370, %v1474
      %v1483 = vtanh.pop %v1475
      %v1484 = vtanh.pop %v1476
      %v1485 = vtanh.pop %v1477
      %v1486 = vtanh.pop %v1478
      %v1487 = vtanh.pop %v1479
      %v1488 = vtanh.pop %v1480
      %v1489 = vtanh.pop %v1481
      %v1490 = vtanh.pop %v1482
      %v1491 = vmul.f32 %v1234, %v1483
      %v1492 = vmul.f32 %v1236, %v1484
      %v1493 = vmul.f32 %v1275, %v1485
      %v1494 = vmul.f32 %v1277, %v1486
      %v1495 = vmul.f32 %v1316, %v1487
      %v1496 = vmul.f32 %v1318, %v1488
      %v1497 = vmul.f32 %v1357, %v1489
      %v1498 = vmul.f32 %v1359, %v1490
      %vm1499 = vcmask 1040384
      %v1500 = vsel %vm1499, %v1491, 0.0
      %v1501 = vsel %vm1499, %v1492, 0.0
      %v1502 = vadd.f32 %v1500, %v1501
      %v1503 = vsel %vm1499, %v1493, 0.0
      %v1504 = vadd.f32 %v1502, %v1503
      %v1505 = vsel %vm1499, %v1494, 0.0
      %v1506 = vadd.f32 %v1504, %v1505
      %v1507 = vsel %vm1499, %v1495, 0.0
      %v1508 = vadd.f32 %v1506, %v1507
      %v1509 = vsel %vm1499, %v1496, 0.0
      %v1510 = vadd.f32 %v1508, %v1509
      %v1511 = vsel %vm1499, %v1497, 0.0
      %v1512 = vadd.f32 %v1510, %v1511
      %v1513 = vsel %vm1499, %v1498, 0.0
      %v1514 = vadd.f32 %v1512, %v1513
      %1515 = vadd.xlane.f32.xlu0 %v1514
      %v1516 = vpop.xlane.xlu0 %1515
      %v1517 = vrcp.pop 1024.0
      %v1518 = vmul.f32 %v1516, %v1517
      %v1519 = vsub.f32 %v1491, %v1518
      %v1520 = vsub.f32 %v1492, %v1518
      %v1521 = vsub.f32 %v1493, %v1518
      %v1522 = vsub.f32 %v1494, %v1518
      %v1523 = vsub.f32 %v1495, %v1518
      %v1524 = vsub.f32 %v1496, %v1518
      %v1525 = vsub.f32 %v1497, %v1518
      %v1526 = vsub.f32 %v1498, %v1518
      %v1527 = vmul.f32 %v1519, %v1519
      %v1528 = vmul.f32 %v1520, %v1520
      %v1529 = vmul.f32 %v1521, %v1521
      %v1530 = vmul.f32 %v1522, %v1522
      %v1531 = vmul.f32 %v1523, %v1523
      %v1532 = vmul.f32 %v1524, %v1524
      %v1533 = vmul.f32 %v1525, %v1525
      %v1534 = vmul.f32 %v1526, %v1526
      %v1535 = vsel %vm1499, %v1527, 0.0
      %v1536 = vsel %vm1499, %v1528, 0.0
      %v1537 = vadd.f32 %v1535, %v1536
      %v1538 = vsel %vm1499, %v1529, 0.0
      %v1539 = vadd.f32 %v1537, %v1538
      %v1540 = vsel %vm1499, %v1530, 0.0
      %v1541 = vadd.f32 %v1539, %v1540
      %v1542 = vsel %vm1499, %v1531, 0.0
      %v1543 = vadd.f32 %v1541, %v1542
      %v1544 = vsel %vm1499, %v1532, 0.0
      %v1545 = vadd.f32 %v1543, %v1544
      %v1546 = vsel %vm1499, %v1533, 0.0
      %v1547 = vadd.f32 %v1545, %v1546
      %v1548 = vsel %vm1499, %v1534, 0.0
      %v1549 = vadd.f32 %v1547, %v1548
      %1550 = vadd.xlane.f32.xlu0 %v1549
      %v1551 = vpop.xlane.xlu0 %1550
      %v1552 = vmul.f32 %v1551, %v1517
      %v1553 = vadd.f32 %v1552, 1e-05
      %v1554 = vrsqrt.pop %v1553
      %v1555 = vmul.f32 %v1519, %v1554
      %v1556 = vmul.f32 %v1520, %v1554
      %v1557 = vmul.f32 %v1521, %v1554
      %v1558 = vmul.f32 %v1522, %v1554
      %v1559 = vmul.f32 %v1523, %v1554
      %v1560 = vmul.f32 %v1524, %v1554
      %v1561 = vmul.f32 %v1525, %v1554
      %v1562 = vmul.f32 %v1526, %v1554
      %v1563 = vld [vmem:[%s11] sm:$0xff]
      %v1565 = vlaneseq
      %v1566 = vshrl.u32 %v1565, 7
      %v1567 = vsub.s32 0, %v1566
      %v1568 = vrot.slane %v1563, %v1567
      %v1569 = vlaneseq
      %v1570 = vshrl.u32 %v1569, 7
      %v1571 = vsub.s32 1, %v1570
      %v1572 = vrot.slane %v1563, %v1571
      %v1573 = vlaneseq
      %v1574 = vshrl.u32 %v1573, 7
      %v1575 = vsub.s32 2, %v1574
      %v1576 = vrot.slane %v1563, %v1575
      %v1577 = vlaneseq
      %v1578 = vshrl.u32 %v1577, 7
      %v1579 = vsub.s32 3, %v1578
      %v1580 = vrot.slane %v1563, %v1579
      %v1581 = vlaneseq
      %v1582 = vshrl.u32 %v1581, 7
      %v1583 = vsub.s32 4, %v1582
      %v1584 = vrot.slane %v1563, %v1583
      %v1585 = vlaneseq
      %v1586 = vshrl.u32 %v1585, 7
      %v1587 = vsub.s32 5, %v1586
      %v1588 = vrot.slane %v1563, %v1587
      %v1589 = vlaneseq
      %v1590 = vshrl.u32 %v1589, 7
      %v1591 = vsub.s32 6, %v1590
      %v1592 = vrot.slane %v1563, %v1591
      %v1593 = vlaneseq
      %v1594 = vshrl.u32 %v1593, 7
      %v1595 = vsub.s32 7, %v1594
      %v1596 = vrot.slane %v1563, %v1595
      %v1605 = vmul.f32 %v1555, %v1568
      %v1606 = vmul.f32 %v1556, %v1572
      %v1607 = vmul.f32 %v1557, %v1576
      %v1608 = vmul.f32 %v1558, %v1580
      %v1609 = vmul.f32 %v1559, %v1584
      %v1610 = vmul.f32 %v1560, %v1588
      %v1611 = vmul.f32 %v1561, %v1592
      %v1612 = vmul.f32 %v1562, %v1596
      %v1613 = vld [vmem:[%s13] sm:$0xff]
      %v1615 = vlaneseq
      %v1616 = vshrl.u32 %v1615, 7
      %v1617 = vsub.s32 0, %v1616
      %v1618 = vrot.slane %v1613, %v1617
      %v1619 = vlaneseq
      %v1620 = vshrl.u32 %v1619, 7
      %v1621 = vsub.s32 1, %v1620
      %v1622 = vrot.slane %v1613, %v1621
      %v1623 = vlaneseq
      %v1624 = vshrl.u32 %v1623, 7
      %v1625 = vsub.s32 2, %v1624
      %v1626 = vrot.slane %v1613, %v1625
      %v1627 = vlaneseq
      %v1628 = vshrl.u32 %v1627, 7
      %v1629 = vsub.s32 3, %v1628
      %v1630 = vrot.slane %v1613, %v1629
      %v1631 = vlaneseq
      %v1632 = vshrl.u32 %v1631, 7
      %v1633 = vsub.s32 4, %v1632
      %v1634 = vrot.slane %v1613, %v1633
      %v1635 = vlaneseq
      %v1636 = vshrl.u32 %v1635, 7
      %v1637 = vsub.s32 5, %v1636
      %v1638 = vrot.slane %v1613, %v1637
      %v1639 = vlaneseq
      %v1640 = vshrl.u32 %v1639, 7
      %v1641 = vsub.s32 6, %v1640
      %v1642 = vrot.slane %v1613, %v1641
      %v1643 = vlaneseq
      %v1644 = vshrl.u32 %v1643, 7
      %v1645 = vsub.s32 7, %v1644
      %v1646 = vrot.slane %v1613, %v1645
      %v1655 = vadd.f32 %v1605, %v1618
      %v1656 = vadd.f32 %v1606, %v1622
      %v1657 = vadd.f32 %v1607, %v1626
      %v1658 = vadd.f32 %v1608, %v1630
      %v1659 = vadd.f32 %v1609, %v1634
      %v1660 = vadd.f32 %v1610, %v1638
      %v1661 = vadd.f32 %v1611, %v1642
      %v1662 = vadd.f32 %v1612, %v1646
      %v1663 = vld [vmem:[%s15] sm:$0xff]
      %v1664 = vld [vmem:[%s15 + $0x8] sm:$0xff]
      %v1665 = vld [vmem:[%s15 + $0x10] sm:$0xff]
      %v1666 = vld [vmem:[%s15 + $0x18] sm:$0xff]
      %v1667 = vld [vmem:[%s15 + $0x20] sm:$0xff]
      %v1668 = vld [vmem:[%s15 + $0x28] sm:$0xff]
      %v1669 = vld [vmem:[%s15 + $0x30] sm:$0xff]
      %v1670 = vld [vmem:[%s15 + $0x38] sm:$0xff]
      %v1671 = vld [vmem:[%s15 + $0x40] sm:$0xff]
      %v1672 = vld [vmem:[%s15 + $0x48] sm:$0xff]
      %v1673 = vld [vmem:[%s15 + $0x50] sm:$0xff]
      %v1674 = vld [vmem:[%s15 + $0x58] sm:$0xff]
      %v1675 = vld [vmem:[%s15 + $0x60] sm:$0xff]
      %v1676 = vld [vmem:[%s15 + $0x68] sm:$0xff]
      %v1677 = vld [vmem:[%s15 + $0x70] sm:$0xff]
      %v1678 = vld [vmem:[%s15 + $0x78] sm:$0xff]
      %v1679 = vld [vmem:[%s15 + $0x80] sm:$0xff]
      %v1680 = vld [vmem:[%s15 + $0x88] sm:$0xff]
      %v1681 = vld [vmem:[%s15 + $0x90] sm:$0xff]
      %v1682 = vld [vmem:[%s15 + $0x98] sm:$0xff]
      %v1683 = vld [vmem:[%s15 + $0xa0] sm:$0xff]
      %v1684 = vld [vmem:[%s15 + $0xa8] sm:$0xff]
      %v1685 = vld [vmem:[%s15 + $0xb0] sm:$0xff]
      %v1686 = vld [vmem:[%s15 + $0xb8] sm:$0xff]
      %v1687 = vld [vmem:[%s15 + $0xc0] sm:$0xff]
      %v1688 = vld [vmem:[%s15 + $0xc8] sm:$0xff]
      %v1689 = vld [vmem:[%s15 + $0xd0] sm:$0xff]
      %v1690 = vld [vmem:[%s15 + $0xd8] sm:$0xff]
      %v1691 = vld [vmem:[%s15 + $0xe0] sm:$0xff]
      %v1692 = vld [vmem:[%s15 + $0xe8] sm:$0xff]
      %v1693 = vld [vmem:[%s15 + $0xf0] sm:$0xff]
      %v1694 = vld [vmem:[%s15 + $0xf8] sm:$0xff]
      %v1695 = vld [vmem:[%s15 + $0x100] sm:$0xff]
      %v1696 = vld [vmem:[%s15 + $0x108] sm:$0xff]
      %v1697 = vld [vmem:[%s15 + $0x110] sm:$0xff]
      %v1698 = vld [vmem:[%s15 + $0x118] sm:$0xff]
      %v1699 = vld [vmem:[%s15 + $0x120] sm:$0xff]
      %v1700 = vld [vmem:[%s15 + $0x128] sm:$0xff]
      %v1701 = vld [vmem:[%s15 + $0x130] sm:$0xff]
      %v1702 = vld [vmem:[%s15 + $0x138] sm:$0xff]
      %v1703 = vld [vmem:[%s15 + $0x140] sm:$0xff]
      %v1704 = vld [vmem:[%s15 + $0x148] sm:$0xff]
      %v1705 = vld [vmem:[%s15 + $0x150] sm:$0xff]
      %v1706 = vld [vmem:[%s15 + $0x158] sm:$0xff]
      %v1707 = vld [vmem:[%s15 + $0x160] sm:$0xff]
      %v1708 = vld [vmem:[%s15 + $0x168] sm:$0xff]
      %v1709 = vld [vmem:[%s15 + $0x170] sm:$0xff]
      %v1710 = vld [vmem:[%s15 + $0x178] sm:$0xff]
      %v1711 = vld [vmem:[%s15 + $0x180] sm:$0xff]
      %v1712 = vld [vmem:[%s15 + $0x188] sm:$0xff]
      %v1713 = vld [vmem:[%s15 + $0x190] sm:$0xff]
      %v1714 = vld [vmem:[%s15 + $0x198] sm:$0xff]
      %v1715 = vld [vmem:[%s15 + $0x1a0] sm:$0xff]
      %v1716 = vld [vmem:[%s15 + $0x1a8] sm:$0xff]
      %v1717 = vld [vmem:[%s15 + $0x1b0] sm:$0xff]
      %v1718 = vld [vmem:[%s15 + $0x1b8] sm:$0xff]
      %v1719 = vld [vmem:[%s15 + $0x1c0] sm:$0xff]
      %v1720 = vld [vmem:[%s15 + $0x1c8] sm:$0xff]
      %v1721 = vld [vmem:[%s15 + $0x1d0] sm:$0xff]
      %v1722 = vld [vmem:[%s15 + $0x1d8] sm:$0xff]
      %v1723 = vld [vmem:[%s15 + $0x1e0] sm:$0xff]
      %v1724 = vld [vmem:[%s15 + $0x1e8] sm:$0xff]
      %v1725 = vld [vmem:[%s15 + $0x1f0] sm:$0xff]
      %v1726 = vld [vmem:[%s15 + $0x1f8] sm:$0xff]
      %v1727 = vlaneseq
      %v1728 = vshrl.u32 %v1727, 7
      %v1729 = vsub.s32 0, %v1728
      %v1730 = vrot.slane %v1655, %v1729
      %v1731 = vlaneseq
      %v1732 = vshrl.u32 %v1731, 7
      %v1733 = vsub.s32 0, %v1732
      %v1734 = vrot.slane %v1656, %v1733
      %v1735 = vlaneseq
      %v1736 = vshrl.u32 %v1735, 7
      %v1737 = vsub.s32 0, %v1736
      %v1738 = vrot.slane %v1657, %v1737
      %v1739 = vlaneseq
      %v1740 = vshrl.u32 %v1739, 7
      %v1741 = vsub.s32 0, %v1740
      %v1742 = vrot.slane %v1658, %v1741
      %v1743 = vlaneseq
      %v1744 = vshrl.u32 %v1743, 7
      %v1745 = vsub.s32 0, %v1744
      %v1746 = vrot.slane %v1659, %v1745
      %v1747 = vlaneseq
      %v1748 = vshrl.u32 %v1747, 7
      %v1749 = vsub.s32 0, %v1748
      %v1750 = vrot.slane %v1660, %v1749
      %v1751 = vlaneseq
      %v1752 = vshrl.u32 %v1751, 7
      %v1753 = vsub.s32 0, %v1752
      %v1754 = vrot.slane %v1661, %v1753
      %v1755 = vlaneseq
      %v1756 = vshrl.u32 %v1755, 7
      %v1757 = vsub.s32 0, %v1756
      %v1758 = vrot.slane %v1662, %v1757
      %v1759 = vmul.f32 %v1663, %v1730
      %v1760 = vmul.f32 %v1664, %v1734
      %v1761 = vmul.f32 %v1665, %v1738
      %v1762 = vmul.f32 %v1666, %v1742
      %v1763 = vmul.f32 %v1667, %v1746
      %v1764 = vmul.f32 %v1668, %v1750
      %v1765 = vmul.f32 %v1669, %v1754
      %v1766 = vmul.f32 %v1670, %v1758
      %v1767 = vmul.f32 %v1671, %v1730
      %v1768 = vmul.f32 %v1672, %v1734
      %v1769 = vmul.f32 %v1673, %v1738
      %v1770 = vmul.f32 %v1674, %v1742
      %v1771 = vmul.f32 %v1675, %v1746
      %v1772 = vmul.f32 %v1676, %v1750
      %v1773 = vmul.f32 %v1677, %v1754
      %v1774 = vmul.f32 %v1678, %v1758
      %v1775 = vmul.f32 %v1679, %v1730
      %v1776 = vmul.f32 %v1680, %v1734
      %v1777 = vmul.f32 %v1681, %v1738
      %v1778 = vmul.f32 %v1682, %v1742
      %v1779 = vmul.f32 %v1683, %v1746
      %v1780 = vmul.f32 %v1684, %v1750
      %v1781 = vmul.f32 %v1685, %v1754
      %v1782 = vmul.f32 %v1686, %v1758
      %v1783 = vmul.f32 %v1687, %v1730
      %v1784 = vmul.f32 %v1688, %v1734
      %v1785 = vmul.f32 %v1689, %v1738
      %v1786 = vmul.f32 %v1690, %v1742
      %v1787 = vmul.f32 %v1691, %v1746
      %v1788 = vmul.f32 %v1692, %v1750
      %v1789 = vmul.f32 %v1693, %v1754
      %v1790 = vmul.f32 %v1694, %v1758
      %v1791 = vmul.f32 %v1695, %v1730
      %v1792 = vmul.f32 %v1696, %v1734
      %v1793 = vmul.f32 %v1697, %v1738
      %v1794 = vmul.f32 %v1698, %v1742
      %v1795 = vmul.f32 %v1699, %v1746
      %v1796 = vmul.f32 %v1700, %v1750
      %v1797 = vmul.f32 %v1701, %v1754
      %v1798 = vmul.f32 %v1702, %v1758
      %v1799 = vmul.f32 %v1703, %v1730
      %v1800 = vmul.f32 %v1704, %v1734
      %v1801 = vmul.f32 %v1705, %v1738
      %v1802 = vmul.f32 %v1706, %v1742
      %v1803 = vmul.f32 %v1707, %v1746
      %v1804 = vmul.f32 %v1708, %v1750
      %v1805 = vmul.f32 %v1709, %v1754
      %v1806 = vmul.f32 %v1710, %v1758
      %v1807 = vmul.f32 %v1711, %v1730
      %v1808 = vmul.f32 %v1712, %v1734
      %v1809 = vmul.f32 %v1713, %v1738
      %v1810 = vmul.f32 %v1714, %v1742
      %v1811 = vmul.f32 %v1715, %v1746
      %v1812 = vmul.f32 %v1716, %v1750
      %v1813 = vmul.f32 %v1717, %v1754
      %v1814 = vmul.f32 %v1718, %v1758
      %v1815 = vmul.f32 %v1719, %v1730
      %v1816 = vmul.f32 %v1720, %v1734
      %v1817 = vmul.f32 %v1721, %v1738
      %v1818 = vmul.f32 %v1722, %v1742
      %v1819 = vmul.f32 %v1723, %v1746
      %v1820 = vmul.f32 %v1724, %v1750
      %v1821 = vmul.f32 %v1725, %v1754
      %v1822 = vmul.f32 %v1726, %v1758
      %v1823 = vpack.c.bf16 %v1767, %v1759
      %v1824 = vpack.c.bf16 %v1768, %v1760
      %v1825 = vpack.c.bf16 %v1769, %v1761
      %v1826 = vpack.c.bf16 %v1770, %v1762
      %v1827 = vpack.c.bf16 %v1771, %v1763
      %v1828 = vpack.c.bf16 %v1772, %v1764
      %v1829 = vpack.c.bf16 %v1773, %v1765
      %v1830 = vpack.c.bf16 %v1774, %v1766
      %v1831 = vpack.c.bf16 %v1783, %v1775
      %v1832 = vpack.c.bf16 %v1784, %v1776
      %v1833 = vpack.c.bf16 %v1785, %v1777
      %v1834 = vpack.c.bf16 %v1786, %v1778
      %v1835 = vpack.c.bf16 %v1787, %v1779
      %v1836 = vpack.c.bf16 %v1788, %v1780
      %v1837 = vpack.c.bf16 %v1789, %v1781
      %v1838 = vpack.c.bf16 %v1790, %v1782
      %v1839 = vpack.c.bf16 %v1799, %v1791
      %v1840 = vpack.c.bf16 %v1800, %v1792
      %v1841 = vpack.c.bf16 %v1801, %v1793
      %v1842 = vpack.c.bf16 %v1802, %v1794
      %v1843 = vpack.c.bf16 %v1803, %v1795
      %v1844 = vpack.c.bf16 %v1804, %v1796
      %v1845 = vpack.c.bf16 %v1805, %v1797
      %v1846 = vpack.c.bf16 %v1806, %v1798
      %v1847 = vpack.c.bf16 %v1815, %v1807
      %v1848 = vpack.c.bf16 %v1816, %v1808
      %v1849 = vpack.c.bf16 %v1817, %v1809
      %v1850 = vpack.c.bf16 %v1818, %v1810
      %v1851 = vpack.c.bf16 %v1819, %v1811
      %v1852 = vpack.c.bf16 %v1820, %v1812
      %v1853 = vpack.c.bf16 %v1821, %v1813
      %v1854 = vpack.c.bf16 %v1822, %v1814
      %v1855 = vld [vmem:[%s17] sm:$0xf]
      %v1856 = vld [vmem:[%s17 + $0x4] sm:$0xf]
      %v1857 = vld [vmem:[%s17 + $0x8] sm:$0xf]
      %v1858 = vld [vmem:[%s17 + $0xc] sm:$0xf]
      %v1859 = vld [vmem:[%s17 + $0x10] sm:$0xf]
      %v1860 = vld [vmem:[%s17 + $0x14] sm:$0xf]
      %v1861 = vld [vmem:[%s17 + $0x18] sm:$0xf]
      %v1862 = vld [vmem:[%s17 + $0x1c] sm:$0xf]
      %v1863 = vld [vmem:[%s17 + $0x20] sm:$0xf]
      %v1864 = vld [vmem:[%s17 + $0x24] sm:$0xf]
      %v1865 = vld [vmem:[%s17 + $0x28] sm:$0xf]
      %v1866 = vld [vmem:[%s17 + $0x2c] sm:$0xf]
      %v1867 = vld [vmem:[%s17 + $0x30] sm:$0xf]
      %v1868 = vld [vmem:[%s17 + $0x34] sm:$0xf]
      %v1869 = vld [vmem:[%s17 + $0x38] sm:$0xf]
      %v1870 = vld [vmem:[%s17 + $0x3c] sm:$0xf]
      %v1871 = vld [vmem:[%s17 + $0x40] sm:$0xf]
      %v1872 = vld [vmem:[%s17 + $0x44] sm:$0xf]
      %v1873 = vld [vmem:[%s17 + $0x48] sm:$0xf]
      %v1874 = vld [vmem:[%s17 + $0x4c] sm:$0xf]
      %v1875 = vld [vmem:[%s17 + $0x50] sm:$0xf]
      %v1876 = vld [vmem:[%s17 + $0x54] sm:$0xf]
      %v1877 = vld [vmem:[%s17 + $0x58] sm:$0xf]
      %v1878 = vld [vmem:[%s17 + $0x5c] sm:$0xf]
      %v1879 = vld [vmem:[%s17 + $0x60] sm:$0xf]
      %v1880 = vld [vmem:[%s17 + $0x64] sm:$0xf]
      %v1881 = vld [vmem:[%s17 + $0x68] sm:$0xf]
      %v1882 = vld [vmem:[%s17 + $0x6c] sm:$0xf]
      %v1883 = vld [vmem:[%s17 + $0x70] sm:$0xf]
      %v1884 = vld [vmem:[%s17 + $0x74] sm:$0xf]
      %v1885 = vld [vmem:[%s17 + $0x78] sm:$0xf]
      %v1886 = vld [vmem:[%s17 + $0x7c] sm:$0xf]
      %v1887 = vld [vmem:[%s17 + $0x80] sm:$0xf]
      %v1888 = vld [vmem:[%s17 + $0x84] sm:$0xf]
      %v1889 = vld [vmem:[%s17 + $0x88] sm:$0xf]
      %v1890 = vld [vmem:[%s17 + $0x8c] sm:$0xf]
      %v1891 = vld [vmem:[%s17 + $0x90] sm:$0xf]
      %v1892 = vld [vmem:[%s17 + $0x94] sm:$0xf]
      %v1893 = vld [vmem:[%s17 + $0x98] sm:$0xf]
      %v1894 = vld [vmem:[%s17 + $0x9c] sm:$0xf]
      %v1895 = vld [vmem:[%s17 + $0xa0] sm:$0xf]
      %v1896 = vld [vmem:[%s17 + $0xa4] sm:$0xf]
      %v1897 = vld [vmem:[%s17 + $0xa8] sm:$0xf]
      %v1898 = vld [vmem:[%s17 + $0xac] sm:$0xf]
      %v1899 = vld [vmem:[%s17 + $0xb0] sm:$0xf]
      %v1900 = vld [vmem:[%s17 + $0xb4] sm:$0xf]
      %v1901 = vld [vmem:[%s17 + $0xb8] sm:$0xf]
      %v1902 = vld [vmem:[%s17 + $0xbc] sm:$0xf]
      %v1903 = vld [vmem:[%s17 + $0xc0] sm:$0xf]
      %v1904 = vld [vmem:[%s17 + $0xc4] sm:$0xf]
      %v1905 = vld [vmem:[%s17 + $0xc8] sm:$0xf]
      %v1906 = vld [vmem:[%s17 + $0xcc] sm:$0xf]
      %v1907 = vld [vmem:[%s17 + $0xd0] sm:$0xf]
      %v1908 = vld [vmem:[%s17 + $0xd4] sm:$0xf]
      %v1909 = vld [vmem:[%s17 + $0xd8] sm:$0xf]
      %v1910 = vld [vmem:[%s17 + $0xdc] sm:$0xf]
      %v1911 = vld [vmem:[%s17 + $0xe0] sm:$0xf]
      %v1912 = vld [vmem:[%s17 + $0xe4] sm:$0xf]
      %v1913 = vld [vmem:[%s17 + $0xe8] sm:$0xf]
      %v1914 = vld [vmem:[%s17 + $0xec] sm:$0xf]
      %v1915 = vld [vmem:[%s17 + $0xf0] sm:$0xf]
      %v1916 = vld [vmem:[%s17 + $0xf4] sm:$0xf]
      %v1917 = vld [vmem:[%s17 + $0xf8] sm:$0xf]
      %v1918 = vld [vmem:[%s17 + $0xfc] sm:$0xf]
      %v1919 = vld [vmem:[%s17 + $0x100] sm:$0xf]
      %v1920 = vld [vmem:[%s17 + $0x104] sm:$0xf]
      %v1921 = vld [vmem:[%s17 + $0x108] sm:$0xf]
      %v1922 = vld [vmem:[%s17 + $0x10c] sm:$0xf]
      %v1923 = vld [vmem:[%s17 + $0x110] sm:$0xf]
      %v1924 = vld [vmem:[%s17 + $0x114] sm:$0xf]
      %v1925 = vld [vmem:[%s17 + $0x118] sm:$0xf]
      %v1926 = vld [vmem:[%s17 + $0x11c] sm:$0xf]
      %v1927 = vld [vmem:[%s17 + $0x120] sm:$0xf]
      %v1928 = vld [vmem:[%s17 + $0x124] sm:$0xf]
      %v1929 = vld [vmem:[%s17 + $0x128] sm:$0xf]
      %v1930 = vld [vmem:[%s17 + $0x12c] sm:$0xf]
      %v1931 = vld [vmem:[%s17 + $0x130] sm:$0xf]
      %v1932 = vld [vmem:[%s17 + $0x134] sm:$0xf]
      %v1933 = vld [vmem:[%s17 + $0x138] sm:$0xf]
      %v1934 = vld [vmem:[%s17 + $0x13c] sm:$0xf]
      %v1935 = vld [vmem:[%s17 + $0x140] sm:$0xf]
      %v1936 = vld [vmem:[%s17 + $0x144] sm:$0xf]
      %v1937 = vld [vmem:[%s17 + $0x148] sm:$0xf]
      %v1938 = vld [vmem:[%s17 + $0x14c] sm:$0xf]
      %v1939 = vld [vmem:[%s17 + $0x150] sm:$0xf]
      %v1940 = vld [vmem:[%s17 + $0x154] sm:$0xf]
      %v1941 = vld [vmem:[%s17 + $0x158] sm:$0xf]
      %v1942 = vld [vmem:[%s17 + $0x15c] sm:$0xf]
      %v1943 = vld [vmem:[%s17 + $0x160] sm:$0xf]
      %v1944 = vld [vmem:[%s17 + $0x164] sm:$0xf]
      %v1945 = vld [vmem:[%s17 + $0x168] sm:$0xf]
      %v1946 = vld [vmem:[%s17 + $0x16c] sm:$0xf]
      %v1947 = vld [vmem:[%s17 + $0x170] sm:$0xf]
      %v1948 = vld [vmem:[%s17 + $0x174] sm:$0xf]
      %v1949 = vld [vmem:[%s17 + $0x178] sm:$0xf]
      %v1950 = vld [vmem:[%s17 + $0x17c] sm:$0xf]
      %v1951 = vld [vmem:[%s17 + $0x180] sm:$0xf]
      %v1952 = vld [vmem:[%s17 + $0x184] sm:$0xf]
      %v1953 = vld [vmem:[%s17 + $0x188] sm:$0xf]
      %v1954 = vld [vmem:[%s17 + $0x18c] sm:$0xf]
      %v1955 = vld [vmem:[%s17 + $0x190] sm:$0xf]
      %v1956 = vld [vmem:[%s17 + $0x194] sm:$0xf]
      %v1957 = vld [vmem:[%s17 + $0x198] sm:$0xf]
      %v1958 = vld [vmem:[%s17 + $0x19c] sm:$0xf]
      %v1959 = vld [vmem:[%s17 + $0x1a0] sm:$0xf]
      %v1960 = vld [vmem:[%s17 + $0x1a4] sm:$0xf]
      %v1961 = vld [vmem:[%s17 + $0x1a8] sm:$0xf]
      %v1962 = vld [vmem:[%s17 + $0x1ac] sm:$0xf]
      %v1963 = vld [vmem:[%s17 + $0x1b0] sm:$0xf]
      %v1964 = vld [vmem:[%s17 + $0x1b4] sm:$0xf]
      %v1965 = vld [vmem:[%s17 + $0x1b8] sm:$0xf]
      %v1966 = vld [vmem:[%s17 + $0x1bc] sm:$0xf]
      %v1967 = vld [vmem:[%s17 + $0x1c0] sm:$0xf]
      %v1968 = vld [vmem:[%s17 + $0x1c4] sm:$0xf]
      %v1969 = vld [vmem:[%s17 + $0x1c8] sm:$0xf]
      %v1970 = vld [vmem:[%s17 + $0x1cc] sm:$0xf]
      %v1971 = vld [vmem:[%s17 + $0x1d0] sm:$0xf]
      %v1972 = vld [vmem:[%s17 + $0x1d4] sm:$0xf]
      %v1973 = vld [vmem:[%s17 + $0x1d8] sm:$0xf]
      %v1974 = vld [vmem:[%s17 + $0x1dc] sm:$0xf]
      %v1975 = vld [vmem:[%s17 + $0x1e0] sm:$0xf]
      %v1976 = vld [vmem:[%s17 + $0x1e4] sm:$0xf]
      %v1977 = vld [vmem:[%s17 + $0x1e8] sm:$0xf]
      %v1978 = vld [vmem:[%s17 + $0x1ec] sm:$0xf]
      %v1979 = vld [vmem:[%s17 + $0x1f0] sm:$0xf]
      %v1980 = vld [vmem:[%s17 + $0x1f4] sm:$0xf]
      %v1981 = vld [vmem:[%s17 + $0x1f8] sm:$0xf]
      %v1982 = vld [vmem:[%s17 + $0x1fc] sm:$0xf]
      %v2111 = vunpack.c.l.b16 %v1855
      %v2112 = vunpack.c.l.b16 %v1856
      %v2113 = vunpack.c.l.b16 %v1857
      %v2114 = vunpack.c.l.b16 %v1858
      %v2115 = vunpack.c.l.b16 %v1859
      %v2116 = vunpack.c.l.b16 %v1860
      %v2117 = vunpack.c.l.b16 %v1861
      %v2118 = vunpack.c.l.b16 %v1862
      %v2119 = vunpack.c.l.b16 %v1863
      %v2120 = vunpack.c.l.b16 %v1864
      %v2121 = vunpack.c.l.b16 %v1865
      %v2122 = vunpack.c.l.b16 %v1866
      %v2123 = vunpack.c.l.b16 %v1867
      %v2124 = vunpack.c.l.b16 %v1868
      %v2125 = vunpack.c.l.b16 %v1869
      %v2126 = vunpack.c.l.b16 %v1870
      %v2127 = vunpack.c.l.b16 %v1871
      %v2128 = vunpack.c.l.b16 %v1872
      %v2129 = vunpack.c.l.b16 %v1873
      %v2130 = vunpack.c.l.b16 %v1874
      %v2131 = vunpack.c.l.b16 %v1875
      %v2132 = vunpack.c.l.b16 %v1876
      %v2133 = vunpack.c.l.b16 %v1877
      %v2134 = vunpack.c.l.b16 %v1878
      %v2135 = vunpack.c.l.b16 %v1879
      %v2136 = vunpack.c.l.b16 %v1880
      %v2137 = vunpack.c.l.b16 %v1881
      %v2138 = vunpack.c.l.b16 %v1882
      %v2139 = vunpack.c.l.b16 %v1883
      %v2140 = vunpack.c.l.b16 %v1884
      %v2141 = vunpack.c.l.b16 %v1885
      %v2142 = vunpack.c.l.b16 %v1886
      %v2143 = vunpack.c.l.b16 %v1887
      %v2144 = vunpack.c.l.b16 %v1888
      %v2145 = vunpack.c.l.b16 %v1889
      %v2146 = vunpack.c.l.b16 %v1890
      %v2147 = vunpack.c.l.b16 %v1891
      %v2148 = vunpack.c.l.b16 %v1892
      %v2149 = vunpack.c.l.b16 %v1893
      %v2150 = vunpack.c.l.b16 %v1894
      %v2151 = vunpack.c.l.b16 %v1895
      %v2152 = vunpack.c.l.b16 %v1896
      %v2153 = vunpack.c.l.b16 %v1897
      %v2154 = vunpack.c.l.b16 %v1898
      %v2155 = vunpack.c.l.b16 %v1899
      %v2156 = vunpack.c.l.b16 %v1900
      %v2157 = vunpack.c.l.b16 %v1901
      %v2158 = vunpack.c.l.b16 %v1902
      %v2159 = vunpack.c.l.b16 %v1903
      %v2160 = vunpack.c.l.b16 %v1904
      %v2161 = vunpack.c.l.b16 %v1905
      %v2162 = vunpack.c.l.b16 %v1906
      %v2163 = vunpack.c.l.b16 %v1907
      %v2164 = vunpack.c.l.b16 %v1908
      %v2165 = vunpack.c.l.b16 %v1909
      %v2166 = vunpack.c.l.b16 %v1910
      %v2167 = vunpack.c.l.b16 %v1911
      %v2168 = vunpack.c.l.b16 %v1912
      %v2169 = vunpack.c.l.b16 %v1913
      %v2170 = vunpack.c.l.b16 %v1914
      %v2171 = vunpack.c.l.b16 %v1915
      %v2172 = vunpack.c.l.b16 %v1916
      %v2173 = vunpack.c.l.b16 %v1917
      %v2174 = vunpack.c.l.b16 %v1918
      %v2175 = vunpack.c.l.b16 %v1919
      %v2176 = vunpack.c.l.b16 %v1920
      %v2177 = vunpack.c.l.b16 %v1921
      %v2178 = vunpack.c.l.b16 %v1922
      %v2179 = vunpack.c.l.b16 %v1923
      %v2180 = vunpack.c.l.b16 %v1924
      %v2181 = vunpack.c.l.b16 %v1925
      %v2182 = vunpack.c.l.b16 %v1926
      %v2183 = vunpack.c.l.b16 %v1927
      %v2184 = vunpack.c.l.b16 %v1928
      %v2185 = vunpack.c.l.b16 %v1929
      %v2186 = vunpack.c.l.b16 %v1930
      %v2187 = vunpack.c.l.b16 %v1931
      %v2188 = vunpack.c.l.b16 %v1932
      %v2189 = vunpack.c.l.b16 %v1933
      %v2190 = vunpack.c.l.b16 %v1934
      %v2191 = vunpack.c.l.b16 %v1935
      %v2192 = vunpack.c.l.b16 %v1936
      %v2193 = vunpack.c.l.b16 %v1937
      %v2194 = vunpack.c.l.b16 %v1938
      %v2195 = vunpack.c.l.b16 %v1939
      %v2196 = vunpack.c.l.b16 %v1940
      %v2197 = vunpack.c.l.b16 %v1941
      %v2198 = vunpack.c.l.b16 %v1942
      %v2199 = vunpack.c.l.b16 %v1943
      %v2200 = vunpack.c.l.b16 %v1944
      %v2201 = vunpack.c.l.b16 %v1945
      %v2202 = vunpack.c.l.b16 %v1946
      %v2203 = vunpack.c.l.b16 %v1947
      %v2204 = vunpack.c.l.b16 %v1948
      %v2205 = vunpack.c.l.b16 %v1949
      %v2206 = vunpack.c.l.b16 %v1950
      %v2207 = vunpack.c.l.b16 %v1951
      %v2208 = vunpack.c.l.b16 %v1952
      %v2209 = vunpack.c.l.b16 %v1953
      %v2210 = vunpack.c.l.b16 %v1954
      %v2211 = vunpack.c.l.b16 %v1955
      %v2212 = vunpack.c.l.b16 %v1956
      %v2213 = vunpack.c.l.b16 %v1957
      %v2214 = vunpack.c.l.b16 %v1958
      %v2215 = vunpack.c.l.b16 %v1959
      %v2216 = vunpack.c.l.b16 %v1960
      %v2217 = vunpack.c.l.b16 %v1961
      %v2218 = vunpack.c.l.b16 %v1962
      %v2219 = vunpack.c.l.b16 %v1963
      %v2220 = vunpack.c.l.b16 %v1964
      %v2221 = vunpack.c.l.b16 %v1965
      %v2222 = vunpack.c.l.b16 %v1966
      %v2223 = vunpack.c.l.b16 %v1967
      %v2224 = vunpack.c.l.b16 %v1968
      %v2225 = vunpack.c.l.b16 %v1969
      %v2226 = vunpack.c.l.b16 %v1970
      %v2227 = vunpack.c.l.b16 %v1971
      %v2228 = vunpack.c.l.b16 %v1972
      %v2229 = vunpack.c.l.b16 %v1973
      %v2230 = vunpack.c.l.b16 %v1974
      %v2231 = vunpack.c.l.b16 %v1975
      %v2232 = vunpack.c.l.b16 %v1976
      %v2233 = vunpack.c.l.b16 %v1977
      %v2234 = vunpack.c.l.b16 %v1978
      %v2235 = vunpack.c.l.b16 %v1979
      %v2236 = vunpack.c.l.b16 %v1980
      %v2237 = vunpack.c.l.b16 %v1981
      %v2238 = vunpack.c.l.b16 %v1982
      %v2239 = vpack.c.b16 %v2112, %v2111
      %v2240 = vpack.c.b16 %v2114, %v2113
      %v2241 = vpack.c.b16 %v2116, %v2115
      %v2242 = vpack.c.b16 %v2118, %v2117
      %v2243 = vpack.c.b16 %v2120, %v2119
      %v2244 = vpack.c.b16 %v2122, %v2121
      %v2245 = vpack.c.b16 %v2124, %v2123
      %v2246 = vpack.c.b16 %v2126, %v2125
      %v2247 = vpack.c.b16 %v2128, %v2127
      %v2248 = vpack.c.b16 %v2130, %v2129
      %v2249 = vpack.c.b16 %v2132, %v2131
      %v2250 = vpack.c.b16 %v2134, %v2133
      %v2251 = vpack.c.b16 %v2136, %v2135
      %v2252 = vpack.c.b16 %v2138, %v2137
      %v2253 = vpack.c.b16 %v2140, %v2139
      %v2254 = vpack.c.b16 %v2142, %v2141
      %v2255 = vpack.c.b16 %v2144, %v2143
      %v2256 = vpack.c.b16 %v2146, %v2145
      %v2257 = vpack.c.b16 %v2148, %v2147
      %v2258 = vpack.c.b16 %v2150, %v2149
      %v2259 = vpack.c.b16 %v2152, %v2151
      %v2260 = vpack.c.b16 %v2154, %v2153
      %v2261 = vpack.c.b16 %v2156, %v2155
      %v2262 = vpack.c.b16 %v2158, %v2157
      %v2263 = vpack.c.b16 %v2160, %v2159
      %v2264 = vpack.c.b16 %v2162, %v2161
      %v2265 = vpack.c.b16 %v2164, %v2163
      %v2266 = vpack.c.b16 %v2166, %v2165
      %v2267 = vpack.c.b16 %v2168, %v2167
      %v2268 = vpack.c.b16 %v2170, %v2169
      %v2269 = vpack.c.b16 %v2172, %v2171
      %v2270 = vpack.c.b16 %v2174, %v2173
      %v2271 = vpack.c.b16 %v2176, %v2175
      %v2272 = vpack.c.b16 %v2178, %v2177
      %v2273 = vpack.c.b16 %v2180, %v2179
      %v2274 = vpack.c.b16 %v2182, %v2181
      %v2275 = vpack.c.b16 %v2184, %v2183
      %v2276 = vpack.c.b16 %v2186, %v2185
      %v2277 = vpack.c.b16 %v2188, %v2187
      %v2278 = vpack.c.b16 %v2190, %v2189
      %v2279 = vpack.c.b16 %v2192, %v2191
      %v2280 = vpack.c.b16 %v2194, %v2193
      %v2281 = vpack.c.b16 %v2196, %v2195
      %v2282 = vpack.c.b16 %v2198, %v2197
      %v2283 = vpack.c.b16 %v2200, %v2199
      %v2284 = vpack.c.b16 %v2202, %v2201
      %v2285 = vpack.c.b16 %v2204, %v2203
      %v2286 = vpack.c.b16 %v2206, %v2205
      %v2287 = vpack.c.b16 %v2208, %v2207
      %v2288 = vpack.c.b16 %v2210, %v2209
      %v2289 = vpack.c.b16 %v2212, %v2211
      %v2290 = vpack.c.b16 %v2214, %v2213
      %v2291 = vpack.c.b16 %v2216, %v2215
      %v2292 = vpack.c.b16 %v2218, %v2217
      %v2293 = vpack.c.b16 %v2220, %v2219
      %v2294 = vpack.c.b16 %v2222, %v2221
      %v2295 = vpack.c.b16 %v2224, %v2223
      %v2296 = vpack.c.b16 %v2226, %v2225
      %v2297 = vpack.c.b16 %v2228, %v2227
      %v2298 = vpack.c.b16 %v2230, %v2229
      %v2299 = vpack.c.b16 %v2232, %v2231
      %v2300 = vpack.c.b16 %v2234, %v2233
      %v2301 = vpack.c.b16 %v2236, %v2235
      %v2302 = vpack.c.b16 %v2238, %v2237
      %2367 = vmatprep.subr.bf16.mxu0 0
      %2368 = vmatpush1.bf16.msra.mxu0 %v2239
      %2369 = vmatprep.subr.bf16.mxu0 0
      %2370 = vmatpush1.bf16.msra.mxu0 %v2240
      %2371 = vmatprep.subr.bf16.mxu0 0
      %2372 = vmatpush1.bf16.msra.mxu0 %v2241
      %2373 = vmatprep.subr.bf16.mxu0 0
      %2374 = vmatpush1.bf16.msra.mxu0 %v2242
      %2375 = vmatprep.subr.bf16.mxu0 0
      %2376 = vmatpush1.bf16.msra.mxu0 %v2243
      %2377 = vmatprep.subr.bf16.mxu0 0
      %2378 = vmatpush1.bf16.msra.mxu0 %v2244
      %2379 = vmatprep.subr.bf16.mxu0 0
      %2380 = vmatpush1.bf16.msra.mxu0 %v2245
      %2381 = vmatprep.subr.bf16.mxu0 0
      %2382 = vmatpush1.bf16.msra.mxu0 %v2246
      %2383 = vmatprep.subr.bf16.mxu0 0
      %2384 = vmatpush1.bf16.msra.mxu0 %v2247
      %2385 = vmatprep.subr.bf16.mxu0 0
      %2386 = vmatpush1.bf16.msra.mxu0 %v2248
      %2387 = vmatprep.subr.bf16.mxu0 0
      %2388 = vmatpush1.bf16.msra.mxu0 %v2249
      %2389 = vmatprep.subr.bf16.mxu0 0
      %2390 = vmatpush1.bf16.msra.mxu0 %v2250
      %2391 = vmatprep.subr.bf16.mxu0 0
      %2392 = vmatpush1.bf16.msra.mxu0 %v2251
      %2393 = vmatprep.subr.bf16.mxu0 0
      %2394 = vmatpush1.bf16.msra.mxu0 %v2252
      %2395 = vmatprep.subr.bf16.mxu0 0
      %2396 = vmatpush1.bf16.msra.mxu0 %v2253
      %2397 = vmatprep.subr.bf16.mxu0 0
      %2398 = vmatpush1.bf16.msra.mxu0 %v2254
      %2399 = vmatprep.mubr.bf16.mxu0 %v1824
      %2400 = vmatmul.mubr.bf16.gmra.mrb[0].mxu0 %v1823
      %v2401 = vpop.f32.mrb[0].mxu0
      %v2402 = vadd.f32 0.0, %v2401
      %v2403 = vpop.f32.mrb[0].mxu0
      %v2404 = vpop.f32.mrb[0].mxu0
      %v2405 = vadd.f32 0.0, %v2404
      %v2406 = vpop.f32.mrb[0].mxu0
      %2407 = vmatprep.mubr.bf16.mxu0 %v1832
      %2408 = vmatmul.mubr.bf16.gmra.mrb[0].mxu0 %v1831
      %v2409 = vpop.f32.mrb[0].mxu0
      %v2410 = vadd.f32 0.0, %v2409
      %v2411 = vpop.f32.mrb[0].mxu0
      %v2412 = vpop.f32.mrb[0].mxu0
      %v2413 = vadd.f32 0.0, %v2412
      %v2414 = vpop.f32.mrb[0].mxu0
      %2415 = vmatprep.mubr.bf16.mxu0 %v1840
      %2416 = vmatmul.mubr.bf16.gmra.mrb[0].mxu0 %v1839
      %v2417 = vpop.f32.mrb[0].mxu0
      %v2418 = vadd.f32 0.0, %v2417
      %v2419 = vpop.f32.mrb[0].mxu0
      %v2420 = vpop.f32.mrb[0].mxu0
      %v2421 = vadd.f32 0.0, %v2420
      %v2422 = vpop.f32.mrb[0].mxu0
      %2423 = vmatprep.mubr.bf16.mxu0 %v1848
      %2424 = vmatmul.mubr.bf16.gmra.mrb[0].mxu0 %v1847
      %v2425 = vpop.f32.mrb[0].mxu0
      %v2426 = vadd.f32 0.0, %v2425
      %v2427 = vpop.f32.mrb[0].mxu0
      %v2428 = vpop.f32.mrb[0].mxu0
      %v2429 = vadd.f32 0.0, %v2428
      %v2430 = vpop.f32.mrb[0].mxu0
      %2431 = vdwg.mxu0
      %2432 = vmatprep.subr.bf16.mxu0 0
      %2433 = vmatpush1.bf16.msra.mxu0 %v2255
      %2434 = vmatprep.subr.bf16.mxu0 0
      %2435 = vmatpush1.bf16.msra.mxu0 %v2256
      %2436 = vmatprep.subr.bf16.mxu0 0
      %2437 = vmatpush1.bf16.msra.mxu0 %v2257
      %2438 = vmatprep.subr.bf16.mxu0 0
      %2439 = vmatpush1.bf16.msra.mxu0 %v2258
      %2440 = vmatprep.subr.bf16.mxu0 0
      %2441 = vmatpush1.bf16.msra.mxu0 %v2259
      %2442 = vmatprep.subr.bf16.mxu0 0
      %2443 = vmatpush1.bf16.msra.mxu0 %v2260
      %2444 = vmatprep.subr.bf16.mxu0 0
      %2445 = vmatpush1.bf16.msra.mxu0 %v2261
      %2446 = vmatprep.subr.bf16.mxu0 0
      %2447 = vmatpush1.bf16.msra.mxu0 %v2262
      %2448 = vmatprep.subr.bf16.mxu0 0
      %2449 = vmatpush1.bf16.msra.mxu0 %v2263
      %2450 = vmatprep.subr.bf16.mxu0 0
      %2451 = vmatpush1.bf16.msra.mxu0 %v2264
      %2452 = vmatprep.subr.bf16.mxu0 0
      %2453 = vmatpush1.bf16.msra.mxu0 %v2265
      %2454 = vmatprep.subr.bf16.mxu0 0
      %2455 = vmatpush1.bf16.msra.mxu0 %v2266
      %2456 = vmatprep.subr.bf16.mxu0 0
      %2457 = vmatpush1.bf16.msra.mxu0 %v2267
      %2458 = vmatprep.subr.bf16.mxu0 0
      %2459 = vmatpush1.bf16.msra.mxu0 %v2268
      %2460 = vmatprep.subr.bf16.mxu0 0
      %2461 = vmatpush1.bf16.msra.mxu0 %v2269
      %2462 = vmatprep.subr.bf16.mxu0 0
      %2463 = vmatpush1.bf16.msra.mxu0 %v2270
      %2464 = vmatprep.mubr.bf16.mxu0 %v1826
      %2465 = vmatmul.mubr.bf16.gmra.mrb[0].mxu0 %v1825
      %v2466 = vpop.f32.mrb[0].mxu0
      %v2467 = vadd.f32 %v2402, %v2466
      %v2468 = vpop.f32.mrb[0].mxu0
      %v2469 = vpop.f32.mrb[0].mxu0
      %v2470 = vadd.f32 %v2405, %v2469
      %v2471 = vpop.f32.mrb[0].mxu0
      %2472 = vmatprep.mubr.bf16.mxu0 %v1834
      %2473 = vmatmul.mubr.bf16.gmra.mrb[0].mxu0 %v1833
      %v2474 = vpop.f32.mrb[0].mxu0
      %v2475 = vadd.f32 %v2410, %v2474
      %v2476 = vpop.f32.mrb[0].mxu0
      %v2477 = vpop.f32.mrb[0].mxu0
      %v2478 = vadd.f32 %v2413, %v2477
      %v2479 = vpop.f32.mrb[0].mxu0
      %2480 = vmatprep.mubr.bf16.mxu0 %v1842
      %2481 = vmatmul.mubr.bf16.gmra.mrb[0].mxu0 %v1841
      %v2482 = vpop.f32.mrb[0].mxu0
      %v2483 = vadd.f32 %v2418, %v2482
      %v2484 = vpop.f32.mrb[0].mxu0
      %v2485 = vpop.f32.mrb[0].mxu0
      %v2486 = vadd.f32 %v2421, %v2485
      %v2487 = vpop.f32.mrb[0].mxu0
      %2488 = vmatprep.mubr.bf16.mxu0 %v1850
      %2489 = vmatmul.mubr.bf16.gmra.mrb[0].mxu0 %v1849
      %v2490 = vpop.f32.mrb[0].mxu0
      %v2491 = vadd.f32 %v2426, %v2490
      %v2492 = vpop.f32.mrb[0].mxu0
      %v2493 = vpop.f32.mrb[0].mxu0
      %v2494 = vadd.f32 %v2429, %v2493
      %v2495 = vpop.f32.mrb[0].mxu0
      %2496 = vdwg.mxu0
      %2497 = vmatprep.subr.bf16.mxu0 0
      %2498 = vmatpush1.bf16.msra.mxu0 %v2271
      %2499 = vmatprep.subr.bf16.mxu0 0
      %2500 = vmatpush1.bf16.msra.mxu0 %v2272
      %2501 = vmatprep.subr.bf16.mxu0 0
      %2502 = vmatpush1.bf16.msra.mxu0 %v2273
      %2503 = vmatprep.subr.bf16.mxu0 0
      %2504 = vmatpush1.bf16.msra.mxu0 %v2274
      %2505 = vmatprep.subr.bf16.mxu0 0
      %2506 = vmatpush1.bf16.msra.mxu0 %v2275
      %2507 = vmatprep.subr.bf16.mxu0 0
      %2508 = vmatpush1.bf16.msra.mxu0 %v2276
      %2509 = vmatprep.subr.bf16.mxu0 0
      %2510 = vmatpush1.bf16.msra.mxu0 %v2277
      %2511 = vmatprep.subr.bf16.mxu0 0
      %2512 = vmatpush1.bf16.msra.mxu0 %v2278
      %2513 = vmatprep.subr.bf16.mxu0 0
      %2514 = vmatpush1.bf16.msra.mxu0 %v2279
      %2515 = vmatprep.subr.bf16.mxu0 0
      %2516 = vmatpush1.bf16.msra.mxu0 %v2280
      %2517 = vmatprep.subr.bf16.mxu0 0
      %2518 = vmatpush1.bf16.msra.mxu0 %v2281
      %2519 = vmatprep.subr.bf16.mxu0 0
      %2520 = vmatpush1.bf16.msra.mxu0 %v2282
      %2521 = vmatprep.subr.bf16.mxu0 0
      %2522 = vmatpush1.bf16.msra.mxu0 %v2283
      %2523 = vmatprep.subr.bf16.mxu0 0
      %2524 = vmatpush1.bf16.msra.mxu0 %v2284
      %2525 = vmatprep.subr.bf16.mxu0 0
      %2526 = vmatpush1.bf16.msra.mxu0 %v2285
      %2527 = vmatprep.subr.bf16.mxu0 0
      %2528 = vmatpush1.bf16.msra.mxu0 %v2286
      %2529 = vmatprep.mubr.bf16.mxu0 %v1828
      %2530 = vmatmul.mubr.bf16.gmra.mrb[0].mxu0 %v1827
      %v2531 = vpop.f32.mrb[0].mxu0
      %v2532 = vadd.f32 %v2467, %v2531
      %v2533 = vpop.f32.mrb[0].mxu0
      %v2534 = vpop.f32.mrb[0].mxu0
      %v2535 = vadd.f32 %v2470, %v2534
      %v2536 = vpop.f32.mrb[0].mxu0
      %2537 = vmatprep.mubr.bf16.mxu0 %v1836
      %2538 = vmatmul.mubr.bf16.gmra.mrb[0].mxu0 %v1835
      %v2539 = vpop.f32.mrb[0].mxu0
      %v2540 = vadd.f32 %v2475, %v2539
      %v2541 = vpop.f32.mrb[0].mxu0
      %v2542 = vpop.f32.mrb[0].mxu0
      %v2543 = vadd.f32 %v2478, %v2542
      %v2544 = vpop.f32.mrb[0].mxu0
      %2545 = vmatprep.mubr.bf16.mxu0 %v1844
      %2546 = vmatmul.mubr.bf16.gmra.mrb[0].mxu0 %v1843
      %v2547 = vpop.f32.mrb[0].mxu0
      %v2548 = vadd.f32 %v2483, %v2547
      %v2549 = vpop.f32.mrb[0].mxu0
      %v2550 = vpop.f32.mrb[0].mxu0
      %v2551 = vadd.f32 %v2486, %v2550
      %v2552 = vpop.f32.mrb[0].mxu0
      %2553 = vmatprep.mubr.bf16.mxu0 %v1852
      %2554 = vmatmul.mubr.bf16.gmra.mrb[0].mxu0 %v1851
      %v2555 = vpop.f32.mrb[0].mxu0
      %v2556 = vadd.f32 %v2491, %v2555
      %v2557 = vpop.f32.mrb[0].mxu0
      %v2558 = vpop.f32.mrb[0].mxu0
      %v2559 = vadd.f32 %v2494, %v2558
      %v2560 = vpop.f32.mrb[0].mxu0
      %2561 = vdwg.mxu0
      %2562 = vmatprep.subr.bf16.mxu0 0
      %2563 = vmatpush1.bf16.msra.mxu0 %v2287
      %2564 = vmatprep.subr.bf16.mxu0 0
      %2565 = vmatpush1.bf16.msra.mxu0 %v2288
      %2566 = vmatprep.subr.bf16.mxu0 0
      %2567 = vmatpush1.bf16.msra.mxu0 %v2289
      %2568 = vmatprep.subr.bf16.mxu0 0
      %2569 = vmatpush1.bf16.msra.mxu0 %v2290
      %2570 = vmatprep.subr.bf16.mxu0 0
      %2571 = vmatpush1.bf16.msra.mxu0 %v2291
      %2572 = vmatprep.subr.bf16.mxu0 0
      %2573 = vmatpush1.bf16.msra.mxu0 %v2292
      %2574 = vmatprep.subr.bf16.mxu0 0
      %2575 = vmatpush1.bf16.msra.mxu0 %v2293
      %2576 = vmatprep.subr.bf16.mxu0 0
      %2577 = vmatpush1.bf16.msra.mxu0 %v2294
      %2578 = vmatprep.subr.bf16.mxu0 0
      %2579 = vmatpush1.bf16.msra.mxu0 %v2295
      %2580 = vmatprep.subr.bf16.mxu0 0
      %2581 = vmatpush1.bf16.msra.mxu0 %v2296
      %2582 = vmatprep.subr.bf16.mxu0 0
      %2583 = vmatpush1.bf16.msra.mxu0 %v2297
      %2584 = vmatprep.subr.bf16.mxu0 0
      %2585 = vmatpush1.bf16.msra.mxu0 %v2298
      %2586 = vmatprep.subr.bf16.mxu0 0
      %2587 = vmatpush1.bf16.msra.mxu0 %v2299
      %2588 = vmatprep.subr.bf16.mxu0 0
      %2589 = vmatpush1.bf16.msra.mxu0 %v2300
      %2590 = vmatprep.subr.bf16.mxu0 0
      %2591 = vmatpush1.bf16.msra.mxu0 %v2301
      %2592 = vmatprep.subr.bf16.mxu0 0
      %2593 = vmatpush1.bf16.msra.mxu0 %v2302
      %2594 = vmatprep.mubr.bf16.mxu0 %v1830
      %2595 = vmatmul.mubr.bf16.gmra.mrb[0].mxu0 %v1829
      %v2596 = vpop.f32.mrb[0].mxu0
      %v2597 = vadd.f32 %v2532, %v2596
      %v2598 = vpop.f32.mrb[0].mxu0
      %v2599 = vpop.f32.mrb[0].mxu0
      %v2600 = vadd.f32 %v2535, %v2599
      %v2601 = vpop.f32.mrb[0].mxu0
      %2602 = vmatprep.mubr.bf16.mxu0 %v1838
      %2603 = vmatmul.mubr.bf16.gmra.mrb[0].mxu0 %v1837
      %v2604 = vpop.f32.mrb[0].mxu0
      %v2605 = vadd.f32 %v2540, %v2604
      %v2606 = vpop.f32.mrb[0].mxu0
      %v2607 = vpop.f32.mrb[0].mxu0
      %v2608 = vadd.f32 %v2543, %v2607
      %v2609 = vpop.f32.mrb[0].mxu0
      %2610 = vmatprep.mubr.bf16.mxu0 %v1846
      %2611 = vmatmul.mubr.bf16.gmra.mrb[0].mxu0 %v1845
      %v2612 = vpop.f32.mrb[0].mxu0
      %v2613 = vadd.f32 %v2548, %v2612
      %v2614 = vpop.f32.mrb[0].mxu0
      %v2615 = vpop.f32.mrb[0].mxu0
      %v2616 = vadd.f32 %v2551, %v2615
      %v2617 = vpop.f32.mrb[0].mxu0
      %2618 = vmatprep.mubr.bf16.mxu0 %v1854
      %2619 = vmatmul.mubr.bf16.gmra.mrb[0].mxu0 %v1853
      %v2620 = vpop.f32.mrb[0].mxu0
      %v2621 = vadd.f32 %v2556, %v2620
      %v2622 = vpop.f32.mrb[0].mxu0
      %v2623 = vpop.f32.mrb[0].mxu0
      %v2624 = vadd.f32 %v2559, %v2623
      %v2625 = vpop.f32.mrb[0].mxu0
      %2626 = vdwg.mxu0
      %v2627 = vpack.c.bf16 %v2600, %v2597
      %v2628 = vpack.c.bf16 %v2608, %v2605
      %v2629 = vpack.c.bf16 %v2616, %v2613
      %v2630 = vpack.c.bf16 %v2624, %v2621
      %v2631 = vld [vmem:[%s19] sm:$0xf]
      %v2632 = vld [vmem:[%s19 + $0x4] sm:$0xf]
      %v2635 = vunpack.c.l.b16 %v2631
      %v2636 = vunpack.c.l.b16 %v2632
      %v2637 = vpack.c.b16 %v2636, %v2635
      %vm2639 = vcmask 130048
      %v2641 = vsel %vm2639, %v2627, 0
      %v2644 = vsel %vm2639, %v2628, 0
      %v2647 = vsel %vm2639, %v2629, 0
      %v2650 = vsel %vm2639, %v2630, 0
      %2652 = vmatprep.subr.bf16.mxu0 0
      %2653 = vmatpush1.bf16.msra.mxu0 %v2637
      %2654 = vmatprep.subr.bf16.mxu0 0
      %2655 = vmatpush1.bf16.msra.mxu0 0
      %2656 = vmatprep.subr.bf16.mxu0 0
      %2657 = vmatpush1.bf16.msra.mxu0 0
      %2658 = vmatprep.subr.bf16.mxu0 0
      %2659 = vmatpush1.bf16.msra.mxu0 0
      %2660 = vmatprep.subr.bf16.mxu0 0
      %2661 = vmatpush1.bf16.msra.mxu0 0
      %2662 = vmatprep.subr.bf16.mxu0 0
      %2663 = vmatpush1.bf16.msra.mxu0 0
      %2664 = vmatprep.subr.bf16.mxu0 0
      %2665 = vmatpush1.bf16.msra.mxu0 0
      %2666 = vmatprep.subr.bf16.mxu0 0
      %2667 = vmatpush1.bf16.msra.mxu0 0
      %2668 = vmatprep.subr.bf16.mxu0 0
      %2669 = vmatpush1.bf16.msra.mxu0 0
      %2670 = vmatprep.subr.bf16.mxu0 0
      %2671 = vmatpush1.bf16.msra.mxu0 0
      %2672 = vmatprep.subr.bf16.mxu0 0
      %2673 = vmatpush1.bf16.msra.mxu0 0
      %2674 = vmatprep.subr.bf16.mxu0 0
      %2675 = vmatpush1.bf16.msra.mxu0 0
      %2676 = vmatprep.subr.bf16.mxu0 0
      %2677 = vmatpush1.bf16.msra.mxu0 0
      %2678 = vmatprep.subr.bf16.mxu0 0
      %2679 = vmatpush1.bf16.msra.mxu0 0
      %2680 = vmatprep.subr.bf16.mxu0 0
      %2681 = vmatpush1.bf16.msra.mxu0 0
      %2682 = vmatprep.subr.bf16.mxu0 0
      %2683 = vmatpush1.bf16.msra.mxu0 0
      %2684 = vmatprep.mubr.bf16.mxu0 0
      %2685 = vmatmul.mubr.bf16.gmra.mrb[0].mxu0 %v2641
      %v2686 = vpop.f32.mrb[0].mxu0
      %v2687 = vadd.f32 0.0, %v2686
      %v2688 = vpop.f32.mrb[0].mxu0
      %v2689 = vpop.f32.mrb[0].mxu0
      %v2690 = vadd.f32 0.0, %v2689
      %v2691 = vpop.f32.mrb[0].mxu0
      %2692 = vmatprep.mubr.bf16.mxu0 0
      %2693 = vmatmul.mubr.bf16.gmra.mrb[0].mxu0 %v2644
      %v2694 = vpop.f32.mrb[0].mxu0
      %v2695 = vadd.f32 0.0, %v2694
      %v2696 = vpop.f32.mrb[0].mxu0
      %v2697 = vpop.f32.mrb[0].mxu0
      %v2698 = vadd.f32 0.0, %v2697
      %v2699 = vpop.f32.mrb[0].mxu0
      %2700 = vmatprep.mubr.bf16.mxu0 0
      %2701 = vmatmul.mubr.bf16.gmra.mrb[0].mxu0 %v2647
      %v2702 = vpop.f32.mrb[0].mxu0
      %v2703 = vadd.f32 0.0, %v2702
      %v2704 = vpop.f32.mrb[0].mxu0
      %v2705 = vpop.f32.mrb[0].mxu0
      %v2706 = vadd.f32 0.0, %v2705
      %v2707 = vpop.f32.mrb[0].mxu0
      %2708 = vmatprep.mubr.bf16.mxu0 0
      %2709 = vmatmul.mubr.bf16.gmra.mrb[0].mxu0 %v2650
      %v2710 = vpop.f32.mrb[0].mxu0
      %v2711 = vadd.f32 0.0, %v2710
      %v2712 = vpop.f32.mrb[0].mxu0
      %v2713 = vpop.f32.mrb[0].mxu0
      %v2714 = vadd.f32 0.0, %v2713
      %v2715 = vpop.f32.mrb[0].mxu0
      %2716 = vdwg.mxu0
      %s2717 = scalar_lea.vmem %s19, 8
      %v2718 = vld [vmem:[%s2717] sm:$0xf]
      %v2719 = vld [vmem:[%s2717 + $0x4] sm:$0xf]
      %v2722 = vunpack.c.l.b16 %v2718
      %v2723 = vunpack.c.l.b16 %v2719
      %v2724 = vpack.c.b16 %v2723, %v2722
      %2726 = vmatprep.subr.bf16.mxu0 0
      %2727 = vmatpush1.bf16.msra.mxu0 %v2724
      %2728 = vmatprep.subr.bf16.mxu0 0
      %2729 = vmatpush1.bf16.msra.mxu0 0
      %2730 = vmatprep.subr.bf16.mxu0 0
      %2731 = vmatpush1.bf16.msra.mxu0 0
      %2732 = vmatprep.subr.bf16.mxu0 0
      %2733 = vmatpush1.bf16.msra.mxu0 0
      %2734 = vmatprep.subr.bf16.mxu0 0
      %2735 = vmatpush1.bf16.msra.mxu0 0
      %2736 = vmatprep.subr.bf16.mxu0 0
      %2737 = vmatpush1.bf16.msra.mxu0 0
      %2738 = vmatprep.subr.bf16.mxu0 0
      %2739 = vmatpush1.bf16.msra.mxu0 0
      %2740 = vmatprep.subr.bf16.mxu0 0
      %2741 = vmatpush1.bf16.msra.mxu0 0
      %2742 = vmatprep.subr.bf16.mxu0 0
      %2743 = vmatpush1.bf16.msra.mxu0 0
      %2744 = vmatprep.subr.bf16.mxu0 0
      %2745 = vmatpush1.bf16.msra.mxu0 0
      %2746 = vmatprep.subr.bf16.mxu0 0
      %2747 = vmatpush1.bf16.msra.mxu0 0
      %2748 = vmatprep.subr.bf16.mxu0 0
      %2749 = vmatpush1.bf16.msra.mxu0 0
      %2750 = vmatprep.subr.bf16.mxu0 0
      %2751 = vmatpush1.bf16.msra.mxu0 0
      %2752 = vmatprep.subr.bf16.mxu0 0
      %2753 = vmatpush1.bf16.msra.mxu0 0
      %2754 = vmatprep.subr.bf16.mxu0 0
      %2755 = vmatpush1.bf16.msra.mxu0 0
      %2756 = vmatprep.subr.bf16.mxu0 0
      %2757 = vmatpush1.bf16.msra.mxu0 0
      %2758 = vmatprep.mubr.bf16.mxu0 0
      %2759 = vmatmul.mubr.bf16.gmra.mrb[0].mxu0 %v2641
      %v2760 = vpop.f32.mrb[0].mxu0
      %v2761 = vadd.f32 0.0, %v2760
      %v2762 = vpop.f32.mrb[0].mxu0
      %v2763 = vpop.f32.mrb[0].mxu0
      %v2764 = vadd.f32 0.0, %v2763
      %v2765 = vpop.f32.mrb[0].mxu0
      %2766 = vmatprep.mubr.bf16.mxu0 0
      %2767 = vmatmul.mubr.bf16.gmra.mrb[0].mxu0 %v2644
      %v2768 = vpop.f32.mrb[0].mxu0
      %v2769 = vadd.f32 0.0, %v2768
      %v2770 = vpop.f32.mrb[0].mxu0
      %v2771 = vpop.f32.mrb[0].mxu0
      %v2772 = vadd.f32 0.0, %v2771
      %v2773 = vpop.f32.mrb[0].mxu0
      %2774 = vmatprep.mubr.bf16.mxu0 0
      %2775 = vmatmul.mubr.bf16.gmra.mrb[0].mxu0 %v2647
      %v2776 = vpop.f32.mrb[0].mxu0
      %v2777 = vadd.f32 0.0, %v2776
      %v2778 = vpop.f32.mrb[0].mxu0
      %v2779 = vpop.f32.mrb[0].mxu0
      %v2780 = vadd.f32 0.0, %v2779
      %v2781 = vpop.f32.mrb[0].mxu0
      %2782 = vmatprep.mubr.bf16.mxu0 0
      %2783 = vmatmul.mubr.bf16.gmra.mrb[0].mxu0 %v2650
      %v2784 = vpop.f32.mrb[0].mxu0
      %v2785 = vadd.f32 0.0, %v2784
      %v2786 = vpop.f32.mrb[0].mxu0
      %v2787 = vpop.f32.mrb[0].mxu0
      %v2788 = vadd.f32 0.0, %v2787
      %v2789 = vpop.f32.mrb[0].mxu0
      %2790 = vdwg.mxu0
      %s2791 = scalar_lea.vmem %s19, 16
      %v2792 = vld [vmem:[%s2791] sm:$0xf]
      %v2793 = vld [vmem:[%s2791 + $0x4] sm:$0xf]
      %v2796 = vunpack.c.l.b16 %v2792
      %v2797 = vunpack.c.l.b16 %v2793
      %v2798 = vpack.c.b16 %v2797, %v2796
      %2800 = vmatprep.subr.bf16.mxu0 0
      %2801 = vmatpush1.bf16.msra.mxu0 %v2798
      %2802 = vmatprep.subr.bf16.mxu0 0
      %2803 = vmatpush1.bf16.msra.mxu0 0
      %2804 = vmatprep.subr.bf16.mxu0 0
      %2805 = vmatpush1.bf16.msra.mxu0 0
      %2806 = vmatprep.subr.bf16.mxu0 0
      %2807 = vmatpush1.bf16.msra.mxu0 0
      %2808 = vmatprep.subr.bf16.mxu0 0
      %2809 = vmatpush1.bf16.msra.mxu0 0
      %2810 = vmatprep.subr.bf16.mxu0 0
      %2811 = vmatpush1.bf16.msra.mxu0 0
      %2812 = vmatprep.subr.bf16.mxu0 0
      %2813 = vmatpush1.bf16.msra.mxu0 0
      %2814 = vmatprep.subr.bf16.mxu0 0
      %2815 = vmatpush1.bf16.msra.mxu0 0
      %2816 = vmatprep.subr.bf16.mxu0 0
      %2817 = vmatpush1.bf16.msra.mxu0 0
      %2818 = vmatprep.subr.bf16.mxu0 0
      %2819 = vmatpush1.bf16.msra.mxu0 0
      %2820 = vmatprep.subr.bf16.mxu0 0
      %2821 = vmatpush1.bf16.msra.mxu0 0
      %2822 = vmatprep.subr.bf16.mxu0 0
      %2823 = vmatpush1.bf16.msra.mxu0 0
      %2824 = vmatprep.subr.bf16.mxu0 0
      %2825 = vmatpush1.bf16.msra.mxu0 0
      %2826 = vmatprep.subr.bf16.mxu0 0
      %2827 = vmatpush1.bf16.msra.mxu0 0
      %2828 = vmatprep.subr.bf16.mxu0 0
      %2829 = vmatpush1.bf16.msra.mxu0 0
      %2830 = vmatprep.subr.bf16.mxu0 0
      %2831 = vmatpush1.bf16.msra.mxu0 0
      %2832 = vmatprep.mubr.bf16.mxu0 0
      %2833 = vmatmul.mubr.bf16.gmra.mrb[0].mxu0 %v2641
      %v2834 = vpop.f32.mrb[0].mxu0
      %v2835 = vadd.f32 0.0, %v2834
      %v2836 = vpop.f32.mrb[0].mxu0
      %v2837 = vpop.f32.mrb[0].mxu0
      %v2838 = vadd.f32 0.0, %v2837
      %v2839 = vpop.f32.mrb[0].mxu0
      %2840 = vmatprep.mubr.bf16.mxu0 0
      %2841 = vmatmul.mubr.bf16.gmra.mrb[0].mxu0 %v2644
      %v2842 = vpop.f32.mrb[0].mxu0
      %v2843 = vadd.f32 0.0, %v2842
      %v2844 = vpop.f32.mrb[0].mxu0
      %v2845 = vpop.f32.mrb[0].mxu0
      %v2846 = vadd.f32 0.0, %v2845
      %v2847 = vpop.f32.mrb[0].mxu0
      %2848 = vmatprep.mubr.bf16.mxu0 0
      %2849 = vmatmul.mubr.bf16.gmra.mrb[0].mxu0 %v2647
      %v2850 = vpop.f32.mrb[0].mxu0
      %v2851 = vadd.f32 0.0, %v2850
      %v2852 = vpop.f32.mrb[0].mxu0
      %v2853 = vpop.f32.mrb[0].mxu0
      %v2854 = vadd.f32 0.0, %v2853
      %v2855 = vpop.f32.mrb[0].mxu0
      %2856 = vmatprep.mubr.bf16.mxu0 0
      %2857 = vmatmul.mubr.bf16.gmra.mrb[0].mxu0 %v2650
      %v2858 = vpop.f32.mrb[0].mxu0
      %v2859 = vadd.f32 0.0, %v2858
      %v2860 = vpop.f32.mrb[0].mxu0
      %v2861 = vpop.f32.mrb[0].mxu0
      %v2862 = vadd.f32 0.0, %v2861
      %v2863 = vpop.f32.mrb[0].mxu0
      %2864 = vdwg.mxu0
      %s2865 = scalar_lea.vmem %s19, 24
      %v2866 = vld [vmem:[%s2865] sm:$0xf]
      %v2867 = vld [vmem:[%s2865 + $0x4] sm:$0xf]
      %v2870 = vunpack.c.l.b16 %v2866
      %v2871 = vunpack.c.l.b16 %v2867
      %v2872 = vpack.c.b16 %v2871, %v2870
      %2874 = vmatprep.subr.bf16.mxu0 0
      %2875 = vmatpush1.bf16.msra.mxu0 %v2872
      %2876 = vmatprep.subr.bf16.mxu0 0
      %2877 = vmatpush1.bf16.msra.mxu0 0
      %2878 = vmatprep.subr.bf16.mxu0 0
      %2879 = vmatpush1.bf16.msra.mxu0 0
      %2880 = vmatprep.subr.bf16.mxu0 0
      %2881 = vmatpush1.bf16.msra.mxu0 0
      %2882 = vmatprep.subr.bf16.mxu0 0
      %2883 = vmatpush1.bf16.msra.mxu0 0
      %2884 = vmatprep.subr.bf16.mxu0 0
      %2885 = vmatpush1.bf16.msra.mxu0 0
      %2886 = vmatprep.subr.bf16.mxu0 0
      %2887 = vmatpush1.bf16.msra.mxu0 0
      %2888 = vmatprep.subr.bf16.mxu0 0
      %2889 = vmatpush1.bf16.msra.mxu0 0
      %2890 = vmatprep.subr.bf16.mxu0 0
      %2891 = vmatpush1.bf16.msra.mxu0 0
      %2892 = vmatprep.subr.bf16.mxu0 0
      %2893 = vmatpush1.bf16.msra.mxu0 0
      %2894 = vmatprep.subr.bf16.mxu0 0
      %2895 = vmatpush1.bf16.msra.mxu0 0
      %2896 = vmatprep.subr.bf16.mxu0 0
      %2897 = vmatpush1.bf16.msra.mxu0 0
      %2898 = vmatprep.subr.bf16.mxu0 0
      %2899 = vmatpush1.bf16.msra.mxu0 0
      %2900 = vmatprep.subr.bf16.mxu0 0
      %2901 = vmatpush1.bf16.msra.mxu0 0
      %2902 = vmatprep.subr.bf16.mxu0 0
      %2903 = vmatpush1.bf16.msra.mxu0 0
      %2904 = vmatprep.subr.bf16.mxu0 0
      %2905 = vmatpush1.bf16.msra.mxu0 0
      %2906 = vmatprep.mubr.bf16.mxu0 0
      %2907 = vmatmul.mubr.bf16.gmra.mrb[0].mxu0 %v2641
      %v2908 = vpop.f32.mrb[0].mxu0
      %v2909 = vadd.f32 0.0, %v2908
      %v2910 = vpop.f32.mrb[0].mxu0
      %v2911 = vpop.f32.mrb[0].mxu0
      %v2912 = vadd.f32 0.0, %v2911
      %v2913 = vpop.f32.mrb[0].mxu0
      %2914 = vmatprep.mubr.bf16.mxu0 0
      %2915 = vmatmul.mubr.bf16.gmra.mrb[0].mxu0 %v2644
      %v2916 = vpop.f32.mrb[0].mxu0
      %v2917 = vadd.f32 0.0, %v2916
      %v2918 = vpop.f32.mrb[0].mxu0
      %v2919 = vpop.f32.mrb[0].mxu0
      %v2920 = vadd.f32 0.0, %v2919
      %v2921 = vpop.f32.mrb[0].mxu0
      %2922 = vmatprep.mubr.bf16.mxu0 0
      %2923 = vmatmul.mubr.bf16.gmra.mrb[0].mxu0 %v2647
      %v2924 = vpop.f32.mrb[0].mxu0
      %v2925 = vadd.f32 0.0, %v2924
      %v2926 = vpop.f32.mrb[0].mxu0
      %v2927 = vpop.f32.mrb[0].mxu0
      %v2928 = vadd.f32 0.0, %v2927
      %v2929 = vpop.f32.mrb[0].mxu0
      %2930 = vmatprep.mubr.bf16.mxu0 0
      %2931 = vmatmul.mubr.bf16.gmra.mrb[0].mxu0 %v2650
      %v2932 = vpop.f32.mrb[0].mxu0
      %v2933 = vadd.f32 0.0, %v2932
      %v2934 = vpop.f32.mrb[0].mxu0
      %v2935 = vpop.f32.mrb[0].mxu0
      %v2936 = vadd.f32 0.0, %v2935
      %v2937 = vpop.f32.mrb[0].mxu0
      %2938 = vdwg.mxu0
      %s2939 = scalar_lea.vmem %s19, 32
      %v2940 = vld [vmem:[%s2939] sm:$0xf]
      %v2941 = vld [vmem:[%s2939 + $0x4] sm:$0xf]
      %v2944 = vunpack.c.l.b16 %v2940
      %v2945 = vunpack.c.l.b16 %v2941
      %v2946 = vpack.c.b16 %v2945, %v2944
      %2948 = vmatprep.subr.bf16.mxu0 0
      %2949 = vmatpush1.bf16.msra.mxu0 %v2946
      %2950 = vmatprep.subr.bf16.mxu0 0
      %2951 = vmatpush1.bf16.msra.mxu0 0
      %2952 = vmatprep.subr.bf16.mxu0 0
      %2953 = vmatpush1.bf16.msra.mxu0 0
      %2954 = vmatprep.subr.bf16.mxu0 0
      %2955 = vmatpush1.bf16.msra.mxu0 0
      %2956 = vmatprep.subr.bf16.mxu0 0
      %2957 = vmatpush1.bf16.msra.mxu0 0
      %2958 = vmatprep.subr.bf16.mxu0 0
      %2959 = vmatpush1.bf16.msra.mxu0 0
      %2960 = vmatprep.subr.bf16.mxu0 0
      %2961 = vmatpush1.bf16.msra.mxu0 0
      %2962 = vmatprep.subr.bf16.mxu0 0
      %2963 = vmatpush1.bf16.msra.mxu0 0
      %2964 = vmatprep.subr.bf16.mxu0 0
      %2965 = vmatpush1.bf16.msra.mxu0 0
      %2966 = vmatprep.subr.bf16.mxu0 0
      %2967 = vmatpush1.bf16.msra.mxu0 0
      %2968 = vmatprep.subr.bf16.mxu0 0
      %2969 = vmatpush1.bf16.msra.mxu0 0
      %2970 = vmatprep.subr.bf16.mxu0 0
      %2971 = vmatpush1.bf16.msra.mxu0 0
      %2972 = vmatprep.subr.bf16.mxu0 0
      %2973 = vmatpush1.bf16.msra.mxu0 0
      %2974 = vmatprep.subr.bf16.mxu0 0
      %2975 = vmatpush1.bf16.msra.mxu0 0
      %2976 = vmatprep.subr.bf16.mxu0 0
      %2977 = vmatpush1.bf16.msra.mxu0 0
      %2978 = vmatprep.subr.bf16.mxu0 0
      %2979 = vmatpush1.bf16.msra.mxu0 0
      %2980 = vmatprep.mubr.bf16.mxu0 0
      %2981 = vmatmul.mubr.bf16.gmra.mrb[0].mxu0 %v2641
      %v2982 = vpop.f32.mrb[0].mxu0
      %v2983 = vadd.f32 0.0, %v2982
      %v2984 = vpop.f32.mrb[0].mxu0
      %v2985 = vpop.f32.mrb[0].mxu0
      %v2986 = vadd.f32 0.0, %v2985
      %v2987 = vpop.f32.mrb[0].mxu0
      %2988 = vmatprep.mubr.bf16.mxu0 0
      %2989 = vmatmul.mubr.bf16.gmra.mrb[0].mxu0 %v2644
      %v2990 = vpop.f32.mrb[0].mxu0
      %v2991 = vadd.f32 0.0, %v2990
      %v2992 = vpop.f32.mrb[0].mxu0
      %v2993 = vpop.f32.mrb[0].mxu0
      %v2994 = vadd.f32 0.0, %v2993
      %v2995 = vpop.f32.mrb[0].mxu0
      %2996 = vmatprep.mubr.bf16.mxu0 0
      %2997 = vmatmul.mubr.bf16.gmra.mrb[0].mxu0 %v2647
      %v2998 = vpop.f32.mrb[0].mxu0
      %v2999 = vadd.f32 0.0, %v2998
      %v3000 = vpop.f32.mrb[0].mxu0
      %v3001 = vpop.f32.mrb[0].mxu0
      %v3002 = vadd.f32 0.0, %v3001
      %v3003 = vpop.f32.mrb[0].mxu0
      %3004 = vmatprep.mubr.bf16.mxu0 0
      %3005 = vmatmul.mubr.bf16.gmra.mrb[0].mxu0 %v2650
      %v3006 = vpop.f32.mrb[0].mxu0
      %v3007 = vadd.f32 0.0, %v3006
      %v3008 = vpop.f32.mrb[0].mxu0
      %v3009 = vpop.f32.mrb[0].mxu0
      %v3010 = vadd.f32 0.0, %v3009
      %v3011 = vpop.f32.mrb[0].mxu0
      %3012 = vdwg.mxu0
      %s3013 = scalar_lea.vmem %s19, 40
      %v3014 = vld [vmem:[%s3013] sm:$0xf]
      %v3015 = vld [vmem:[%s3013 + $0x4] sm:$0xf]
      %v3018 = vunpack.c.l.b16 %v3014
      %v3019 = vunpack.c.l.b16 %v3015
      %v3020 = vpack.c.b16 %v3019, %v3018
      %3022 = vmatprep.subr.bf16.mxu0 0
      %3023 = vmatpush1.bf16.msra.mxu0 %v3020
      %3024 = vmatprep.subr.bf16.mxu0 0
      %3025 = vmatpush1.bf16.msra.mxu0 0
      %3026 = vmatprep.subr.bf16.mxu0 0
      %3027 = vmatpush1.bf16.msra.mxu0 0
      %3028 = vmatprep.subr.bf16.mxu0 0
      %3029 = vmatpush1.bf16.msra.mxu0 0
      %3030 = vmatprep.subr.bf16.mxu0 0
      %3031 = vmatpush1.bf16.msra.mxu0 0
      %3032 = vmatprep.subr.bf16.mxu0 0
      %3033 = vmatpush1.bf16.msra.mxu0 0
      %3034 = vmatprep.subr.bf16.mxu0 0
      %3035 = vmatpush1.bf16.msra.mxu0 0
      %3036 = vmatprep.subr.bf16.mxu0 0
      %3037 = vmatpush1.bf16.msra.mxu0 0
      %3038 = vmatprep.subr.bf16.mxu0 0
      %3039 = vmatpush1.bf16.msra.mxu0 0
      %3040 = vmatprep.subr.bf16.mxu0 0
      %3041 = vmatpush1.bf16.msra.mxu0 0
      %3042 = vmatprep.subr.bf16.mxu0 0
      %3043 = vmatpush1.bf16.msra.mxu0 0
      %3044 = vmatprep.subr.bf16.mxu0 0
      %3045 = vmatpush1.bf16.msra.mxu0 0
      %3046 = vmatprep.subr.bf16.mxu0 0
      %3047 = vmatpush1.bf16.msra.mxu0 0
      %3048 = vmatprep.subr.bf16.mxu0 0
      %3049 = vmatpush1.bf16.msra.mxu0 0
      %3050 = vmatprep.subr.bf16.mxu0 0
      %3051 = vmatpush1.bf16.msra.mxu0 0
      %3052 = vmatprep.subr.bf16.mxu0 0
      %3053 = vmatpush1.bf16.msra.mxu0 0
      %3054 = vmatprep.mubr.bf16.mxu0 0
      %3055 = vmatmul.mubr.bf16.gmra.mrb[0].mxu0 %v2641
      %v3056 = vpop.f32.mrb[0].mxu0
      %v3057 = vadd.f32 0.0, %v3056
      %v3058 = vpop.f32.mrb[0].mxu0
      %v3059 = vpop.f32.mrb[0].mxu0
      %v3060 = vadd.f32 0.0, %v3059
      %v3061 = vpop.f32.mrb[0].mxu0
      %3062 = vmatprep.mubr.bf16.mxu0 0
      %3063 = vmatmul.mubr.bf16.gmra.mrb[0].mxu0 %v2644
      %v3064 = vpop.f32.mrb[0].mxu0
      %v3065 = vadd.f32 0.0, %v3064
      %v3066 = vpop.f32.mrb[0].mxu0
      %v3067 = vpop.f32.mrb[0].mxu0
      %v3068 = vadd.f32 0.0, %v3067
      %v3069 = vpop.f32.mrb[0].mxu0
      %3070 = vmatprep.mubr.bf16.mxu0 0
      %3071 = vmatmul.mubr.bf16.gmra.mrb[0].mxu0 %v2647
      %v3072 = vpop.f32.mrb[0].mxu0
      %v3073 = vadd.f32 0.0, %v3072
      %v3074 = vpop.f32.mrb[0].mxu0
      %v3075 = vpop.f32.mrb[0].mxu0
      %v3076 = vadd.f32 0.0, %v3075
      %v3077 = vpop.f32.mrb[0].mxu0
      %3078 = vmatprep.mubr.bf16.mxu0 0
      %3079 = vmatmul.mubr.bf16.gmra.mrb[0].mxu0 %v2650
      %v3080 = vpop.f32.mrb[0].mxu0
      %v3081 = vadd.f32 0.0, %v3080
      %v3082 = vpop.f32.mrb[0].mxu0
      %v3083 = vpop.f32.mrb[0].mxu0
      %v3084 = vadd.f32 0.0, %v3083
      %v3085 = vpop.f32.mrb[0].mxu0
      %3086 = vdwg.mxu0
      %s3087 = scalar_lea.vmem %s19, 48
      %v3088 = vld [vmem:[%s3087] sm:$0xf]
      %v3089 = vld [vmem:[%s3087 + $0x4] sm:$0xf]
      %v3092 = vunpack.c.l.b16 %v3088
      %v3093 = vunpack.c.l.b16 %v3089
      %v3094 = vpack.c.b16 %v3093, %v3092
      %3096 = vmatprep.subr.bf16.mxu0 0
      %3097 = vmatpush1.bf16.msra.mxu0 %v3094
      %3098 = vmatprep.subr.bf16.mxu0 0
      %3099 = vmatpush1.bf16.msra.mxu0 0
      %3100 = vmatprep.subr.bf16.mxu0 0
      %3101 = vmatpush1.bf16.msra.mxu0 0
      %3102 = vmatprep.subr.bf16.mxu0 0
      %3103 = vmatpush1.bf16.msra.mxu0 0
      %3104 = vmatprep.subr.bf16.mxu0 0
      %3105 = vmatpush1.bf16.msra.mxu0 0
      %3106 = vmatprep.subr.bf16.mxu0 0
      %3107 = vmatpush1.bf16.msra.mxu0 0
      %3108 = vmatprep.subr.bf16.mxu0 0
      %3109 = vmatpush1.bf16.msra.mxu0 0
      %3110 = vmatprep.subr.bf16.mxu0 0
      %3111 = vmatpush1.bf16.msra.mxu0 0
      %3112 = vmatprep.subr.bf16.mxu0 0
      %3113 = vmatpush1.bf16.msra.mxu0 0
      %3114 = vmatprep.subr.bf16.mxu0 0
      %3115 = vmatpush1.bf16.msra.mxu0 0
      %3116 = vmatprep.subr.bf16.mxu0 0
      %3117 = vmatpush1.bf16.msra.mxu0 0
      %3118 = vmatprep.subr.bf16.mxu0 0
      %3119 = vmatpush1.bf16.msra.mxu0 0
      %3120 = vmatprep.subr.bf16.mxu0 0
      %3121 = vmatpush1.bf16.msra.mxu0 0
      %3122 = vmatprep.subr.bf16.mxu0 0
      %3123 = vmatpush1.bf16.msra.mxu0 0
      %3124 = vmatprep.subr.bf16.mxu0 0
      %3125 = vmatpush1.bf16.msra.mxu0 0
      %3126 = vmatprep.subr.bf16.mxu0 0
      %3127 = vmatpush1.bf16.msra.mxu0 0
      %3128 = vmatprep.mubr.bf16.mxu0 0
      %3129 = vmatmul.mubr.bf16.gmra.mrb[0].mxu0 %v2641
      %v3130 = vpop.f32.mrb[0].mxu0
      %v3131 = vadd.f32 0.0, %v3130
      %v3132 = vpop.f32.mrb[0].mxu0
      %v3133 = vpop.f32.mrb[0].mxu0
      %v3134 = vadd.f32 0.0, %v3133
      %v3135 = vpop.f32.mrb[0].mxu0
      %3136 = vmatprep.mubr.bf16.mxu0 0
      %3137 = vmatmul.mubr.bf16.gmra.mrb[0].mxu0 %v2644
      %v3138 = vpop.f32.mrb[0].mxu0
      %v3139 = vadd.f32 0.0, %v3138
      %v3140 = vpop.f32.mrb[0].mxu0
      %v3141 = vpop.f32.mrb[0].mxu0
      %v3142 = vadd.f32 0.0, %v3141
      %v3143 = vpop.f32.mrb[0].mxu0
      %3144 = vmatprep.mubr.bf16.mxu0 0
      %3145 = vmatmul.mubr.bf16.gmra.mrb[0].mxu0 %v2647
      %v3146 = vpop.f32.mrb[0].mxu0
      %v3147 = vadd.f32 0.0, %v3146
      %v3148 = vpop.f32.mrb[0].mxu0
      %v3149 = vpop.f32.mrb[0].mxu0
      %v3150 = vadd.f32 0.0, %v3149
      %v3151 = vpop.f32.mrb[0].mxu0
      %3152 = vmatprep.mubr.bf16.mxu0 0
      %3153 = vmatmul.mubr.bf16.gmra.mrb[0].mxu0 %v2650
      %v3154 = vpop.f32.mrb[0].mxu0
      %v3155 = vadd.f32 0.0, %v3154
      %v3156 = vpop.f32.mrb[0].mxu0
      %v3157 = vpop.f32.mrb[0].mxu0
      %v3158 = vadd.f32 0.0, %v3157
      %v3159 = vpop.f32.mrb[0].mxu0
      %3160 = vdwg.mxu0
      %s3161 = scalar_lea.vmem %s19, 56
      %v3162 = vld [vmem:[%s3161] sm:$0xf]
      %v3163 = vld [vmem:[%s3161 + $0x4] sm:$0xf]
      %v3166 = vunpack.c.l.b16 %v3162
      %v3167 = vunpack.c.l.b16 %v3163
      %v3168 = vpack.c.b16 %v3167, %v3166
      %3170 = vmatprep.subr.bf16.mxu0 0
      %3171 = vmatpush1.bf16.msra.mxu0 %v3168
      %3172 = vmatprep.subr.bf16.mxu0 0
      %3173 = vmatpush1.bf16.msra.mxu0 0
      %3174 = vmatprep.subr.bf16.mxu0 0
      %3175 = vmatpush1.bf16.msra.mxu0 0
      %3176 = vmatprep.subr.bf16.mxu0 0
      %3177 = vmatpush1.bf16.msra.mxu0 0
      %3178 = vmatprep.subr.bf16.mxu0 0
      %3179 = vmatpush1.bf16.msra.mxu0 0
      %3180 = vmatprep.subr.bf16.mxu0 0
      %3181 = vmatpush1.bf16.msra.mxu0 0
      %3182 = vmatprep.subr.bf16.mxu0 0
      %3183 = vmatpush1.bf16.msra.mxu0 0
      %3184 = vmatprep.subr.bf16.mxu0 0
      %3185 = vmatpush1.bf16.msra.mxu0 0
      %3186 = vmatprep.subr.bf16.mxu0 0
      %3187 = vmatpush1.bf16.msra.mxu0 0
      %3188 = vmatprep.subr.bf16.mxu0 0
      %3189 = vmatpush1.bf16.msra.mxu0 0
      %3190 = vmatprep.subr.bf16.mxu0 0
      %3191 = vmatpush1.bf16.msra.mxu0 0
      %3192 = vmatprep.subr.bf16.mxu0 0
      %3193 = vmatpush1.bf16.msra.mxu0 0
      %3194 = vmatprep.subr.bf16.mxu0 0
      %3195 = vmatpush1.bf16.msra.mxu0 0
      %3196 = vmatprep.subr.bf16.mxu0 0
      %3197 = vmatpush1.bf16.msra.mxu0 0
      %3198 = vmatprep.subr.bf16.mxu0 0
      %3199 = vmatpush1.bf16.msra.mxu0 0
      %3200 = vmatprep.subr.bf16.mxu0 0
      %3201 = vmatpush1.bf16.msra.mxu0 0
      %3202 = vmatprep.mubr.bf16.mxu0 0
      %3203 = vmatmul.mubr.bf16.gmra.mrb[0].mxu0 %v2641
      %v3204 = vpop.f32.mrb[0].mxu0
      %v3205 = vadd.f32 0.0, %v3204
      %v3206 = vpop.f32.mrb[0].mxu0
      %v3207 = vpop.f32.mrb[0].mxu0
      %v3208 = vadd.f32 0.0, %v3207
      %v3209 = vpop.f32.mrb[0].mxu0
      %3210 = vmatprep.mubr.bf16.mxu0 0
      %3211 = vmatmul.mubr.bf16.gmra.mrb[0].mxu0 %v2644
      %v3212 = vpop.f32.mrb[0].mxu0
      %v3213 = vadd.f32 0.0, %v3212
      %v3214 = vpop.f32.mrb[0].mxu0
      %v3215 = vpop.f32.mrb[0].mxu0
      %v3216 = vadd.f32 0.0, %v3215
      %v3217 = vpop.f32.mrb[0].mxu0
      %3218 = vmatprep.mubr.bf16.mxu0 0
      %3219 = vmatmul.mubr.bf16.gmra.mrb[0].mxu0 %v2647
      %v3220 = vpop.f32.mrb[0].mxu0
      %v3221 = vadd.f32 0.0, %v3220
      %v3222 = vpop.f32.mrb[0].mxu0
      %v3223 = vpop.f32.mrb[0].mxu0
      %v3224 = vadd.f32 0.0, %v3223
      %v3225 = vpop.f32.mrb[0].mxu0
      %3226 = vmatprep.mubr.bf16.mxu0 0
      %3227 = vmatmul.mubr.bf16.gmra.mrb[0].mxu0 %v2650
      %v3228 = vpop.f32.mrb[0].mxu0
      %v3229 = vadd.f32 0.0, %v3228
      %v3230 = vpop.f32.mrb[0].mxu0
      %v3231 = vpop.f32.mrb[0].mxu0
      %v3232 = vadd.f32 0.0, %v3231
      %v3233 = vpop.f32.mrb[0].mxu0
      %3234 = vdwg.mxu0
      %s3235 = scalar_lea.vmem %s19, 64
      %v3236 = vld [vmem:[%s3235] sm:$0xf]
      %v3237 = vld [vmem:[%s3235 + $0x4] sm:$0xf]
      %v3240 = vunpack.c.l.b16 %v3236
      %v3241 = vunpack.c.l.b16 %v3237
      %v3242 = vpack.c.b16 %v3241, %v3240
      %3244 = vmatprep.subr.bf16.mxu0 0
      %3245 = vmatpush1.bf16.msra.mxu0 %v3242
      %3246 = vmatprep.subr.bf16.mxu0 0
      %3247 = vmatpush1.bf16.msra.mxu0 0
      %3248 = vmatprep.subr.bf16.mxu0 0
      %3249 = vmatpush1.bf16.msra.mxu0 0
      %3250 = vmatprep.subr.bf16.mxu0 0
      %3251 = vmatpush1.bf16.msra.mxu0 0
      %3252 = vmatprep.subr.bf16.mxu0 0
      %3253 = vmatpush1.bf16.msra.mxu0 0
      %3254 = vmatprep.subr.bf16.mxu0 0
      %3255 = vmatpush1.bf16.msra.mxu0 0
      %3256 = vmatprep.subr.bf16.mxu0 0
      %3257 = vmatpush1.bf16.msra.mxu0 0
      %3258 = vmatprep.subr.bf16.mxu0 0
      %3259 = vmatpush1.bf16.msra.mxu0 0
      %3260 = vmatprep.subr.bf16.mxu0 0
      %3261 = vmatpush1.bf16.msra.mxu0 0
      %3262 = vmatprep.subr.bf16.mxu0 0
      %3263 = vmatpush1.bf16.msra.mxu0 0
      %3264 = vmatprep.subr.bf16.mxu0 0
      %3265 = vmatpush1.bf16.msra.mxu0 0
      %3266 = vmatprep.subr.bf16.mxu0 0
      %3267 = vmatpush1.bf16.msra.mxu0 0
      %3268 = vmatprep.subr.bf16.mxu0 0
      %3269 = vmatpush1.bf16.msra.mxu0 0
      %3270 = vmatprep.subr.bf16.mxu0 0
      %3271 = vmatpush1.bf16.msra.mxu0 0
      %3272 = vmatprep.subr.bf16.mxu0 0
      %3273 = vmatpush1.bf16.msra.mxu0 0
      %3274 = vmatprep.subr.bf16.mxu0 0
      %3275 = vmatpush1.bf16.msra.mxu0 0
      %3276 = vmatprep.mubr.bf16.mxu0 0
      %3277 = vmatmul.mubr.bf16.gmra.mrb[0].mxu0 %v2641
      %v3278 = vpop.f32.mrb[0].mxu0
      %v3279 = vadd.f32 0.0, %v3278
      %v3280 = vpop.f32.mrb[0].mxu0
      %v3281 = vpop.f32.mrb[0].mxu0
      %v3282 = vadd.f32 0.0, %v3281
      %v3283 = vpop.f32.mrb[0].mxu0
      %3284 = vmatprep.mubr.bf16.mxu0 0
      %3285 = vmatmul.mubr.bf16.gmra.mrb[0].mxu0 %v2644
      %v3286 = vpop.f32.mrb[0].mxu0
      %v3287 = vadd.f32 0.0, %v3286
      %v3288 = vpop.f32.mrb[0].mxu0
      %v3289 = vpop.f32.mrb[0].mxu0
      %v3290 = vadd.f32 0.0, %v3289
      %v3291 = vpop.f32.mrb[0].mxu0
      %3292 = vmatprep.mubr.bf16.mxu0 0
      %3293 = vmatmul.mubr.bf16.gmra.mrb[0].mxu0 %v2647
      %v3294 = vpop.f32.mrb[0].mxu0
      %v3295 = vadd.f32 0.0, %v3294
      %v3296 = vpop.f32.mrb[0].mxu0
      %v3297 = vpop.f32.mrb[0].mxu0
      %v3298 = vadd.f32 0.0, %v3297
      %v3299 = vpop.f32.mrb[0].mxu0
      %3300 = vmatprep.mubr.bf16.mxu0 0
      %3301 = vmatmul.mubr.bf16.gmra.mrb[0].mxu0 %v2650
      %v3302 = vpop.f32.mrb[0].mxu0
      %v3303 = vadd.f32 0.0, %v3302
      %v3304 = vpop.f32.mrb[0].mxu0
      %v3305 = vpop.f32.mrb[0].mxu0
      %v3306 = vadd.f32 0.0, %v3305
      %v3307 = vpop.f32.mrb[0].mxu0
      %3308 = vdwg.mxu0
      %v3309 = vpack.c.bf16 %v2690, %v2687
      %v3310 = vpack.c.bf16 %v2698, %v2695
      %v3311 = vpack.c.bf16 %v2706, %v2703
      %v3312 = vpack.c.bf16 %v2714, %v2711
      %v3313 = vpack.c.bf16 %v2764, %v2761
      %v3314 = vpack.c.bf16 %v2772, %v2769
      %v3315 = vpack.c.bf16 %v2780, %v2777
      %v3316 = vpack.c.bf16 %v2788, %v2785
      %v3317 = vpack.c.bf16 %v2838, %v2835
      %v3318 = vpack.c.bf16 %v2846, %v2843
      %v3319 = vpack.c.bf16 %v2854, %v2851
      %v3320 = vpack.c.bf16 %v2862, %v2859
      %v3321 = vpack.c.bf16 %v2912, %v2909
      %v3322 = vpack.c.bf16 %v2920, %v2917
      %v3323 = vpack.c.bf16 %v2928, %v2925
      %v3324 = vpack.c.bf16 %v2936, %v2933
      %v3325 = vpack.c.bf16 %v2986, %v2983
      %v3326 = vpack.c.bf16 %v2994, %v2991
      %v3327 = vpack.c.bf16 %v3002, %v2999
      %v3328 = vpack.c.bf16 %v3010, %v3007
      %v3329 = vpack.c.bf16 %v3060, %v3057
      %v3330 = vpack.c.bf16 %v3068, %v3065
      %v3331 = vpack.c.bf16 %v3076, %v3073
      %v3332 = vpack.c.bf16 %v3084, %v3081
      %v3333 = vpack.c.bf16 %v3134, %v3131
      %v3334 = vpack.c.bf16 %v3142, %v3139
      %v3335 = vpack.c.bf16 %v3150, %v3147
      %v3336 = vpack.c.bf16 %v3158, %v3155
      %v3337 = vpack.c.bf16 %v3208, %v3205
      %v3338 = vpack.c.bf16 %v3216, %v3213
      %v3339 = vpack.c.bf16 %v3224, %v3221
      %v3340 = vpack.c.bf16 %v3232, %v3229
      %v3341 = vpack.c.bf16 %v3282, %v3279
      %v3342 = vpack.c.bf16 %v3290, %v3287
      %v3343 = vpack.c.bf16 %v3298, %v3295
      %v3344 = vpack.c.bf16 %v3306, %v3303
      %v3345 = vld [vmem:[%s21] sm:$0xff]
      %v3346 = vld [vmem:[%s21 + $0x8] sm:$0xff]
      %v3347 = vld [vmem:[%s21 + $0x10] sm:$0xf]
      %v3348 = vld [vmem:[%s21 + $0x14] sm:$0xff]
      %v3349 = vld [vmem:[%s21 + $0x1c] sm:$0xff]
      %v3350 = vld [vmem:[%s21 + $0x24] sm:$0xf]
      %v3351 = vld [vmem:[%s21 + $0x28] sm:$0xff]
      %v3352 = vld [vmem:[%s21 + $0x30] sm:$0xff]
      %v3353 = vld [vmem:[%s21 + $0x38] sm:$0xf]
      %v3354 = vld [vmem:[%s21 + $0x3c] sm:$0xff]
      %v3355 = vld [vmem:[%s21 + $0x44] sm:$0xff]
      %v3356 = vld [vmem:[%s21 + $0x4c] sm:$0xf]
      %v3357 = vld [vmem:[%s23] sm:$0xff]
      %v3358 = vld [vmem:[%s23 + $0x8] sm:$0xff]
      %v3359 = vld [vmem:[%s23 + $0x10] sm:$0xff]
      %v3360 = vld [vmem:[%s23 + $0x18] sm:$0xff]
      %3362 = vset.pattern.permute.xlu0 0
      %3363 = vperm.xlu0 %3362, %v3357
      %v3364 = vpop.permute.xlu0 %3363
      %3367 = vset.pattern.permute.xlu0 0
      %3368 = vperm.xlu0 %3367, %v3358
      %v3369 = vpop.permute.xlu0 %3368
      %3372 = vset.pattern.permute.xlu0 0
      %3373 = vperm.xlu0 %3372, %v3359
      %v3374 = vpop.permute.xlu0 %3373
      %3377 = vset.pattern.permute.xlu0 0
      %3378 = vperm.xlu0 %3377, %v3360
      %v3379 = vpop.permute.xlu0 %3378
      %v3393 = vunpack.c.l.b16 %v3345
      %v3394 = vunpack.c.h.b16 %v3345
      %v3395 = vunpack.c.l.b16 %v3346
      %v3396 = vunpack.c.h.b16 %v3346
      %v3397 = vunpack.c.l.b16 %v3347
      %v3398 = vunpack.c.l.b16 %v3348
      %v3399 = vunpack.c.h.b16 %v3348
      %v3400 = vunpack.c.l.b16 %v3349
      %v3401 = vunpack.c.h.b16 %v3349
      %v3402 = vunpack.c.l.b16 %v3350
      %v3403 = vunpack.c.l.b16 %v3351
      %v3404 = vunpack.c.h.b16 %v3351
      %v3405 = vunpack.c.l.b16 %v3352
      %v3406 = vunpack.c.h.b16 %v3352
      %v3407 = vunpack.c.l.b16 %v3353
      %v3408 = vunpack.c.l.b16 %v3354
      %v3409 = vunpack.c.h.b16 %v3354
      %v3410 = vunpack.c.l.b16 %v3355
      %v3411 = vunpack.c.h.b16 %v3355
      %v3412 = vunpack.c.l.b16 %v3356
      %v3413 = vpack.c.b16 %v3398, %v3393
      %v3414 = vpack.c.b16 %v3399, %v3394
      %v3415 = vpack.c.b16 %v3400, %v3395
      %v3416 = vpack.c.b16 %v3401, %v3396
      %v3417 = vpack.c.b16 %v3402, %v3397
      %v3418 = vpack.c.b16 %v3408, %v3403
      %v3419 = vpack.c.b16 %v3409, %v3404
      %v3420 = vpack.c.b16 %v3410, %v3405
      %v3421 = vpack.c.b16 %v3411, %v3406
      %v3422 = vpack.c.b16 %v3412, %v3407
      %vm3431 = vcmask 523264
      %v3433 = vsel %vm3431, %v3417, 0
      %v3436 = vsel %vm3431, %v3422, 0
      %3438 = vmatprep.subr.bf16.mxu0 0
      %3439 = vmatpush1.bf16.msra.mxu0 %v3309
      %3440 = vmatprep.subr.bf16.mxu0 0
      %3441 = vmatpush1.bf16.msra.mxu0 %v3310
      %3442 = vmatprep.subr.bf16.mxu0 0
      %3443 = vmatpush1.bf16.msra.mxu0 %v3311
      %3444 = vmatprep.subr.bf16.mxu0 0
      %3445 = vmatpush1.bf16.msra.mxu0 %v3312
      %3446 = vmatprep.subr.bf16.mxu0 0
      %3447 = vmatpush1.bf16.msra.mxu0 %v3313
      %3448 = vmatprep.subr.bf16.mxu0 0
      %3449 = vmatpush1.bf16.msra.mxu0 %v3314
      %3450 = vmatprep.subr.bf16.mxu0 0
      %3451 = vmatpush1.bf16.msra.mxu0 %v3315
      %3452 = vmatprep.subr.bf16.mxu0 0
      %3453 = vmatpush1.bf16.msra.mxu0 %v3316
      %3454 = vmatprep.subr.bf16.mxu0 0
      %3455 = vmatpush1.bf16.msra.mxu0 %v3317
      %3456 = vmatprep.subr.bf16.mxu0 0
      %3457 = vmatpush1.bf16.msra.mxu0 %v3318
      %3458 = vmatprep.subr.bf16.mxu0 0
      %3459 = vmatpush1.bf16.msra.mxu0 %v3319
      %3460 = vmatprep.subr.bf16.mxu0 0
      %3461 = vmatpush1.bf16.msra.mxu0 %v3320
      %3462 = vmatprep.subr.bf16.mxu0 0
      %3463 = vmatpush1.bf16.msra.mxu0 %v3321
      %3464 = vmatprep.subr.bf16.mxu0 0
      %3465 = vmatpush1.bf16.msra.mxu0 %v3322
      %3466 = vmatprep.subr.bf16.mxu0 0
      %3467 = vmatpush1.bf16.msra.mxu0 %v3323
      %3468 = vmatprep.subr.bf16.mxu0 0
      %3469 = vmatpush1.bf16.msra.mxu0 %v3324
      %3470 = vmatprep.mubr.bf16.mxu0 %v3414
      %3471 = vmatmul.mubr.bf16.gmra.mrb[0].mxu0 %v3413
      %v3472 = vpop.f32.mrb[0].mxu0
      %v3473 = vadd.f32 %v3364, %v3472
      %v3474 = vpop.f32.mrb[0].mxu0
      %v3475 = vpop.f32.mrb[0].mxu0
      %v3476 = vadd.f32 %v3369, %v3475
      %v3477 = vpop.f32.mrb[0].mxu0
      %3478 = vmatprep.mubr.bf16.mxu0 %v3419
      %3479 = vmatmul.mubr.bf16.gmra.mrb[0].mxu0 %v3418
      %v3480 = vpop.f32.mrb[0].mxu0
      %v3481 = vadd.f32 %v3374, %v3480
      %v3482 = vpop.f32.mrb[0].mxu0
      %v3483 = vpop.f32.mrb[0].mxu0
      %v3484 = vadd.f32 %v3379, %v3483
      %v3485 = vpop.f32.mrb[0].mxu0
      %3486 = vdwg.mxu0
      %3487 = vmatprep.subr.bf16.mxu0 0
      %3488 = vmatpush1.bf16.msra.mxu0 %v3325
      %3489 = vmatprep.subr.bf16.mxu0 0
      %3490 = vmatpush1.bf16.msra.mxu0 %v3326
      %3491 = vmatprep.subr.bf16.mxu0 0
      %3492 = vmatpush1.bf16.msra.mxu0 %v3327
      %3493 = vmatprep.subr.bf16.mxu0 0
      %3494 = vmatpush1.bf16.msra.mxu0 %v3328
      %3495 = vmatprep.subr.bf16.mxu0 0
      %3496 = vmatpush1.bf16.msra.mxu0 %v3329
      %3497 = vmatprep.subr.bf16.mxu0 0
      %3498 = vmatpush1.bf16.msra.mxu0 %v3330
      %3499 = vmatprep.subr.bf16.mxu0 0
      %3500 = vmatpush1.bf16.msra.mxu0 %v3331
      %3501 = vmatprep.subr.bf16.mxu0 0
      %3502 = vmatpush1.bf16.msra.mxu0 %v3332
      %3503 = vmatprep.subr.bf16.mxu0 0
      %3504 = vmatpush1.bf16.msra.mxu0 %v3333
      %3505 = vmatprep.subr.bf16.mxu0 0
      %3506 = vmatpush1.bf16.msra.mxu0 %v3334
      %3507 = vmatprep.subr.bf16.mxu0 0
      %3508 = vmatpush1.bf16.msra.mxu0 %v3335
      %3509 = vmatprep.subr.bf16.mxu0 0
      %3510 = vmatpush1.bf16.msra.mxu0 %v3336
      %3511 = vmatprep.subr.bf16.mxu0 0
      %3512 = vmatpush1.bf16.msra.mxu0 %v3337
      %3513 = vmatprep.subr.bf16.mxu0 0
      %3514 = vmatpush1.bf16.msra.mxu0 %v3338
      %3515 = vmatprep.subr.bf16.mxu0 0
      %3516 = vmatpush1.bf16.msra.mxu0 %v3339
      %3517 = vmatprep.subr.bf16.mxu0 0
      %3518 = vmatpush1.bf16.msra.mxu0 %v3340
      %3519 = vmatprep.mubr.bf16.mxu0 %v3416
      %3520 = vmatmul.mubr.bf16.gmra.mrb[0].mxu0 %v3415
      %v3521 = vpop.f32.mrb[0].mxu0
      %v3522 = vadd.f32 %v3473, %v3521
      %v3523 = vpop.f32.mrb[0].mxu0
      %v3524 = vpop.f32.mrb[0].mxu0
      %v3525 = vadd.f32 %v3476, %v3524
      %v3526 = vpop.f32.mrb[0].mxu0
      %3527 = vmatprep.mubr.bf16.mxu0 %v3421
      %3528 = vmatmul.mubr.bf16.gmra.mrb[0].mxu0 %v3420
      %v3529 = vpop.f32.mrb[0].mxu0
      %v3530 = vadd.f32 %v3481, %v3529
      %v3531 = vpop.f32.mrb[0].mxu0
      %v3532 = vpop.f32.mrb[0].mxu0
      %v3533 = vadd.f32 %v3484, %v3532
      %v3534 = vpop.f32.mrb[0].mxu0
      %3535 = vdwg.mxu0
      %3536 = vmatprep.subr.bf16.mxu0 0
      %3537 = vmatpush1.bf16.msra.mxu0 %v3341
      %3538 = vmatprep.subr.bf16.mxu0 0
      %3539 = vmatpush1.bf16.msra.mxu0 %v3342
      %3540 = vmatprep.subr.bf16.mxu0 0
      %3541 = vmatpush1.bf16.msra.mxu0 %v3343
      %3542 = vmatprep.subr.bf16.mxu0 0
      %3543 = vmatpush1.bf16.msra.mxu0 %v3344
      %3544 = vmatprep.subr.bf16.mxu0 0
      %3545 = vmatpush1.bf16.msra.mxu0 0
      %3546 = vmatprep.subr.bf16.mxu0 0
      %3547 = vmatpush1.bf16.msra.mxu0 0
      %3548 = vmatprep.subr.bf16.mxu0 0
      %3549 = vmatpush1.bf16.msra.mxu0 0
      %3550 = vmatprep.subr.bf16.mxu0 0
      %3551 = vmatpush1.bf16.msra.mxu0 0
      %3552 = vmatprep.subr.bf16.mxu0 0
      %3553 = vmatpush1.bf16.msra.mxu0 0
      %3554 = vmatprep.subr.bf16.mxu0 0
      %3555 = vmatpush1.bf16.msra.mxu0 0
      %3556 = vmatprep.subr.bf16.mxu0 0
      %3557 = vmatpush1.bf16.msra.mxu0 0
      %3558 = vmatprep.subr.bf16.mxu0 0
      %3559 = vmatpush1.bf16.msra.mxu0 0
      %3560 = vmatprep.subr.bf16.mxu0 0
      %3561 = vmatpush1.bf16.msra.mxu0 0
      %3562 = vmatprep.subr.bf16.mxu0 0
      %3563 = vmatpush1.bf16.msra.mxu0 0
      %3564 = vmatprep.subr.bf16.mxu0 0
      %3565 = vmatpush1.bf16.msra.mxu0 0
      %3566 = vmatprep.subr.bf16.mxu0 0
      %3567 = vmatpush1.bf16.msra.mxu0 0
      %3568 = vmatprep.mubr.bf16.mxu0 0
      %3569 = vmatmul.mubr.bf16.gmra.mrb[0].mxu0 %v3433
      %v3570 = vpop.f32.mrb[0].mxu0
      %v3571 = vadd.f32 %v3522, %v3570
      %v3572 = vpop.f32.mrb[0].mxu0
      %v3573 = vpop.f32.mrb[0].mxu0
      %v3574 = vadd.f32 %v3525, %v3573
      %v3575 = vpop.f32.mrb[0].mxu0
      %3576 = vmatprep.mubr.bf16.mxu0 0
      %3577 = vmatmul.mubr.bf16.gmra.mrb[0].mxu0 %v3436
      %v3578 = vpop.f32.mrb[0].mxu0
      %v3579 = vadd.f32 %v3530, %v3578
      %v3580 = vpop.f32.mrb[0].mxu0
      %v3581 = vpop.f32.mrb[0].mxu0
      %v3582 = vadd.f32 %v3533, %v3581
      %v3583 = vpop.f32.mrb[0].mxu0
      %3584 = vdwg.mxu0
      %v3585 = vmax.f32 %v3571, 0.0
      %v3586 = vmax.f32 %v3574, 0.0
      %v3587 = vmax.f32 %v3579, 0.0
      %v3588 = vmax.f32 %v3582, 0.0
      %v3589 = vand.u32 2147483647, %v3571
      %v3590 = vand.u32 2147483647, %v3574
      %v3591 = vand.u32 2147483647, %v3579
      %v3592 = vand.u32 2147483647, %v3582
      %v3593 = vsub.f32 0.0, %v3589
      %v3594 = vsub.f32 0.0, %v3590
      %v3595 = vsub.f32 0.0, %v3591
      %v3596 = vsub.f32 0.0, %v3592
      %v3597 = vmul.f32 %v3593, 1.442695
      %v3598 = vpow.pop %v3597
      %v3599 = vmul.f32 %v3594, 1.442695
      %v3600 = vpow.pop %v3599
      %v3601 = vmul.f32 %v3595, 1.442695
      %v3602 = vpow.pop %v3601
      %v3603 = vmul.f32 %v3596, 1.442695
      %v3604 = vpow.pop %v3603
      %v3605 = vadd.f32 %v3598, 1.0
      %v3606 = vlog2.pop %v3605
      %v3607 = vmul.f32 %v3606, 0.6931472
      %v3608 = vmul.f32 -0.5, %v3598
      %v3609 = vadd.f32 %v3608, 1.0
      %v3610 = vmul.f32 %v3609, %v3598
      %v3611 = vand.u32 2147483647, %v3598
      %vm3612 = vcmp.lt.f32.partialorder %v3611, 0.0004427343
      %v3613 = vsel %vm3612, %v3610, %v3607
      %v3614 = vadd.f32 %v3600, 1.0
      %v3615 = vlog2.pop %v3614
      %v3616 = vmul.f32 %v3615, 0.6931472
      %v3617 = vmul.f32 -0.5, %v3600
      %v3618 = vadd.f32 %v3617, 1.0
      %v3619 = vmul.f32 %v3618, %v3600
      %v3620 = vand.u32 2147483647, %v3600
      %vm3621 = vcmp.lt.f32.partialorder %v3620, 0.0004427343
      %v3622 = vsel %vm3621, %v3619, %v3616
      %v3623 = vadd.f32 %v3602, 1.0
      %v3624 = vlog2.pop %v3623
      %v3625 = vmul.f32 %v3624, 0.6931472
      %v3626 = vmul.f32 -0.5, %v3602
      %v3627 = vadd.f32 %v3626, 1.0
      %v3628 = vmul.f32 %v3627, %v3602
      %v3629 = vand.u32 2147483647, %v3602
      %vm3630 = vcmp.lt.f32.partialorder %v3629, 0.0004427343
      %v3631 = vsel %vm3630, %v3628, %v3625
      %v3632 = vadd.f32 %v3604, 1.0
      %v3633 = vlog2.pop %v3632
      %v3634 = vmul.f32 %v3633, 0.6931472
      %v3635 = vmul.f32 -0.5, %v3604
      %v3636 = vadd.f32 %v3635, 1.0
      %v3637 = vmul.f32 %v3636, %v3604
      %v3638 = vand.u32 2147483647, %v3604
      %vm3639 = vcmp.lt.f32.partialorder %v3638, 0.0004427343
      %v3640 = vsel %vm3639, %v3637, %v3634
      %v3641 = vadd.f32 %v3585, %v3613
      %v3642 = vadd.f32 %v3586, %v3622
      %v3643 = vadd.f32 %v3587, %v3631
      %v3644 = vadd.f32 %v3588, %v3640
      %v3645 = vtanh.pop %v3641
      %v3646 = vtanh.pop %v3642
      %v3647 = vtanh.pop %v3643
      %v3648 = vtanh.pop %v3644
      %v3649 = vmul.f32 %v3571, %v3645
      %v3650 = vmul.f32 %v3574, %v3646
      %v3651 = vmul.f32 %v3579, %v3647
      %v3652 = vmul.f32 %v3582, %v3648
      %v3653 = vsel %vm3431, %v3649, 0.0
      %3654 = vadd.xlane.f32.xlu0 %v3653
      %v3655 = vpop.xlane.xlu0 %3654
      %v3656 = vsel %vm3431, %v3650, 0.0
      %3657 = vadd.xlane.f32.xlu0 %v3656
      %v3658 = vpop.xlane.xlu0 %3657
      %v3659 = vsel %vm3431, %v3651, 0.0
      %3660 = vadd.xlane.f32.xlu0 %v3659
      %v3661 = vpop.xlane.xlu0 %3660
      %v3662 = vsel %vm3431, %v3652, 0.0
      %3663 = vadd.xlane.f32.xlu0 %v3662
      %v3664 = vpop.xlane.xlu0 %3663
      %v3665 = vrcp.pop 64.0
      %v3666 = vmul.f32 %v3655, %v3665
      %v3667 = vmul.f32 %v3658, %v3665
      %v3668 = vmul.f32 %v3661, %v3665
      %v3669 = vmul.f32 %v3664, %v3665
      %v3670 = vsub.f32 %v3649, %v3666
      %v3671 = vsub.f32 %v3650, %v3667
      %v3672 = vsub.f32 %v3651, %v3668
      %v3673 = vsub.f32 %v3652, %v3669
      %v3674 = vmul.f32 %v3670, %v3670
      %v3675 = vmul.f32 %v3671, %v3671
      %v3676 = vmul.f32 %v3672, %v3672
      %v3677 = vmul.f32 %v3673, %v3673
      %v3678 = vsel %vm3431, %v3674, 0.0
      %3679 = vadd.xlane.f32.xlu0 %v3678
      %v3680 = vpop.xlane.xlu0 %3679
      %v3681 = vsel %vm3431, %v3675, 0.0
      %3682 = vadd.xlane.f32.xlu0 %v3681
      %v3683 = vpop.xlane.xlu0 %3682
      %v3684 = vsel %vm3431, %v3676, 0.0
      %3685 = vadd.xlane.f32.xlu0 %v3684
      %v3686 = vpop.xlane.xlu0 %3685
      %v3687 = vsel %vm3431, %v3677, 0.0
      %3688 = vadd.xlane.f32.xlu0 %v3687
      %v3689 = vpop.xlane.xlu0 %3688
      %v3690 = vmul.f32 %v3680, %v3665
      %v3691 = vmul.f32 %v3683, %v3665
      %v3692 = vmul.f32 %v3686, %v3665
      %v3693 = vmul.f32 %v3689, %v3665
      %v3694 = vadd.f32 %v3690, 1e-05
      %v3695 = vadd.f32 %v3691, 1e-05
      %v3696 = vadd.f32 %v3692, 1e-05
      %v3697 = vadd.f32 %v3693, 1e-05
      %v3698 = vrsqrt.pop %v3694
      %v3699 = vrsqrt.pop %v3695
      %v3700 = vrsqrt.pop %v3696
      %v3701 = vrsqrt.pop %v3697
      %v3702 = vmul.f32 %v3670, %v3698
      %v3703 = vmul.f32 %v3671, %v3699
      %v3704 = vmul.f32 %v3672, %v3700
      %v3705 = vmul.f32 %v3673, %v3701
      %v3706 = vld [vmem:[%s25] sm:$0xff]
      %v3707 = vld [vmem:[%s25 + $0x8] sm:$0xff]
      %v3708 = vld [vmem:[%s25 + $0x10] sm:$0xff]
      %v3709 = vld [vmem:[%s25 + $0x18] sm:$0xff]
      %3711 = vset.pattern.permute.xlu0 0
      %3712 = vperm.xlu0 %3711, %v3706
      %v3713 = vpop.permute.xlu0 %3712
      %3716 = vset.pattern.permute.xlu0 0
      %3717 = vperm.xlu0 %3716, %v3707
      %v3718 = vpop.permute.xlu0 %3717
      %3721 = vset.pattern.permute.xlu0 0
      %3722 = vperm.xlu0 %3721, %v3708
      %v3723 = vpop.permute.xlu0 %3722
      %3726 = vset.pattern.permute.xlu0 0
      %3727 = vperm.xlu0 %3726, %v3709
      %v3728 = vpop.permute.xlu0 %3727
      %v3730 = vmul.f32 %v3702, %v3713
      %v3731 = vmul.f32 %v3703, %v3718
      %v3732 = vmul.f32 %v3704, %v3723
      %v3733 = vmul.f32 %v3705, %v3728
      %v3734 = vld [vmem:[%s27] sm:$0xff]
      %v3735 = vld [vmem:[%s27 + $0x8] sm:$0xff]
      %v3736 = vld [vmem:[%s27 + $0x10] sm:$0xff]
      %v3737 = vld [vmem:[%s27 + $0x18] sm:$0xff]
      %3739 = vset.pattern.permute.xlu0 0
      %3740 = vperm.xlu0 %3739, %v3734
      %v3741 = vpop.permute.xlu0 %3740
      %3744 = vset.pattern.permute.xlu0 0
      %3745 = vperm.xlu0 %3744, %v3735
      %v3746 = vpop.permute.xlu0 %3745
      %3749 = vset.pattern.permute.xlu0 0
      %3750 = vperm.xlu0 %3749, %v3736
      %v3751 = vpop.permute.xlu0 %3750
      %3754 = vset.pattern.permute.xlu0 0
      %3755 = vperm.xlu0 %3754, %v3737
      %v3756 = vpop.permute.xlu0 %3755
      %v3758 = vadd.f32 %v3730, %v3741
      %v3759 = vadd.f32 %v3731, %v3746
      %v3760 = vadd.f32 %v3732, %v3751
      %v3761 = vadd.f32 %v3733, %v3756
      %v3762 = vpack.c.bf16 %v3759, %v3758
      %v3763 = vpack.c.bf16 %v3761, %v3760
      %v3764 = vld [vmem:[%s29] sm:$0xf]
      %v3765 = vld [vmem:[%s29 + $0x4] sm:$0xf]
      %v3766 = vld [vmem:[%s29 + $0x8] sm:$0xf]
      %v3767 = vld [vmem:[%s29 + $0xc] sm:$0xf]
      %v3768 = vld [vmem:[%s29 + $0x10] sm:$0xf]
      %v3769 = vld [vmem:[%s29 + $0x14] sm:$0xf]
      %v3770 = vld [vmem:[%s29 + $0x18] sm:$0xf]
      %v3771 = vld [vmem:[%s29 + $0x1c] sm:$0xf]
      %v3780 = vunpack.c.l.b16 %v3764
      %v3781 = vunpack.c.l.b16 %v3765
      %v3782 = vunpack.c.l.b16 %v3766
      %v3783 = vunpack.c.l.b16 %v3767
      %v3784 = vunpack.c.l.b16 %v3768
      %v3785 = vunpack.c.l.b16 %v3769
      %v3786 = vunpack.c.l.b16 %v3770
      %v3787 = vunpack.c.l.b16 %v3771
      %v3788 = vpack.c.b16 %v3781, %v3780
      %v3789 = vpack.c.b16 %v3783, %v3782
      %v3790 = vpack.c.b16 %v3785, %v3784
      %v3791 = vpack.c.b16 %v3787, %v3786
      %v3797 = vsel %vm3431, %v3762, 0
      %v3800 = vsel %vm3431, %v3763, 0
      %3802 = vmatprep.subr.bf16.mxu0 0
      %3803 = vmatpush1.bf16.msra.mxu0 %v3788
      %3804 = vmatprep.subr.bf16.mxu0 0
      %3805 = vmatpush1.bf16.msra.mxu0 %v3789
      %3806 = vmatprep.subr.bf16.mxu0 0
      %3807 = vmatpush1.bf16.msra.mxu0 %v3790
      %3808 = vmatprep.subr.bf16.mxu0 0
      %3809 = vmatpush1.bf16.msra.mxu0 %v3791
      %3810 = vmatprep.subr.bf16.mxu0 0
      %3811 = vmatpush1.bf16.msra.mxu0 0
      %3812 = vmatprep.subr.bf16.mxu0 0
      %3813 = vmatpush1.bf16.msra.mxu0 0
      %3814 = vmatprep.subr.bf16.mxu0 0
      %3815 = vmatpush1.bf16.msra.mxu0 0
      %3816 = vmatprep.subr.bf16.mxu0 0
      %3817 = vmatpush1.bf16.msra.mxu0 0
      %3818 = vmatprep.subr.bf16.mxu0 0
      %3819 = vmatpush1.bf16.msra.mxu0 0
      %3820 = vmatprep.subr.bf16.mxu0 0
      %3821 = vmatpush1.bf16.msra.mxu0 0
      %3822 = vmatprep.subr.bf16.mxu0 0
      %3823 = vmatpush1.bf16.msra.mxu0 0
      %3824 = vmatprep.subr.bf16.mxu0 0
      %3825 = vmatpush1.bf16.msra.mxu0 0
      %3826 = vmatprep.subr.bf16.mxu0 0
      %3827 = vmatpush1.bf16.msra.mxu0 0
      %3828 = vmatprep.subr.bf16.mxu0 0
      %3829 = vmatpush1.bf16.msra.mxu0 0
      %3830 = vmatprep.subr.bf16.mxu0 0
      %3831 = vmatpush1.bf16.msra.mxu0 0
      %3832 = vmatprep.subr.bf16.mxu0 0
      %3833 = vmatpush1.bf16.msra.mxu0 0
      %3834 = vmatprep.mubr.bf16.mxu0 0
      %3835 = vmatmul.mubr.bf16.gmra.mrb[0].mxu0 %v3797
      %v3836 = vpop.f32.mrb[0].mxu0
      %v3837 = vadd.f32 0.0, %v3836
      %v3838 = vpop.f32.mrb[0].mxu0
      %v3839 = vpop.f32.mrb[0].mxu0
      %v3840 = vadd.f32 0.0, %v3839
      %v3841 = vpop.f32.mrb[0].mxu0
      %3842 = vmatprep.mubr.bf16.mxu0 0
      %3843 = vmatmul.mubr.bf16.gmra.mrb[0].mxu0 %v3800
      %v3844 = vpop.f32.mrb[0].mxu0
      %v3845 = vadd.f32 0.0, %v3844
      %v3846 = vpop.f32.mrb[0].mxu0
      %v3847 = vpop.f32.mrb[0].mxu0
      %v3848 = vadd.f32 0.0, %v3847
      %v3849 = vpop.f32.mrb[0].mxu0
      %3850 = vdwg.mxu0
      %s3851 = scalar_lea.vmem %s29, 32
      %v3852 = vld [vmem:[%s3851] sm:$0xf]
      %v3853 = vld [vmem:[%s3851 + $0x4] sm:$0xf]
      %v3854 = vld [vmem:[%s3851 + $0x8] sm:$0xf]
      %v3855 = vld [vmem:[%s3851 + $0xc] sm:$0xf]
      %v3856 = vld [vmem:[%s3851 + $0x10] sm:$0xf]
      %v3857 = vld [vmem:[%s3851 + $0x14] sm:$0xf]
      %v3858 = vld [vmem:[%s3851 + $0x18] sm:$0xf]
      %v3859 = vld [vmem:[%s3851 + $0x1c] sm:$0xf]
      %v3868 = vunpack.c.l.b16 %v3852
      %v3869 = vunpack.c.l.b16 %v3853
      %v3870 = vunpack.c.l.b16 %v3854
      %v3871 = vunpack.c.l.b16 %v3855
      %v3872 = vunpack.c.l.b16 %v3856
      %v3873 = vunpack.c.l.b16 %v3857
      %v3874 = vunpack.c.l.b16 %v3858
      %v3875 = vunpack.c.l.b16 %v3859
      %v3876 = vpack.c.b16 %v3869, %v3868
      %v3877 = vpack.c.b16 %v3871, %v3870
      %v3878 = vpack.c.b16 %v3873, %v3872
      %v3879 = vpack.c.b16 %v3875, %v3874
      %3884 = vmatprep.subr.bf16.mxu0 0
      %3885 = vmatpush1.bf16.msra.mxu0 %v3876
      %3886 = vmatprep.subr.bf16.mxu0 0
      %3887 = vmatpush1.bf16.msra.mxu0 %v3877
      %3888 = vmatprep.subr.bf16.mxu0 0
      %3889 = vmatpush1.bf16.msra.mxu0 %v3878
      %3890 = vmatprep.subr.bf16.mxu0 0
      %3891 = vmatpush1.bf16.msra.mxu0 %v3879
      %3892 = vmatprep.subr.bf16.mxu0 0
      %3893 = vmatpush1.bf16.msra.mxu0 0
      %3894 = vmatprep.subr.bf16.mxu0 0
      %3895 = vmatpush1.bf16.msra.mxu0 0
      %3896 = vmatprep.subr.bf16.mxu0 0
      %3897 = vmatpush1.bf16.msra.mxu0 0
      %3898 = vmatprep.subr.bf16.mxu0 0
      %3899 = vmatpush1.bf16.msra.mxu0 0
      %3900 = vmatprep.subr.bf16.mxu0 0
      %3901 = vmatpush1.bf16.msra.mxu0 0
      %3902 = vmatprep.subr.bf16.mxu0 0
      %3903 = vmatpush1.bf16.msra.mxu0 0
      %3904 = vmatprep.subr.bf16.mxu0 0
      %3905 = vmatpush1.bf16.msra.mxu0 0
      %3906 = vmatprep.subr.bf16.mxu0 0
      %3907 = vmatpush1.bf16.msra.mxu0 0
      %3908 = vmatprep.subr.bf16.mxu0 0
      %3909 = vmatpush1.bf16.msra.mxu0 0
      %3910 = vmatprep.subr.bf16.mxu0 0
      %3911 = vmatpush1.bf16.msra.mxu0 0
      %3912 = vmatprep.subr.bf16.mxu0 0
      %3913 = vmatpush1.bf16.msra.mxu0 0
      %3914 = vmatprep.subr.bf16.mxu0 0
      %3915 = vmatpush1.bf16.msra.mxu0 0
      %3916 = vmatprep.mubr.bf16.mxu0 0
      %3917 = vmatmul.mubr.bf16.gmra.mrb[0].mxu0 %v3797
      %v3918 = vpop.f32.mrb[0].mxu0
      %v3919 = vadd.f32 0.0, %v3918
      %v3920 = vpop.f32.mrb[0].mxu0
      %v3921 = vpop.f32.mrb[0].mxu0
      %v3922 = vadd.f32 0.0, %v3921
      %v3923 = vpop.f32.mrb[0].mxu0
      %3924 = vmatprep.mubr.bf16.mxu0 0
      %3925 = vmatmul.mubr.bf16.gmra.mrb[0].mxu0 %v3800
      %v3926 = vpop.f32.mrb[0].mxu0
      %v3927 = vadd.f32 0.0, %v3926
      %v3928 = vpop.f32.mrb[0].mxu0
      %v3929 = vpop.f32.mrb[0].mxu0
      %v3930 = vadd.f32 0.0, %v3929
      %v3931 = vpop.f32.mrb[0].mxu0
      %3932 = vdwg.mxu0
      %s3933 = scalar_lea.vmem %s29, 64
      %v3934 = vld [vmem:[%s3933] sm:$0xf]
      %v3935 = vld [vmem:[%s3933 + $0x4] sm:$0xf]
      %v3936 = vld [vmem:[%s3933 + $0x8] sm:$0xf]
      %v3937 = vld [vmem:[%s3933 + $0xc] sm:$0xf]
      %v3938 = vld [vmem:[%s3933 + $0x10] sm:$0xf]
      %v3939 = vld [vmem:[%s3933 + $0x14] sm:$0xf]
      %v3940 = vld [vmem:[%s3933 + $0x18] sm:$0xf]
      %v3941 = vld [vmem:[%s3933 + $0x1c] sm:$0xf]
      %v3950 = vunpack.c.l.b16 %v3934
      %v3951 = vunpack.c.l.b16 %v3935
      %v3952 = vunpack.c.l.b16 %v3936
      %v3953 = vunpack.c.l.b16 %v3937
      %v3954 = vunpack.c.l.b16 %v3938
      %v3955 = vunpack.c.l.b16 %v3939
      %v3956 = vunpack.c.l.b16 %v3940
      %v3957 = vunpack.c.l.b16 %v3941
      %v3958 = vpack.c.b16 %v3951, %v3950
      %v3959 = vpack.c.b16 %v3953, %v3952
      %v3960 = vpack.c.b16 %v3955, %v3954
      %v3961 = vpack.c.b16 %v3957, %v3956
      %3966 = vmatprep.subr.bf16.mxu0 0
      %3967 = vmatpush1.bf16.msra.mxu0 %v3958
      %3968 = vmatprep.subr.bf16.mxu0 0
      %3969 = vmatpush1.bf16.msra.mxu0 %v3959
      %3970 = vmatprep.subr.bf16.mxu0 0
      %3971 = vmatpush1.bf16.msra.mxu0 %v3960
      %3972 = vmatprep.subr.bf16.mxu0 0
      %3973 = vmatpush1.bf16.msra.mxu0 %v3961
      %3974 = vmatprep.subr.bf16.mxu0 0
      %3975 = vmatpush1.bf16.msra.mxu0 0
      %3976 = vmatprep.subr.bf16.mxu0 0
      %3977 = vmatpush1.bf16.msra.mxu0 0
      %3978 = vmatprep.subr.bf16.mxu0 0
      %3979 = vmatpush1.bf16.msra.mxu0 0
      %3980 = vmatprep.subr.bf16.mxu0 0
      %3981 = vmatpush1.bf16.msra.mxu0 0
      %3982 = vmatprep.subr.bf16.mxu0 0
      %3983 = vmatpush1.bf16.msra.mxu0 0
      %3984 = vmatprep.subr.bf16.mxu0 0
      %3985 = vmatpush1.bf16.msra.mxu0 0
      %3986 = vmatprep.subr.bf16.mxu0 0
      %3987 = vmatpush1.bf16.msra.mxu0 0
      %3988 = vmatprep.subr.bf16.mxu0 0
      %3989 = vmatpush1.bf16.msra.mxu0 0
      %3990 = vmatprep.subr.bf16.mxu0 0
      %3991 = vmatpush1.bf16.msra.mxu0 0
      %3992 = vmatprep.subr.bf16.mxu0 0
      %3993 = vmatpush1.bf16.msra.mxu0 0
      %3994 = vmatprep.subr.bf16.mxu0 0
      %3995 = vmatpush1.bf16.msra.mxu0 0
      %3996 = vmatprep.subr.bf16.mxu0 0
      %3997 = vmatpush1.bf16.msra.mxu0 0
      %3998 = vmatprep.mubr.bf16.mxu0 0
      %3999 = vmatmul.mubr.bf16.gmra.mrb[0].mxu0 %v3797
      %v4000 = vpop.f32.mrb[0].mxu0
      %v4001 = vadd.f32 0.0, %v4000
      %v4002 = vpop.f32.mrb[0].mxu0
      %v4003 = vpop.f32.mrb[0].mxu0
      %v4004 = vadd.f32 0.0, %v4003
      %v4005 = vpop.f32.mrb[0].mxu0
      %4006 = vmatprep.mubr.bf16.mxu0 0
      %4007 = vmatmul.mubr.bf16.gmra.mrb[0].mxu0 %v3800
      %v4008 = vpop.f32.mrb[0].mxu0
      %v4009 = vadd.f32 0.0, %v4008
      %v4010 = vpop.f32.mrb[0].mxu0
      %v4011 = vpop.f32.mrb[0].mxu0
      %v4012 = vadd.f32 0.0, %v4011
      %v4013 = vpop.f32.mrb[0].mxu0
      %4014 = vdwg.mxu0
      %s4015 = scalar_lea.vmem %s29, 96
      %v4016 = vld [vmem:[%s4015] sm:$0xf]
      %v4017 = vld [vmem:[%s4015 + $0x4] sm:$0xf]
      %v4018 = vld [vmem:[%s4015 + $0x8] sm:$0xf]
      %v4019 = vld [vmem:[%s4015 + $0xc] sm:$0xf]
      %v4020 = vld [vmem:[%s4015 + $0x10] sm:$0xf]
      %v4021 = vld [vmem:[%s4015 + $0x14] sm:$0xf]
      %v4022 = vld [vmem:[%s4015 + $0x18] sm:$0xf]
      %v4023 = vld [vmem:[%s4015 + $0x1c] sm:$0xf]
      %v4032 = vunpack.c.l.b16 %v4016
      %v4033 = vunpack.c.l.b16 %v4017
      %v4034 = vunpack.c.l.b16 %v4018
      %v4035 = vunpack.c.l.b16 %v4019
      %v4036 = vunpack.c.l.b16 %v4020
      %v4037 = vunpack.c.l.b16 %v4021
      %v4038 = vunpack.c.l.b16 %v4022
      %v4039 = vunpack.c.l.b16 %v4023
      %v4040 = vpack.c.b16 %v4033, %v4032
      %v4041 = vpack.c.b16 %v4035, %v4034
      %v4042 = vpack.c.b16 %v4037, %v4036
      %v4043 = vpack.c.b16 %v4039, %v4038
      %4048 = vmatprep.subr.bf16.mxu0 0
      %4049 = vmatpush1.bf16.msra.mxu0 %v4040
      %4050 = vmatprep.subr.bf16.mxu0 0
      %4051 = vmatpush1.bf16.msra.mxu0 %v4041
      %4052 = vmatprep.subr.bf16.mxu0 0
      %4053 = vmatpush1.bf16.msra.mxu0 %v4042
      %4054 = vmatprep.subr.bf16.mxu0 0
      %4055 = vmatpush1.bf16.msra.mxu0 %v4043
      %4056 = vmatprep.subr.bf16.mxu0 0
      %4057 = vmatpush1.bf16.msra.mxu0 0
      %4058 = vmatprep.subr.bf16.mxu0 0
      %4059 = vmatpush1.bf16.msra.mxu0 0
      %4060 = vmatprep.subr.bf16.mxu0 0
      %4061 = vmatpush1.bf16.msra.mxu0 0
      %4062 = vmatprep.subr.bf16.mxu0 0
      %4063 = vmatpush1.bf16.msra.mxu0 0
      %4064 = vmatprep.subr.bf16.mxu0 0
      %4065 = vmatpush1.bf16.msra.mxu0 0
      %4066 = vmatprep.subr.bf16.mxu0 0
      %4067 = vmatpush1.bf16.msra.mxu0 0
      %4068 = vmatprep.subr.bf16.mxu0 0
      %4069 = vmatpush1.bf16.msra.mxu0 0
      %4070 = vmatprep.subr.bf16.mxu0 0
      %4071 = vmatpush1.bf16.msra.mxu0 0
      %4072 = vmatprep.subr.bf16.mxu0 0
      %4073 = vmatpush1.bf16.msra.mxu0 0
      %4074 = vmatprep.subr.bf16.mxu0 0
      %4075 = vmatpush1.bf16.msra.mxu0 0
      %4076 = vmatprep.subr.bf16.mxu0 0
      %4077 = vmatpush1.bf16.msra.mxu0 0
      %4078 = vmatprep.subr.bf16.mxu0 0
      %4079 = vmatpush1.bf16.msra.mxu0 0
      %4080 = vmatprep.mubr.bf16.mxu0 0
      %4081 = vmatmul.mubr.bf16.gmra.mrb[0].mxu0 %v3797
      %v4082 = vpop.f32.mrb[0].mxu0
      %v4083 = vadd.f32 0.0, %v4082
      %v4084 = vpop.f32.mrb[0].mxu0
      %v4085 = vpop.f32.mrb[0].mxu0
      %v4086 = vadd.f32 0.0, %v4085
      %v4087 = vpop.f32.mrb[0].mxu0
      %4088 = vmatprep.mubr.bf16.mxu0 0
      %4089 = vmatmul.mubr.bf16.gmra.mrb[0].mxu0 %v3800
      %v4090 = vpop.f32.mrb[0].mxu0
      %v4091 = vadd.f32 0.0, %v4090
      %v4092 = vpop.f32.mrb[0].mxu0
      %v4093 = vpop.f32.mrb[0].mxu0
      %v4094 = vadd.f32 0.0, %v4093
      %v4095 = vpop.f32.mrb[0].mxu0
      %4096 = vdwg.mxu0
      %s4097 = scalar_lea.vmem %s29, 128
      %v4098 = vld [vmem:[%s4097] sm:$0xf]
      %v4099 = vld [vmem:[%s4097 + $0x4] sm:$0xf]
      %v4100 = vld [vmem:[%s4097 + $0x8] sm:$0xf]
      %v4101 = vld [vmem:[%s4097 + $0xc] sm:$0xf]
      %v4102 = vld [vmem:[%s4097 + $0x10] sm:$0xf]
      %v4103 = vld [vmem:[%s4097 + $0x14] sm:$0xf]
      %v4104 = vld [vmem:[%s4097 + $0x18] sm:$0xf]
      %v4105 = vld [vmem:[%s4097 + $0x1c] sm:$0xf]
      %v4114 = vunpack.c.l.b16 %v4098
      %v4115 = vunpack.c.l.b16 %v4099
      %v4116 = vunpack.c.l.b16 %v4100
      %v4117 = vunpack.c.l.b16 %v4101
      %v4118 = vunpack.c.l.b16 %v4102
      %v4119 = vunpack.c.l.b16 %v4103
      %v4120 = vunpack.c.l.b16 %v4104
      %v4121 = vunpack.c.l.b16 %v4105
      %v4122 = vpack.c.b16 %v4115, %v4114
      %v4123 = vpack.c.b16 %v4117, %v4116
      %v4124 = vpack.c.b16 %v4119, %v4118
      %v4125 = vpack.c.b16 %v4121, %v4120
      %4130 = vmatprep.subr.bf16.mxu0 0
      %4131 = vmatpush1.bf16.msra.mxu0 %v4122
      %4132 = vmatprep.subr.bf16.mxu0 0
      %4133 = vmatpush1.bf16.msra.mxu0 %v4123
      %4134 = vmatprep.subr.bf16.mxu0 0
      %4135 = vmatpush1.bf16.msra.mxu0 %v4124
      %4136 = vmatprep.subr.bf16.mxu0 0
      %4137 = vmatpush1.bf16.msra.mxu0 %v4125
      %4138 = vmatprep.subr.bf16.mxu0 0
      %4139 = vmatpush1.bf16.msra.mxu0 0
      %4140 = vmatprep.subr.bf16.mxu0 0
      %4141 = vmatpush1.bf16.msra.mxu0 0
      %4142 = vmatprep.subr.bf16.mxu0 0
      %4143 = vmatpush1.bf16.msra.mxu0 0
      %4144 = vmatprep.subr.bf16.mxu0 0
      %4145 = vmatpush1.bf16.msra.mxu0 0
      %4146 = vmatprep.subr.bf16.mxu0 0
      %4147 = vmatpush1.bf16.msra.mxu0 0
      %4148 = vmatprep.subr.bf16.mxu0 0
      %4149 = vmatpush1.bf16.msra.mxu0 0
      %4150 = vmatprep.subr.bf16.mxu0 0
      %4151 = vmatpush1.bf16.msra.mxu0 0
      %4152 = vmatprep.subr.bf16.mxu0 0
      %4153 = vmatpush1.bf16.msra.mxu0 0
      %4154 = vmatprep.subr.bf16.mxu0 0
      %4155 = vmatpush1.bf16.msra.mxu0 0
      %4156 = vmatprep.subr.bf16.mxu0 0
      %4157 = vmatpush1.bf16.msra.mxu0 0
      %4158 = vmatprep.subr.bf16.mxu0 0
      %4159 = vmatpush1.bf16.msra.mxu0 0
      %4160 = vmatprep.subr.bf16.mxu0 0
      %4161 = vmatpush1.bf16.msra.mxu0 0
      %4162 = vmatprep.mubr.bf16.mxu0 0
      %4163 = vmatmul.mubr.bf16.gmra.mrb[0].mxu0 %v3797
      %v4164 = vpop.f32.mrb[0].mxu0
      %v4165 = vadd.f32 0.0, %v4164
      %v4166 = vpop.f32.mrb[0].mxu0
      %v4167 = vpop.f32.mrb[0].mxu0
      %v4168 = vadd.f32 0.0, %v4167
      %v4169 = vpop.f32.mrb[0].mxu0
      %4170 = vmatprep.mubr.bf16.mxu0 0
      %4171 = vmatmul.mubr.bf16.gmra.mrb[0].mxu0 %v3800
      %v4172 = vpop.f32.mrb[0].mxu0
      %v4173 = vadd.f32 0.0, %v4172
      %v4174 = vpop.f32.mrb[0].mxu0
      %v4175 = vpop.f32.mrb[0].mxu0
      %v4176 = vadd.f32 0.0, %v4175
      %v4177 = vpop.f32.mrb[0].mxu0
      %4178 = vdwg.mxu0
      %s4179 = scalar_lea.vmem %s29, 160
      %v4180 = vld [vmem:[%s4179] sm:$0xf]
      %v4181 = vld [vmem:[%s4179 + $0x4] sm:$0xf]
      %v4182 = vld [vmem:[%s4179 + $0x8] sm:$0xf]
      %v4183 = vld [vmem:[%s4179 + $0xc] sm:$0xf]
      %v4184 = vld [vmem:[%s4179 + $0x10] sm:$0xf]
      %v4185 = vld [vmem:[%s4179 + $0x14] sm:$0xf]
      %v4186 = vld [vmem:[%s4179 + $0x18] sm:$0xf]
      %v4187 = vld [vmem:[%s4179 + $0x1c] sm:$0xf]
      %v4196 = vunpack.c.l.b16 %v4180
      %v4197 = vunpack.c.l.b16 %v4181
      %v4198 = vunpack.c.l.b16 %v4182
      %v4199 = vunpack.c.l.b16 %v4183
      %v4200 = vunpack.c.l.b16 %v4184
      %v4201 = vunpack.c.l.b16 %v4185
      %v4202 = vunpack.c.l.b16 %v4186
      %v4203 = vunpack.c.l.b16 %v4187
      %v4204 = vpack.c.b16 %v4197, %v4196
      %v4205 = vpack.c.b16 %v4199, %v4198
      %v4206 = vpack.c.b16 %v4201, %v4200
      %v4207 = vpack.c.b16 %v4203, %v4202
      %4212 = vmatprep.subr.bf16.mxu0 0
      %4213 = vmatpush1.bf16.msra.mxu0 %v4204
      %4214 = vmatprep.subr.bf16.mxu0 0
      %4215 = vmatpush1.bf16.msra.mxu0 %v4205
      %4216 = vmatprep.subr.bf16.mxu0 0
      %4217 = vmatpush1.bf16.msra.mxu0 %v4206
      %4218 = vmatprep.subr.bf16.mxu0 0
      %4219 = vmatpush1.bf16.msra.mxu0 %v4207
      %4220 = vmatprep.subr.bf16.mxu0 0
      %4221 = vmatpush1.bf16.msra.mxu0 0
      %4222 = vmatprep.subr.bf16.mxu0 0
      %4223 = vmatpush1.bf16.msra.mxu0 0
      %4224 = vmatprep.subr.bf16.mxu0 0
      %4225 = vmatpush1.bf16.msra.mxu0 0
      %4226 = vmatprep.subr.bf16.mxu0 0
      %4227 = vmatpush1.bf16.msra.mxu0 0
      %4228 = vmatprep.subr.bf16.mxu0 0
      %4229 = vmatpush1.bf16.msra.mxu0 0
      %4230 = vmatprep.subr.bf16.mxu0 0
      %4231 = vmatpush1.bf16.msra.mxu0 0
      %4232 = vmatprep.subr.bf16.mxu0 0
      %4233 = vmatpush1.bf16.msra.mxu0 0
      %4234 = vmatprep.subr.bf16.mxu0 0
      %4235 = vmatpush1.bf16.msra.mxu0 0
      %4236 = vmatprep.subr.bf16.mxu0 0
      %4237 = vmatpush1.bf16.msra.mxu0 0
      %4238 = vmatprep.subr.bf16.mxu0 0
      %4239 = vmatpush1.bf16.msra.mxu0 0
      %4240 = vmatprep.subr.bf16.mxu0 0
      %4241 = vmatpush1.bf16.msra.mxu0 0
      %4242 = vmatprep.subr.bf16.mxu0 0
      %4243 = vmatpush1.bf16.msra.mxu0 0
      %4244 = vmatprep.mubr.bf16.mxu0 0
      %4245 = vmatmul.mubr.bf16.gmra.mrb[0].mxu0 %v3797
      %v4246 = vpop.f32.mrb[0].mxu0
      %v4247 = vadd.f32 0.0, %v4246
      %v4248 = vpop.f32.mrb[0].mxu0
      %v4249 = vpop.f32.mrb[0].mxu0
      %v4250 = vadd.f32 0.0, %v4249
      %v4251 = vpop.f32.mrb[0].mxu0
      %4252 = vmatprep.mubr.bf16.mxu0 0
      %4253 = vmatmul.mubr.bf16.gmra.mrb[0].mxu0 %v3800
      %v4254 = vpop.f32.mrb[0].mxu0
      %v4255 = vadd.f32 0.0, %v4254
      %v4256 = vpop.f32.mrb[0].mxu0
      %v4257 = vpop.f32.mrb[0].mxu0
      %v4258 = vadd.f32 0.0, %v4257
      %v4259 = vpop.f32.mrb[0].mxu0
      %4260 = vdwg.mxu0
      %s4261 = scalar_lea.vmem %s29, 192
      %v4262 = vld [vmem:[%s4261] sm:$0xf]
      %v4263 = vld [vmem:[%s4261 + $0x4] sm:$0xf]
      %v4264 = vld [vmem:[%s4261 + $0x8] sm:$0xf]
      %v4265 = vld [vmem:[%s4261 + $0xc] sm:$0xf]
      %v4266 = vld [vmem:[%s4261 + $0x10] sm:$0xf]
      %v4267 = vld [vmem:[%s4261 + $0x14] sm:$0xf]
      %v4268 = vld [vmem:[%s4261 + $0x18] sm:$0xf]
      %v4269 = vld [vmem:[%s4261 + $0x1c] sm:$0xf]
      %v4278 = vunpack.c.l.b16 %v4262
      %v4279 = vunpack.c.l.b16 %v4263
      %v4280 = vunpack.c.l.b16 %v4264
      %v4281 = vunpack.c.l.b16 %v4265
      %v4282 = vunpack.c.l.b16 %v4266
      %v4283 = vunpack.c.l.b16 %v4267
      %v4284 = vunpack.c.l.b16 %v4268
      %v4285 = vunpack.c.l.b16 %v4269
      %v4286 = vpack.c.b16 %v4279, %v4278
      %v4287 = vpack.c.b16 %v4281, %v4280
      %v4288 = vpack.c.b16 %v4283, %v4282
      %v4289 = vpack.c.b16 %v4285, %v4284
      %4294 = vmatprep.subr.bf16.mxu0 0
      %4295 = vmatpush1.bf16.msra.mxu0 %v4286
      %4296 = vmatprep.subr.bf16.mxu0 0
      %4297 = vmatpush1.bf16.msra.mxu0 %v4287
      %4298 = vmatprep.subr.bf16.mxu0 0
      %4299 = vmatpush1.bf16.msra.mxu0 %v4288
      %4300 = vmatprep.subr.bf16.mxu0 0
      %4301 = vmatpush1.bf16.msra.mxu0 %v4289
      %4302 = vmatprep.subr.bf16.mxu0 0
      %4303 = vmatpush1.bf16.msra.mxu0 0
      %4304 = vmatprep.subr.bf16.mxu0 0
      %4305 = vmatpush1.bf16.msra.mxu0 0
      %4306 = vmatprep.subr.bf16.mxu0 0
      %4307 = vmatpush1.bf16.msra.mxu0 0
      %4308 = vmatprep.subr.bf16.mxu0 0
      %4309 = vmatpush1.bf16.msra.mxu0 0
      %4310 = vmatprep.subr.bf16.mxu0 0
      %4311 = vmatpush1.bf16.msra.mxu0 0
      %4312 = vmatprep.subr.bf16.mxu0 0
      %4313 = vmatpush1.bf16.msra.mxu0 0
      %4314 = vmatprep.subr.bf16.mxu0 0
      %4315 = vmatpush1.bf16.msra.mxu0 0
      %4316 = vmatprep.subr.bf16.mxu0 0
      %4317 = vmatpush1.bf16.msra.mxu0 0
      %4318 = vmatprep.subr.bf16.mxu0 0
      %4319 = vmatpush1.bf16.msra.mxu0 0
      %4320 = vmatprep.subr.bf16.mxu0 0
      %4321 = vmatpush1.bf16.msra.mxu0 0
      %4322 = vmatprep.subr.bf16.mxu0 0
      %4323 = vmatpush1.bf16.msra.mxu0 0
      %4324 = vmatprep.subr.bf16.mxu0 0
      %4325 = vmatpush1.bf16.msra.mxu0 0
      %4326 = vmatprep.mubr.bf16.mxu0 0
      %4327 = vmatmul.mubr.bf16.gmra.mrb[0].mxu0 %v3797
      %v4328 = vpop.f32.mrb[0].mxu0
      %v4329 = vadd.f32 0.0, %v4328
      %v4330 = vpop.f32.mrb[0].mxu0
      %v4331 = vpop.f32.mrb[0].mxu0
      %v4332 = vadd.f32 0.0, %v4331
      %v4333 = vpop.f32.mrb[0].mxu0
      %4334 = vmatprep.mubr.bf16.mxu0 0
      %4335 = vmatmul.mubr.bf16.gmra.mrb[0].mxu0 %v3800
      %v4336 = vpop.f32.mrb[0].mxu0
      %v4337 = vadd.f32 0.0, %v4336
      %v4338 = vpop.f32.mrb[0].mxu0
      %v4339 = vpop.f32.mrb[0].mxu0
      %v4340 = vadd.f32 0.0, %v4339
      %v4341 = vpop.f32.mrb[0].mxu0
      %4342 = vdwg.mxu0
      %s4343 = scalar_lea.vmem %s29, 224
      %v4344 = vld [vmem:[%s4343] sm:$0xf]
      %v4345 = vld [vmem:[%s4343 + $0x4] sm:$0xf]
      %v4346 = vld [vmem:[%s4343 + $0x8] sm:$0xf]
      %v4347 = vld [vmem:[%s4343 + $0xc] sm:$0xf]
      %v4348 = vld [vmem:[%s4343 + $0x10] sm:$0xf]
      %v4349 = vld [vmem:[%s4343 + $0x14] sm:$0xf]
      %v4350 = vld [vmem:[%s4343 + $0x18] sm:$0xf]
      %v4351 = vld [vmem:[%s4343 + $0x1c] sm:$0xf]
      %v4360 = vunpack.c.l.b16 %v4344
      %v4361 = vunpack.c.l.b16 %v4345
      %v4362 = vunpack.c.l.b16 %v4346
      %v4363 = vunpack.c.l.b16 %v4347
      %v4364 = vunpack.c.l.b16 %v4348
      %v4365 = vunpack.c.l.b16 %v4349
      %v4366 = vunpack.c.l.b16 %v4350
      %v4367 = vunpack.c.l.b16 %v4351
      %v4368 = vpack.c.b16 %v4361, %v4360
      %v4369 = vpack.c.b16 %v4363, %v4362
      %v4370 = vpack.c.b16 %v4365, %v4364
      %v4371 = vpack.c.b16 %v4367, %v4366
      %4376 = vmatprep.subr.bf16.mxu0 0
      %4377 = vmatpush1.bf16.msra.mxu0 %v4368
      %4378 = vmatprep.subr.bf16.mxu0 0
      %4379 = vmatpush1.bf16.msra.mxu0 %v4369
      %4380 = vmatprep.subr.bf16.mxu0 0
      %4381 = vmatpush1.bf16.msra.mxu0 %v4370
      %4382 = vmatprep.subr.bf16.mxu0 0
      %4383 = vmatpush1.bf16.msra.mxu0 %v4371
      %4384 = vmatprep.subr.bf16.mxu0 0
      %4385 = vmatpush1.bf16.msra.mxu0 0
      %4386 = vmatprep.subr.bf16.mxu0 0
      %4387 = vmatpush1.bf16.msra.mxu0 0
      %4388 = vmatprep.subr.bf16.mxu0 0
      %4389 = vmatpush1.bf16.msra.mxu0 0
      %4390 = vmatprep.subr.bf16.mxu0 0
      %4391 = vmatpush1.bf16.msra.mxu0 0
      %4392 = vmatprep.subr.bf16.mxu0 0
      %4393 = vmatpush1.bf16.msra.mxu0 0
      %4394 = vmatprep.subr.bf16.mxu0 0
      %4395 = vmatpush1.bf16.msra.mxu0 0
      %4396 = vmatprep.subr.bf16.mxu0 0
      %4397 = vmatpush1.bf16.msra.mxu0 0
      %4398 = vmatprep.subr.bf16.mxu0 0
      %4399 = vmatpush1.bf16.msra.mxu0 0
      %4400 = vmatprep.subr.bf16.mxu0 0
      %4401 = vmatpush1.bf16.msra.mxu0 0
      %4402 = vmatprep.subr.bf16.mxu0 0
      %4403 = vmatpush1.bf16.msra.mxu0 0
      %4404 = vmatprep.subr.bf16.mxu0 0
      %4405 = vmatpush1.bf16.msra.mxu0 0
      %4406 = vmatprep.subr.bf16.mxu0 0
      %4407 = vmatpush1.bf16.msra.mxu0 0
      %4408 = vmatprep.mubr.bf16.mxu0 0
      %4409 = vmatmul.mubr.bf16.gmra.mrb[0].mxu0 %v3797
      %v4410 = vpop.f32.mrb[0].mxu0
      %v4411 = vadd.f32 0.0, %v4410
      %v4412 = vpop.f32.mrb[0].mxu0
      %v4413 = vpop.f32.mrb[0].mxu0
      %v4414 = vadd.f32 0.0, %v4413
      %v4415 = vpop.f32.mrb[0].mxu0
      %4416 = vmatprep.mubr.bf16.mxu0 0
      %4417 = vmatmul.mubr.bf16.gmra.mrb[0].mxu0 %v3800
      %v4418 = vpop.f32.mrb[0].mxu0
      %v4419 = vadd.f32 0.0, %v4418
      %v4420 = vpop.f32.mrb[0].mxu0
      %v4421 = vpop.f32.mrb[0].mxu0
      %v4422 = vadd.f32 0.0, %v4421
      %v4423 = vpop.f32.mrb[0].mxu0
      %4424 = vdwg.mxu0
      %s4425 = scalar_lea.vmem %s29, 256
      %v4426 = vld [vmem:[%s4425] sm:$0xf]
      %v4427 = vld [vmem:[%s4425 + $0x4] sm:$0xf]
      %v4428 = vld [vmem:[%s4425 + $0x8] sm:$0xf]
      %v4429 = vld [vmem:[%s4425 + $0xc] sm:$0xf]
      %v4430 = vld [vmem:[%s4425 + $0x10] sm:$0xf]
      %v4431 = vld [vmem:[%s4425 + $0x14] sm:$0xf]
      %v4432 = vld [vmem:[%s4425 + $0x18] sm:$0xf]
      %v4433 = vld [vmem:[%s4425 + $0x1c] sm:$0xf]
      %v4442 = vunpack.c.l.b16 %v4426
      %v4443 = vunpack.c.l.b16 %v4427
      %v4444 = vunpack.c.l.b16 %v4428
      %v4445 = vunpack.c.l.b16 %v4429
      %v4446 = vunpack.c.l.b16 %v4430
      %v4447 = vunpack.c.l.b16 %v4431
      %v4448 = vunpack.c.l.b16 %v4432
      %v4449 = vunpack.c.l.b16 %v4433
      %v4450 = vpack.c.b16 %v4443, %v4442
      %v4451 = vpack.c.b16 %v4445, %v4444
      %v4452 = vpack.c.b16 %v4447, %v4446
      %v4453 = vpack.c.b16 %v4449, %v4448
      %4458 = vmatprep.subr.bf16.mxu0 0
      %4459 = vmatpush1.bf16.msra.mxu0 %v4450
      %4460 = vmatprep.subr.bf16.mxu0 0
      %4461 = vmatpush1.bf16.msra.mxu0 %v4451
      %4462 = vmatprep.subr.bf16.mxu0 0
      %4463 = vmatpush1.bf16.msra.mxu0 %v4452
      %4464 = vmatprep.subr.bf16.mxu0 0
      %4465 = vmatpush1.bf16.msra.mxu0 %v4453
      %4466 = vmatprep.subr.bf16.mxu0 0
      %4467 = vmatpush1.bf16.msra.mxu0 0
      %4468 = vmatprep.subr.bf16.mxu0 0
      %4469 = vmatpush1.bf16.msra.mxu0 0
      %4470 = vmatprep.subr.bf16.mxu0 0
      %4471 = vmatpush1.bf16.msra.mxu0 0
      %4472 = vmatprep.subr.bf16.mxu0 0
      %4473 = vmatpush1.bf16.msra.mxu0 0
      %4474 = vmatprep.subr.bf16.mxu0 0
      %4475 = vmatpush1.bf16.msra.mxu0 0
      %4476 = vmatprep.subr.bf16.mxu0 0
      %4477 = vmatpush1.bf16.msra.mxu0 0
      %4478 = vmatprep.subr.bf16.mxu0 0
      %4479 = vmatpush1.bf16.msra.mxu0 0
      %4480 = vmatprep.subr.bf16.mxu0 0
      %4481 = vmatpush1.bf16.msra.mxu0 0
      %4482 = vmatprep.subr.bf16.mxu0 0
      %4483 = vmatpush1.bf16.msra.mxu0 0
      %4484 = vmatprep.subr.bf16.mxu0 0
      %4485 = vmatpush1.bf16.msra.mxu0 0
      %4486 = vmatprep.subr.bf16.mxu0 0
      %4487 = vmatpush1.bf16.msra.mxu0 0
      %4488 = vmatprep.subr.bf16.mxu0 0
      %4489 = vmatpush1.bf16.msra.mxu0 0
      %4490 = vmatprep.mubr.bf16.mxu0 0
      %4491 = vmatmul.mubr.bf16.gmra.mrb[0].mxu0 %v3797
      %v4492 = vpop.f32.mrb[0].mxu0
      %v4493 = vadd.f32 0.0, %v4492
      %v4494 = vpop.f32.mrb[0].mxu0
      %v4495 = vpop.f32.mrb[0].mxu0
      %v4496 = vadd.f32 0.0, %v4495
      %v4497 = vpop.f32.mrb[0].mxu0
      %4498 = vmatprep.mubr.bf16.mxu0 0
      %4499 = vmatmul.mubr.bf16.gmra.mrb[0].mxu0 %v3800
      %v4500 = vpop.f32.mrb[0].mxu0
      %v4501 = vadd.f32 0.0, %v4500
      %v4502 = vpop.f32.mrb[0].mxu0
      %v4503 = vpop.f32.mrb[0].mxu0
      %v4504 = vadd.f32 0.0, %v4503
      %v4505 = vpop.f32.mrb[0].mxu0
      %4506 = vdwg.mxu0
      %v4507 = vpack.c.bf16 %v3840, %v3837
      %v4508 = vpack.c.bf16 %v3848, %v3845
      %v4509 = vpack.c.bf16 %v3922, %v3919
      %v4510 = vpack.c.bf16 %v3930, %v3927
      %v4511 = vpack.c.bf16 %v4004, %v4001
      %v4512 = vpack.c.bf16 %v4012, %v4009
      %v4513 = vpack.c.bf16 %v4086, %v4083
      %v4514 = vpack.c.bf16 %v4094, %v4091
      %v4515 = vpack.c.bf16 %v4168, %v4165
      %v4516 = vpack.c.bf16 %v4176, %v4173
      %v4517 = vpack.c.bf16 %v4250, %v4247
      %v4518 = vpack.c.bf16 %v4258, %v4255
      %v4519 = vpack.c.bf16 %v4332, %v4329
      %v4520 = vpack.c.bf16 %v4340, %v4337
      %v4521 = vpack.c.bf16 %v4414, %v4411
      %v4522 = vpack.c.bf16 %v4422, %v4419
      %v4523 = vpack.c.bf16 %v4496, %v4493
      %v4524 = vpack.c.bf16 %v4504, %v4501
      %v4525 = vld [vmem:[%s31] sm:$0xff]
      %v4526 = vld [vmem:[%s31 + $0x8] sm:$0xf]
      %v4527 = vld [vmem:[%s31 + $0xc] sm:$0xff]
      %v4528 = vld [vmem:[%s31 + $0x14] sm:$0xf]
      %v4529 = vld [vmem:[%s31 + $0x18] sm:$0xff]
      %v4530 = vld [vmem:[%s31 + $0x20] sm:$0xf]
      %v4531 = vld [vmem:[%s31 + $0x24] sm:$0xff]
      %v4532 = vld [vmem:[%s31 + $0x2c] sm:$0xf]
      %v4533 = vld [vmem:[%s33] sm:$0xff]
      %v4534 = vld [vmem:[%s33 + $0x8] sm:$0xff]
      %v4535 = vld [vmem:[%s33 + $0x10] sm:$0xff]
      %v4536 = vld [vmem:[%s33 + $0x18] sm:$0xff]
      %4538 = vset.pattern.permute.xlu0 0
      %4539 = vperm.xlu0 %4538, %v4533
      %v4540 = vpop.permute.xlu0 %4539
      %4543 = vset.pattern.permute.xlu0 0
      %4544 = vperm.xlu0 %4543, %v4534
      %v4545 = vpop.permute.xlu0 %4544
      %4548 = vset.pattern.permute.xlu0 0
      %4549 = vperm.xlu0 %4548, %v4535
      %v4550 = vpop.permute.xlu0 %4549
      %4553 = vset.pattern.permute.xlu0 0
      %4554 = vperm.xlu0 %4553, %v4536
      %v4555 = vpop.permute.xlu0 %4554
      %v4565 = vunpack.c.l.b16 %v4525
      %v4566 = vunpack.c.h.b16 %v4525
      %v4567 = vunpack.c.l.b16 %v4526
      %v4568 = vunpack.c.l.b16 %v4527
      %v4569 = vunpack.c.h.b16 %v4527
      %v4570 = vunpack.c.l.b16 %v4528
      %v4571 = vunpack.c.l.b16 %v4529
      %v4572 = vunpack.c.h.b16 %v4529
      %v4573 = vunpack.c.l.b16 %v4530
      %v4574 = vunpack.c.l.b16 %v4531
      %v4575 = vunpack.c.h.b16 %v4531
      %v4576 = vunpack.c.l.b16 %v4532
      %v4577 = vpack.c.b16 %v4568, %v4565
      %v4578 = vpack.c.b16 %v4569, %v4566
      %v4579 = vpack.c.b16 %v4570, %v4567
      %v4580 = vpack.c.b16 %v4574, %v4571
      %v4581 = vpack.c.b16 %v4575, %v4572
      %v4582 = vpack.c.b16 %v4576, %v4573
      %v4588 = vsel %vm1195, %v4579, 0
      %v4591 = vsel %vm1195, %v4582, 0
      %4593 = vmatprep.subr.bf16.mxu0 0
      %4594 = vmatpush1.bf16.msra.mxu0 %v4507
      %4595 = vmatprep.subr.bf16.mxu0 0
      %4596 = vmatpush1.bf16.msra.mxu0 %v4508
      %4597 = vmatprep.subr.bf16.mxu0 0
      %4598 = vmatpush1.bf16.msra.mxu0 %v4509
      %4599 = vmatprep.subr.bf16.mxu0 0
      %4600 = vmatpush1.bf16.msra.mxu0 %v4510
      %4601 = vmatprep.subr.bf16.mxu0 0
      %4602 = vmatpush1.bf16.msra.mxu0 %v4511
      %4603 = vmatprep.subr.bf16.mxu0 0
      %4604 = vmatpush1.bf16.msra.mxu0 %v4512
      %4605 = vmatprep.subr.bf16.mxu0 0
      %4606 = vmatpush1.bf16.msra.mxu0 %v4513
      %4607 = vmatprep.subr.bf16.mxu0 0
      %4608 = vmatpush1.bf16.msra.mxu0 %v4514
      %4609 = vmatprep.subr.bf16.mxu0 0
      %4610 = vmatpush1.bf16.msra.mxu0 %v4515
      %4611 = vmatprep.subr.bf16.mxu0 0
      %4612 = vmatpush1.bf16.msra.mxu0 %v4516
      %4613 = vmatprep.subr.bf16.mxu0 0
      %4614 = vmatpush1.bf16.msra.mxu0 %v4517
      %4615 = vmatprep.subr.bf16.mxu0 0
      %4616 = vmatpush1.bf16.msra.mxu0 %v4518
      %4617 = vmatprep.subr.bf16.mxu0 0
      %4618 = vmatpush1.bf16.msra.mxu0 %v4519
      %4619 = vmatprep.subr.bf16.mxu0 0
      %4620 = vmatpush1.bf16.msra.mxu0 %v4520
      %4621 = vmatprep.subr.bf16.mxu0 0
      %4622 = vmatpush1.bf16.msra.mxu0 %v4521
      %4623 = vmatprep.subr.bf16.mxu0 0
      %4624 = vmatpush1.bf16.msra.mxu0 %v4522
      %4625 = vmatprep.mubr.bf16.mxu0 %v4578
      %4626 = vmatmul.mubr.bf16.gmra.mrb[0].mxu0 %v4577
      %v4627 = vpop.f32.mrb[0].mxu0
      %v4628 = vadd.f32 %v4540, %v4627
      %v4629 = vpop.f32.mrb[0].mxu0
      %v4630 = vpop.f32.mrb[0].mxu0
      %v4631 = vadd.f32 %v4545, %v4630
      %v4632 = vpop.f32.mrb[0].mxu0
      %4633 = vmatprep.mubr.bf16.mxu0 %v4581
      %4634 = vmatmul.mubr.bf16.gmra.mrb[0].mxu0 %v4580
      %v4635 = vpop.f32.mrb[0].mxu0
      %v4636 = vadd.f32 %v4550, %v4635
      %v4637 = vpop.f32.mrb[0].mxu0
      %v4638 = vpop.f32.mrb[0].mxu0
      %v4639 = vadd.f32 %v4555, %v4638
      %v4640 = vpop.f32.mrb[0].mxu0
      %4641 = vdwg.mxu0
      %4642 = vmatprep.subr.bf16.mxu0 0
      %4643 = vmatpush1.bf16.msra.mxu0 %v4523
      %4644 = vmatprep.subr.bf16.mxu0 0
      %4645 = vmatpush1.bf16.msra.mxu0 %v4524
      %4646 = vmatprep.subr.bf16.mxu0 0
      %4647 = vmatpush1.bf16.msra.mxu0 0
      %4648 = vmatprep.subr.bf16.mxu0 0
      %4649 = vmatpush1.bf16.msra.mxu0 0
      %4650 = vmatprep.subr.bf16.mxu0 0
      %4651 = vmatpush1.bf16.msra.mxu0 0
      %4652 = vmatprep.subr.bf16.mxu0 0
      %4653 = vmatpush1.bf16.msra.mxu0 0
      %4654 = vmatprep.subr.bf16.mxu0 0
      %4655 = vmatpush1.bf16.msra.mxu0 0
      %4656 = vmatprep.subr.bf16.mxu0 0
      %4657 = vmatpush1.bf16.msra.mxu0 0
      %4658 = vmatprep.subr.bf16.mxu0 0
      %4659 = vmatpush1.bf16.msra.mxu0 0
      %4660 = vmatprep.subr.bf16.mxu0 0
      %4661 = vmatpush1.bf16.msra.mxu0 0
      %4662 = vmatprep.subr.bf16.mxu0 0
      %4663 = vmatpush1.bf16.msra.mxu0 0
      %4664 = vmatprep.subr.bf16.mxu0 0
      %4665 = vmatpush1.bf16.msra.mxu0 0
      %4666 = vmatprep.subr.bf16.mxu0 0
      %4667 = vmatpush1.bf16.msra.mxu0 0
      %4668 = vmatprep.subr.bf16.mxu0 0
      %4669 = vmatpush1.bf16.msra.mxu0 0
      %4670 = vmatprep.subr.bf16.mxu0 0
      %4671 = vmatpush1.bf16.msra.mxu0 0
      %4672 = vmatprep.subr.bf16.mxu0 0
      %4673 = vmatpush1.bf16.msra.mxu0 0
      %4674 = vmatprep.mubr.bf16.mxu0 0
      %4675 = vmatmul.mubr.bf16.gmra.mrb[0].mxu0 %v4588
      %v4676 = vpop.f32.mrb[0].mxu0
      %v4677 = vadd.f32 %v4628, %v4676
      %v4678 = vpop.f32.mrb[0].mxu0
      %v4679 = vpop.f32.mrb[0].mxu0
      %v4680 = vadd.f32 %v4631, %v4679
      %v4681 = vpop.f32.mrb[0].mxu0
      %4682 = vmatprep.mubr.bf16.mxu0 0
      %4683 = vmatmul.mubr.bf16.gmra.mrb[0].mxu0 %v4591
      %v4684 = vpop.f32.mrb[0].mxu0
      %v4685 = vadd.f32 %v4636, %v4684
      %v4686 = vpop.f32.mrb[0].mxu0
      %v4687 = vpop.f32.mrb[0].mxu0
      %v4688 = vadd.f32 %v4639, %v4687
      %v4689 = vpop.f32.mrb[0].mxu0
      %4690 = vdwg.mxu0
      %v4691 = vmax.f32 %v4677, 0.0
      %v4692 = vmax.f32 %v4680, 0.0
      %v4693 = vmax.f32 %v4685, 0.0
      %v4694 = vmax.f32 %v4688, 0.0
      %v4695 = vand.u32 2147483647, %v4677
      %v4696 = vand.u32 2147483647, %v4680
      %v4697 = vand.u32 2147483647, %v4685
      %v4698 = vand.u32 2147483647, %v4688
      %v4699 = vsub.f32 0.0, %v4695
      %v4700 = vsub.f32 0.0, %v4696
      %v4701 = vsub.f32 0.0, %v4697
      %v4702 = vsub.f32 0.0, %v4698
      %v4703 = vmul.f32 %v4699, 1.442695
      %v4704 = vpow.pop %v4703
      %v4705 = vmul.f32 %v4700, 1.442695
      %v4706 = vpow.pop %v4705
      %v4707 = vmul.f32 %v4701, 1.442695
      %v4708 = vpow.pop %v4707
      %v4709 = vmul.f32 %v4702, 1.442695
      %v4710 = vpow.pop %v4709
      %v4711 = vadd.f32 %v4704, 1.0
      %v4712 = vlog2.pop %v4711
      %v4713 = vmul.f32 %v4712, 0.6931472
      %v4714 = vmul.f32 -0.5, %v4704
      %v4715 = vadd.f32 %v4714, 1.0
      %v4716 = vmul.f32 %v4715, %v4704
      %v4717 = vand.u32 2147483647, %v4704
      %vm4718 = vcmp.lt.f32.partialorder %v4717, 0.0004427343
      %v4719 = vsel %vm4718, %v4716, %v4713
      %v4720 = vadd.f32 %v4706, 1.0
      %v4721 = vlog2.pop %v4720
      %v4722 = vmul.f32 %v4721, 0.6931472
      %v4723 = vmul.f32 -0.5, %v4706
      %v4724 = vadd.f32 %v4723, 1.0
      %v4725 = vmul.f32 %v4724, %v4706
      %v4726 = vand.u32 2147483647, %v4706
      %vm4727 = vcmp.lt.f32.partialorder %v4726, 0.0004427343
      %v4728 = vsel %vm4727, %v4725, %v4722
      %v4729 = vadd.f32 %v4708, 1.0
      %v4730 = vlog2.pop %v4729
      %v4731 = vmul.f32 %v4730, 0.6931472
      %v4732 = vmul.f32 -0.5, %v4708
      %v4733 = vadd.f32 %v4732, 1.0
      %v4734 = vmul.f32 %v4733, %v4708
      %v4735 = vand.u32 2147483647, %v4708
      %vm4736 = vcmp.lt.f32.partialorder %v4735, 0.0004427343
      %v4737 = vsel %vm4736, %v4734, %v4731
      %v4738 = vadd.f32 %v4710, 1.0
      %v4739 = vlog2.pop %v4738
      %v4740 = vmul.f32 %v4739, 0.6931472
      %v4741 = vmul.f32 -0.5, %v4710
      %v4742 = vadd.f32 %v4741, 1.0
      %v4743 = vmul.f32 %v4742, %v4710
      %v4744 = vand.u32 2147483647, %v4710
      %vm4745 = vcmp.lt.f32.partialorder %v4744, 0.0004427343
      %v4746 = vsel %vm4745, %v4743, %v4740
      %v4747 = vadd.f32 %v4691, %v4719
      %v4748 = vadd.f32 %v4692, %v4728
      %v4749 = vadd.f32 %v4693, %v4737
      %v4750 = vadd.f32 %v4694, %v4746
      %v4751 = vtanh.pop %v4747
      %v4752 = vtanh.pop %v4748
      %v4753 = vtanh.pop %v4749
      %v4754 = vtanh.pop %v4750
      %v4755 = vmul.f32 %v4677, %v4751
      %v4756 = vmul.f32 %v4680, %v4752
      %v4757 = vmul.f32 %v4685, %v4753
      %v4758 = vmul.f32 %v4688, %v4754
      %v4759 = vsel %vm3431, %v4755, 0.0
      %4760 = vadd.xlane.f32.xlu0 %v4759
      %v4761 = vpop.xlane.xlu0 %4760
      %v4762 = vsel %vm3431, %v4756, 0.0
      %4763 = vadd.xlane.f32.xlu0 %v4762
      %v4764 = vpop.xlane.xlu0 %4763
      %v4765 = vsel %vm3431, %v4757, 0.0
      %4766 = vadd.xlane.f32.xlu0 %v4765
      %v4767 = vpop.xlane.xlu0 %4766
      %v4768 = vsel %vm3431, %v4758, 0.0
      %4769 = vadd.xlane.f32.xlu0 %v4768
      %v4770 = vpop.xlane.xlu0 %4769
      %v4771 = vmul.f32 %v4761, %v3665
      %v4772 = vmul.f32 %v4764, %v3665
      %v4773 = vmul.f32 %v4767, %v3665
      %v4774 = vmul.f32 %v4770, %v3665
      %v4775 = vsub.f32 %v4755, %v4771
      %v4776 = vsub.f32 %v4756, %v4772
      %v4777 = vsub.f32 %v4757, %v4773
      %v4778 = vsub.f32 %v4758, %v4774
      %v4779 = vmul.f32 %v4775, %v4775
      %v4780 = vmul.f32 %v4776, %v4776
      %v4781 = vmul.f32 %v4777, %v4777
      %v4782 = vmul.f32 %v4778, %v4778
      %v4783 = vsel %vm3431, %v4779, 0.0
      %4784 = vadd.xlane.f32.xlu0 %v4783
      %v4785 = vpop.xlane.xlu0 %4784
      %v4786 = vsel %vm3431, %v4780, 0.0
      %4787 = vadd.xlane.f32.xlu0 %v4786
      %v4788 = vpop.xlane.xlu0 %4787
      %v4789 = vsel %vm3431, %v4781, 0.0
      %4790 = vadd.xlane.f32.xlu0 %v4789
      %v4791 = vpop.xlane.xlu0 %4790
      %v4792 = vsel %vm3431, %v4782, 0.0
      %4793 = vadd.xlane.f32.xlu0 %v4792
      %v4794 = vpop.xlane.xlu0 %4793
      %v4795 = vmul.f32 %v4785, %v3665
      %v4796 = vmul.f32 %v4788, %v3665
      %v4797 = vmul.f32 %v4791, %v3665
      %v4798 = vmul.f32 %v4794, %v3665
      %v4799 = vadd.f32 %v4795, 1e-05
      %v4800 = vadd.f32 %v4796, 1e-05
      %v4801 = vadd.f32 %v4797, 1e-05
      %v4802 = vadd.f32 %v4798, 1e-05
      %v4803 = vrsqrt.pop %v4799
      %v4804 = vrsqrt.pop %v4800
      %v4805 = vrsqrt.pop %v4801
      %v4806 = vrsqrt.pop %v4802
      %v4807 = vmul.f32 %v4775, %v4803
      %v4808 = vmul.f32 %v4776, %v4804
      %v4809 = vmul.f32 %v4777, %v4805
      %v4810 = vmul.f32 %v4778, %v4806
      %v4811 = vld [vmem:[%s35] sm:$0xff]
      %v4812 = vld [vmem:[%s35 + $0x8] sm:$0xff]
      %v4813 = vld [vmem:[%s35 + $0x10] sm:$0xff]
      %v4814 = vld [vmem:[%s35 + $0x18] sm:$0xff]
      %4816 = vset.pattern.permute.xlu0 0
      %4817 = vperm.xlu0 %4816, %v4811
      %v4818 = vpop.permute.xlu0 %4817
      %4821 = vset.pattern.permute.xlu0 0
      %4822 = vperm.xlu0 %4821, %v4812
      %v4823 = vpop.permute.xlu0 %4822
      %4826 = vset.pattern.permute.xlu0 0
      %4827 = vperm.xlu0 %4826, %v4813
      %v4828 = vpop.permute.xlu0 %4827
      %4831 = vset.pattern.permute.xlu0 0
      %4832 = vperm.xlu0 %4831, %v4814
      %v4833 = vpop.permute.xlu0 %4832
      %v4835 = vmul.f32 %v4807, %v4818
      %v4836 = vmul.f32 %v4808, %v4823
      %v4837 = vmul.f32 %v4809, %v4828
      %v4838 = vmul.f32 %v4810, %v4833
      %v4839 = vld [vmem:[%s37] sm:$0xff]
      %v4840 = vld [vmem:[%s37 + $0x8] sm:$0xff]
      %v4841 = vld [vmem:[%s37 + $0x10] sm:$0xff]
      %v4842 = vld [vmem:[%s37 + $0x18] sm:$0xff]
      %4844 = vset.pattern.permute.xlu0 0
      %4845 = vperm.xlu0 %4844, %v4839
      %v4846 = vpop.permute.xlu0 %4845
      %4849 = vset.pattern.permute.xlu0 0
      %4850 = vperm.xlu0 %4849, %v4840
      %v4851 = vpop.permute.xlu0 %4850
      %4854 = vset.pattern.permute.xlu0 0
      %4855 = vperm.xlu0 %4854, %v4841
      %v4856 = vpop.permute.xlu0 %4855
      %4859 = vset.pattern.permute.xlu0 0
      %4860 = vperm.xlu0 %4859, %v4842
      %v4861 = vpop.permute.xlu0 %4860
      %v4863 = vadd.f32 %v4835, %v4846
      %v4864 = vadd.f32 %v4836, %v4851
      %v4865 = vadd.f32 %v4837, %v4856
      %v4866 = vadd.f32 %v4838, %v4861
      %v4867 = vld [vmem:[%s39] sm:$0x3]
      %v4868 = vpack.c.bf16 %v4864, %v4863
      %v4869 = vpack.c.bf16 %v4866, %v4865
      %v4870 = vld [vmem:[%s41] sm:$0x7]
      %4872 = vset.pattern.permute.xlu0 0
      %4873 = vperm.xlu0 %4872, %v4870
      %v4874 = vpop.permute.xlu0 %4873
      %v4877 = vsel %vm1195, %v4867, 0
      %4879 = vmatprep.subr.bf16.mxu0 0
      %4880 = vmatpush1.bf16.msra.mxu0 %v4868
      %4881 = vmatprep.subr.bf16.mxu0 0
      %4882 = vmatpush1.bf16.msra.mxu0 %v4869
      %4883 = vmatprep.subr.bf16.mxu0 0
      %4884 = vmatpush1.bf16.msra.mxu0 0
      %4885 = vmatprep.subr.bf16.mxu0 0
      %4886 = vmatpush1.bf16.msra.mxu0 0
      %4887 = vmatprep.subr.bf16.mxu0 0
      %4888 = vmatpush1.bf16.msra.mxu0 0
      %4889 = vmatprep.subr.bf16.mxu0 0
      %4890 = vmatpush1.bf16.msra.mxu0 0
      %4891 = vmatprep.subr.bf16.mxu0 0
      %4892 = vmatpush1.bf16.msra.mxu0 0
      %4893 = vmatprep.subr.bf16.mxu0 0
      %4894 = vmatpush1.bf16.msra.mxu0 0
      %4895 = vmatprep.subr.bf16.mxu0 0
      %4896 = vmatpush1.bf16.msra.mxu0 0
      %4897 = vmatprep.subr.bf16.mxu0 0
      %4898 = vmatpush1.bf16.msra.mxu0 0
      %4899 = vmatprep.subr.bf16.mxu0 0
      %4900 = vmatpush1.bf16.msra.mxu0 0
      %4901 = vmatprep.subr.bf16.mxu0 0
      %4902 = vmatpush1.bf16.msra.mxu0 0
      %4903 = vmatprep.subr.bf16.mxu0 0
      %4904 = vmatpush1.bf16.msra.mxu0 0
      %4905 = vmatprep.subr.bf16.mxu0 0
      %4906 = vmatpush1.bf16.msra.mxu0 0
      %4907 = vmatprep.subr.bf16.mxu0 0
      %4908 = vmatpush1.bf16.msra.mxu0 0
      %4909 = vmatprep.subr.bf16.mxu0 0
      %4910 = vmatpush1.bf16.msra.mxu0 0
      %4911 = vmatprep.mubr.bf16.mxu0 0
      %4912 = vmatmul.mubr.bf16.gmra.mrb[0].mxu0 %v4877
      %v4913 = vpop.f32.mrb[0].mxu0
      %v4914 = vadd.f32 %v4874, %v4913
      %v4915 = vpop.f32.mrb[0].mxu0
      %v4916 = vpop.f32.mrb[0].mxu0
      %v4917 = vpop.f32.mrb[0].mxu0
      %4918 = vdwg.mxu0
      %v4919 = vtanh.pop %v4914
      %vm4920 = vcmask 518144
      %4921 = vst.msk [vmem:[%s1042] sm:$0x7] %vm4920, %v4919
      %v4922 = vld [vmem:[%s43] sm:$0xff]
      %v4923 = vld [vmem:[%s43 + $0x8] sm:$0xff]
      %v4924 = vld [vmem:[%s43 + $0x10] sm:$0xff]
      %v4925 = vld [vmem:[%s43 + $0x18] sm:$0xff]
      %v4926 = vld [vmem:[%s43 + $0x20] sm:$0xff]
      %v4927 = vld [vmem:[%s43 + $0x28] sm:$0xff]
      %v4928 = vld [vmem:[%s43 + $0x30] sm:$0xff]
      %v4929 = vld [vmem:[%s43 + $0x38] sm:$0xff]
      %v4938 = vunpack.c.l.b16 %v4922
      %v4939 = vunpack.c.h.b16 %v4922
      %v4940 = vunpack.c.l.b16 %v4923
      %v4941 = vunpack.c.h.b16 %v4923
      %v4942 = vunpack.c.l.b16 %v4924
      %v4943 = vunpack.c.h.b16 %v4924
      %v4944 = vunpack.c.l.b16 %v4925
      %v4945 = vunpack.c.h.b16 %v4925
      %v4946 = vunpack.c.l.b16 %v4926
      %v4947 = vunpack.c.h.b16 %v4926
      %v4948 = vunpack.c.l.b16 %v4927
      %v4949 = vunpack.c.h.b16 %v4927
      %v4950 = vunpack.c.l.b16 %v4928
      %v4951 = vunpack.c.h.b16 %v4928
      %v4952 = vunpack.c.l.b16 %v4929
      %v4953 = vunpack.c.h.b16 %v4929
      %v4954 = vpack.c.b16 %v4940, %v4938
      %v4955 = vpack.c.b16 %v4941, %v4939
      %v4956 = vpack.c.b16 %v4944, %v4942
      %v4957 = vpack.c.b16 %v4945, %v4943
      %v4958 = vpack.c.b16 %v4948, %v4946
      %v4959 = vpack.c.b16 %v4949, %v4947
      %v4960 = vpack.c.b16 %v4952, %v4950
      %v4961 = vpack.c.b16 %v4953, %v4951
      %v4971 = vsel %vm3431, %v4868, 0
      %v4974 = vsel %vm3431, %v4869, 0
      %4976 = vmatprep.subr.bf16.mxu0 %v4955
      %4977 = vmatpush1.bf16.msra.mxu0 %v4954
      %4978 = vmatprep.subr.bf16.mxu0 %v4957
      %4979 = vmatpush1.bf16.msra.mxu0 %v4956
      %4980 = vmatprep.subr.bf16.mxu0 %v4959
      %4981 = vmatpush1.bf16.msra.mxu0 %v4958
      %4982 = vmatprep.subr.bf16.mxu0 %v4961
      %4983 = vmatpush1.bf16.msra.mxu0 %v4960
      %4984 = vmatprep.subr.bf16.mxu0 0
      %4985 = vmatpush1.bf16.msra.mxu0 0
      %4986 = vmatprep.subr.bf16.mxu0 0
      %4987 = vmatpush1.bf16.msra.mxu0 0
      %4988 = vmatprep.subr.bf16.mxu0 0
      %4989 = vmatpush1.bf16.msra.mxu0 0
      %4990 = vmatprep.subr.bf16.mxu0 0
      %4991 = vmatpush1.bf16.msra.mxu0 0
      %4992 = vmatprep.subr.bf16.mxu0 0
      %4993 = vmatpush1.bf16.msra.mxu0 0
      %4994 = vmatprep.subr.bf16.mxu0 0
      %4995 = vmatpush1.bf16.msra.mxu0 0
      %4996 = vmatprep.subr.bf16.mxu0 0
      %4997 = vmatpush1.bf16.msra.mxu0 0
      %4998 = vmatprep.subr.bf16.mxu0 0
      %4999 = vmatpush1.bf16.msra.mxu0 0
      %5000 = vmatprep.subr.bf16.mxu0 0
      %5001 = vmatpush1.bf16.msra.mxu0 0
      %5002 = vmatprep.subr.bf16.mxu0 0
      %5003 = vmatpush1.bf16.msra.mxu0 0
      %5004 = vmatprep.subr.bf16.mxu0 0
      %5005 = vmatpush1.bf16.msra.mxu0 0
      %5006 = vmatprep.subr.bf16.mxu0 0
      %5007 = vmatpush1.bf16.msra.mxu0 0
      %5008 = vmatprep.mubr.bf16.mxu0 0
      %5009 = vmatmul.mubr.bf16.gmra.mrb[0].mxu0 %v4971
      %v5010 = vpop.f32.mrb[0].mxu0
      %v5011 = vadd.f32 0.0, %v5010
      %v5012 = vpop.f32.mrb[0].mxu0
      %v5013 = vadd.f32 0.0, %v5012
      %v5014 = vpop.f32.mrb[0].mxu0
      %v5015 = vadd.f32 0.0, %v5014
      %v5016 = vpop.f32.mrb[0].mxu0
      %v5017 = vadd.f32 0.0, %v5016
      %5018 = vmatprep.mubr.bf16.mxu0 0
      %5019 = vmatmul.mubr.bf16.gmra.mrb[0].mxu0 %v4974
      %v5020 = vpop.f32.mrb[0].mxu0
      %v5021 = vadd.f32 0.0, %v5020
      %v5022 = vpop.f32.mrb[0].mxu0
      %v5023 = vadd.f32 0.0, %v5022
      %v5024 = vpop.f32.mrb[0].mxu0
      %v5025 = vadd.f32 0.0, %v5024
      %v5026 = vpop.f32.mrb[0].mxu0
      %v5027 = vadd.f32 0.0, %v5026
      %5028 = vdwg.mxu0
      %s5029 = scalar_lea.vmem %s43, 64
      %v5030 = vld [vmem:[%s5029] sm:$0xff]
      %v5031 = vld [vmem:[%s5029 + $0x8] sm:$0xff]
      %v5032 = vld [vmem:[%s5029 + $0x10] sm:$0xff]
      %v5033 = vld [vmem:[%s5029 + $0x18] sm:$0xff]
      %v5034 = vld [vmem:[%s5029 + $0x20] sm:$0xff]
      %v5035 = vld [vmem:[%s5029 + $0x28] sm:$0xff]
      %v5036 = vld [vmem:[%s5029 + $0x30] sm:$0xff]
      %v5037 = vld [vmem:[%s5029 + $0x38] sm:$0xff]
      %v5046 = vunpack.c.l.b16 %v5030
      %v5047 = vunpack.c.h.b16 %v5030
      %v5048 = vunpack.c.l.b16 %v5031
      %v5049 = vunpack.c.h.b16 %v5031
      %v5050 = vunpack.c.l.b16 %v5032
      %v5051 = vunpack.c.h.b16 %v5032
      %v5052 = vunpack.c.l.b16 %v5033
      %v5053 = vunpack.c.h.b16 %v5033
      %v5054 = vunpack.c.l.b16 %v5034
      %v5055 = vunpack.c.h.b16 %v5034
      %v5056 = vunpack.c.l.b16 %v5035
      %v5057 = vunpack.c.h.b16 %v5035
      %v5058 = vunpack.c.l.b16 %v5036
      %v5059 = vunpack.c.h.b16 %v5036
      %v5060 = vunpack.c.l.b16 %v5037
      %v5061 = vunpack.c.h.b16 %v5037
      %v5062 = vpack.c.b16 %v5048, %v5046
      %v5063 = vpack.c.b16 %v5049, %v5047
      %v5064 = vpack.c.b16 %v5052, %v5050
      %v5065 = vpack.c.b16 %v5053, %v5051
      %v5066 = vpack.c.b16 %v5056, %v5054
      %v5067 = vpack.c.b16 %v5057, %v5055
      %v5068 = vpack.c.b16 %v5060, %v5058
      %v5069 = vpack.c.b16 %v5061, %v5059
      %5078 = vmatprep.subr.bf16.mxu0 %v5063
      %5079 = vmatpush1.bf16.msra.mxu0 %v5062
      %5080 = vmatprep.subr.bf16.mxu0 %v5065
      %5081 = vmatpush1.bf16.msra.mxu0 %v5064
      %5082 = vmatprep.subr.bf16.mxu0 %v5067
      %5083 = vmatpush1.bf16.msra.mxu0 %v5066
      %5084 = vmatprep.subr.bf16.mxu0 %v5069
      %5085 = vmatpush1.bf16.msra.mxu0 %v5068
      %5086 = vmatprep.subr.bf16.mxu0 0
      %5087 = vmatpush1.bf16.msra.mxu0 0
      %5088 = vmatprep.subr.bf16.mxu0 0
      %5089 = vmatpush1.bf16.msra.mxu0 0
      %5090 = vmatprep.subr.bf16.mxu0 0
      %5091 = vmatpush1.bf16.msra.mxu0 0
      %5092 = vmatprep.subr.bf16.mxu0 0
      %5093 = vmatpush1.bf16.msra.mxu0 0
      %5094 = vmatprep.subr.bf16.mxu0 0
      %5095 = vmatpush1.bf16.msra.mxu0 0
      %5096 = vmatprep.subr.bf16.mxu0 0
      %5097 = vmatpush1.bf16.msra.mxu0 0
      %5098 = vmatprep.subr.bf16.mxu0 0
      %5099 = vmatpush1.bf16.msra.mxu0 0
      %5100 = vmatprep.subr.bf16.mxu0 0
      %5101 = vmatpush1.bf16.msra.mxu0 0
      %5102 = vmatprep.subr.bf16.mxu0 0
      %5103 = vmatpush1.bf16.msra.mxu0 0
      %5104 = vmatprep.subr.bf16.mxu0 0
      %5105 = vmatpush1.bf16.msra.mxu0 0
      %5106 = vmatprep.subr.bf16.mxu0 0
      %5107 = vmatpush1.bf16.msra.mxu0 0
      %5108 = vmatprep.subr.bf16.mxu0 0
      %5109 = vmatpush1.bf16.msra.mxu0 0
      %5110 = vmatprep.mubr.bf16.mxu0 0
      %5111 = vmatmul.mubr.bf16.gmra.mrb[0].mxu0 %v4971
      %v5112 = vpop.f32.mrb[0].mxu0
      %v5113 = vadd.f32 0.0, %v5112
      %v5114 = vpop.f32.mrb[0].mxu0
      %v5115 = vadd.f32 0.0, %v5114
      %v5116 = vpop.f32.mrb[0].mxu0
      %v5117 = vadd.f32 0.0, %v5116
      %v5118 = vpop.f32.mrb[0].mxu0
      %v5119 = vadd.f32 0.0, %v5118
      %5120 = vmatprep.mubr.bf16.mxu0 0
      %5121 = vmatmul.mubr.bf16.gmra.mrb[0].mxu0 %v4974
      %v5122 = vpop.f32.mrb[0].mxu0
      %v5123 = vadd.f32 0.0, %v5122
      %v5124 = vpop.f32.mrb[0].mxu0
      %v5125 = vadd.f32 0.0, %v5124
      %v5126 = vpop.f32.mrb[0].mxu0
      %v5127 = vadd.f32 0.0, %v5126
      %v5128 = vpop.f32.mrb[0].mxu0
      %v5129 = vadd.f32 0.0, %v5128
      %5130 = vdwg.mxu0
      %s5131 = scalar_lea.vmem %s43, 128
      %v5132 = vld [vmem:[%s5131] sm:$0xff]
      %v5133 = vld [vmem:[%s5131 + $0x8] sm:$0xff]
      %v5134 = vld [vmem:[%s5131 + $0x10] sm:$0xff]
      %v5135 = vld [vmem:[%s5131 + $0x18] sm:$0xff]
      %v5136 = vld [vmem:[%s5131 + $0x20] sm:$0xff]
      %v5137 = vld [vmem:[%s5131 + $0x28] sm:$0xff]
      %v5138 = vld [vmem:[%s5131 + $0x30] sm:$0xff]
      %v5139 = vld [vmem:[%s5131 + $0x38] sm:$0xff]
      %v5148 = vunpack.c.l.b16 %v5132
      %v5149 = vunpack.c.h.b16 %v5132
      %v5150 = vunpack.c.l.b16 %v5133
      %v5151 = vunpack.c.h.b16 %v5133
      %v5152 = vunpack.c.l.b16 %v5134
      %v5153 = vunpack.c.h.b16 %v5134
      %v5154 = vunpack.c.l.b16 %v5135
      %v5155 = vunpack.c.h.b16 %v5135
      %v5156 = vunpack.c.l.b16 %v5136
      %v5157 = vunpack.c.h.b16 %v5136
      %v5158 = vunpack.c.l.b16 %v5137
      %v5159 = vunpack.c.h.b16 %v5137
      %v5160 = vunpack.c.l.b16 %v5138
      %v5161 = vunpack.c.h.b16 %v5138
      %v5162 = vunpack.c.l.b16 %v5139
      %v5163 = vunpack.c.h.b16 %v5139
      %v5164 = vpack.c.b16 %v5150, %v5148
      %v5165 = vpack.c.b16 %v5151, %v5149
      %v5166 = vpack.c.b16 %v5154, %v5152
      %v5167 = vpack.c.b16 %v5155, %v5153
      %v5168 = vpack.c.b16 %v5158, %v5156
      %v5169 = vpack.c.b16 %v5159, %v5157
      %v5170 = vpack.c.b16 %v5162, %v5160
      %v5171 = vpack.c.b16 %v5163, %v5161
      %5180 = vmatprep.subr.bf16.mxu0 %v5165
      %5181 = vmatpush1.bf16.msra.mxu0 %v5164
      %5182 = vmatprep.subr.bf16.mxu0 %v5167
      %5183 = vmatpush1.bf16.msra.mxu0 %v5166
      %5184 = vmatprep.subr.bf16.mxu0 %v5169
      %5185 = vmatpush1.bf16.msra.mxu0 %v5168
      %5186 = vmatprep.subr.bf16.mxu0 %v5171
      %5187 = vmatpush1.bf16.msra.mxu0 %v5170
      %5188 = vmatprep.subr.bf16.mxu0 0
      %5189 = vmatpush1.bf16.msra.mxu0 0
      %5190 = vmatprep.subr.bf16.mxu0 0
      %5191 = vmatpush1.bf16.msra.mxu0 0
      %5192 = vmatprep.subr.bf16.mxu0 0
      %5193 = vmatpush1.bf16.msra.mxu0 0
      %5194 = vmatprep.subr.bf16.mxu0 0
      %5195 = vmatpush1.bf16.msra.mxu0 0
      %5196 = vmatprep.subr.bf16.mxu0 0
      %5197 = vmatpush1.bf16.msra.mxu0 0
      %5198 = vmatprep.subr.bf16.mxu0 0
      %5199 = vmatpush1.bf16.msra.mxu0 0
      %5200 = vmatprep.subr.bf16.mxu0 0
      %5201 = vmatpush1.bf16.msra.mxu0 0
      %5202 = vmatprep.subr.bf16.mxu0 0
      %5203 = vmatpush1.bf16.msra.mxu0 0
      %5204 = vmatprep.subr.bf16.mxu0 0
      %5205 = vmatpush1.bf16.msra.mxu0 0
      %5206 = vmatprep.subr.bf16.mxu0 0
      %5207 = vmatpush1.bf16.msra.mxu0 0
      %5208 = vmatprep.subr.bf16.mxu0 0
      %5209 = vmatpush1.bf16.msra.mxu0 0
      %5210 = vmatprep.subr.bf16.mxu0 0
      %5211 = vmatpush1.bf16.msra.mxu0 0
      %5212 = vmatprep.mubr.bf16.mxu0 0
      %5213 = vmatmul.mubr.bf16.gmra.mrb[0].mxu0 %v4971
      %v5214 = vpop.f32.mrb[0].mxu0
      %v5215 = vadd.f32 0.0, %v5214
      %v5216 = vpop.f32.mrb[0].mxu0
      %v5217 = vadd.f32 0.0, %v5216
      %v5218 = vpop.f32.mrb[0].mxu0
      %v5219 = vadd.f32 0.0, %v5218
      %v5220 = vpop.f32.mrb[0].mxu0
      %v5221 = vadd.f32 0.0, %v5220
      %5222 = vmatprep.mubr.bf16.mxu0 0
      %5223 = vmatmul.mubr.bf16.gmra.mrb[0].mxu0 %v4974
      %v5224 = vpop.f32.mrb[0].mxu0
      %v5225 = vadd.f32 0.0, %v5224
      %v5226 = vpop.f32.mrb[0].mxu0
      %v5227 = vadd.f32 0.0, %v5226
      %v5228 = vpop.f32.mrb[0].mxu0
      %v5229 = vadd.f32 0.0, %v5228
      %v5230 = vpop.f32.mrb[0].mxu0
      %v5231 = vadd.f32 0.0, %v5230
      %5232 = vdwg.mxu0
      %s5233 = scalar_lea.vmem %s43, 192
      %v5234 = vld [vmem:[%s5233] sm:$0xff]
      %v5235 = vld [vmem:[%s5233 + $0x8] sm:$0xff]
      %v5236 = vld [vmem:[%s5233 + $0x10] sm:$0xff]
      %v5237 = vld [vmem:[%s5233 + $0x18] sm:$0xff]
      %v5238 = vld [vmem:[%s5233 + $0x20] sm:$0xff]
      %v5239 = vld [vmem:[%s5233 + $0x28] sm:$0xff]
      %v5240 = vld [vmem:[%s5233 + $0x30] sm:$0xff]
      %v5241 = vld [vmem:[%s5233 + $0x38] sm:$0xff]
      %v5250 = vunpack.c.l.b16 %v5234
      %v5251 = vunpack.c.h.b16 %v5234
      %v5252 = vunpack.c.l.b16 %v5235
      %v5253 = vunpack.c.h.b16 %v5235
      %v5254 = vunpack.c.l.b16 %v5236
      %v5255 = vunpack.c.h.b16 %v5236
      %v5256 = vunpack.c.l.b16 %v5237
      %v5257 = vunpack.c.h.b16 %v5237
      %v5258 = vunpack.c.l.b16 %v5238
      %v5259 = vunpack.c.h.b16 %v5238
      %v5260 = vunpack.c.l.b16 %v5239
      %v5261 = vunpack.c.h.b16 %v5239
      %v5262 = vunpack.c.l.b16 %v5240
      %v5263 = vunpack.c.h.b16 %v5240
      %v5264 = vunpack.c.l.b16 %v5241
      %v5265 = vunpack.c.h.b16 %v5241
      %v5266 = vpack.c.b16 %v5252, %v5250
      %v5267 = vpack.c.b16 %v5253, %v5251
      %v5268 = vpack.c.b16 %v5256, %v5254
      %v5269 = vpack.c.b16 %v5257, %v5255
      %v5270 = vpack.c.b16 %v5260, %v5258
      %v5271 = vpack.c.b16 %v5261, %v5259
      %v5272 = vpack.c.b16 %v5264, %v5262
      %v5273 = vpack.c.b16 %v5265, %v5263
      %5282 = vmatprep.subr.bf16.mxu0 %v5267
      %5283 = vmatpush1.bf16.msra.mxu0 %v5266
      %5284 = vmatprep.subr.bf16.mxu0 %v5269
      %5285 = vmatpush1.bf16.msra.mxu0 %v5268
      %5286 = vmatprep.subr.bf16.mxu0 %v5271
      %5287 = vmatpush1.bf16.msra.mxu0 %v5270
      %5288 = vmatprep.subr.bf16.mxu0 %v5273
      %5289 = vmatpush1.bf16.msra.mxu0 %v5272
      %5290 = vmatprep.subr.bf16.mxu0 0
      %5291 = vmatpush1.bf16.msra.mxu0 0
      %5292 = vmatprep.subr.bf16.mxu0 0
      %5293 = vmatpush1.bf16.msra.mxu0 0
      %5294 = vmatprep.subr.bf16.mxu0 0
      %5295 = vmatpush1.bf16.msra.mxu0 0
      %5296 = vmatprep.subr.bf16.mxu0 0
      %5297 = vmatpush1.bf16.msra.mxu0 0
      %5298 = vmatprep.subr.bf16.mxu0 0
      %5299 = vmatpush1.bf16.msra.mxu0 0
      %5300 = vmatprep.subr.bf16.mxu0 0
      %5301 = vmatpush1.bf16.msra.mxu0 0
      %5302 = vmatprep.subr.bf16.mxu0 0
      %5303 = vmatpush1.bf16.msra.mxu0 0
      %5304 = vmatprep.subr.bf16.mxu0 0
      %5305 = vmatpush1.bf16.msra.mxu0 0
      %5306 = vmatprep.subr.bf16.mxu0 0
      %5307 = vmatpush1.bf16.msra.mxu0 0
      %5308 = vmatprep.subr.bf16.mxu0 0
      %5309 = vmatpush1.bf16.msra.mxu0 0
      %5310 = vmatprep.subr.bf16.mxu0 0
      %5311 = vmatpush1.bf16.msra.mxu0 0
      %5312 = vmatprep.subr.bf16.mxu0 0
      %5313 = vmatpush1.bf16.msra.mxu0 0
      %5314 = vmatprep.mubr.bf16.mxu0 0
      %5315 = vmatmul.mubr.bf16.gmra.mrb[0].mxu0 %v4971
      %v5316 = vpop.f32.mrb[0].mxu0
      %v5317 = vadd.f32 0.0, %v5316
      %v5318 = vpop.f32.mrb[0].mxu0
      %v5319 = vadd.f32 0.0, %v5318
      %v5320 = vpop.f32.mrb[0].mxu0
      %v5321 = vadd.f32 0.0, %v5320
      %v5322 = vpop.f32.mrb[0].mxu0
      %v5323 = vadd.f32 0.0, %v5322
      %5324 = vmatprep.mubr.bf16.mxu0 0
      %5325 = vmatmul.mubr.bf16.gmra.mrb[0].mxu0 %v4974
      %v5326 = vpop.f32.mrb[0].mxu0
      %v5327 = vadd.f32 0.0, %v5326
      %v5328 = vpop.f32.mrb[0].mxu0
      %v5329 = vadd.f32 0.0, %v5328
      %v5330 = vpop.f32.mrb[0].mxu0
      %v5331 = vadd.f32 0.0, %v5330
      %v5332 = vpop.f32.mrb[0].mxu0
      %v5333 = vadd.f32 0.0, %v5332
      %5334 = vdwg.mxu0
      %s5335 = scalar_lea.vmem %s43, 256
      %v5336 = vld [vmem:[%s5335] sm:$0xff]
      %v5337 = vld [vmem:[%s5335 + $0x8] sm:$0xff]
      %v5338 = vld [vmem:[%s5335 + $0x10] sm:$0xff]
      %v5339 = vld [vmem:[%s5335 + $0x18] sm:$0xff]
      %v5340 = vld [vmem:[%s5335 + $0x20] sm:$0xff]
      %v5341 = vld [vmem:[%s5335 + $0x28] sm:$0xff]
      %v5342 = vld [vmem:[%s5335 + $0x30] sm:$0xff]
      %v5343 = vld [vmem:[%s5335 + $0x38] sm:$0xff]
      %v5352 = vunpack.c.l.b16 %v5336
      %v5353 = vunpack.c.h.b16 %v5336
      %v5354 = vunpack.c.l.b16 %v5337
      %v5355 = vunpack.c.h.b16 %v5337
      %v5356 = vunpack.c.l.b16 %v5338
      %v5357 = vunpack.c.h.b16 %v5338
      %v5358 = vunpack.c.l.b16 %v5339
      %v5359 = vunpack.c.h.b16 %v5339
      %v5360 = vunpack.c.l.b16 %v5340
      %v5361 = vunpack.c.h.b16 %v5340
      %v5362 = vunpack.c.l.b16 %v5341
      %v5363 = vunpack.c.h.b16 %v5341
      %v5364 = vunpack.c.l.b16 %v5342
      %v5365 = vunpack.c.h.b16 %v5342
      %v5366 = vunpack.c.l.b16 %v5343
      %v5367 = vunpack.c.h.b16 %v5343
      %v5368 = vpack.c.b16 %v5354, %v5352
      %v5369 = vpack.c.b16 %v5355, %v5353
      %v5370 = vpack.c.b16 %v5358, %v5356
      %v5371 = vpack.c.b16 %v5359, %v5357
      %v5372 = vpack.c.b16 %v5362, %v5360
      %v5373 = vpack.c.b16 %v5363, %v5361
      %v5374 = vpack.c.b16 %v5366, %v5364
      %v5375 = vpack.c.b16 %v5367, %v5365
      %5384 = vmatprep.subr.bf16.mxu0 %v5369
      %5385 = vmatpush1.bf16.msra.mxu0 %v5368
      %5386 = vmatprep.subr.bf16.mxu0 %v5371
      %5387 = vmatpush1.bf16.msra.mxu0 %v5370
      %5388 = vmatprep.subr.bf16.mxu0 %v5373
      %5389 = vmatpush1.bf16.msra.mxu0 %v5372
      %5390 = vmatprep.subr.bf16.mxu0 %v5375
      %5391 = vmatpush1.bf16.msra.mxu0 %v5374
      %5392 = vmatprep.subr.bf16.mxu0 0
      %5393 = vmatpush1.bf16.msra.mxu0 0
      %5394 = vmatprep.subr.bf16.mxu0 0
      %5395 = vmatpush1.bf16.msra.mxu0 0
      %5396 = vmatprep.subr.bf16.mxu0 0
      %5397 = vmatpush1.bf16.msra.mxu0 0
      %5398 = vmatprep.subr.bf16.mxu0 0
      %5399 = vmatpush1.bf16.msra.mxu0 0
      %5400 = vmatprep.subr.bf16.mxu0 0
      %5401 = vmatpush1.bf16.msra.mxu0 0
      %5402 = vmatprep.subr.bf16.mxu0 0
      %5403 = vmatpush1.bf16.msra.mxu0 0
      %5404 = vmatprep.subr.bf16.mxu0 0
      %5405 = vmatpush1.bf16.msra.mxu0 0
      %5406 = vmatprep.subr.bf16.mxu0 0
      %5407 = vmatpush1.bf16.msra.mxu0 0
      %5408 = vmatprep.subr.bf16.mxu0 0
      %5409 = vmatpush1.bf16.msra.mxu0 0
      %5410 = vmatprep.subr.bf16.mxu0 0
      %5411 = vmatpush1.bf16.msra.mxu0 0
      %5412 = vmatprep.subr.bf16.mxu0 0
      %5413 = vmatpush1.bf16.msra.mxu0 0
      %5414 = vmatprep.subr.bf16.mxu0 0
      %5415 = vmatpush1.bf16.msra.mxu0 0
      %5416 = vmatprep.mubr.bf16.mxu0 0
      %5417 = vmatmul.mubr.bf16.gmra.mrb[0].mxu0 %v4971
      %v5418 = vpop.f32.mrb[0].mxu0
      %v5419 = vadd.f32 0.0, %v5418
      %v5420 = vpop.f32.mrb[0].mxu0
      %v5421 = vadd.f32 0.0, %v5420
      %v5422 = vpop.f32.mrb[0].mxu0
      %v5423 = vadd.f32 0.0, %v5422
      %v5424 = vpop.f32.mrb[0].mxu0
      %v5425 = vadd.f32 0.0, %v5424
      %5426 = vmatprep.mubr.bf16.mxu0 0
      %5427 = vmatmul.mubr.bf16.gmra.mrb[0].mxu0 %v4974
      %v5428 = vpop.f32.mrb[0].mxu0
      %v5429 = vadd.f32 0.0, %v5428
      %v5430 = vpop.f32.mrb[0].mxu0
      %v5431 = vadd.f32 0.0, %v5430
      %v5432 = vpop.f32.mrb[0].mxu0
      %v5433 = vadd.f32 0.0, %v5432
      %v5434 = vpop.f32.mrb[0].mxu0
      %v5435 = vadd.f32 0.0, %v5434
      %5436 = vdwg.mxu0
      %s5437 = scalar_lea.vmem %s43, 320
      %v5438 = vld [vmem:[%s5437] sm:$0xff]
      %v5439 = vld [vmem:[%s5437 + $0x8] sm:$0xff]
      %v5440 = vld [vmem:[%s5437 + $0x10] sm:$0xff]
      %v5441 = vld [vmem:[%s5437 + $0x18] sm:$0xff]
      %v5442 = vld [vmem:[%s5437 + $0x20] sm:$0xff]
      %v5443 = vld [vmem:[%s5437 + $0x28] sm:$0xff]
      %v5444 = vld [vmem:[%s5437 + $0x30] sm:$0xff]
      %v5445 = vld [vmem:[%s5437 + $0x38] sm:$0xff]
      %v5454 = vunpack.c.l.b16 %v5438
      %v5455 = vunpack.c.h.b16 %v5438
      %v5456 = vunpack.c.l.b16 %v5439
      %v5457 = vunpack.c.h.b16 %v5439
      %v5458 = vunpack.c.l.b16 %v5440
      %v5459 = vunpack.c.h.b16 %v5440
      %v5460 = vunpack.c.l.b16 %v5441
      %v5461 = vunpack.c.h.b16 %v5441
      %v5462 = vunpack.c.l.b16 %v5442
      %v5463 = vunpack.c.h.b16 %v5442
      %v5464 = vunpack.c.l.b16 %v5443
      %v5465 = vunpack.c.h.b16 %v5443
      %v5466 = vunpack.c.l.b16 %v5444
      %v5467 = vunpack.c.h.b16 %v5444
      %v5468 = vunpack.c.l.b16 %v5445
      %v5469 = vunpack.c.h.b16 %v5445
      %v5470 = vpack.c.b16 %v5456, %v5454
      %v5471 = vpack.c.b16 %v5457, %v5455
      %v5472 = vpack.c.b16 %v5460, %v5458
      %v5473 = vpack.c.b16 %v5461, %v5459
      %v5474 = vpack.c.b16 %v5464, %v5462
      %v5475 = vpack.c.b16 %v5465, %v5463
      %v5476 = vpack.c.b16 %v5468, %v5466
      %v5477 = vpack.c.b16 %v5469, %v5467
      %5486 = vmatprep.subr.bf16.mxu0 %v5471
      %5487 = vmatpush1.bf16.msra.mxu0 %v5470
      %5488 = vmatprep.subr.bf16.mxu0 %v5473
      %5489 = vmatpush1.bf16.msra.mxu0 %v5472
      %5490 = vmatprep.subr.bf16.mxu0 %v5475
      %5491 = vmatpush1.bf16.msra.mxu0 %v5474
      %5492 = vmatprep.subr.bf16.mxu0 %v5477
      %5493 = vmatpush1.bf16.msra.mxu0 %v5476
      %5494 = vmatprep.subr.bf16.mxu0 0
      %5495 = vmatpush1.bf16.msra.mxu0 0
      %5496 = vmatprep.subr.bf16.mxu0 0
      %5497 = vmatpush1.bf16.msra.mxu0 0
      %5498 = vmatprep.subr.bf16.mxu0 0
      %5499 = vmatpush1.bf16.msra.mxu0 0
      %5500 = vmatprep.subr.bf16.mxu0 0
      %5501 = vmatpush1.bf16.msra.mxu0 0
      %5502 = vmatprep.subr.bf16.mxu0 0
      %5503 = vmatpush1.bf16.msra.mxu0 0
      %5504 = vmatprep.subr.bf16.mxu0 0
      %5505 = vmatpush1.bf16.msra.mxu0 0
      %5506 = vmatprep.subr.bf16.mxu0 0
      %5507 = vmatpush1.bf16.msra.mxu0 0
      %5508 = vmatprep.subr.bf16.mxu0 0
      %5509 = vmatpush1.bf16.msra.mxu0 0
      %5510 = vmatprep.subr.bf16.mxu0 0
      %5511 = vmatpush1.bf16.msra.mxu0 0
      %5512 = vmatprep.subr.bf16.mxu0 0
      %5513 = vmatpush1.bf16.msra.mxu0 0
      %5514 = vmatprep.subr.bf16.mxu0 0
      %5515 = vmatpush1.bf16.msra.mxu0 0
      %5516 = vmatprep.subr.bf16.mxu0 0
      %5517 = vmatpush1.bf16.msra.mxu0 0
      %5518 = vmatprep.mubr.bf16.mxu0 0
      %5519 = vmatmul.mubr.bf16.gmra.mrb[0].mxu0 %v4971
      %v5520 = vpop.f32.mrb[0].mxu0
      %v5521 = vadd.f32 0.0, %v5520
      %v5522 = vpop.f32.mrb[0].mxu0
      %v5523 = vadd.f32 0.0, %v5522
      %v5524 = vpop.f32.mrb[0].mxu0
      %v5525 = vadd.f32 0.0, %v5524
      %v5526 = vpop.f32.mrb[0].mxu0
      %v5527 = vadd.f32 0.0, %v5526
      %5528 = vmatprep.mubr.bf16.mxu0 0
      %5529 = vmatmul.mubr.bf16.gmra.mrb[0].mxu0 %v4974
      %v5530 = vpop.f32.mrb[0].mxu0
      %v5531 = vadd.f32 0.0, %v5530
      %v5532 = vpop.f32.mrb[0].mxu0
      %v5533 = vadd.f32 0.0, %v5532
      %v5534 = vpop.f32.mrb[0].mxu0
      %v5535 = vadd.f32 0.0, %v5534
      %v5536 = vpop.f32.mrb[0].mxu0
      %v5537 = vadd.f32 0.0, %v5536
      %5538 = vdwg.mxu0
      %s5539 = scalar_lea.vmem %s43, 384
      %v5540 = vld [vmem:[%s5539] sm:$0xff]
      %v5541 = vld [vmem:[%s5539 + $0x8] sm:$0xff]
      %v5542 = vld [vmem:[%s5539 + $0x10] sm:$0xff]
      %v5543 = vld [vmem:[%s5539 + $0x18] sm:$0xff]
      %v5544 = vld [vmem:[%s5539 + $0x20] sm:$0xff]
      %v5545 = vld [vmem:[%s5539 + $0x28] sm:$0xff]
      %v5546 = vld [vmem:[%s5539 + $0x30] sm:$0xff]
      %v5547 = vld [vmem:[%s5539 + $0x38] sm:$0xff]
      %v5556 = vunpack.c.l.b16 %v5540
      %v5557 = vunpack.c.h.b16 %v5540
      %v5558 = vunpack.c.l.b16 %v5541
      %v5559 = vunpack.c.h.b16 %v5541
      %v5560 = vunpack.c.l.b16 %v5542
      %v5561 = vunpack.c.h.b16 %v5542
      %v5562 = vunpack.c.l.b16 %v5543
      %v5563 = vunpack.c.h.b16 %v5543
      %v5564 = vunpack.c.l.b16 %v5544
      %v5565 = vunpack.c.h.b16 %v5544
      %v5566 = vunpack.c.l.b16 %v5545
      %v5567 = vunpack.c.h.b16 %v5545
      %v5568 = vunpack.c.l.b16 %v5546
      %v5569 = vunpack.c.h.b16 %v5546
      %v5570 = vunpack.c.l.b16 %v5547
      %v5571 = vunpack.c.h.b16 %v5547
      %v5572 = vpack.c.b16 %v5558, %v5556
      %v5573 = vpack.c.b16 %v5559, %v5557
      %v5574 = vpack.c.b16 %v5562, %v5560
      %v5575 = vpack.c.b16 %v5563, %v5561
      %v5576 = vpack.c.b16 %v5566, %v5564
      %v5577 = vpack.c.b16 %v5567, %v5565
      %v5578 = vpack.c.b16 %v5570, %v5568
      %v5579 = vpack.c.b16 %v5571, %v5569
      %5588 = vmatprep.subr.bf16.mxu0 %v5573
      %5589 = vmatpush1.bf16.msra.mxu0 %v5572
      %5590 = vmatprep.subr.bf16.mxu0 %v5575
      %5591 = vmatpush1.bf16.msra.mxu0 %v5574
      %5592 = vmatprep.subr.bf16.mxu0 %v5577
      %5593 = vmatpush1.bf16.msra.mxu0 %v5576
      %5594 = vmatprep.subr.bf16.mxu0 %v5579
      %5595 = vmatpush1.bf16.msra.mxu0 %v5578
      %5596 = vmatprep.subr.bf16.mxu0 0
      %5597 = vmatpush1.bf16.msra.mxu0 0
      %5598 = vmatprep.subr.bf16.mxu0 0
      %5599 = vmatpush1.bf16.msra.mxu0 0
      %5600 = vmatprep.subr.bf16.mxu0 0
      %5601 = vmatpush1.bf16.msra.mxu0 0
      %5602 = vmatprep.subr.bf16.mxu0 0
      %5603 = vmatpush1.bf16.msra.mxu0 0
      %5604 = vmatprep.subr.bf16.mxu0 0
      %5605 = vmatpush1.bf16.msra.mxu0 0
      %5606 = vmatprep.subr.bf16.mxu0 0
      %5607 = vmatpush1.bf16.msra.mxu0 0
      %5608 = vmatprep.subr.bf16.mxu0 0
      %5609 = vmatpush1.bf16.msra.mxu0 0
      %5610 = vmatprep.subr.bf16.mxu0 0
      %5611 = vmatpush1.bf16.msra.mxu0 0
      %5612 = vmatprep.subr.bf16.mxu0 0
      %5613 = vmatpush1.bf16.msra.mxu0 0
      %5614 = vmatprep.subr.bf16.mxu0 0
      %5615 = vmatpush1.bf16.msra.mxu0 0
      %5616 = vmatprep.subr.bf16.mxu0 0
      %5617 = vmatpush1.bf16.msra.mxu0 0
      %5618 = vmatprep.subr.bf16.mxu0 0
      %5619 = vmatpush1.bf16.msra.mxu0 0
      %5620 = vmatprep.mubr.bf16.mxu0 0
      %5621 = vmatmul.mubr.bf16.gmra.mrb[0].mxu0 %v4971
      %v5622 = vpop.f32.mrb[0].mxu0
      %v5623 = vadd.f32 0.0, %v5622
      %v5624 = vpop.f32.mrb[0].mxu0
      %v5625 = vadd.f32 0.0, %v5624
      %v5626 = vpop.f32.mrb[0].mxu0
      %v5627 = vadd.f32 0.0, %v5626
      %v5628 = vpop.f32.mrb[0].mxu0
      %v5629 = vadd.f32 0.0, %v5628
      %5630 = vmatprep.mubr.bf16.mxu0 0
      %5631 = vmatmul.mubr.bf16.gmra.mrb[0].mxu0 %v4974
      %v5632 = vpop.f32.mrb[0].mxu0
      %v5633 = vadd.f32 0.0, %v5632
      %v5634 = vpop.f32.mrb[0].mxu0
      %v5635 = vadd.f32 0.0, %v5634
      %v5636 = vpop.f32.mrb[0].mxu0
      %v5637 = vadd.f32 0.0, %v5636
      %v5638 = vpop.f32.mrb[0].mxu0
      %v5639 = vadd.f32 0.0, %v5638
      %5640 = vdwg.mxu0
      %s5641 = scalar_lea.vmem %s43, 448
      %v5642 = vld [vmem:[%s5641] sm:$0xff]
      %v5643 = vld [vmem:[%s5641 + $0x8] sm:$0xff]
      %v5644 = vld [vmem:[%s5641 + $0x10] sm:$0xff]
      %v5645 = vld [vmem:[%s5641 + $0x18] sm:$0xff]
      %v5646 = vld [vmem:[%s5641 + $0x20] sm:$0xff]
      %v5647 = vld [vmem:[%s5641 + $0x28] sm:$0xff]
      %v5648 = vld [vmem:[%s5641 + $0x30] sm:$0xff]
      %v5649 = vld [vmem:[%s5641 + $0x38] sm:$0xff]
      %v5658 = vunpack.c.l.b16 %v5642
      %v5659 = vunpack.c.h.b16 %v5642
      %v5660 = vunpack.c.l.b16 %v5643
      %v5661 = vunpack.c.h.b16 %v5643
      %v5662 = vunpack.c.l.b16 %v5644
      %v5663 = vunpack.c.h.b16 %v5644
      %v5664 = vunpack.c.l.b16 %v5645
      %v5665 = vunpack.c.h.b16 %v5645
      %v5666 = vunpack.c.l.b16 %v5646
      %v5667 = vunpack.c.h.b16 %v5646
      %v5668 = vunpack.c.l.b16 %v5647
      %v5669 = vunpack.c.h.b16 %v5647
      %v5670 = vunpack.c.l.b16 %v5648
      %v5671 = vunpack.c.h.b16 %v5648
      %v5672 = vunpack.c.l.b16 %v5649
      %v5673 = vunpack.c.h.b16 %v5649
      %v5674 = vpack.c.b16 %v5660, %v5658
      %v5675 = vpack.c.b16 %v5661, %v5659
      %v5676 = vpack.c.b16 %v5664, %v5662
      %v5677 = vpack.c.b16 %v5665, %v5663
      %v5678 = vpack.c.b16 %v5668, %v5666
      %v5679 = vpack.c.b16 %v5669, %v5667
      %v5680 = vpack.c.b16 %v5672, %v5670
      %v5681 = vpack.c.b16 %v5673, %v5671
      %5690 = vmatprep.subr.bf16.mxu0 %v5675
      %5691 = vmatpush1.bf16.msra.mxu0 %v5674
      %5692 = vmatprep.subr.bf16.mxu0 %v5677
      %5693 = vmatpush1.bf16.msra.mxu0 %v5676
      %5694 = vmatprep.subr.bf16.mxu0 %v5679
      %5695 = vmatpush1.bf16.msra.mxu0 %v5678
      %5696 = vmatprep.subr.bf16.mxu0 %v5681
      %5697 = vmatpush1.bf16.msra.mxu0 %v5680
      %5698 = vmatprep.subr.bf16.mxu0 0
      %5699 = vmatpush1.bf16.msra.mxu0 0
      %5700 = vmatprep.subr.bf16.mxu0 0
      %5701 = vmatpush1.bf16.msra.mxu0 0
      %5702 = vmatprep.subr.bf16.mxu0 0
      %5703 = vmatpush1.bf16.msra.mxu0 0
      %5704 = vmatprep.subr.bf16.mxu0 0
      %5705 = vmatpush1.bf16.msra.mxu0 0
      %5706 = vmatprep.subr.bf16.mxu0 0
      %5707 = vmatpush1.bf16.msra.mxu0 0
      %5708 = vmatprep.subr.bf16.mxu0 0
      %5709 = vmatpush1.bf16.msra.mxu0 0
      %5710 = vmatprep.subr.bf16.mxu0 0
      %5711 = vmatpush1.bf16.msra.mxu0 0
      %5712 = vmatprep.subr.bf16.mxu0 0
      %5713 = vmatpush1.bf16.msra.mxu0 0
      %5714 = vmatprep.subr.bf16.mxu0 0
      %5715 = vmatpush1.bf16.msra.mxu0 0
      %5716 = vmatprep.subr.bf16.mxu0 0
      %5717 = vmatpush1.bf16.msra.mxu0 0
      %5718 = vmatprep.subr.bf16.mxu0 0
      %5719 = vmatpush1.bf16.msra.mxu0 0
      %5720 = vmatprep.subr.bf16.mxu0 0
      %5721 = vmatpush1.bf16.msra.mxu0 0
      %5722 = vmatprep.mubr.bf16.mxu0 0
      %5723 = vmatmul.mubr.bf16.gmra.mrb[0].mxu0 %v4971
      %v5724 = vpop.f32.mrb[0].mxu0
      %v5725 = vadd.f32 0.0, %v5724
      %v5726 = vpop.f32.mrb[0].mxu0
      %v5727 = vadd.f32 0.0, %v5726
      %v5728 = vpop.f32.mrb[0].mxu0
      %v5729 = vadd.f32 0.0, %v5728
      %v5730 = vpop.f32.mrb[0].mxu0
      %v5731 = vadd.f32 0.0, %v5730
      %5732 = vmatprep.mubr.bf16.mxu0 0
      %5733 = vmatmul.mubr.bf16.gmra.mrb[0].mxu0 %v4974
      %v5734 = vpop.f32.mrb[0].mxu0
      %v5735 = vadd.f32 0.0, %v5734
      %v5736 = vpop.f32.mrb[0].mxu0
      %v5737 = vadd.f32 0.0, %v5736
      %v5738 = vpop.f32.mrb[0].mxu0
      %v5739 = vadd.f32 0.0, %v5738
      %v5740 = vpop.f32.mrb[0].mxu0
      %v5741 = vadd.f32 0.0, %v5740
      %5742 = vdwg.mxu0
      %s5743 = scalar_lea.vmem %s43, 512
      %v5744 = vld [vmem:[%s5743] sm:$0xff]
      %v5745 = vld [vmem:[%s5743 + $0x8] sm:$0xff]
      %v5746 = vld [vmem:[%s5743 + $0x10] sm:$0xff]
      %v5747 = vld [vmem:[%s5743 + $0x18] sm:$0xff]
      %v5748 = vld [vmem:[%s5743 + $0x20] sm:$0xff]
      %v5749 = vld [vmem:[%s5743 + $0x28] sm:$0xff]
      %v5750 = vld [vmem:[%s5743 + $0x30] sm:$0xff]
      %v5751 = vld [vmem:[%s5743 + $0x38] sm:$0xff]
      %v5760 = vunpack.c.l.b16 %v5744
      %v5761 = vunpack.c.h.b16 %v5744
      %v5762 = vunpack.c.l.b16 %v5745
      %v5763 = vunpack.c.h.b16 %v5745
      %v5764 = vunpack.c.l.b16 %v5746
      %v5765 = vunpack.c.h.b16 %v5746
      %v5766 = vunpack.c.l.b16 %v5747
      %v5767 = vunpack.c.h.b16 %v5747
      %v5768 = vunpack.c.l.b16 %v5748
      %v5769 = vunpack.c.h.b16 %v5748
      %v5770 = vunpack.c.l.b16 %v5749
      %v5771 = vunpack.c.h.b16 %v5749
      %v5772 = vunpack.c.l.b16 %v5750
      %v5773 = vunpack.c.h.b16 %v5750
      %v5774 = vunpack.c.l.b16 %v5751
      %v5775 = vunpack.c.h.b16 %v5751
      %v5776 = vpack.c.b16 %v5762, %v5760
      %v5777 = vpack.c.b16 %v5763, %v5761
      %v5778 = vpack.c.b16 %v5766, %v5764
      %v5779 = vpack.c.b16 %v5767, %v5765
      %v5780 = vpack.c.b16 %v5770, %v5768
      %v5781 = vpack.c.b16 %v5771, %v5769
      %v5782 = vpack.c.b16 %v5774, %v5772
      %v5783 = vpack.c.b16 %v5775, %v5773
      %5792 = vmatprep.subr.bf16.mxu0 %v5777
      %5793 = vmatpush1.bf16.msra.mxu0 %v5776
      %5794 = vmatprep.subr.bf16.mxu0 %v5779
      %5795 = vmatpush1.bf16.msra.mxu0 %v5778
      %5796 = vmatprep.subr.bf16.mxu0 %v5781
      %5797 = vmatpush1.bf16.msra.mxu0 %v5780
      %5798 = vmatprep.subr.bf16.mxu0 %v5783
      %5799 = vmatpush1.bf16.msra.mxu0 %v5782
      %5800 = vmatprep.subr.bf16.mxu0 0
      %5801 = vmatpush1.bf16.msra.mxu0 0
      %5802 = vmatprep.subr.bf16.mxu0 0
      %5803 = vmatpush1.bf16.msra.mxu0 0
      %5804 = vmatprep.subr.bf16.mxu0 0
      %5805 = vmatpush1.bf16.msra.mxu0 0
      %5806 = vmatprep.subr.bf16.mxu0 0
      %5807 = vmatpush1.bf16.msra.mxu0 0
      %5808 = vmatprep.subr.bf16.mxu0 0
      %5809 = vmatpush1.bf16.msra.mxu0 0
      %5810 = vmatprep.subr.bf16.mxu0 0
      %5811 = vmatpush1.bf16.msra.mxu0 0
      %5812 = vmatprep.subr.bf16.mxu0 0
      %5813 = vmatpush1.bf16.msra.mxu0 0
      %5814 = vmatprep.subr.bf16.mxu0 0
      %5815 = vmatpush1.bf16.msra.mxu0 0
      %5816 = vmatprep.subr.bf16.mxu0 0
      %5817 = vmatpush1.bf16.msra.mxu0 0
      %5818 = vmatprep.subr.bf16.mxu0 0
      %5819 = vmatpush1.bf16.msra.mxu0 0
      %5820 = vmatprep.subr.bf16.mxu0 0
      %5821 = vmatpush1.bf16.msra.mxu0 0
      %5822 = vmatprep.subr.bf16.mxu0 0
      %5823 = vmatpush1.bf16.msra.mxu0 0
      %5824 = vmatprep.mubr.bf16.mxu0 0
      %5825 = vmatmul.mubr.bf16.gmra.mrb[0].mxu0 %v4971
      %v5826 = vpop.f32.mrb[0].mxu0
      %v5827 = vadd.f32 0.0, %v5826
      %v5828 = vpop.f32.mrb[0].mxu0
      %v5829 = vadd.f32 0.0, %v5828
      %v5830 = vpop.f32.mrb[0].mxu0
      %v5831 = vadd.f32 0.0, %v5830
      %v5832 = vpop.f32.mrb[0].mxu0
      %v5833 = vadd.f32 0.0, %v5832
      %5834 = vmatprep.mubr.bf16.mxu0 0
      %5835 = vmatmul.mubr.bf16.gmra.mrb[0].mxu0 %v4974
      %v5836 = vpop.f32.mrb[0].mxu0
      %v5837 = vadd.f32 0.0, %v5836
      %v5838 = vpop.f32.mrb[0].mxu0
      %v5839 = vadd.f32 0.0, %v5838
      %v5840 = vpop.f32.mrb[0].mxu0
      %v5841 = vadd.f32 0.0, %v5840
      %v5842 = vpop.f32.mrb[0].mxu0
      %v5843 = vadd.f32 0.0, %v5842
      %5844 = vdwg.mxu0
      %v5845 = vpack.c.bf16 %v5015, %v5011
      %v5846 = vpack.c.bf16 %v5017, %v5013
      %v5847 = vpack.c.bf16 %v5025, %v5021
      %v5848 = vpack.c.bf16 %v5027, %v5023
      %v5849 = vpack.c.bf16 %v5117, %v5113
      %v5850 = vpack.c.bf16 %v5119, %v5115
      %v5851 = vpack.c.bf16 %v5127, %v5123
      %v5852 = vpack.c.bf16 %v5129, %v5125
      %v5853 = vpack.c.bf16 %v5219, %v5215
      %v5854 = vpack.c.bf16 %v5221, %v5217
      %v5855 = vpack.c.bf16 %v5229, %v5225
      %v5856 = vpack.c.bf16 %v5231, %v5227
      %v5857 = vpack.c.bf16 %v5321, %v5317
      %v5858 = vpack.c.bf16 %v5323, %v5319
      %v5859 = vpack.c.bf16 %v5331, %v5327
      %v5860 = vpack.c.bf16 %v5333, %v5329
      %v5861 = vpack.c.bf16 %v5423, %v5419
      %v5862 = vpack.c.bf16 %v5425, %v5421
      %v5863 = vpack.c.bf16 %v5433, %v5429
      %v5864 = vpack.c.bf16 %v5435, %v5431
      %v5865 = vpack.c.bf16 %v5525, %v5521
      %v5866 = vpack.c.bf16 %v5527, %v5523
      %v5867 = vpack.c.bf16 %v5535, %v5531
      %v5868 = vpack.c.bf16 %v5537, %v5533
      %v5869 = vpack.c.bf16 %v5627, %v5623
      %v5870 = vpack.c.bf16 %v5629, %v5625
      %v5871 = vpack.c.bf16 %v5637, %v5633
      %v5872 = vpack.c.bf16 %v5639, %v5635
      %v5873 = vpack.c.bf16 %v5729, %v5725
      %v5874 = vpack.c.bf16 %v5731, %v5727
      %v5875 = vpack.c.bf16 %v5739, %v5735
      %v5876 = vpack.c.bf16 %v5741, %v5737
      %v5877 = vpack.c.bf16 %v5831, %v5827
      %v5878 = vpack.c.bf16 %v5833, %v5829
      %v5879 = vpack.c.bf16 %v5841, %v5837
      %v5880 = vpack.c.bf16 %v5843, %v5839
      %v5881 = vld [vmem:[%s45] sm:$0xff]
      %v5882 = vld [vmem:[%s45 + $0x8] sm:$0xf]
      %v5883 = vld [vmem:[%s45 + $0xc] sm:$0xff]
      %v5884 = vld [vmem:[%s45 + $0x14] sm:$0xf]
      %v5885 = vld [vmem:[%s47] sm:$0xff]
      %v5886 = vld [vmem:[%s47 + $0x8] sm:$0xff]
      %5888 = vset.pattern.permute.xlu0 0
      %5889 = vperm.xlu0 %5888, %v5885
      %v5890 = vpop.permute.xlu0 %5889
      %5893 = vset.pattern.permute.xlu0 0
      %5894 = vperm.xlu0 %5893, %v5886
      %v5895 = vpop.permute.xlu0 %5894
      %v5901 = vunpack.c.l.b16 %v5881
      %v5902 = vunpack.c.h.b16 %v5881
      %v5903 = vunpack.c.l.b16 %v5882
      %v5904 = vunpack.c.l.b16 %v5883
      %v5905 = vunpack.c.h.b16 %v5883
      %v5906 = vunpack.c.l.b16 %v5884
      %v5907 = vpack.c.b16 %v5904, %v5901
      %v5908 = vpack.c.b16 %v5905, %v5902
      %v5909 = vpack.c.b16 %v5906, %v5903
      %v5913 = vsel %vm1195, %v5909, 0
      %5915 = vmatprep.subr.bf16.mxu0 %v5846
      %5916 = vmatpush1.bf16.msra.mxu0 %v5845
      %5917 = vmatprep.subr.bf16.mxu0 %v5848
      %5918 = vmatpush1.bf16.msra.mxu0 %v5847
      %5919 = vmatprep.subr.bf16.mxu0 %v5850
      %5920 = vmatpush1.bf16.msra.mxu0 %v5849
      %5921 = vmatprep.subr.bf16.mxu0 %v5852
      %5922 = vmatpush1.bf16.msra.mxu0 %v5851
      %5923 = vmatprep.subr.bf16.mxu0 %v5854
      %5924 = vmatpush1.bf16.msra.mxu0 %v5853
      %5925 = vmatprep.subr.bf16.mxu0 %v5856
      %5926 = vmatpush1.bf16.msra.mxu0 %v5855
      %5927 = vmatprep.subr.bf16.mxu0 %v5858
      %5928 = vmatpush1.bf16.msra.mxu0 %v5857
      %5929 = vmatprep.subr.bf16.mxu0 %v5860
      %5930 = vmatpush1.bf16.msra.mxu0 %v5859
      %5931 = vmatprep.subr.bf16.mxu0 %v5862
      %5932 = vmatpush1.bf16.msra.mxu0 %v5861
      %5933 = vmatprep.subr.bf16.mxu0 %v5864
      %5934 = vmatpush1.bf16.msra.mxu0 %v5863
      %5935 = vmatprep.subr.bf16.mxu0 %v5866
      %5936 = vmatpush1.bf16.msra.mxu0 %v5865
      %5937 = vmatprep.subr.bf16.mxu0 %v5868
      %5938 = vmatpush1.bf16.msra.mxu0 %v5867
      %5939 = vmatprep.subr.bf16.mxu0 %v5870
      %5940 = vmatpush1.bf16.msra.mxu0 %v5869
      %5941 = vmatprep.subr.bf16.mxu0 %v5872
      %5942 = vmatpush1.bf16.msra.mxu0 %v5871
      %5943 = vmatprep.subr.bf16.mxu0 %v5874
      %5944 = vmatpush1.bf16.msra.mxu0 %v5873
      %5945 = vmatprep.subr.bf16.mxu0 %v5876
      %5946 = vmatpush1.bf16.msra.mxu0 %v5875
      %5947 = vmatprep.mubr.bf16.mxu0 %v5908
      %5948 = vmatmul.mubr.bf16.gmra.mrb[0].mxu0 %v5907
      %v5949 = vpop.f32.mrb[0].mxu0
      %v5950 = vadd.f32 %v5890, %v5949
      %v5951 = vpop.f32.mrb[0].mxu0
      %v5952 = vadd.f32 %v5890, %v5951
      %v5953 = vpop.f32.mrb[0].mxu0
      %v5954 = vadd.f32 %v5895, %v5953
      %v5955 = vpop.f32.mrb[0].mxu0
      %v5956 = vadd.f32 %v5895, %v5955
      %5957 = vdwg.mxu0
      %5958 = vmatprep.subr.bf16.mxu0 %v5878
      %5959 = vmatpush1.bf16.msra.mxu0 %v5877
      %5960 = vmatprep.subr.bf16.mxu0 %v5880
      %5961 = vmatpush1.bf16.msra.mxu0 %v5879
      %5962 = vmatprep.subr.bf16.mxu0 0
      %5963 = vmatpush1.bf16.msra.mxu0 0
      %5964 = vmatprep.subr.bf16.mxu0 0
      %5965 = vmatpush1.bf16.msra.mxu0 0
      %5966 = vmatprep.subr.bf16.mxu0 0
      %5967 = vmatpush1.bf16.msra.mxu0 0
      %5968 = vmatprep.subr.bf16.mxu0 0
      %5969 = vmatpush1.bf16.msra.mxu0 0
      %5970 = vmatprep.subr.bf16.mxu0 0
      %5971 = vmatpush1.bf16.msra.mxu0 0
      %5972 = vmatprep.subr.bf16.mxu0 0
      %5973 = vmatpush1.bf16.msra.mxu0 0
      %5974 = vmatprep.subr.bf16.mxu0 0
      %5975 = vmatpush1.bf16.msra.mxu0 0
      %5976 = vmatprep.subr.bf16.mxu0 0
      %5977 = vmatpush1.bf16.msra.mxu0 0
      %5978 = vmatprep.subr.bf16.mxu0 0
      %5979 = vmatpush1.bf16.msra.mxu0 0
      %5980 = vmatprep.subr.bf16.mxu0 0
      %5981 = vmatpush1.bf16.msra.mxu0 0
      %5982 = vmatprep.subr.bf16.mxu0 0
      %5983 = vmatpush1.bf16.msra.mxu0 0
      %5984 = vmatprep.subr.bf16.mxu0 0
      %5985 = vmatpush1.bf16.msra.mxu0 0
      %5986 = vmatprep.subr.bf16.mxu0 0
      %5987 = vmatpush1.bf16.msra.mxu0 0
      %5988 = vmatprep.subr.bf16.mxu0 0
      %5989 = vmatpush1.bf16.msra.mxu0 0
      %5990 = vmatprep.mubr.bf16.mxu0 0
      %5991 = vmatmul.mubr.bf16.gmra.mrb[0].mxu0 %v5913
      %v5992 = vpop.f32.mrb[0].mxu0
      %v5993 = vadd.f32 %v5950, %v5992
      %v5994 = vpop.f32.mrb[0].mxu0
      %v5995 = vadd.f32 %v5952, %v5994
      %v5996 = vpop.f32.mrb[0].mxu0
      %v5997 = vadd.f32 %v5954, %v5996
      %v5998 = vpop.f32.mrb[0].mxu0
      %v5999 = vadd.f32 %v5956, %v5998
      %6000 = vdwg.mxu0
      %v6001 = vmax.f32 %v5993, 0.0
      %v6002 = vmax.f32 %v5995, 0.0
      %v6003 = vmax.f32 %v5997, 0.0
      %v6004 = vmax.f32 %v5999, 0.0
      %v6005 = vand.u32 2147483647, %v5993
      %v6006 = vand.u32 2147483647, %v5995
      %v6007 = vand.u32 2147483647, %v5997
      %v6008 = vand.u32 2147483647, %v5999
      %v6009 = vsub.f32 0.0, %v6005
      %v6010 = vsub.f32 0.0, %v6006
      %v6011 = vsub.f32 0.0, %v6007
      %v6012 = vsub.f32 0.0, %v6008
      %v6013 = vmul.f32 %v6009, 1.442695
      %v6014 = vpow.pop %v6013
      %v6015 = vmul.f32 %v6010, 1.442695
      %v6016 = vpow.pop %v6015
      %v6017 = vmul.f32 %v6011, 1.442695
      %v6018 = vpow.pop %v6017
      %v6019 = vmul.f32 %v6012, 1.442695
      %v6020 = vpow.pop %v6019
      %v6021 = vadd.f32 %v6014, 1.0
      %v6022 = vlog2.pop %v6021
      %v6023 = vmul.f32 %v6022, 0.6931472
      %v6024 = vmul.f32 -0.5, %v6014
      %v6025 = vadd.f32 %v6024, 1.0
      %v6026 = vmul.f32 %v6025, %v6014
      %v6027 = vand.u32 2147483647, %v6014
      %vm6028 = vcmp.lt.f32.partialorder %v6027, 0.0004427343
      %v6029 = vsel %vm6028, %v6026, %v6023
      %v6030 = vadd.f32 %v6016, 1.0
      %v6031 = vlog2.pop %v6030
      %v6032 = vmul.f32 %v6031, 0.6931472
      %v6033 = vmul.f32 -0.5, %v6016
      %v6034 = vadd.f32 %v6033, 1.0
      %v6035 = vmul.f32 %v6034, %v6016
      %v6036 = vand.u32 2147483647, %v6016
      %vm6037 = vcmp.lt.f32.partialorder %v6036, 0.0004427343
      %v6038 = vsel %vm6037, %v6035, %v6032
      %v6039 = vadd.f32 %v6018, 1.0
      %v6040 = vlog2.pop %v6039
      %v6041 = vmul.f32 %v6040, 0.6931472
      %v6042 = vmul.f32 -0.5, %v6018
      %v6043 = vadd.f32 %v6042, 1.0
      %v6044 = vmul.f32 %v6043, %v6018
      %v6045 = vand.u32 2147483647, %v6018
      %vm6046 = vcmp.lt.f32.partialorder %v6045, 0.0004427343
      %v6047 = vsel %vm6046, %v6044, %v6041
      %v6048 = vadd.f32 %v6020, 1.0
      %v6049 = vlog2.pop %v6048
      %v6050 = vmul.f32 %v6049, 0.6931472
      %v6051 = vmul.f32 -0.5, %v6020
      %v6052 = vadd.f32 %v6051, 1.0
      %v6053 = vmul.f32 %v6052, %v6020
      %v6054 = vand.u32 2147483647, %v6020
      %vm6055 = vcmp.lt.f32.partialorder %v6054, 0.0004427343
      %v6056 = vsel %vm6055, %v6053, %v6050
      %v6057 = vadd.f32 %v6001, %v6029
      %v6058 = vadd.f32 %v6002, %v6038
      %v6059 = vadd.f32 %v6003, %v6047
      %v6060 = vadd.f32 %v6004, %v6056
      %v6061 = vtanh.pop %v6057
      %v6062 = vtanh.pop %v6058
      %v6063 = vtanh.pop %v6059
      %v6064 = vtanh.pop %v6060
      %v6065 = vmul.f32 %v5993, %v6061
      %v6066 = vmul.f32 %v5995, %v6062
      %v6067 = vmul.f32 %v5997, %v6063
      %v6068 = vmul.f32 %v5999, %v6064
      %v6069 = vadd.f32 %v6065, %v6066
      %6070 = vadd.xlane.f32.xlu0 %v6069
      %v6071 = vpop.xlane.xlu0 %6070
      %v6072 = vadd.f32 %v6067, %v6068
      %6073 = vadd.xlane.f32.xlu0 %v6072
      %v6074 = vpop.xlane.xlu0 %6073
      %v6075 = vrcp.pop 256.0
      %v6076 = vmul.f32 %v6071, %v6075
      %v6077 = vmul.f32 %v6074, %v6075
      %v6078 = vsub.f32 %v6065, %v6076
      %v6079 = vsub.f32 %v6066, %v6076
      %v6080 = vsub.f32 %v6067, %v6077
      %v6081 = vsub.f32 %v6068, %v6077
      %v6082 = vmul.f32 %v6078, %v6078
      %v6083 = vmul.f32 %v6079, %v6079
      %v6084 = vmul.f32 %v6080, %v6080
      %v6085 = vmul.f32 %v6081, %v6081
      %v6086 = vadd.f32 %v6082, %v6083
      %6087 = vadd.xlane.f32.xlu0 %v6086
      %v6088 = vpop.xlane.xlu0 %6087
      %v6089 = vadd.f32 %v6084, %v6085
      %6090 = vadd.xlane.f32.xlu0 %v6089
      %v6091 = vpop.xlane.xlu0 %6090
      %v6092 = vmul.f32 %v6088, %v6075
      %v6093 = vmul.f32 %v6091, %v6075
      %v6094 = vadd.f32 %v6092, 1e-05
      %v6095 = vadd.f32 %v6093, 1e-05
      %v6096 = vrsqrt.pop %v6094
      %v6097 = vrsqrt.pop %v6095
      %v6098 = vmul.f32 %v6078, %v6096
      %v6099 = vmul.f32 %v6079, %v6096
      %v6100 = vmul.f32 %v6080, %v6097
      %v6101 = vmul.f32 %v6081, %v6097
      %v6102 = vld [vmem:[%s49] sm:$0xff]
      %v6103 = vld [vmem:[%s49 + $0x8] sm:$0xff]
      %6105 = vset.pattern.permute.xlu0 0
      %6106 = vperm.xlu0 %6105, %v6102
      %v6107 = vpop.permute.xlu0 %6106
      %6110 = vset.pattern.permute.xlu0 0
      %6111 = vperm.xlu0 %6110, %v6103
      %v6112 = vpop.permute.xlu0 %6111
      %v6114 = vmul.f32 %v6098, %v6107
      %v6115 = vmul.f32 %v6099, %v6107
      %v6116 = vmul.f32 %v6100, %v6112
      %v6117 = vmul.f32 %v6101, %v6112
      %v6118 = vld [vmem:[%s51] sm:$0xff]
      %v6119 = vld [vmem:[%s51 + $0x8] sm:$0xff]
      %6121 = vset.pattern.permute.xlu0 0
      %6122 = vperm.xlu0 %6121, %v6118
      %v6123 = vpop.permute.xlu0 %6122
      %6126 = vset.pattern.permute.xlu0 0
      %6127 = vperm.xlu0 %6126, %v6119
      %v6128 = vpop.permute.xlu0 %6127
      %v6130 = vadd.f32 %v6114, %v6123
      %v6131 = vadd.f32 %v6115, %v6123
      %v6132 = vadd.f32 %v6116, %v6128
      %v6133 = vadd.f32 %v6117, %v6128
      %v6134 = vpack.c.bf16 %v6132, %v6130
      %v6135 = vpack.c.bf16 %v6133, %v6131
      %v6136 = vld [vmem:[%s53] sm:$0xff]
      %v6137 = vld [vmem:[%s53 + $0x8] sm:$0xff]
      %v6138 = vld [vmem:[%s53 + $0x10] sm:$0xff]
      %v6139 = vld [vmem:[%s53 + $0x18] sm:$0xff]
      %v6140 = vld [vmem:[%s53 + $0x20] sm:$0xff]
      %v6141 = vld [vmem:[%s53 + $0x28] sm:$0xff]
      %v6142 = vld [vmem:[%s53 + $0x30] sm:$0xff]
      %v6143 = vld [vmem:[%s53 + $0x38] sm:$0xff]
      %v6144 = vld [vmem:[%s53 + $0x40] sm:$0xff]
      %v6145 = vld [vmem:[%s53 + $0x48] sm:$0xff]
      %v6146 = vld [vmem:[%s53 + $0x50] sm:$0xff]
      %v6147 = vld [vmem:[%s53 + $0x58] sm:$0xff]
      %v6148 = vld [vmem:[%s53 + $0x60] sm:$0xff]
      %v6149 = vld [vmem:[%s53 + $0x68] sm:$0xff]
      %v6150 = vld [vmem:[%s53 + $0x70] sm:$0xff]
      %v6151 = vld [vmem:[%s53 + $0x78] sm:$0xff]
      %v6152 = vld [vmem:[%s53 + $0x80] sm:$0xff]
      %v6153 = vld [vmem:[%s53 + $0x88] sm:$0xff]
      %v6154 = vld [vmem:[%s53 + $0x90] sm:$0xff]
      %v6155 = vld [vmem:[%s53 + $0x98] sm:$0xff]
      %v6156 = vld [vmem:[%s53 + $0xa0] sm:$0xff]
      %v6157 = vld [vmem:[%s53 + $0xa8] sm:$0xff]
      %v6158 = vld [vmem:[%s53 + $0xb0] sm:$0xff]
      %v6159 = vld [vmem:[%s53 + $0xb8] sm:$0xff]
      %v6160 = vld [vmem:[%s53 + $0xc0] sm:$0xff]
      %v6161 = vld [vmem:[%s53 + $0xc8] sm:$0xff]
      %v6162 = vld [vmem:[%s53 + $0xd0] sm:$0xff]
      %v6163 = vld [vmem:[%s53 + $0xd8] sm:$0xff]
      %v6164 = vld [vmem:[%s53 + $0xe0] sm:$0xff]
      %v6165 = vld [vmem:[%s53 + $0xe8] sm:$0xff]
      %v6166 = vld [vmem:[%s53 + $0xf0] sm:$0xff]
      %v6167 = vld [vmem:[%s53 + $0xf8] sm:$0xff]
      %v6200 = vunpack.c.l.b16 %v6136
      %v6201 = vunpack.c.h.b16 %v6136
      %v6202 = vunpack.c.l.b16 %v6137
      %v6203 = vunpack.c.h.b16 %v6137
      %v6204 = vunpack.c.l.b16 %v6138
      %v6205 = vunpack.c.h.b16 %v6138
      %v6206 = vunpack.c.l.b16 %v6139
      %v6207 = vunpack.c.h.b16 %v6139
      %v6208 = vunpack.c.l.b16 %v6140
      %v6209 = vunpack.c.h.b16 %v6140
      %v6210 = vunpack.c.l.b16 %v6141
      %v6211 = vunpack.c.h.b16 %v6141
      %v6212 = vunpack.c.l.b16 %v6142
      %v6213 = vunpack.c.h.b16 %v6142
      %v6214 = vunpack.c.l.b16 %v6143
      %v6215 = vunpack.c.h.b16 %v6143
      %v6216 = vunpack.c.l.b16 %v6144
      %v6217 = vunpack.c.h.b16 %v6144
      %v6218 = vunpack.c.l.b16 %v6145
      %v6219 = vunpack.c.h.b16 %v6145
      %v6220 = vunpack.c.l.b16 %v6146
      %v6221 = vunpack.c.h.b16 %v6146
      %v6222 = vunpack.c.l.b16 %v6147
      %v6223 = vunpack.c.h.b16 %v6147
      %v6224 = vunpack.c.l.b16 %v6148
      %v6225 = vunpack.c.h.b16 %v6148
      %v6226 = vunpack.c.l.b16 %v6149
      %v6227 = vunpack.c.h.b16 %v6149
      %v6228 = vunpack.c.l.b16 %v6150
      %v6229 = vunpack.c.h.b16 %v6150
      %v6230 = vunpack.c.l.b16 %v6151
      %v6231 = vunpack.c.h.b16 %v6151
      %v6232 = vunpack.c.l.b16 %v6152
      %v6233 = vunpack.c.h.b16 %v6152
      %v6234 = vunpack.c.l.b16 %v6153
      %v6235 = vunpack.c.h.b16 %v6153
      %v6236 = vunpack.c.l.b16 %v6154
      %v6237 = vunpack.c.h.b16 %v6154
      %v6238 = vunpack.c.l.b16 %v6155
      %v6239 = vunpack.c.h.b16 %v6155
      %v6240 = vunpack.c.l.b16 %v6156
      %v6241 = vunpack.c.h.b16 %v6156
      %v6242 = vunpack.c.l.b16 %v6157
      %v6243 = vunpack.c.h.b16 %v6157
      %v6244 = vunpack.c.l.b16 %v6158
      %v6245 = vunpack.c.h.b16 %v6158
      %v6246 = vunpack.c.l.b16 %v6159
      %v6247 = vunpack.c.h.b16 %v6159
      %v6248 = vunpack.c.l.b16 %v6160
      %v6249 = vunpack.c.h.b16 %v6160
      %v6250 = vunpack.c.l.b16 %v6161
      %v6251 = vunpack.c.h.b16 %v6161
      %v6252 = vunpack.c.l.b16 %v6162
      %v6253 = vunpack.c.h.b16 %v6162
      %v6254 = vunpack.c.l.b16 %v6163
      %v6255 = vunpack.c.h.b16 %v6163
      %v6256 = vunpack.c.l.b16 %v6164
      %v6257 = vunpack.c.h.b16 %v6164
      %v6258 = vunpack.c.l.b16 %v6165
      %v6259 = vunpack.c.h.b16 %v6165
      %v6260 = vunpack.c.l.b16 %v6166
      %v6261 = vunpack.c.h.b16 %v6166
      %v6262 = vunpack.c.l.b16 %v6167
      %v6263 = vunpack.c.h.b16 %v6167
      %v6264 = vpack.c.b16 %v6202, %v6200
      %v6265 = vpack.c.b16 %v6203, %v6201
      %v6266 = vpack.c.b16 %v6206, %v6204
      %v6267 = vpack.c.b16 %v6207, %v6205
      %v6268 = vpack.c.b16 %v6210, %v6208
      %v6269 = vpack.c.b16 %v6211, %v6209
      %v6270 = vpack.c.b16 %v6214, %v6212
      %v6271 = vpack.c.b16 %v6215, %v6213
      %v6272 = vpack.c.b16 %v6218, %v6216
      %v6273 = vpack.c.b16 %v6219, %v6217
      %v6274 = vpack.c.b16 %v6222, %v6220
      %v6275 = vpack.c.b16 %v6223, %v6221
      %v6276 = vpack.c.b16 %v6226, %v6224
      %v6277 = vpack.c.b16 %v6227, %v6225
      %v6278 = vpack.c.b16 %v6230, %v6228
      %v6279 = vpack.c.b16 %v6231, %v6229
      %v6280 = vpack.c.b16 %v6234, %v6232
      %v6281 = vpack.c.b16 %v6235, %v6233
      %v6282 = vpack.c.b16 %v6238, %v6236
      %v6283 = vpack.c.b16 %v6239, %v6237
      %v6284 = vpack.c.b16 %v6242, %v6240
      %v6285 = vpack.c.b16 %v6243, %v6241
      %v6286 = vpack.c.b16 %v6246, %v6244
      %v6287 = vpack.c.b16 %v6247, %v6245
      %v6288 = vpack.c.b16 %v6250, %v6248
      %v6289 = vpack.c.b16 %v6251, %v6249
      %v6290 = vpack.c.b16 %v6254, %v6252
      %v6291 = vpack.c.b16 %v6255, %v6253
      %v6292 = vpack.c.b16 %v6258, %v6256
      %v6293 = vpack.c.b16 %v6259, %v6257
      %v6294 = vpack.c.b16 %v6262, %v6260
      %v6295 = vpack.c.b16 %v6263, %v6261
      %6328 = vmatprep.subr.bf16.mxu0 %v6265
      %6329 = vmatpush1.bf16.msra.mxu0 %v6264
      %6330 = vmatprep.subr.bf16.mxu0 %v6267
      %6331 = vmatpush1.bf16.msra.mxu0 %v6266
      %6332 = vmatprep.subr.bf16.mxu0 %v6269
      %6333 = vmatpush1.bf16.msra.mxu0 %v6268
      %6334 = vmatprep.subr.bf16.mxu0 %v6271
      %6335 = vmatpush1.bf16.msra.mxu0 %v6270
      %6336 = vmatprep.subr.bf16.mxu0 %v6273
      %6337 = vmatpush1.bf16.msra.mxu0 %v6272
      %6338 = vmatprep.subr.bf16.mxu0 %v6275
      %6339 = vmatpush1.bf16.msra.mxu0 %v6274
      %6340 = vmatprep.subr.bf16.mxu0 %v6277
      %6341 = vmatpush1.bf16.msra.mxu0 %v6276
      %6342 = vmatprep.subr.bf16.mxu0 %v6279
      %6343 = vmatpush1.bf16.msra.mxu0 %v6278
      %6344 = vmatprep.subr.bf16.mxu0 %v6281
      %6345 = vmatpush1.bf16.msra.mxu0 %v6280
      %6346 = vmatprep.subr.bf16.mxu0 %v6283
      %6347 = vmatpush1.bf16.msra.mxu0 %v6282
      %6348 = vmatprep.subr.bf16.mxu0 %v6285
      %6349 = vmatpush1.bf16.msra.mxu0 %v6284
      %6350 = vmatprep.subr.bf16.mxu0 %v6287
      %6351 = vmatpush1.bf16.msra.mxu0 %v6286
      %6352 = vmatprep.subr.bf16.mxu0 %v6289
      %6353 = vmatpush1.bf16.msra.mxu0 %v6288
      %6354 = vmatprep.subr.bf16.mxu0 %v6291
      %6355 = vmatpush1.bf16.msra.mxu0 %v6290
      %6356 = vmatprep.subr.bf16.mxu0 %v6293
      %6357 = vmatpush1.bf16.msra.mxu0 %v6292
      %6358 = vmatprep.subr.bf16.mxu0 %v6295
      %6359 = vmatpush1.bf16.msra.mxu0 %v6294
      %6360 = vmatprep.mubr.bf16.mxu0 %v6135
      %6361 = vmatmul.mubr.bf16.gmra.mrb[0].mxu0 %v6134
      %v6362 = vpop.f32.mrb[0].mxu0
      %v6363 = vadd.f32 0.0, %v6362
      %v6364 = vpop.f32.mrb[0].mxu0
      %v6365 = vadd.f32 0.0, %v6364
      %v6366 = vpop.f32.mrb[0].mxu0
      %v6367 = vadd.f32 0.0, %v6366
      %v6368 = vpop.f32.mrb[0].mxu0
      %v6369 = vadd.f32 0.0, %v6368
      %6370 = vdwg.mxu0
      %s6371 = scalar_lea.vmem %s53, 256
      %v6372 = vld [vmem:[%s6371] sm:$0xff]
      %v6373 = vld [vmem:[%s6371 + $0x8] sm:$0xff]
      %v6374 = vld [vmem:[%s6371 + $0x10] sm:$0xff]
      %v6375 = vld [vmem:[%s6371 + $0x18] sm:$0xff]
      %v6376 = vld [vmem:[%s6371 + $0x20] sm:$0xff]
      %v6377 = vld [vmem:[%s6371 + $0x28] sm:$0xff]
      %v6378 = vld [vmem:[%s6371 + $0x30] sm:$0xff]
      %v6379 = vld [vmem:[%s6371 + $0x38] sm:$0xff]
      %v6380 = vld [vmem:[%s6371 + $0x40] sm:$0xff]
      %v6381 = vld [vmem:[%s6371 + $0x48] sm:$0xff]
      %v6382 = vld [vmem:[%s6371 + $0x50] sm:$0xff]
      %v6383 = vld [vmem:[%s6371 + $0x58] sm:$0xff]
      %v6384 = vld [vmem:[%s6371 + $0x60] sm:$0xff]
      %v6385 = vld [vmem:[%s6371 + $0x68] sm:$0xff]
      %v6386 = vld [vmem:[%s6371 + $0x70] sm:$0xff]
      %v6387 = vld [vmem:[%s6371 + $0x78] sm:$0xff]
      %v6388 = vld [vmem:[%s6371 + $0x80] sm:$0xff]
      %v6389 = vld [vmem:[%s6371 + $0x88] sm:$0xff]
      %v6390 = vld [vmem:[%s6371 + $0x90] sm:$0xff]
      %v6391 = vld [vmem:[%s6371 + $0x98] sm:$0xff]
      %v6392 = vld [vmem:[%s6371 + $0xa0] sm:$0xff]
      %v6393 = vld [vmem:[%s6371 + $0xa8] sm:$0xff]
      %v6394 = vld [vmem:[%s6371 + $0xb0] sm:$0xff]
      %v6395 = vld [vmem:[%s6371 + $0xb8] sm:$0xff]
      %v6396 = vld [vmem:[%s6371 + $0xc0] sm:$0xff]
      %v6397 = vld [vmem:[%s6371 + $0xc8] sm:$0xff]
      %v6398 = vld [vmem:[%s6371 + $0xd0] sm:$0xff]
      %v6399 = vld [vmem:[%s6371 + $0xd8] sm:$0xff]
      %v6400 = vld [vmem:[%s6371 + $0xe0] sm:$0xff]
      %v6401 = vld [vmem:[%s6371 + $0xe8] sm:$0xff]
      %v6402 = vld [vmem:[%s6371 + $0xf0] sm:$0xff]
      %v6403 = vld [vmem:[%s6371 + $0xf8] sm:$0xff]
      %v6436 = vunpack.c.l.b16 %v6372
      %v6437 = vunpack.c.h.b16 %v6372
      %v6438 = vunpack.c.l.b16 %v6373
      %v6439 = vunpack.c.h.b16 %v6373
      %v6440 = vunpack.c.l.b16 %v6374
      %v6441 = vunpack.c.h.b16 %v6374
      %v6442 = vunpack.c.l.b16 %v6375
      %v6443 = vunpack.c.h.b16 %v6375
      %v6444 = vunpack.c.l.b16 %v6376
      %v6445 = vunpack.c.h.b16 %v6376
      %v6446 = vunpack.c.l.b16 %v6377
      %v6447 = vunpack.c.h.b16 %v6377
      %v6448 = vunpack.c.l.b16 %v6378
      %v6449 = vunpack.c.h.b16 %v6378
      %v6450 = vunpack.c.l.b16 %v6379
      %v6451 = vunpack.c.h.b16 %v6379
      %v6452 = vunpack.c.l.b16 %v6380
      %v6453 = vunpack.c.h.b16 %v6380
      %v6454 = vunpack.c.l.b16 %v6381
      %v6455 = vunpack.c.h.b16 %v6381
      %v6456 = vunpack.c.l.b16 %v6382
      %v6457 = vunpack.c.h.b16 %v6382
      %v6458 = vunpack.c.l.b16 %v6383
      %v6459 = vunpack.c.h.b16 %v6383
      %v6460 = vunpack.c.l.b16 %v6384
      %v6461 = vunpack.c.h.b16 %v6384
      %v6462 = vunpack.c.l.b16 %v6385
      %v6463 = vunpack.c.h.b16 %v6385
      %v6464 = vunpack.c.l.b16 %v6386
      %v6465 = vunpack.c.h.b16 %v6386
      %v6466 = vunpack.c.l.b16 %v6387
      %v6467 = vunpack.c.h.b16 %v6387
      %v6468 = vunpack.c.l.b16 %v6388
      %v6469 = vunpack.c.h.b16 %v6388
      %v6470 = vunpack.c.l.b16 %v6389
      %v6471 = vunpack.c.h.b16 %v6389
      %v6472 = vunpack.c.l.b16 %v6390
      %v6473 = vunpack.c.h.b16 %v6390
      %v6474 = vunpack.c.l.b16 %v6391
      %v6475 = vunpack.c.h.b16 %v6391
      %v6476 = vunpack.c.l.b16 %v6392
      %v6477 = vunpack.c.h.b16 %v6392
      %v6478 = vunpack.c.l.b16 %v6393
      %v6479 = vunpack.c.h.b16 %v6393
      %v6480 = vunpack.c.l.b16 %v6394
      %v6481 = vunpack.c.h.b16 %v6394
      %v6482 = vunpack.c.l.b16 %v6395
      %v6483 = vunpack.c.h.b16 %v6395
      %v6484 = vunpack.c.l.b16 %v6396
      %v6485 = vunpack.c.h.b16 %v6396
      %v6486 = vunpack.c.l.b16 %v6397
      %v6487 = vunpack.c.h.b16 %v6397
      %v6488 = vunpack.c.l.b16 %v6398
      %v6489 = vunpack.c.h.b16 %v6398
      %v6490 = vunpack.c.l.b16 %v6399
      %v6491 = vunpack.c.h.b16 %v6399
      %v6492 = vunpack.c.l.b16 %v6400
      %v6493 = vunpack.c.h.b16 %v6400
      %v6494 = vunpack.c.l.b16 %v6401
      %v6495 = vunpack.c.h.b16 %v6401
      %v6496 = vunpack.c.l.b16 %v6402
      %v6497 = vunpack.c.h.b16 %v6402
      %v6498 = vunpack.c.l.b16 %v6403
      %v6499 = vunpack.c.h.b16 %v6403
      %v6500 = vpack.c.b16 %v6438, %v6436
      %v6501 = vpack.c.b16 %v6439, %v6437
      %v6502 = vpack.c.b16 %v6442, %v6440
      %v6503 = vpack.c.b16 %v6443, %v6441
      %v6504 = vpack.c.b16 %v6446, %v6444
      %v6505 = vpack.c.b16 %v6447, %v6445
      %v6506 = vpack.c.b16 %v6450, %v6448
      %v6507 = vpack.c.b16 %v6451, %v6449
      %v6508 = vpack.c.b16 %v6454, %v6452
      %v6509 = vpack.c.b16 %v6455, %v6453
      %v6510 = vpack.c.b16 %v6458, %v6456
      %v6511 = vpack.c.b16 %v6459, %v6457
      %v6512 = vpack.c.b16 %v6462, %v6460
      %v6513 = vpack.c.b16 %v6463, %v6461
      %v6514 = vpack.c.b16 %v6466, %v6464
      %v6515 = vpack.c.b16 %v6467, %v6465
      %v6516 = vpack.c.b16 %v6470, %v6468
      %v6517 = vpack.c.b16 %v6471, %v6469
      %v6518 = vpack.c.b16 %v6474, %v6472
      %v6519 = vpack.c.b16 %v6475, %v6473
      %v6520 = vpack.c.b16 %v6478, %v6476
      %v6521 = vpack.c.b16 %v6479, %v6477
      %v6522 = vpack.c.b16 %v6482, %v6480
      %v6523 = vpack.c.b16 %v6483, %v6481
      %v6524 = vpack.c.b16 %v6486, %v6484
      %v6525 = vpack.c.b16 %v6487, %v6485
      %v6526 = vpack.c.b16 %v6490, %v6488
      %v6527 = vpack.c.b16 %v6491, %v6489
      %v6528 = vpack.c.b16 %v6494, %v6492
      %v6529 = vpack.c.b16 %v6495, %v6493
      %v6530 = vpack.c.b16 %v6498, %v6496
      %v6531 = vpack.c.b16 %v6499, %v6497
      %6564 = vmatprep.subr.bf16.mxu0 %v6501
      %6565 = vmatpush1.bf16.msra.mxu0 %v6500
      %6566 = vmatprep.subr.bf16.mxu0 %v6503
      %6567 = vmatpush1.bf16.msra.mxu0 %v6502
      %6568 = vmatprep.subr.bf16.mxu0 %v6505
      %6569 = vmatpush1.bf16.msra.mxu0 %v6504
      %6570 = vmatprep.subr.bf16.mxu0 %v6507
      %6571 = vmatpush1.bf16.msra.mxu0 %v6506
      %6572 = vmatprep.subr.bf16.mxu0 %v6509
      %6573 = vmatpush1.bf16.msra.mxu0 %v6508
      %6574 = vmatprep.subr.bf16.mxu0 %v6511
      %6575 = vmatpush1.bf16.msra.mxu0 %v6510
      %6576 = vmatprep.subr.bf16.mxu0 %v6513
      %6577 = vmatpush1.bf16.msra.mxu0 %v6512
      %6578 = vmatprep.subr.bf16.mxu0 %v6515
      %6579 = vmatpush1.bf16.msra.mxu0 %v6514
      %6580 = vmatprep.subr.bf16.mxu0 %v6517
      %6581 = vmatpush1.bf16.msra.mxu0 %v6516
      %6582 = vmatprep.subr.bf16.mxu0 %v6519
      %6583 = vmatpush1.bf16.msra.mxu0 %v6518
      %6584 = vmatprep.subr.bf16.mxu0 %v6521
      %6585 = vmatpush1.bf16.msra.mxu0 %v6520
      %6586 = vmatprep.subr.bf16.mxu0 %v6523
      %6587 = vmatpush1.bf16.msra.mxu0 %v6522
      %6588 = vmatprep.subr.bf16.mxu0 %v6525
      %6589 = vmatpush1.bf16.msra.mxu0 %v6524
      %6590 = vmatprep.subr.bf16.mxu0 %v6527
      %6591 = vmatpush1.bf16.msra.mxu0 %v6526
      %6592 = vmatprep.subr.bf16.mxu0 %v6529
      %6593 = vmatpush1.bf16.msra.mxu0 %v6528
      %6594 = vmatprep.subr.bf16.mxu0 %v6531
      %6595 = vmatpush1.bf16.msra.mxu0 %v6530
      %6596 = vmatprep.mubr.bf16.mxu0 %v6135
      %6597 = vmatmul.mubr.bf16.gmra.mrb[0].mxu0 %v6134
      %v6598 = vpop.f32.mrb[0].mxu0
      %v6599 = vadd.f32 0.0, %v6598
      %v6600 = vpop.f32.mrb[0].mxu0
      %v6601 = vadd.f32 0.0, %v6600
      %v6602 = vpop.f32.mrb[0].mxu0
      %v6603 = vadd.f32 0.0, %v6602
      %v6604 = vpop.f32.mrb[0].mxu0
      %v6605 = vadd.f32 0.0, %v6604
      %6606 = vdwg.mxu0
      %s6607 = scalar_lea.vmem %s53, 512
      %v6608 = vld [vmem:[%s6607] sm:$0xff]
      %v6609 = vld [vmem:[%s6607 + $0x8] sm:$0xff]
      %v6610 = vld [vmem:[%s6607 + $0x10] sm:$0xff]
      %v6611 = vld [vmem:[%s6607 + $0x18] sm:$0xff]
      %v6612 = vld [vmem:[%s6607 + $0x20] sm:$0xff]
      %v6613 = vld [vmem:[%s6607 + $0x28] sm:$0xff]
      %v6614 = vld [vmem:[%s6607 + $0x30] sm:$0xff]
      %v6615 = vld [vmem:[%s6607 + $0x38] sm:$0xff]
      %v6616 = vld [vmem:[%s6607 + $0x40] sm:$0xff]
      %v6617 = vld [vmem:[%s6607 + $0x48] sm:$0xff]
      %v6618 = vld [vmem:[%s6607 + $0x50] sm:$0xff]
      %v6619 = vld [vmem:[%s6607 + $0x58] sm:$0xff]
      %v6620 = vld [vmem:[%s6607 + $0x60] sm:$0xff]
      %v6621 = vld [vmem:[%s6607 + $0x68] sm:$0xff]
      %v6622 = vld [vmem:[%s6607 + $0x70] sm:$0xff]
      %v6623 = vld [vmem:[%s6607 + $0x78] sm:$0xff]
      %v6624 = vld [vmem:[%s6607 + $0x80] sm:$0xff]
      %v6625 = vld [vmem:[%s6607 + $0x88] sm:$0xff]
      %v6626 = vld [vmem:[%s6607 + $0x90] sm:$0xff]
      %v6627 = vld [vmem:[%s6607 + $0x98] sm:$0xff]
      %v6628 = vld [vmem:[%s6607 + $0xa0] sm:$0xff]
      %v6629 = vld [vmem:[%s6607 + $0xa8] sm:$0xff]
      %v6630 = vld [vmem:[%s6607 + $0xb0] sm:$0xff]
      %v6631 = vld [vmem:[%s6607 + $0xb8] sm:$0xff]
      %v6632 = vld [vmem:[%s6607 + $0xc0] sm:$0xff]
      %v6633 = vld [vmem:[%s6607 + $0xc8] sm:$0xff]
      %v6634 = vld [vmem:[%s6607 + $0xd0] sm:$0xff]
      %v6635 = vld [vmem:[%s6607 + $0xd8] sm:$0xff]
      %v6636 = vld [vmem:[%s6607 + $0xe0] sm:$0xff]
      %v6637 = vld [vmem:[%s6607 + $0xe8] sm:$0xff]
      %v6638 = vld [vmem:[%s6607 + $0xf0] sm:$0xff]
      %v6639 = vld [vmem:[%s6607 + $0xf8] sm:$0xff]
      %v6672 = vunpack.c.l.b16 %v6608
      %v6673 = vunpack.c.h.b16 %v6608
      %v6674 = vunpack.c.l.b16 %v6609
      %v6675 = vunpack.c.h.b16 %v6609
      %v6676 = vunpack.c.l.b16 %v6610
      %v6677 = vunpack.c.h.b16 %v6610
      %v6678 = vunpack.c.l.b16 %v6611
      %v6679 = vunpack.c.h.b16 %v6611
      %v6680 = vunpack.c.l.b16 %v6612
      %v6681 = vunpack.c.h.b16 %v6612
      %v6682 = vunpack.c.l.b16 %v6613
      %v6683 = vunpack.c.h.b16 %v6613
      %v6684 = vunpack.c.l.b16 %v6614
      %v6685 = vunpack.c.h.b16 %v6614
      %v6686 = vunpack.c.l.b16 %v6615
      %v6687 = vunpack.c.h.b16 %v6615
      %v6688 = vunpack.c.l.b16 %v6616
      %v6689 = vunpack.c.h.b16 %v6616
      %v6690 = vunpack.c.l.b16 %v6617
      %v6691 = vunpack.c.h.b16 %v6617
      %v6692 = vunpack.c.l.b16 %v6618
      %v6693 = vunpack.c.h.b16 %v6618
      %v6694 = vunpack.c.l.b16 %v6619
      %v6695 = vunpack.c.h.b16 %v6619
      %v6696 = vunpack.c.l.b16 %v6620
      %v6697 = vunpack.c.h.b16 %v6620
      %v6698 = vunpack.c.l.b16 %v6621
      %v6699 = vunpack.c.h.b16 %v6621
      %v6700 = vunpack.c.l.b16 %v6622
      %v6701 = vunpack.c.h.b16 %v6622
      %v6702 = vunpack.c.l.b16 %v6623
      %v6703 = vunpack.c.h.b16 %v6623
      %v6704 = vunpack.c.l.b16 %v6624
      %v6705 = vunpack.c.h.b16 %v6624
      %v6706 = vunpack.c.l.b16 %v6625
      %v6707 = vunpack.c.h.b16 %v6625
      %v6708 = vunpack.c.l.b16 %v6626
      %v6709 = vunpack.c.h.b16 %v6626
      %v6710 = vunpack.c.l.b16 %v6627
      %v6711 = vunpack.c.h.b16 %v6627
      %v6712 = vunpack.c.l.b16 %v6628
      %v6713 = vunpack.c.h.b16 %v6628
      %v6714 = vunpack.c.l.b16 %v6629
      %v6715 = vunpack.c.h.b16 %v6629
      %v6716 = vunpack.c.l.b16 %v6630
      %v6717 = vunpack.c.h.b16 %v6630
      %v6718 = vunpack.c.l.b16 %v6631
      %v6719 = vunpack.c.h.b16 %v6631
      %v6720 = vunpack.c.l.b16 %v6632
      %v6721 = vunpack.c.h.b16 %v6632
      %v6722 = vunpack.c.l.b16 %v6633
      %v6723 = vunpack.c.h.b16 %v6633
      %v6724 = vunpack.c.l.b16 %v6634
      %v6725 = vunpack.c.h.b16 %v6634
      %v6726 = vunpack.c.l.b16 %v6635
      %v6727 = vunpack.c.h.b16 %v6635
      %v6728 = vunpack.c.l.b16 %v6636
      %v6729 = vunpack.c.h.b16 %v6636
      %v6730 = vunpack.c.l.b16 %v6637
      %v6731 = vunpack.c.h.b16 %v6637
      %v6732 = vunpack.c.l.b16 %v6638
      %v6733 = vunpack.c.h.b16 %v6638
      %v6734 = vunpack.c.l.b16 %v6639
      %v6735 = vunpack.c.h.b16 %v6639
      %v6736 = vpack.c.b16 %v6674, %v6672
      %v6737 = vpack.c.b16 %v6675, %v6673
      %v6738 = vpack.c.b16 %v6678, %v6676
      %v6739 = vpack.c.b16 %v6679, %v6677
      %v6740 = vpack.c.b16 %v6682, %v6680
      %v6741 = vpack.c.b16 %v6683, %v6681
      %v6742 = vpack.c.b16 %v6686, %v6684
      %v6743 = vpack.c.b16 %v6687, %v6685
      %v6744 = vpack.c.b16 %v6690, %v6688
      %v6745 = vpack.c.b16 %v6691, %v6689
      %v6746 = vpack.c.b16 %v6694, %v6692
      %v6747 = vpack.c.b16 %v6695, %v6693
      %v6748 = vpack.c.b16 %v6698, %v6696
      %v6749 = vpack.c.b16 %v6699, %v6697
      %v6750 = vpack.c.b16 %v6702, %v6700
      %v6751 = vpack.c.b16 %v6703, %v6701
      %v6752 = vpack.c.b16 %v6706, %v6704
      %v6753 = vpack.c.b16 %v6707, %v6705
      %v6754 = vpack.c.b16 %v6710, %v6708
      %v6755 = vpack.c.b16 %v6711, %v6709
      %v6756 = vpack.c.b16 %v6714, %v6712
      %v6757 = vpack.c.b16 %v6715, %v6713
      %v6758 = vpack.c.b16 %v6718, %v6716
      %v6759 = vpack.c.b16 %v6719, %v6717
      %v6760 = vpack.c.b16 %v6722, %v6720
      %v6761 = vpack.c.b16 %v6723, %v6721
      %v6762 = vpack.c.b16 %v6726, %v6724
      %v6763 = vpack.c.b16 %v6727, %v6725
      %v6764 = vpack.c.b16 %v6730, %v6728
      %v6765 = vpack.c.b16 %v6731, %v6729
      %v6766 = vpack.c.b16 %v6734, %v6732
      %v6767 = vpack.c.b16 %v6735, %v6733
      %6800 = vmatprep.subr.bf16.mxu0 %v6737
      %6801 = vmatpush1.bf16.msra.mxu0 %v6736
      %6802 = vmatprep.subr.bf16.mxu0 %v6739
      %6803 = vmatpush1.bf16.msra.mxu0 %v6738
      %6804 = vmatprep.subr.bf16.mxu0 %v6741
      %6805 = vmatpush1.bf16.msra.mxu0 %v6740
      %6806 = vmatprep.subr.bf16.mxu0 %v6743
      %6807 = vmatpush1.bf16.msra.mxu0 %v6742
      %6808 = vmatprep.subr.bf16.mxu0 %v6745
      %6809 = vmatpush1.bf16.msra.mxu0 %v6744
      %6810 = vmatprep.subr.bf16.mxu0 %v6747
      %6811 = vmatpush1.bf16.msra.mxu0 %v6746
      %6812 = vmatprep.subr.bf16.mxu0 %v6749
      %6813 = vmatpush1.bf16.msra.mxu0 %v6748
      %6814 = vmatprep.subr.bf16.mxu0 %v6751
      %6815 = vmatpush1.bf16.msra.mxu0 %v6750
      %6816 = vmatprep.subr.bf16.mxu0 %v6753
      %6817 = vmatpush1.bf16.msra.mxu0 %v6752
      %6818 = vmatprep.subr.bf16.mxu0 %v6755
      %6819 = vmatpush1.bf16.msra.mxu0 %v6754
      %6820 = vmatprep.subr.bf16.mxu0 %v6757
      %6821 = vmatpush1.bf16.msra.mxu0 %v6756
      %6822 = vmatprep.subr.bf16.mxu0 %v6759
      %6823 = vmatpush1.bf16.msra.mxu0 %v6758
      %6824 = vmatprep.subr.bf16.mxu0 %v6761
      %6825 = vmatpush1.bf16.msra.mxu0 %v6760
      %6826 = vmatprep.subr.bf16.mxu0 %v6763
      %6827 = vmatpush1.bf16.msra.mxu0 %v6762
      %6828 = vmatprep.subr.bf16.mxu0 %v6765
      %6829 = vmatpush1.bf16.msra.mxu0 %v6764
      %6830 = vmatprep.subr.bf16.mxu0 %v6767
      %6831 = vmatpush1.bf16.msra.mxu0 %v6766
      %6832 = vmatprep.mubr.bf16.mxu0 %v6135
      %6833 = vmatmul.mubr.bf16.gmra.mrb[0].mxu0 %v6134
      %v6834 = vpop.f32.mrb[0].mxu0
      %v6835 = vadd.f32 0.0, %v6834
      %v6836 = vpop.f32.mrb[0].mxu0
      %v6837 = vadd.f32 0.0, %v6836
      %v6838 = vpop.f32.mrb[0].mxu0
      %v6839 = vadd.f32 0.0, %v6838
      %v6840 = vpop.f32.mrb[0].mxu0
      %v6841 = vadd.f32 0.0, %v6840
      %6842 = vdwg.mxu0
      %s6843 = scalar_lea.vmem %s53, 768
      %v6844 = vld [vmem:[%s6843] sm:$0xff]
      %v6845 = vld [vmem:[%s6843 + $0x8] sm:$0xff]
      %v6846 = vld [vmem:[%s6843 + $0x10] sm:$0xff]
      %v6847 = vld [vmem:[%s6843 + $0x18] sm:$0xff]
      %v6848 = vld [vmem:[%s6843 + $0x20] sm:$0xff]
      %v6849 = vld [vmem:[%s6843 + $0x28] sm:$0xff]
      %v6850 = vld [vmem:[%s6843 + $0x30] sm:$0xff]
      %v6851 = vld [vmem:[%s6843 + $0x38] sm:$0xff]
      %v6852 = vld [vmem:[%s6843 + $0x40] sm:$0xff]
      %v6853 = vld [vmem:[%s6843 + $0x48] sm:$0xff]
      %v6854 = vld [vmem:[%s6843 + $0x50] sm:$0xff]
      %v6855 = vld [vmem:[%s6843 + $0x58] sm:$0xff]
      %v6856 = vld [vmem:[%s6843 + $0x60] sm:$0xff]
      %v6857 = vld [vmem:[%s6843 + $0x68] sm:$0xff]
      %v6858 = vld [vmem:[%s6843 + $0x70] sm:$0xff]
      %v6859 = vld [vmem:[%s6843 + $0x78] sm:$0xff]
      %v6860 = vld [vmem:[%s6843 + $0x80] sm:$0xff]
      %v6861 = vld [vmem:[%s6843 + $0x88] sm:$0xff]
      %v6862 = vld [vmem:[%s6843 + $0x90] sm:$0xff]
      %v6863 = vld [vmem:[%s6843 + $0x98] sm:$0xff]
      %v6864 = vld [vmem:[%s6843 + $0xa0] sm:$0xff]
      %v6865 = vld [vmem:[%s6843 + $0xa8] sm:$0xff]
      %v6866 = vld [vmem:[%s6843 + $0xb0] sm:$0xff]
      %v6867 = vld [vmem:[%s6843 + $0xb8] sm:$0xff]
      %v6868 = vld [vmem:[%s6843 + $0xc0] sm:$0xff]
      %v6869 = vld [vmem:[%s6843 + $0xc8] sm:$0xff]
      %v6870 = vld [vmem:[%s6843 + $0xd0] sm:$0xff]
      %v6871 = vld [vmem:[%s6843 + $0xd8] sm:$0xff]
      %v6872 = vld [vmem:[%s6843 + $0xe0] sm:$0xff]
      %v6873 = vld [vmem:[%s6843 + $0xe8] sm:$0xff]
      %v6874 = vld [vmem:[%s6843 + $0xf0] sm:$0xff]
      %v6875 = vld [vmem:[%s6843 + $0xf8] sm:$0xff]
      %v6908 = vunpack.c.l.b16 %v6844
      %v6909 = vunpack.c.h.b16 %v6844
      %v6910 = vunpack.c.l.b16 %v6845
      %v6911 = vunpack.c.h.b16 %v6845
      %v6912 = vunpack.c.l.b16 %v6846
      %v6913 = vunpack.c.h.b16 %v6846
      %v6914 = vunpack.c.l.b16 %v6847
      %v6915 = vunpack.c.h.b16 %v6847
      %v6916 = vunpack.c.l.b16 %v6848
      %v6917 = vunpack.c.h.b16 %v6848
      %v6918 = vunpack.c.l.b16 %v6849
      %v6919 = vunpack.c.h.b16 %v6849
      %v6920 = vunpack.c.l.b16 %v6850
      %v6921 = vunpack.c.h.b16 %v6850
      %v6922 = vunpack.c.l.b16 %v6851
      %v6923 = vunpack.c.h.b16 %v6851
      %v6924 = vunpack.c.l.b16 %v6852
      %v6925 = vunpack.c.h.b16 %v6852
      %v6926 = vunpack.c.l.b16 %v6853
      %v6927 = vunpack.c.h.b16 %v6853
      %v6928 = vunpack.c.l.b16 %v6854
      %v6929 = vunpack.c.h.b16 %v6854
      %v6930 = vunpack.c.l.b16 %v6855
      %v6931 = vunpack.c.h.b16 %v6855
      %v6932 = vunpack.c.l.b16 %v6856
      %v6933 = vunpack.c.h.b16 %v6856
      %v6934 = vunpack.c.l.b16 %v6857
      %v6935 = vunpack.c.h.b16 %v6857
      %v6936 = vunpack.c.l.b16 %v6858
      %v6937 = vunpack.c.h.b16 %v6858
      %v6938 = vunpack.c.l.b16 %v6859
      %v6939 = vunpack.c.h.b16 %v6859
      %v6940 = vunpack.c.l.b16 %v6860
      %v6941 = vunpack.c.h.b16 %v6860
      %v6942 = vunpack.c.l.b16 %v6861
      %v6943 = vunpack.c.h.b16 %v6861
      %v6944 = vunpack.c.l.b16 %v6862
      %v6945 = vunpack.c.h.b16 %v6862
      %v6946 = vunpack.c.l.b16 %v6863
      %v6947 = vunpack.c.h.b16 %v6863
      %v6948 = vunpack.c.l.b16 %v6864
      %v6949 = vunpack.c.h.b16 %v6864
      %v6950 = vunpack.c.l.b16 %v6865
      %v6951 = vunpack.c.h.b16 %v6865
      %v6952 = vunpack.c.l.b16 %v6866
      %v6953 = vunpack.c.h.b16 %v6866
      %v6954 = vunpack.c.l.b16 %v6867
      %v6955 = vunpack.c.h.b16 %v6867
      %v6956 = vunpack.c.l.b16 %v6868
      %v6957 = vunpack.c.h.b16 %v6868
      %v6958 = vunpack.c.l.b16 %v6869
      %v6959 = vunpack.c.h.b16 %v6869
      %v6960 = vunpack.c.l.b16 %v6870
      %v6961 = vunpack.c.h.b16 %v6870
      %v6962 = vunpack.c.l.b16 %v6871
      %v6963 = vunpack.c.h.b16 %v6871
      %v6964 = vunpack.c.l.b16 %v6872
      %v6965 = vunpack.c.h.b16 %v6872
      %v6966 = vunpack.c.l.b16 %v6873
      %v6967 = vunpack.c.h.b16 %v6873
      %v6968 = vunpack.c.l.b16 %v6874
      %v6969 = vunpack.c.h.b16 %v6874
      %v6970 = vunpack.c.l.b16 %v6875
      %v6971 = vunpack.c.h.b16 %v6875
      %v6972 = vpack.c.b16 %v6910, %v6908
      %v6973 = vpack.c.b16 %v6911, %v6909
      %v6974 = vpack.c.b16 %v6914, %v6912
      %v6975 = vpack.c.b16 %v6915, %v6913
      %v6976 = vpack.c.b16 %v6918, %v6916
      %v6977 = vpack.c.b16 %v6919, %v6917
      %v6978 = vpack.c.b16 %v6922, %v6920
      %v6979 = vpack.c.b16 %v6923, %v6921
      %v6980 = vpack.c.b16 %v6926, %v6924
      %v6981 = vpack.c.b16 %v6927, %v6925
      %v6982 = vpack.c.b16 %v6930, %v6928
      %v6983 = vpack.c.b16 %v6931, %v6929
      %v6984 = vpack.c.b16 %v6934, %v6932
      %v6985 = vpack.c.b16 %v6935, %v6933
      %v6986 = vpack.c.b16 %v6938, %v6936
      %v6987 = vpack.c.b16 %v6939, %v6937
      %v6988 = vpack.c.b16 %v6942, %v6940
      %v6989 = vpack.c.b16 %v6943, %v6941
      %v6990 = vpack.c.b16 %v6946, %v6944
      %v6991 = vpack.c.b16 %v6947, %v6945
      %v6992 = vpack.c.b16 %v6950, %v6948
      %v6993 = vpack.c.b16 %v6951, %v6949
      %v6994 = vpack.c.b16 %v6954, %v6952
      %v6995 = vpack.c.b16 %v6955, %v6953
      %v6996 = vpack.c.b16 %v6958, %v6956
      %v6997 = vpack.c.b16 %v6959, %v6957
      %v6998 = vpack.c.b16 %v6962, %v6960
      %v6999 = vpack.c.b16 %v6963, %v6961
      %v7000 = vpack.c.b16 %v6966, %v6964
      %v7001 = vpack.c.b16 %v6967, %v6965
      %v7002 = vpack.c.b16 %v6970, %v6968
      %v7003 = vpack.c.b16 %v6971, %v6969
      %7036 = vmatprep.subr.bf16.mxu0 %v6973
      %7037 = vmatpush1.bf16.msra.mxu0 %v6972
      %7038 = vmatprep.subr.bf16.mxu0 %v6975
      %7039 = vmatpush1.bf16.msra.mxu0 %v6974
      %7040 = vmatprep.subr.bf16.mxu0 %v6977
      %7041 = vmatpush1.bf16.msra.mxu0 %v6976
      %7042 = vmatprep.subr.bf16.mxu0 %v6979
      %7043 = vmatpush1.bf16.msra.mxu0 %v6978
      %7044 = vmatprep.subr.bf16.mxu0 %v6981
      %7045 = vmatpush1.bf16.msra.mxu0 %v6980
      %7046 = vmatprep.subr.bf16.mxu0 %v6983
      %7047 = vmatpush1.bf16.msra.mxu0 %v6982
      %7048 = vmatprep.subr.bf16.mxu0 %v6985
      %7049 = vmatpush1.bf16.msra.mxu0 %v6984
      %7050 = vmatprep.subr.bf16.mxu0 %v6987
      %7051 = vmatpush1.bf16.msra.mxu0 %v6986
      %7052 = vmatprep.subr.bf16.mxu0 %v6989
      %7053 = vmatpush1.bf16.msra.mxu0 %v6988
      %7054 = vmatprep.subr.bf16.mxu0 %v6991
      %7055 = vmatpush1.bf16.msra.mxu0 %v6990
      %7056 = vmatprep.subr.bf16.mxu0 %v6993
      %7057 = vmatpush1.bf16.msra.mxu0 %v6992
      %7058 = vmatprep.subr.bf16.mxu0 %v6995
      %7059 = vmatpush1.bf16.msra.mxu0 %v6994
      %7060 = vmatprep.subr.bf16.mxu0 %v6997
      %7061 = vmatpush1.bf16.msra.mxu0 %v6996
      %7062 = vmatprep.subr.bf16.mxu0 %v6999
      %7063 = vmatpush1.bf16.msra.mxu0 %v6998
      %7064 = vmatprep.subr.bf16.mxu0 %v7001
      %7065 = vmatpush1.bf16.msra.mxu0 %v7000
      %7066 = vmatprep.subr.bf16.mxu0 %v7003
      %7067 = vmatpush1.bf16.msra.mxu0 %v7002
      %7068 = vmatprep.mubr.bf16.mxu0 %v6135
      %7069 = vmatmul.mubr.bf16.gmra.mrb[0].mxu0 %v6134
      %v7070 = vpop.f32.mrb[0].mxu0
      %v7071 = vadd.f32 0.0, %v7070
      %v7072 = vpop.f32.mrb[0].mxu0
      %v7073 = vadd.f32 0.0, %v7072
      %v7074 = vpop.f32.mrb[0].mxu0
      %v7075 = vadd.f32 0.0, %v7074
      %v7076 = vpop.f32.mrb[0].mxu0
      %v7077 = vadd.f32 0.0, %v7076
      %7078 = vdwg.mxu0
      %s7079 = scalar_lea.vmem %s53, 1024
      %v7080 = vld [vmem:[%s7079] sm:$0xff]
      %v7081 = vld [vmem:[%s7079 + $0x8] sm:$0xff]
      %v7082 = vld [vmem:[%s7079 + $0x10] sm:$0xff]
      %v7083 = vld [vmem:[%s7079 + $0x18] sm:$0xff]
      %v7084 = vld [vmem:[%s7079 + $0x20] sm:$0xff]
      %v7085 = vld [vmem:[%s7079 + $0x28] sm:$0xff]
      %v7086 = vld [vmem:[%s7079 + $0x30] sm:$0xff]
      %v7087 = vld [vmem:[%s7079 + $0x38] sm:$0xff]
      %v7088 = vld [vmem:[%s7079 + $0x40] sm:$0xff]
      %v7089 = vld [vmem:[%s7079 + $0x48] sm:$0xff]
      %v7090 = vld [vmem:[%s7079 + $0x50] sm:$0xff]
      %v7091 = vld [vmem:[%s7079 + $0x58] sm:$0xff]
      %v7092 = vld [vmem:[%s7079 + $0x60] sm:$0xff]
      %v7093 = vld [vmem:[%s7079 + $0x68] sm:$0xff]
      %v7094 = vld [vmem:[%s7079 + $0x70] sm:$0xff]
      %v7095 = vld [vmem:[%s7079 + $0x78] sm:$0xff]
      %v7096 = vld [vmem:[%s7079 + $0x80] sm:$0xff]
      %v7097 = vld [vmem:[%s7079 + $0x88] sm:$0xff]
      %v7098 = vld [vmem:[%s7079 + $0x90] sm:$0xff]
      %v7099 = vld [vmem:[%s7079 + $0x98] sm:$0xff]
      %v7100 = vld [vmem:[%s7079 + $0xa0] sm:$0xff]
      %v7101 = vld [vmem:[%s7079 + $0xa8] sm:$0xff]
      %v7102 = vld [vmem:[%s7079 + $0xb0] sm:$0xff]
      %v7103 = vld [vmem:[%s7079 + $0xb8] sm:$0xff]
      %v7104 = vld [vmem:[%s7079 + $0xc0] sm:$0xff]
      %v7105 = vld [vmem:[%s7079 + $0xc8] sm:$0xff]
      %v7106 = vld [vmem:[%s7079 + $0xd0] sm:$0xff]
      %v7107 = vld [vmem:[%s7079 + $0xd8] sm:$0xff]
      %v7108 = vld [vmem:[%s7079 + $0xe0] sm:$0xff]
      %v7109 = vld [vmem:[%s7079 + $0xe8] sm:$0xff]
      %v7110 = vld [vmem:[%s7079 + $0xf0] sm:$0xff]
      %v7111 = vld [vmem:[%s7079 + $0xf8] sm:$0xff]
      %v7144 = vunpack.c.l.b16 %v7080
      %v7145 = vunpack.c.h.b16 %v7080
      %v7146 = vunpack.c.l.b16 %v7081
      %v7147 = vunpack.c.h.b16 %v7081
      %v7148 = vunpack.c.l.b16 %v7082
      %v7149 = vunpack.c.h.b16 %v7082
      %v7150 = vunpack.c.l.b16 %v7083
      %v7151 = vunpack.c.h.b16 %v7083
      %v7152 = vunpack.c.l.b16 %v7084
      %v7153 = vunpack.c.h.b16 %v7084
      %v7154 = vunpack.c.l.b16 %v7085
      %v7155 = vunpack.c.h.b16 %v7085
      %v7156 = vunpack.c.l.b16 %v7086
      %v7157 = vunpack.c.h.b16 %v7086
      %v7158 = vunpack.c.l.b16 %v7087
      %v7159 = vunpack.c.h.b16 %v7087
      %v7160 = vunpack.c.l.b16 %v7088
      %v7161 = vunpack.c.h.b16 %v7088
      %v7162 = vunpack.c.l.b16 %v7089
      %v7163 = vunpack.c.h.b16 %v7089
      %v7164 = vunpack.c.l.b16 %v7090
      %v7165 = vunpack.c.h.b16 %v7090
      %v7166 = vunpack.c.l.b16 %v7091
      %v7167 = vunpack.c.h.b16 %v7091
      %v7168 = vunpack.c.l.b16 %v7092
      %v7169 = vunpack.c.h.b16 %v7092
      %v7170 = vunpack.c.l.b16 %v7093
      %v7171 = vunpack.c.h.b16 %v7093
      %v7172 = vunpack.c.l.b16 %v7094
      %v7173 = vunpack.c.h.b16 %v7094
      %v7174 = vunpack.c.l.b16 %v7095
      %v7175 = vunpack.c.h.b16 %v7095
      %v7176 = vunpack.c.l.b16 %v7096
      %v7177 = vunpack.c.h.b16 %v7096
      %v7178 = vunpack.c.l.b16 %v7097
      %v7179 = vunpack.c.h.b16 %v7097
      %v7180 = vunpack.c.l.b16 %v7098
      %v7181 = vunpack.c.h.b16 %v7098
      %v7182 = vunpack.c.l.b16 %v7099
      %v7183 = vunpack.c.h.b16 %v7099
      %v7184 = vunpack.c.l.b16 %v7100
      %v7185 = vunpack.c.h.b16 %v7100
      %v7186 = vunpack.c.l.b16 %v7101
      %v7187 = vunpack.c.h.b16 %v7101
      %v7188 = vunpack.c.l.b16 %v7102
      %v7189 = vunpack.c.h.b16 %v7102
      %v7190 = vunpack.c.l.b16 %v7103
      %v7191 = vunpack.c.h.b16 %v7103
      %v7192 = vunpack.c.l.b16 %v7104
      %v7193 = vunpack.c.h.b16 %v7104
      %v7194 = vunpack.c.l.b16 %v7105
      %v7195 = vunpack.c.h.b16 %v7105
      %v7196 = vunpack.c.l.b16 %v7106
      %v7197 = vunpack.c.h.b16 %v7106
      %v7198 = vunpack.c.l.b16 %v7107
      %v7199 = vunpack.c.h.b16 %v7107
      %v7200 = vunpack.c.l.b16 %v7108
      %v7201 = vunpack.c.h.b16 %v7108
      %v7202 = vunpack.c.l.b16 %v7109
      %v7203 = vunpack.c.h.b16 %v7109
      %v7204 = vunpack.c.l.b16 %v7110
      %v7205 = vunpack.c.h.b16 %v7110
      %v7206 = vunpack.c.l.b16 %v7111
      %v7207 = vunpack.c.h.b16 %v7111
      %v7208 = vpack.c.b16 %v7146, %v7144
      %v7209 = vpack.c.b16 %v7147, %v7145
      %v7210 = vpack.c.b16 %v7150, %v7148
      %v7211 = vpack.c.b16 %v7151, %v7149
      %v7212 = vpack.c.b16 %v7154, %v7152
      %v7213 = vpack.c.b16 %v7155, %v7153
      %v7214 = vpack.c.b16 %v7158, %v7156
      %v7215 = vpack.c.b16 %v7159, %v7157
      %v7216 = vpack.c.b16 %v7162, %v7160
      %v7217 = vpack.c.b16 %v7163, %v7161
      %v7218 = vpack.c.b16 %v7166, %v7164
      %v7219 = vpack.c.b16 %v7167, %v7165
      %v7220 = vpack.c.b16 %v7170, %v7168
      %v7221 = vpack.c.b16 %v7171, %v7169
      %v7222 = vpack.c.b16 %v7174, %v7172
      %v7223 = vpack.c.b16 %v7175, %v7173
      %v7224 = vpack.c.b16 %v7178, %v7176
      %v7225 = vpack.c.b16 %v7179, %v7177
      %v7226 = vpack.c.b16 %v7182, %v7180
      %v7227 = vpack.c.b16 %v7183, %v7181
      %v7228 = vpack.c.b16 %v7186, %v7184
      %v7229 = vpack.c.b16 %v7187, %v7185
      %v7230 = vpack.c.b16 %v7190, %v7188
      %v7231 = vpack.c.b16 %v7191, %v7189
      %v7232 = vpack.c.b16 %v7194, %v7192
      %v7233 = vpack.c.b16 %v7195, %v7193
      %v7234 = vpack.c.b16 %v7198, %v7196
      %v7235 = vpack.c.b16 %v7199, %v7197
      %v7236 = vpack.c.b16 %v7202, %v7200
      %v7237 = vpack.c.b16 %v7203, %v7201
      %v7238 = vpack.c.b16 %v7206, %v7204
      %v7239 = vpack.c.b16 %v7207, %v7205
      %7272 = vmatprep.subr.bf16.mxu0 %v7209
      %7273 = vmatpush1.bf16.msra.mxu0 %v7208
      %7274 = vmatprep.subr.bf16.mxu0 %v7211
      %7275 = vmatpush1.bf16.msra.mxu0 %v7210
      %7276 = vmatprep.subr.bf16.mxu0 %v7213
      %7277 = vmatpush1.bf16.msra.mxu0 %v7212
      %7278 = vmatprep.subr.bf16.mxu0 %v7215
      %7279 = vmatpush1.bf16.msra.mxu0 %v7214
      %7280 = vmatprep.subr.bf16.mxu0 %v7217
      %7281 = vmatpush1.bf16.msra.mxu0 %v7216
      %7282 = vmatprep.subr.bf16.mxu0 %v7219
      %7283 = vmatpush1.bf16.msra.mxu0 %v7218
      %7284 = vmatprep.subr.bf16.mxu0 %v7221
      %7285 = vmatpush1.bf16.msra.mxu0 %v7220
      %7286 = vmatprep.subr.bf16.mxu0 %v7223
      %7287 = vmatpush1.bf16.msra.mxu0 %v7222
      %7288 = vmatprep.subr.bf16.mxu0 %v7225
      %7289 = vmatpush1.bf16.msra.mxu0 %v7224
      %7290 = vmatprep.subr.bf16.mxu0 %v7227
      %7291 = vmatpush1.bf16.msra.mxu0 %v7226
      %7292 = vmatprep.subr.bf16.mxu0 %v7229
      %7293 = vmatpush1.bf16.msra.mxu0 %v7228
      %7294 = vmatprep.subr.bf16.mxu0 %v7231
      %7295 = vmatpush1.bf16.msra.mxu0 %v7230
      %7296 = vmatprep.subr.bf16.mxu0 %v7233
      %7297 = vmatpush1.bf16.msra.mxu0 %v7232
      %7298 = vmatprep.subr.bf16.mxu0 %v7235
      %7299 = vmatpush1.bf16.msra.mxu0 %v7234
      %7300 = vmatprep.subr.bf16.mxu0 %v7237
      %7301 = vmatpush1.bf16.msra.mxu0 %v7236
      %7302 = vmatprep.subr.bf16.mxu0 %v7239
      %7303 = vmatpush1.bf16.msra.mxu0 %v7238
      %7304 = vmatprep.mubr.bf16.mxu0 %v6135
      %7305 = vmatmul.mubr.bf16.gmra.mrb[0].mxu0 %v6134
      %v7306 = vpop.f32.mrb[0].mxu0
      %v7307 = vadd.f32 0.0, %v7306
      %v7308 = vpop.f32.mrb[0].mxu0
      %v7309 = vadd.f32 0.0, %v7308
      %v7310 = vpop.f32.mrb[0].mxu0
      %v7311 = vadd.f32 0.0, %v7310
      %v7312 = vpop.f32.mrb[0].mxu0
      %v7313 = vadd.f32 0.0, %v7312
      %7314 = vdwg.mxu0
      %s7315 = scalar_lea.vmem %s53, 1280
      %v7316 = vld [vmem:[%s7315] sm:$0xff]
      %v7317 = vld [vmem:[%s7315 + $0x8] sm:$0xff]
      %v7318 = vld [vmem:[%s7315 + $0x10] sm:$0xff]
      %v7319 = vld [vmem:[%s7315 + $0x18] sm:$0xff]
      %v7320 = vld [vmem:[%s7315 + $0x20] sm:$0xff]
      %v7321 = vld [vmem:[%s7315 + $0x28] sm:$0xff]
      %v7322 = vld [vmem:[%s7315 + $0x30] sm:$0xff]
      %v7323 = vld [vmem:[%s7315 + $0x38] sm:$0xff]
      %v7324 = vld [vmem:[%s7315 + $0x40] sm:$0xff]
      %v7325 = vld [vmem:[%s7315 + $0x48] sm:$0xff]
      %v7326 = vld [vmem:[%s7315 + $0x50] sm:$0xff]
      %v7327 = vld [vmem:[%s7315 + $0x58] sm:$0xff]
      %v7328 = vld [vmem:[%s7315 + $0x60] sm:$0xff]
      %v7329 = vld [vmem:[%s7315 + $0x68] sm:$0xff]
      %v7330 = vld [vmem:[%s7315 + $0x70] sm:$0xff]
      %v7331 = vld [vmem:[%s7315 + $0x78] sm:$0xff]
      %v7332 = vld [vmem:[%s7315 + $0x80] sm:$0xff]
      %v7333 = vld [vmem:[%s7315 + $0x88] sm:$0xff]
      %v7334 = vld [vmem:[%s7315 + $0x90] sm:$0xff]
      %v7335 = vld [vmem:[%s7315 + $0x98] sm:$0xff]
      %v7336 = vld [vmem:[%s7315 + $0xa0] sm:$0xff]
      %v7337 = vld [vmem:[%s7315 + $0xa8] sm:$0xff]
      %v7338 = vld [vmem:[%s7315 + $0xb0] sm:$0xff]
      %v7339 = vld [vmem:[%s7315 + $0xb8] sm:$0xff]
      %v7340 = vld [vmem:[%s7315 + $0xc0] sm:$0xff]
      %v7341 = vld [vmem:[%s7315 + $0xc8] sm:$0xff]
      %v7342 = vld [vmem:[%s7315 + $0xd0] sm:$0xff]
      %v7343 = vld [vmem:[%s7315 + $0xd8] sm:$0xff]
      %v7344 = vld [vmem:[%s7315 + $0xe0] sm:$0xff]
      %v7345 = vld [vmem:[%s7315 + $0xe8] sm:$0xff]
      %v7346 = vld [vmem:[%s7315 + $0xf0] sm:$0xff]
      %v7347 = vld [vmem:[%s7315 + $0xf8] sm:$0xff]
      %v7380 = vunpack.c.l.b16 %v7316
      %v7381 = vunpack.c.h.b16 %v7316
      %v7382 = vunpack.c.l.b16 %v7317
      %v7383 = vunpack.c.h.b16 %v7317
      %v7384 = vunpack.c.l.b16 %v7318
      %v7385 = vunpack.c.h.b16 %v7318
      %v7386 = vunpack.c.l.b16 %v7319
      %v7387 = vunpack.c.h.b16 %v7319
      %v7388 = vunpack.c.l.b16 %v7320
      %v7389 = vunpack.c.h.b16 %v7320
      %v7390 = vunpack.c.l.b16 %v7321
      %v7391 = vunpack.c.h.b16 %v7321
      %v7392 = vunpack.c.l.b16 %v7322
      %v7393 = vunpack.c.h.b16 %v7322
      %v7394 = vunpack.c.l.b16 %v7323
      %v7395 = vunpack.c.h.b16 %v7323
      %v7396 = vunpack.c.l.b16 %v7324
      %v7397 = vunpack.c.h.b16 %v7324
      %v7398 = vunpack.c.l.b16 %v7325
      %v7399 = vunpack.c.h.b16 %v7325
      %v7400 = vunpack.c.l.b16 %v7326
      %v7401 = vunpack.c.h.b16 %v7326
      %v7402 = vunpack.c.l.b16 %v7327
      %v7403 = vunpack.c.h.b16 %v7327
      %v7404 = vunpack.c.l.b16 %v7328
      %v7405 = vunpack.c.h.b16 %v7328
      %v7406 = vunpack.c.l.b16 %v7329
      %v7407 = vunpack.c.h.b16 %v7329
      %v7408 = vunpack.c.l.b16 %v7330
      %v7409 = vunpack.c.h.b16 %v7330
      %v7410 = vunpack.c.l.b16 %v7331
      %v7411 = vunpack.c.h.b16 %v7331
      %v7412 = vunpack.c.l.b16 %v7332
      %v7413 = vunpack.c.h.b16 %v7332
      %v7414 = vunpack.c.l.b16 %v7333
      %v7415 = vunpack.c.h.b16 %v7333
      %v7416 = vunpack.c.l.b16 %v7334
      %v7417 = vunpack.c.h.b16 %v7334
      %v7418 = vunpack.c.l.b16 %v7335
      %v7419 = vunpack.c.h.b16 %v7335
      %v7420 = vunpack.c.l.b16 %v7336
      %v7421 = vunpack.c.h.b16 %v7336
      %v7422 = vunpack.c.l.b16 %v7337
      %v7423 = vunpack.c.h.b16 %v7337
      %v7424 = vunpack.c.l.b16 %v7338
      %v7425 = vunpack.c.h.b16 %v7338
      %v7426 = vunpack.c.l.b16 %v7339
      %v7427 = vunpack.c.h.b16 %v7339
      %v7428 = vunpack.c.l.b16 %v7340
      %v7429 = vunpack.c.h.b16 %v7340
      %v7430 = vunpack.c.l.b16 %v7341
      %v7431 = vunpack.c.h.b16 %v7341
      %v7432 = vunpack.c.l.b16 %v7342
      %v7433 = vunpack.c.h.b16 %v7342
      %v7434 = vunpack.c.l.b16 %v7343
      %v7435 = vunpack.c.h.b16 %v7343
      %v7436 = vunpack.c.l.b16 %v7344
      %v7437 = vunpack.c.h.b16 %v7344
      %v7438 = vunpack.c.l.b16 %v7345
      %v7439 = vunpack.c.h.b16 %v7345
      %v7440 = vunpack.c.l.b16 %v7346
      %v7441 = vunpack.c.h.b16 %v7346
      %v7442 = vunpack.c.l.b16 %v7347
      %v7443 = vunpack.c.h.b16 %v7347
      %v7444 = vpack.c.b16 %v7382, %v7380
      %v7445 = vpack.c.b16 %v7383, %v7381
      %v7446 = vpack.c.b16 %v7386, %v7384
      %v7447 = vpack.c.b16 %v7387, %v7385
      %v7448 = vpack.c.b16 %v7390, %v7388
      %v7449 = vpack.c.b16 %v7391, %v7389
      %v7450 = vpack.c.b16 %v7394, %v7392
      %v7451 = vpack.c.b16 %v7395, %v7393
      %v7452 = vpack.c.b16 %v7398, %v7396
      %v7453 = vpack.c.b16 %v7399, %v7397
      %v7454 = vpack.c.b16 %v7402, %v7400
      %v7455 = vpack.c.b16 %v7403, %v7401
      %v7456 = vpack.c.b16 %v7406, %v7404
      %v7457 = vpack.c.b16 %v7407, %v7405
      %v7458 = vpack.c.b16 %v7410, %v7408
      %v7459 = vpack.c.b16 %v7411, %v7409
      %v7460 = vpack.c.b16 %v7414, %v7412
      %v7461 = vpack.c.b16 %v7415, %v7413
      %v7462 = vpack.c.b16 %v7418, %v7416
      %v7463 = vpack.c.b16 %v7419, %v7417
      %v7464 = vpack.c.b16 %v7422, %v7420
      %v7465 = vpack.c.b16 %v7423, %v7421
      %v7466 = vpack.c.b16 %v7426, %v7424
      %v7467 = vpack.c.b16 %v7427, %v7425
      %v7468 = vpack.c.b16 %v7430, %v7428
      %v7469 = vpack.c.b16 %v7431, %v7429
      %v7470 = vpack.c.b16 %v7434, %v7432
      %v7471 = vpack.c.b16 %v7435, %v7433
      %v7472 = vpack.c.b16 %v7438, %v7436
      %v7473 = vpack.c.b16 %v7439, %v7437
      %v7474 = vpack.c.b16 %v7442, %v7440
      %v7475 = vpack.c.b16 %v7443, %v7441
      %7508 = vmatprep.subr.bf16.mxu0 %v7445
      %7509 = vmatpush1.bf16.msra.mxu0 %v7444
      %7510 = vmatprep.subr.bf16.mxu0 %v7447
      %7511 = vmatpush1.bf16.msra.mxu0 %v7446
      %7512 = vmatprep.subr.bf16.mxu0 %v7449
      %7513 = vmatpush1.bf16.msra.mxu0 %v7448
      %7514 = vmatprep.subr.bf16.mxu0 %v7451
      %7515 = vmatpush1.bf16.msra.mxu0 %v7450
      %7516 = vmatprep.subr.bf16.mxu0 %v7453
      %7517 = vmatpush1.bf16.msra.mxu0 %v7452
      %7518 = vmatprep.subr.bf16.mxu0 %v7455
      %7519 = vmatpush1.bf16.msra.mxu0 %v7454
      %7520 = vmatprep.subr.bf16.mxu0 %v7457
      %7521 = vmatpush1.bf16.msra.mxu0 %v7456
      %7522 = vmatprep.subr.bf16.mxu0 %v7459
      %7523 = vmatpush1.bf16.msra.mxu0 %v7458
      %7524 = vmatprep.subr.bf16.mxu0 %v7461
      %7525 = vmatpush1.bf16.msra.mxu0 %v7460
      %7526 = vmatprep.subr.bf16.mxu0 %v7463
      %7527 = vmatpush1.bf16.msra.mxu0 %v7462
      %7528 = vmatprep.subr.bf16.mxu0 %v7465
      %7529 = vmatpush1.bf16.msra.mxu0 %v7464
      %7530 = vmatprep.subr.bf16.mxu0 %v7467
      %7531 = vmatpush1.bf16.msra.mxu0 %v7466
      %7532 = vmatprep.subr.bf16.mxu0 %v7469
      %7533 = vmatpush1.bf16.msra.mxu0 %v7468
      %7534 = vmatprep.subr.bf16.mxu0 %v7471
      %7535 = vmatpush1.bf16.msra.mxu0 %v7470
      %7536 = vmatprep.subr.bf16.mxu0 %v7473
      %7537 = vmatpush1.bf16.msra.mxu0 %v7472
      %7538 = vmatprep.subr.bf16.mxu0 %v7475
      %7539 = vmatpush1.bf16.msra.mxu0 %v7474
      %7540 = vmatprep.mubr.bf16.mxu0 %v6135
      %7541 = vmatmul.mubr.bf16.gmra.mrb[0].mxu0 %v6134
      %v7542 = vpop.f32.mrb[0].mxu0
      %v7543 = vadd.f32 0.0, %v7542
      %v7544 = vpop.f32.mrb[0].mxu0
      %v7545 = vadd.f32 0.0, %v7544
      %v7546 = vpop.f32.mrb[0].mxu0
      %v7547 = vadd.f32 0.0, %v7546
      %v7548 = vpop.f32.mrb[0].mxu0
      %v7549 = vadd.f32 0.0, %v7548
      %7550 = vdwg.mxu0
      %s7551 = scalar_lea.vmem %s53, 1536
      %v7552 = vld [vmem:[%s7551] sm:$0xff]
      %v7553 = vld [vmem:[%s7551 + $0x8] sm:$0xff]
      %v7554 = vld [vmem:[%s7551 + $0x10] sm:$0xff]
      %v7555 = vld [vmem:[%s7551 + $0x18] sm:$0xff]
      %v7556 = vld [vmem:[%s7551 + $0x20] sm:$0xff]
      %v7557 = vld [vmem:[%s7551 + $0x28] sm:$0xff]
      %v7558 = vld [vmem:[%s7551 + $0x30] sm:$0xff]
      %v7559 = vld [vmem:[%s7551 + $0x38] sm:$0xff]
      %v7560 = vld [vmem:[%s7551 + $0x40] sm:$0xff]
      %v7561 = vld [vmem:[%s7551 + $0x48] sm:$0xff]
      %v7562 = vld [vmem:[%s7551 + $0x50] sm:$0xff]
      %v7563 = vld [vmem:[%s7551 + $0x58] sm:$0xff]
      %v7564 = vld [vmem:[%s7551 + $0x60] sm:$0xff]
      %v7565 = vld [vmem:[%s7551 + $0x68] sm:$0xff]
      %v7566 = vld [vmem:[%s7551 + $0x70] sm:$0xff]
      %v7567 = vld [vmem:[%s7551 + $0x78] sm:$0xff]
      %v7568 = vld [vmem:[%s7551 + $0x80] sm:$0xff]
      %v7569 = vld [vmem:[%s7551 + $0x88] sm:$0xff]
      %v7570 = vld [vmem:[%s7551 + $0x90] sm:$0xff]
      %v7571 = vld [vmem:[%s7551 + $0x98] sm:$0xff]
      %v7572 = vld [vmem:[%s7551 + $0xa0] sm:$0xff]
      %v7573 = vld [vmem:[%s7551 + $0xa8] sm:$0xff]
      %v7574 = vld [vmem:[%s7551 + $0xb0] sm:$0xff]
      %v7575 = vld [vmem:[%s7551 + $0xb8] sm:$0xff]
      %v7576 = vld [vmem:[%s7551 + $0xc0] sm:$0xff]
      %v7577 = vld [vmem:[%s7551 + $0xc8] sm:$0xff]
      %v7578 = vld [vmem:[%s7551 + $0xd0] sm:$0xff]
      %v7579 = vld [vmem:[%s7551 + $0xd8] sm:$0xff]
      %v7580 = vld [vmem:[%s7551 + $0xe0] sm:$0xff]
      %v7581 = vld [vmem:[%s7551 + $0xe8] sm:$0xff]
      %v7582 = vld [vmem:[%s7551 + $0xf0] sm:$0xff]
      %v7583 = vld [vmem:[%s7551 + $0xf8] sm:$0xff]
      %v7616 = vunpack.c.l.b16 %v7552
      %v7617 = vunpack.c.h.b16 %v7552
      %v7618 = vunpack.c.l.b16 %v7553
      %v7619 = vunpack.c.h.b16 %v7553
      %v7620 = vunpack.c.l.b16 %v7554
      %v7621 = vunpack.c.h.b16 %v7554
      %v7622 = vunpack.c.l.b16 %v7555
      %v7623 = vunpack.c.h.b16 %v7555
      %v7624 = vunpack.c.l.b16 %v7556
      %v7625 = vunpack.c.h.b16 %v7556
      %v7626 = vunpack.c.l.b16 %v7557
      %v7627 = vunpack.c.h.b16 %v7557
      %v7628 = vunpack.c.l.b16 %v7558
      %v7629 = vunpack.c.h.b16 %v7558
      %v7630 = vunpack.c.l.b16 %v7559
      %v7631 = vunpack.c.h.b16 %v7559
      %v7632 = vunpack.c.l.b16 %v7560
      %v7633 = vunpack.c.h.b16 %v7560
      %v7634 = vunpack.c.l.b16 %v7561
      %v7635 = vunpack.c.h.b16 %v7561
      %v7636 = vunpack.c.l.b16 %v7562
      %v7637 = vunpack.c.h.b16 %v7562
      %v7638 = vunpack.c.l.b16 %v7563
      %v7639 = vunpack.c.h.b16 %v7563
      %v7640 = vunpack.c.l.b16 %v7564
      %v7641 = vunpack.c.h.b16 %v7564
      %v7642 = vunpack.c.l.b16 %v7565
      %v7643 = vunpack.c.h.b16 %v7565
      %v7644 = vunpack.c.l.b16 %v7566
      %v7645 = vunpack.c.h.b16 %v7566
      %v7646 = vunpack.c.l.b16 %v7567
      %v7647 = vunpack.c.h.b16 %v7567
      %v7648 = vunpack.c.l.b16 %v7568
      %v7649 = vunpack.c.h.b16 %v7568
      %v7650 = vunpack.c.l.b16 %v7569
      %v7651 = vunpack.c.h.b16 %v7569
      %v7652 = vunpack.c.l.b16 %v7570
      %v7653 = vunpack.c.h.b16 %v7570
      %v7654 = vunpack.c.l.b16 %v7571
      %v7655 = vunpack.c.h.b16 %v7571
      %v7656 = vunpack.c.l.b16 %v7572
      %v7657 = vunpack.c.h.b16 %v7572
      %v7658 = vunpack.c.l.b16 %v7573
      %v7659 = vunpack.c.h.b16 %v7573
      %v7660 = vunpack.c.l.b16 %v7574
      %v7661 = vunpack.c.h.b16 %v7574
      %v7662 = vunpack.c.l.b16 %v7575
      %v7663 = vunpack.c.h.b16 %v7575
      %v7664 = vunpack.c.l.b16 %v7576
      %v7665 = vunpack.c.h.b16 %v7576
      %v7666 = vunpack.c.l.b16 %v7577
      %v7667 = vunpack.c.h.b16 %v7577
      %v7668 = vunpack.c.l.b16 %v7578
      %v7669 = vunpack.c.h.b16 %v7578
      %v7670 = vunpack.c.l.b16 %v7579
      %v7671 = vunpack.c.h.b16 %v7579
      %v7672 = vunpack.c.l.b16 %v7580
      %v7673 = vunpack.c.h.b16 %v7580
      %v7674 = vunpack.c.l.b16 %v7581
      %v7675 = vunpack.c.h.b16 %v7581
      %v7676 = vunpack.c.l.b16 %v7582
      %v7677 = vunpack.c.h.b16 %v7582
      %v7678 = vunpack.c.l.b16 %v7583
      %v7679 = vunpack.c.h.b16 %v7583
      %v7680 = vpack.c.b16 %v7618, %v7616
      %v7681 = vpack.c.b16 %v7619, %v7617
      %v7682 = vpack.c.b16 %v7622, %v7620
      %v7683 = vpack.c.b16 %v7623, %v7621
      %v7684 = vpack.c.b16 %v7626, %v7624
      %v7685 = vpack.c.b16 %v7627, %v7625
      %v7686 = vpack.c.b16 %v7630, %v7628
      %v7687 = vpack.c.b16 %v7631, %v7629
      %v7688 = vpack.c.b16 %v7634, %v7632
      %v7689 = vpack.c.b16 %v7635, %v7633
      %v7690 = vpack.c.b16 %v7638, %v7636
      %v7691 = vpack.c.b16 %v7639, %v7637
      %v7692 = vpack.c.b16 %v7642, %v7640
      %v7693 = vpack.c.b16 %v7643, %v7641
      %v7694 = vpack.c.b16 %v7646, %v7644
      %v7695 = vpack.c.b16 %v7647, %v7645
      %v7696 = vpack.c.b16 %v7650, %v7648
      %v7697 = vpack.c.b16 %v7651, %v7649
      %v7698 = vpack.c.b16 %v7654, %v7652
      %v7699 = vpack.c.b16 %v7655, %v7653
      %v7700 = vpack.c.b16 %v7658, %v7656
      %v7701 = vpack.c.b16 %v7659, %v7657
      %v7702 = vpack.c.b16 %v7662, %v7660
      %v7703 = vpack.c.b16 %v7663, %v7661
      %v7704 = vpack.c.b16 %v7666, %v7664
      %v7705 = vpack.c.b16 %v7667, %v7665
      %v7706 = vpack.c.b16 %v7670, %v7668
      %v7707 = vpack.c.b16 %v7671, %v7669
      %v7708 = vpack.c.b16 %v7674, %v7672
      %v7709 = vpack.c.b16 %v7675, %v7673
      %v7710 = vpack.c.b16 %v7678, %v7676
      %v7711 = vpack.c.b16 %v7679, %v7677
      %7744 = vmatprep.subr.bf16.mxu0 %v7681
      %7745 = vmatpush1.bf16.msra.mxu0 %v7680
      %7746 = vmatprep.subr.bf16.mxu0 %v7683
      %7747 = vmatpush1.bf16.msra.mxu0 %v7682
      %7748 = vmatprep.subr.bf16.mxu0 %v7685
      %7749 = vmatpush1.bf16.msra.mxu0 %v7684
      %7750 = vmatprep.subr.bf16.mxu0 %v7687
      %7751 = vmatpush1.bf16.msra.mxu0 %v7686
      %7752 = vmatprep.subr.bf16.mxu0 %v7689
      %7753 = vmatpush1.bf16.msra.mxu0 %v7688
      %7754 = vmatprep.subr.bf16.mxu0 %v7691
      %7755 = vmatpush1.bf16.msra.mxu0 %v7690
      %7756 = vmatprep.subr.bf16.mxu0 %v7693
      %7757 = vmatpush1.bf16.msra.mxu0 %v7692
      %7758 = vmatprep.subr.bf16.mxu0 %v7695
      %7759 = vmatpush1.bf16.msra.mxu0 %v7694
      %7760 = vmatprep.subr.bf16.mxu0 %v7697
      %7761 = vmatpush1.bf16.msra.mxu0 %v7696
      %7762 = vmatprep.subr.bf16.mxu0 %v7699
      %7763 = vmatpush1.bf16.msra.mxu0 %v7698
      %7764 = vmatprep.subr.bf16.mxu0 %v7701
      %7765 = vmatpush1.bf16.msra.mxu0 %v7700
      %7766 = vmatprep.subr.bf16.mxu0 %v7703
      %7767 = vmatpush1.bf16.msra.mxu0 %v7702
      %7768 = vmatprep.subr.bf16.mxu0 %v7705
      %7769 = vmatpush1.bf16.msra.mxu0 %v7704
      %7770 = vmatprep.subr.bf16.mxu0 %v7707
      %7771 = vmatpush1.bf16.msra.mxu0 %v7706
      %7772 = vmatprep.subr.bf16.mxu0 %v7709
      %7773 = vmatpush1.bf16.msra.mxu0 %v7708
      %7774 = vmatprep.subr.bf16.mxu0 %v7711
      %7775 = vmatpush1.bf16.msra.mxu0 %v7710
      %7776 = vmatprep.mubr.bf16.mxu0 %v6135
      %7777 = vmatmul.mubr.bf16.gmra.mrb[0].mxu0 %v6134
      %v7778 = vpop.f32.mrb[0].mxu0
      %v7779 = vadd.f32 0.0, %v7778
      %v7780 = vpop.f32.mrb[0].mxu0
      %v7781 = vadd.f32 0.0, %v7780
      %v7782 = vpop.f32.mrb[0].mxu0
      %v7783 = vadd.f32 0.0, %v7782
      %v7784 = vpop.f32.mrb[0].mxu0
      %v7785 = vadd.f32 0.0, %v7784
      %7786 = vdwg.mxu0
      %s7787 = scalar_lea.vmem %s53, 1792
      %v7788 = vld [vmem:[%s7787] sm:$0xff]
      %v7789 = vld [vmem:[%s7787 + $0x8] sm:$0xff]
      %v7790 = vld [vmem:[%s7787 + $0x10] sm:$0xff]
      %v7791 = vld [vmem:[%s7787 + $0x18] sm:$0xff]
      %v7792 = vld [vmem:[%s7787 + $0x20] sm:$0xff]
      %v7793 = vld [vmem:[%s7787 + $0x28] sm:$0xff]
      %v7794 = vld [vmem:[%s7787 + $0x30] sm:$0xff]
      %v7795 = vld [vmem:[%s7787 + $0x38] sm:$0xff]
      %v7796 = vld [vmem:[%s7787 + $0x40] sm:$0xff]
      %v7797 = vld [vmem:[%s7787 + $0x48] sm:$0xff]
      %v7798 = vld [vmem:[%s7787 + $0x50] sm:$0xff]
      %v7799 = vld [vmem:[%s7787 + $0x58] sm:$0xff]
      %v7800 = vld [vmem:[%s7787 + $0x60] sm:$0xff]
      %v7801 = vld [vmem:[%s7787 + $0x68] sm:$0xff]
      %v7802 = vld [vmem:[%s7787 + $0x70] sm:$0xff]
      %v7803 = vld [vmem:[%s7787 + $0x78] sm:$0xff]
      %v7804 = vld [vmem:[%s7787 + $0x80] sm:$0xff]
      %v7805 = vld [vmem:[%s7787 + $0x88] sm:$0xff]
      %v7806 = vld [vmem:[%s7787 + $0x90] sm:$0xff]
      %v7807 = vld [vmem:[%s7787 + $0x98] sm:$0xff]
      %v7808 = vld [vmem:[%s7787 + $0xa0] sm:$0xff]
      %v7809 = vld [vmem:[%s7787 + $0xa8] sm:$0xff]
      %v7810 = vld [vmem:[%s7787 + $0xb0] sm:$0xff]
      %v7811 = vld [vmem:[%s7787 + $0xb8] sm:$0xff]
      %v7812 = vld [vmem:[%s7787 + $0xc0] sm:$0xff]
      %v7813 = vld [vmem:[%s7787 + $0xc8] sm:$0xff]
      %v7814 = vld [vmem:[%s7787 + $0xd0] sm:$0xff]
      %v7815 = vld [vmem:[%s7787 + $0xd8] sm:$0xff]
      %v7816 = vld [vmem:[%s7787 + $0xe0] sm:$0xff]
      %v7817 = vld [vmem:[%s7787 + $0xe8] sm:$0xff]
      %v7818 = vld [vmem:[%s7787 + $0xf0] sm:$0xff]
      %v7819 = vld [vmem:[%s7787 + $0xf8] sm:$0xff]
      %v7852 = vunpack.c.l.b16 %v7788
      %v7853 = vunpack.c.h.b16 %v7788
      %v7854 = vunpack.c.l.b16 %v7789
      %v7855 = vunpack.c.h.b16 %v7789
      %v7856 = vunpack.c.l.b16 %v7790
      %v7857 = vunpack.c.h.b16 %v7790
      %v7858 = vunpack.c.l.b16 %v7791
      %v7859 = vunpack.c.h.b16 %v7791
      %v7860 = vunpack.c.l.b16 %v7792
      %v7861 = vunpack.c.h.b16 %v7792
      %v7862 = vunpack.c.l.b16 %v7793
      %v7863 = vunpack.c.h.b16 %v7793
      %v7864 = vunpack.c.l.b16 %v7794
      %v7865 = vunpack.c.h.b16 %v7794
      %v7866 = vunpack.c.l.b16 %v7795
      %v7867 = vunpack.c.h.b16 %v7795
      %v7868 = vunpack.c.l.b16 %v7796
      %v7869 = vunpack.c.h.b16 %v7796
      %v7870 = vunpack.c.l.b16 %v7797
      %v7871 = vunpack.c.h.b16 %v7797
      %v7872 = vunpack.c.l.b16 %v7798
      %v7873 = vunpack.c.h.b16 %v7798
      %v7874 = vunpack.c.l.b16 %v7799
      %v7875 = vunpack.c.h.b16 %v7799
      %v7876 = vunpack.c.l.b16 %v7800
      %v7877 = vunpack.c.h.b16 %v7800
      %v7878 = vunpack.c.l.b16 %v7801
      %v7879 = vunpack.c.h.b16 %v7801
      %v7880 = vunpack.c.l.b16 %v7802
      %v7881 = vunpack.c.h.b16 %v7802
      %v7882 = vunpack.c.l.b16 %v7803
      %v7883 = vunpack.c.h.b16 %v7803
      %v7884 = vunpack.c.l.b16 %v7804
      %v7885 = vunpack.c.h.b16 %v7804
      %v7886 = vunpack.c.l.b16 %v7805
      %v7887 = vunpack.c.h.b16 %v7805
      %v7888 = vunpack.c.l.b16 %v7806
      %v7889 = vunpack.c.h.b16 %v7806
      %v7890 = vunpack.c.l.b16 %v7807
      %v7891 = vunpack.c.h.b16 %v7807
      %v7892 = vunpack.c.l.b16 %v7808
      %v7893 = vunpack.c.h.b16 %v7808
      %v7894 = vunpack.c.l.b16 %v7809
      %v7895 = vunpack.c.h.b16 %v7809
      %v7896 = vunpack.c.l.b16 %v7810
      %v7897 = vunpack.c.h.b16 %v7810
      %v7898 = vunpack.c.l.b16 %v7811
      %v7899 = vunpack.c.h.b16 %v7811
      %v7900 = vunpack.c.l.b16 %v7812
      %v7901 = vunpack.c.h.b16 %v7812
      %v7902 = vunpack.c.l.b16 %v7813
      %v7903 = vunpack.c.h.b16 %v7813
      %v7904 = vunpack.c.l.b16 %v7814
      %v7905 = vunpack.c.h.b16 %v7814
      %v7906 = vunpack.c.l.b16 %v7815
      %v7907 = vunpack.c.h.b16 %v7815
      %v7908 = vunpack.c.l.b16 %v7816
      %v7909 = vunpack.c.h.b16 %v7816
      %v7910 = vunpack.c.l.b16 %v7817
      %v7911 = vunpack.c.h.b16 %v7817
      %v7912 = vunpack.c.l.b16 %v7818
      %v7913 = vunpack.c.h.b16 %v7818
      %v7914 = vunpack.c.l.b16 %v7819
      %v7915 = vunpack.c.h.b16 %v7819
      %v7916 = vpack.c.b16 %v7854, %v7852
      %v7917 = vpack.c.b16 %v7855, %v7853
      %v7918 = vpack.c.b16 %v7858, %v7856
      %v7919 = vpack.c.b16 %v7859, %v7857
      %v7920 = vpack.c.b16 %v7862, %v7860
      %v7921 = vpack.c.b16 %v7863, %v7861
      %v7922 = vpack.c.b16 %v7866, %v7864
      %v7923 = vpack.c.b16 %v7867, %v7865
      %v7924 = vpack.c.b16 %v7870, %v7868
      %v7925 = vpack.c.b16 %v7871, %v7869
      %v7926 = vpack.c.b16 %v7874, %v7872
      %v7927 = vpack.c.b16 %v7875, %v7873
      %v7928 = vpack.c.b16 %v7878, %v7876
      %v7929 = vpack.c.b16 %v7879, %v7877
      %v7930 = vpack.c.b16 %v7882, %v7880
      %v7931 = vpack.c.b16 %v7883, %v7881
      %v7932 = vpack.c.b16 %v7886, %v7884
      %v7933 = vpack.c.b16 %v7887, %v7885
      %v7934 = vpack.c.b16 %v7890, %v7888
      %v7935 = vpack.c.b16 %v7891, %v7889
      %v7936 = vpack.c.b16 %v7894, %v7892
      %v7937 = vpack.c.b16 %v7895, %v7893
      %v7938 = vpack.c.b16 %v7898, %v7896
      %v7939 = vpack.c.b16 %v7899, %v7897
      %v7940 = vpack.c.b16 %v7902, %v7900
      %v7941 = vpack.c.b16 %v7903, %v7901
      %v7942 = vpack.c.b16 %v7906, %v7904
      %v7943 = vpack.c.b16 %v7907, %v7905
      %v7944 = vpack.c.b16 %v7910, %v7908
      %v7945 = vpack.c.b16 %v7911, %v7909
      %v7946 = vpack.c.b16 %v7914, %v7912
      %v7947 = vpack.c.b16 %v7915, %v7913
      %7980 = vmatprep.subr.bf16.mxu0 %v7917
      %7981 = vmatpush1.bf16.msra.mxu0 %v7916
      %7982 = vmatprep.subr.bf16.mxu0 %v7919
      %7983 = vmatpush1.bf16.msra.mxu0 %v7918
      %7984 = vmatprep.subr.bf16.mxu0 %v7921
      %7985 = vmatpush1.bf16.msra.mxu0 %v7920
      %7986 = vmatprep.subr.bf16.mxu0 %v7923
      %7987 = vmatpush1.bf16.msra.mxu0 %v7922
      %7988 = vmatprep.subr.bf16.mxu0 %v7925
      %7989 = vmatpush1.bf16.msra.mxu0 %v7924
      %7990 = vmatprep.subr.bf16.mxu0 %v7927
      %7991 = vmatpush1.bf16.msra.mxu0 %v7926
      %7992 = vmatprep.subr.bf16.mxu0 %v7929
      %7993 = vmatpush1.bf16.msra.mxu0 %v7928
      %7994 = vmatprep.subr.bf16.mxu0 %v7931
      %7995 = vmatpush1.bf16.msra.mxu0 %v7930
      %7996 = vmatprep.subr.bf16.mxu0 %v7933
      %7997 = vmatpush1.bf16.msra.mxu0 %v7932
      %7998 = vmatprep.subr.bf16.mxu0 %v7935
      %7999 = vmatpush1.bf16.msra.mxu0 %v7934
      %8000 = vmatprep.subr.bf16.mxu0 %v7937
      %8001 = vmatpush1.bf16.msra.mxu0 %v7936
      %8002 = vmatprep.subr.bf16.mxu0 %v7939
      %8003 = vmatpush1.bf16.msra.mxu0 %v7938
      %8004 = vmatprep.subr.bf16.mxu0 %v7941
      %8005 = vmatpush1.bf16.msra.mxu0 %v7940
      %8006 = vmatprep.subr.bf16.mxu0 %v7943
      %8007 = vmatpush1.bf16.msra.mxu0 %v7942
      %8008 = vmatprep.subr.bf16.mxu0 %v7945
      %8009 = vmatpush1.bf16.msra.mxu0 %v7944
      %8010 = vmatprep.subr.bf16.mxu0 %v7947
      %8011 = vmatpush1.bf16.msra.mxu0 %v7946
      %8012 = vmatprep.mubr.bf16.mxu0 %v6135
      %8013 = vmatmul.mubr.bf16.gmra.mrb[0].mxu0 %v6134
      %v8014 = vpop.f32.mrb[0].mxu0
      %v8015 = vadd.f32 0.0, %v8014
      %v8016 = vpop.f32.mrb[0].mxu0
      %v8017 = vadd.f32 0.0, %v8016
      %v8018 = vpop.f32.mrb[0].mxu0
      %v8019 = vadd.f32 0.0, %v8018
      %v8020 = vpop.f32.mrb[0].mxu0
      %v8021 = vadd.f32 0.0, %v8020
      %8022 = vdwg.mxu0
      %s8023 = scalar_lea.vmem %s53, 2048
      %v8024 = vld [vmem:[%s8023] sm:$0xff]
      %v8025 = vld [vmem:[%s8023 + $0x8] sm:$0xff]
      %v8026 = vld [vmem:[%s8023 + $0x10] sm:$0xff]
      %v8027 = vld [vmem:[%s8023 + $0x18] sm:$0xff]
      %v8028 = vld [vmem:[%s8023 + $0x20] sm:$0xff]
      %v8029 = vld [vmem:[%s8023 + $0x28] sm:$0xff]
      %v8030 = vld [vmem:[%s8023 + $0x30] sm:$0xff]
      %v8031 = vld [vmem:[%s8023 + $0x38] sm:$0xff]
      %v8032 = vld [vmem:[%s8023 + $0x40] sm:$0xff]
      %v8033 = vld [vmem:[%s8023 + $0x48] sm:$0xff]
      %v8034 = vld [vmem:[%s8023 + $0x50] sm:$0xff]
      %v8035 = vld [vmem:[%s8023 + $0x58] sm:$0xff]
      %v8036 = vld [vmem:[%s8023 + $0x60] sm:$0xff]
      %v8037 = vld [vmem:[%s8023 + $0x68] sm:$0xff]
      %v8038 = vld [vmem:[%s8023 + $0x70] sm:$0xff]
      %v8039 = vld [vmem:[%s8023 + $0x78] sm:$0xff]
      %v8040 = vld [vmem:[%s8023 + $0x80] sm:$0xff]
      %v8041 = vld [vmem:[%s8023 + $0x88] sm:$0xff]
      %v8042 = vld [vmem:[%s8023 + $0x90] sm:$0xff]
      %v8043 = vld [vmem:[%s8023 + $0x98] sm:$0xff]
      %v8044 = vld [vmem:[%s8023 + $0xa0] sm:$0xff]
      %v8045 = vld [vmem:[%s8023 + $0xa8] sm:$0xff]
      %v8046 = vld [vmem:[%s8023 + $0xb0] sm:$0xff]
      %v8047 = vld [vmem:[%s8023 + $0xb8] sm:$0xff]
      %v8048 = vld [vmem:[%s8023 + $0xc0] sm:$0xff]
      %v8049 = vld [vmem:[%s8023 + $0xc8] sm:$0xff]
      %v8050 = vld [vmem:[%s8023 + $0xd0] sm:$0xff]
      %v8051 = vld [vmem:[%s8023 + $0xd8] sm:$0xff]
      %v8052 = vld [vmem:[%s8023 + $0xe0] sm:$0xff]
      %v8053 = vld [vmem:[%s8023 + $0xe8] sm:$0xff]
      %v8054 = vld [vmem:[%s8023 + $0xf0] sm:$0xff]
      %v8055 = vld [vmem:[%s8023 + $0xf8] sm:$0xff]
      %v8088 = vunpack.c.l.b16 %v8024
      %v8089 = vunpack.c.h.b16 %v8024
      %v8090 = vunpack.c.l.b16 %v8025
      %v8091 = vunpack.c.h.b16 %v8025
      %v8092 = vunpack.c.l.b16 %v8026
      %v8093 = vunpack.c.h.b16 %v8026
      %v8094 = vunpack.c.l.b16 %v8027
      %v8095 = vunpack.c.h.b16 %v8027
      %v8096 = vunpack.c.l.b16 %v8028
      %v8097 = vunpack.c.h.b16 %v8028
      %v8098 = vunpack.c.l.b16 %v8029
      %v8099 = vunpack.c.h.b16 %v8029
      %v8100 = vunpack.c.l.b16 %v8030
      %v8101 = vunpack.c.h.b16 %v8030
      %v8102 = vunpack.c.l.b16 %v8031
      %v8103 = vunpack.c.h.b16 %v8031
      %v8104 = vunpack.c.l.b16 %v8032
      %v8105 = vunpack.c.h.b16 %v8032
      %v8106 = vunpack.c.l.b16 %v8033
      %v8107 = vunpack.c.h.b16 %v8033
      %v8108 = vunpack.c.l.b16 %v8034
      %v8109 = vunpack.c.h.b16 %v8034
      %v8110 = vunpack.c.l.b16 %v8035
      %v8111 = vunpack.c.h.b16 %v8035
      %v8112 = vunpack.c.l.b16 %v8036
      %v8113 = vunpack.c.h.b16 %v8036
      %v8114 = vunpack.c.l.b16 %v8037
      %v8115 = vunpack.c.h.b16 %v8037
      %v8116 = vunpack.c.l.b16 %v8038
      %v8117 = vunpack.c.h.b16 %v8038
      %v8118 = vunpack.c.l.b16 %v8039
      %v8119 = vunpack.c.h.b16 %v8039
      %v8120 = vunpack.c.l.b16 %v8040
      %v8121 = vunpack.c.h.b16 %v8040
      %v8122 = vunpack.c.l.b16 %v8041
      %v8123 = vunpack.c.h.b16 %v8041
      %v8124 = vunpack.c.l.b16 %v8042
      %v8125 = vunpack.c.h.b16 %v8042
      %v8126 = vunpack.c.l.b16 %v8043
      %v8127 = vunpack.c.h.b16 %v8043
      %v8128 = vunpack.c.l.b16 %v8044
      %v8129 = vunpack.c.h.b16 %v8044
      %v8130 = vunpack.c.l.b16 %v8045
      %v8131 = vunpack.c.h.b16 %v8045
      %v8132 = vunpack.c.l.b16 %v8046
      %v8133 = vunpack.c.h.b16 %v8046
      %v8134 = vunpack.c.l.b16 %v8047
      %v8135 = vunpack.c.h.b16 %v8047
      %v8136 = vunpack.c.l.b16 %v8048
      %v8137 = vunpack.c.h.b16 %v8048
      %v8138 = vunpack.c.l.b16 %v8049
      %v8139 = vunpack.c.h.b16 %v8049
      %v8140 = vunpack.c.l.b16 %v8050
      %v8141 = vunpack.c.h.b16 %v8050
      %v8142 = vunpack.c.l.b16 %v8051
      %v8143 = vunpack.c.h.b16 %v8051
      %v8144 = vunpack.c.l.b16 %v8052
      %v8145 = vunpack.c.h.b16 %v8052
      %v8146 = vunpack.c.l.b16 %v8053
      %v8147 = vunpack.c.h.b16 %v8053
      %v8148 = vunpack.c.l.b16 %v8054
      %v8149 = vunpack.c.h.b16 %v8054
      %v8150 = vunpack.c.l.b16 %v8055
      %v8151 = vunpack.c.h.b16 %v8055
      %v8152 = vpack.c.b16 %v8090, %v8088
      %v8153 = vpack.c.b16 %v8091, %v8089
      %v8154 = vpack.c.b16 %v8094, %v8092
      %v8155 = vpack.c.b16 %v8095, %v8093
      %v8156 = vpack.c.b16 %v8098, %v8096
      %v8157 = vpack.c.b16 %v8099, %v8097
      %v8158 = vpack.c.b16 %v8102, %v8100
      %v8159 = vpack.c.b16 %v8103, %v8101
      %v8160 = vpack.c.b16 %v8106, %v8104
      %v8161 = vpack.c.b16 %v8107, %v8105
      %v8162 = vpack.c.b16 %v8110, %v8108
      %v8163 = vpack.c.b16 %v8111, %v8109
      %v8164 = vpack.c.b16 %v8114, %v8112
      %v8165 = vpack.c.b16 %v8115, %v8113
      %v8166 = vpack.c.b16 %v8118, %v8116
      %v8167 = vpack.c.b16 %v8119, %v8117
      %v8168 = vpack.c.b16 %v8122, %v8120
      %v8169 = vpack.c.b16 %v8123, %v8121
      %v8170 = vpack.c.b16 %v8126, %v8124
      %v8171 = vpack.c.b16 %v8127, %v8125
      %v8172 = vpack.c.b16 %v8130, %v8128
      %v8173 = vpack.c.b16 %v8131, %v8129
      %v8174 = vpack.c.b16 %v8134, %v8132
      %v8175 = vpack.c.b16 %v8135, %v8133
      %v8176 = vpack.c.b16 %v8138, %v8136
      %v8177 = vpack.c.b16 %v8139, %v8137
      %v8178 = vpack.c.b16 %v8142, %v8140
      %v8179 = vpack.c.b16 %v8143, %v8141
      %v8180 = vpack.c.b16 %v8146, %v8144
      %v8181 = vpack.c.b16 %v8147, %v8145
      %v8182 = vpack.c.b16 %v8150, %v8148
      %v8183 = vpack.c.b16 %v8151, %v8149
      %8216 = vmatprep.subr.bf16.mxu0 %v8153
      %8217 = vmatpush1.bf16.msra.mxu0 %v8152
      %8218 = vmatprep.subr.bf16.mxu0 %v8155
      %8219 = vmatpush1.bf16.msra.mxu0 %v8154
      %8220 = vmatprep.subr.bf16.mxu0 %v8157
      %8221 = vmatpush1.bf16.msra.mxu0 %v8156
      %8222 = vmatprep.subr.bf16.mxu0 %v8159
      %8223 = vmatpush1.bf16.msra.mxu0 %v8158
      %8224 = vmatprep.subr.bf16.mxu0 %v8161
      %8225 = vmatpush1.bf16.msra.mxu0 %v8160
      %8226 = vmatprep.subr.bf16.mxu0 %v8163
      %8227 = vmatpush1.bf16.msra.mxu0 %v8162
      %8228 = vmatprep.subr.bf16.mxu0 %v8165
      %8229 = vmatpush1.bf16.msra.mxu0 %v8164
      %8230 = vmatprep.subr.bf16.mxu0 %v8167
      %8231 = vmatpush1.bf16.msra.mxu0 %v8166
      %8232 = vmatprep.subr.bf16.mxu0 %v8169
      %8233 = vmatpush1.bf16.msra.mxu0 %v8168
      %8234 = vmatprep.subr.bf16.mxu0 %v8171
      %8235 = vmatpush1.bf16.msra.mxu0 %v8170
      %8236 = vmatprep.subr.bf16.mxu0 %v8173
      %8237 = vmatpush1.bf16.msra.mxu0 %v8172
      %8238 = vmatprep.subr.bf16.mxu0 %v8175
      %8239 = vmatpush1.bf16.msra.mxu0 %v8174
      %8240 = vmatprep.subr.bf16.mxu0 %v8177
      %8241 = vmatpush1.bf16.msra.mxu0 %v8176
      %8242 = vmatprep.subr.bf16.mxu0 %v8179
      %8243 = vmatpush1.bf16.msra.mxu0 %v8178
      %8244 = vmatprep.subr.bf16.mxu0 %v8181
      %8245 = vmatpush1.bf16.msra.mxu0 %v8180
      %8246 = vmatprep.subr.bf16.mxu0 %v8183
      %8247 = vmatpush1.bf16.msra.mxu0 %v8182
      %8248 = vmatprep.mubr.bf16.mxu0 %v6135
      %8249 = vmatmul.mubr.bf16.gmra.mrb[0].mxu0 %v6134
      %v8250 = vpop.f32.mrb[0].mxu0
      %v8251 = vadd.f32 0.0, %v8250
      %v8252 = vpop.f32.mrb[0].mxu0
      %v8253 = vadd.f32 0.0, %v8252
      %v8254 = vpop.f32.mrb[0].mxu0
      %v8255 = vadd.f32 0.0, %v8254
      %v8256 = vpop.f32.mrb[0].mxu0
      %v8257 = vadd.f32 0.0, %v8256
      %8258 = vdwg.mxu0
      %v8259 = vpack.c.bf16 %v6367, %v6363
      %v8260 = vpack.c.bf16 %v6369, %v6365
      %v8261 = vpack.c.bf16 %v6603, %v6599
      %v8262 = vpack.c.bf16 %v6605, %v6601
      %v8263 = vpack.c.bf16 %v6839, %v6835
      %v8264 = vpack.c.bf16 %v6841, %v6837
      %v8265 = vpack.c.bf16 %v7075, %v7071
      %v8266 = vpack.c.bf16 %v7077, %v7073
      %v8267 = vpack.c.bf16 %v7311, %v7307
      %v8268 = vpack.c.bf16 %v7313, %v7309
      %v8269 = vpack.c.bf16 %v7547, %v7543
      %v8270 = vpack.c.bf16 %v7549, %v7545
      %v8271 = vpack.c.bf16 %v7783, %v7779
      %v8272 = vpack.c.bf16 %v7785, %v7781
      %v8273 = vpack.c.bf16 %v8019, %v8015
      %v8274 = vpack.c.bf16 %v8021, %v8017
      %v8275 = vpack.c.bf16 %v8255, %v8251
      %v8276 = vpack.c.bf16 %v8257, %v8253
      %v8277 = vld [vmem:[%s55] sm:$0xff]
      %v8278 = vld [vmem:[%s55 + $0x8] sm:$0xff]
      %v8279 = vld [vmem:[%s57] sm:$0xff]
      %v8280 = vld [vmem:[%s57 + $0x8] sm:$0xff]
      %8282 = vset.pattern.permute.xlu0 0
      %8283 = vperm.xlu0 %8282, %v8279
      %v8284 = vpop.permute.xlu0 %8283
      %8287 = vset.pattern.permute.xlu0 0
      %8288 = vperm.xlu0 %8287, %v8280
      %v8289 = vpop.permute.xlu0 %8288
      %v8293 = vunpack.c.l.b16 %v8277
      %v8294 = vunpack.c.h.b16 %v8277
      %v8295 = vunpack.c.l.b16 %v8278
      %v8296 = vunpack.c.h.b16 %v8278
      %v8297 = vpack.c.b16 %v8295, %v8293
      %v8298 = vpack.c.b16 %v8296, %v8294
      %v8301 = vsel %vm2639, %v8298, 0
      %8303 = vmatprep.subr.bf16.mxu0 %v8260
      %8304 = vmatpush1.bf16.msra.mxu0 %v8259
      %8305 = vmatprep.subr.bf16.mxu0 %v8262
      %8306 = vmatpush1.bf16.msra.mxu0 %v8261
      %8307 = vmatprep.subr.bf16.mxu0 %v8264
      %8308 = vmatpush1.bf16.msra.mxu0 %v8263
      %8309 = vmatprep.subr.bf16.mxu0 %v8266
      %8310 = vmatpush1.bf16.msra.mxu0 %v8265
      %8311 = vmatprep.subr.bf16.mxu0 %v8268
      %8312 = vmatpush1.bf16.msra.mxu0 %v8267
      %8313 = vmatprep.subr.bf16.mxu0 %v8270
      %8314 = vmatpush1.bf16.msra.mxu0 %v8269
      %8315 = vmatprep.subr.bf16.mxu0 %v8272
      %8316 = vmatpush1.bf16.msra.mxu0 %v8271
      %8317 = vmatprep.subr.bf16.mxu0 %v8274
      %8318 = vmatpush1.bf16.msra.mxu0 %v8273
      %8319 = vmatprep.subr.bf16.mxu0 %v8276
      %8320 = vmatpush1.bf16.msra.mxu0 %v8275
      %8321 = vmatprep.subr.bf16.mxu0 0
      %8322 = vmatpush1.bf16.msra.mxu0 0
      %8323 = vmatprep.subr.bf16.mxu0 0
      %8324 = vmatpush1.bf16.msra.mxu0 0
      %8325 = vmatprep.subr.bf16.mxu0 0
      %8326 = vmatpush1.bf16.msra.mxu0 0
      %8327 = vmatprep.subr.bf16.mxu0 0
      %8328 = vmatpush1.bf16.msra.mxu0 0
      %8329 = vmatprep.subr.bf16.mxu0 0
      %8330 = vmatpush1.bf16.msra.mxu0 0
      %8331 = vmatprep.subr.bf16.mxu0 0
      %8332 = vmatpush1.bf16.msra.mxu0 0
      %8333 = vmatprep.subr.bf16.mxu0 0
      %8334 = vmatpush1.bf16.msra.mxu0 0
      %8335 = vmatprep.mubr.bf16.mxu0 %v8301
      %8336 = vmatmul.mubr.bf16.gmra.mrb[0].mxu0 %v8297
      %v8337 = vpop.f32.mrb[0].mxu0
      %v8338 = vadd.f32 %v8284, %v8337
      %v8339 = vpop.f32.mrb[0].mxu0
      %v8340 = vadd.f32 %v8284, %v8339
      %v8341 = vpop.f32.mrb[0].mxu0
      %v8342 = vadd.f32 %v8289, %v8341
      %v8343 = vpop.f32.mrb[0].mxu0
      %v8344 = vadd.f32 %v8289, %v8343
      %8345 = vdwg.mxu0
      %v8346 = vmax.f32 %v8338, 0.0
      %v8347 = vmax.f32 %v8340, 0.0
      %v8348 = vmax.f32 %v8342, 0.0
      %v8349 = vmax.f32 %v8344, 0.0
      %v8350 = vand.u32 2147483647, %v8338
      %v8351 = vand.u32 2147483647, %v8340
      %v8352 = vand.u32 2147483647, %v8342
      %v8353 = vand.u32 2147483647, %v8344
      %v8354 = vsub.f32 0.0, %v8350
      %v8355 = vsub.f32 0.0, %v8351
      %v8356 = vsub.f32 0.0, %v8352
      %v8357 = vsub.f32 0.0, %v8353
      %v8358 = vmul.f32 %v8354, 1.442695
      %v8359 = vpow.pop %v8358
      %v8360 = vmul.f32 %v8355, 1.442695
      %v8361 = vpow.pop %v8360
      %v8362 = vmul.f32 %v8356, 1.442695
      %v8363 = vpow.pop %v8362
      %v8364 = vmul.f32 %v8357, 1.442695
      %v8365 = vpow.pop %v8364
      %v8366 = vadd.f32 %v8359, 1.0
      %v8367 = vlog2.pop %v8366
      %v8368 = vmul.f32 %v8367, 0.6931472
      %v8369 = vmul.f32 -0.5, %v8359
      %v8370 = vadd.f32 %v8369, 1.0
      %v8371 = vmul.f32 %v8370, %v8359
      %v8372 = vand.u32 2147483647, %v8359
      %vm8373 = vcmp.lt.f32.partialorder %v8372, 0.0004427343
      %v8374 = vsel %vm8373, %v8371, %v8368
      %v8375 = vadd.f32 %v8361, 1.0
      %v8376 = vlog2.pop %v8375
      %v8377 = vmul.f32 %v8376, 0.6931472
      %v8378 = vmul.f32 -0.5, %v8361
      %v8379 = vadd.f32 %v8378, 1.0
      %v8380 = vmul.f32 %v8379, %v8361
      %v8381 = vand.u32 2147483647, %v8361
      %vm8382 = vcmp.lt.f32.partialorder %v8381, 0.0004427343
      %v8383 = vsel %vm8382, %v8380, %v8377
      %v8384 = vadd.f32 %v8363, 1.0
      %v8385 = vlog2.pop %v8384
      %v8386 = vmul.f32 %v8385, 0.6931472
      %v8387 = vmul.f32 -0.5, %v8363
      %v8388 = vadd.f32 %v8387, 1.0
      %v8389 = vmul.f32 %v8388, %v8363
      %v8390 = vand.u32 2147483647, %v8363
      %vm8391 = vcmp.lt.f32.partialorder %v8390, 0.0004427343
      %v8392 = vsel %vm8391, %v8389, %v8386
      %v8393 = vadd.f32 %v8365, 1.0
      %v8394 = vlog2.pop %v8393
      %v8395 = vmul.f32 %v8394, 0.6931472
      %v8396 = vmul.f32 -0.5, %v8365
      %v8397 = vadd.f32 %v8396, 1.0
      %v8398 = vmul.f32 %v8397, %v8365
      %v8399 = vand.u32 2147483647, %v8365
      %vm8400 = vcmp.lt.f32.partialorder %v8399, 0.0004427343
      %v8401 = vsel %vm8400, %v8398, %v8395
      %v8402 = vadd.f32 %v8346, %v8374
      %v8403 = vadd.f32 %v8347, %v8383
      %v8404 = vadd.f32 %v8348, %v8392
      %v8405 = vadd.f32 %v8349, %v8401
      %v8406 = vtanh.pop %v8402
      %v8407 = vtanh.pop %v8403
      %v8408 = vtanh.pop %v8404
      %v8409 = vtanh.pop %v8405
      %v8410 = vmul.f32 %v8338, %v8406
      %v8411 = vmul.f32 %v8340, %v8407
      %v8412 = vmul.f32 %v8342, %v8408
      %v8413 = vmul.f32 %v8344, %v8409
      %v8414 = vadd.f32 %v8410, %v8411
      %8415 = vadd.xlane.f32.xlu0 %v8414
      %v8416 = vpop.xlane.xlu0 %8415
      %v8417 = vadd.f32 %v8412, %v8413
      %8418 = vadd.xlane.f32.xlu0 %v8417
      %v8419 = vpop.xlane.xlu0 %8418
      %v8420 = vmul.f32 %v8416, %v6075
      %v8421 = vmul.f32 %v8419, %v6075
      %v8422 = vsub.f32 %v8410, %v8420
      %v8423 = vsub.f32 %v8411, %v8420
      %v8424 = vsub.f32 %v8412, %v8421
      %v8425 = vsub.f32 %v8413, %v8421
      %v8426 = vmul.f32 %v8422, %v8422
      %v8427 = vmul.f32 %v8423, %v8423
      %v8428 = vmul.f32 %v8424, %v8424
      %v8429 = vmul.f32 %v8425, %v8425
      %v8430 = vadd.f32 %v8426, %v8427
      %8431 = vadd.xlane.f32.xlu0 %v8430
      %v8432 = vpop.xlane.xlu0 %8431
      %v8433 = vadd.f32 %v8428, %v8429
      %8434 = vadd.xlane.f32.xlu0 %v8433
      %v8435 = vpop.xlane.xlu0 %8434
      %v8436 = vmul.f32 %v8432, %v6075
      %v8437 = vmul.f32 %v8435, %v6075
      %v8438 = vadd.f32 %v8436, 1e-05
      %v8439 = vadd.f32 %v8437, 1e-05
      %v8440 = vrsqrt.pop %v8438
      %v8441 = vrsqrt.pop %v8439
      %v8442 = vmul.f32 %v8422, %v8440
      %v8443 = vmul.f32 %v8423, %v8440
      %v8444 = vmul.f32 %v8424, %v8441
      %v8445 = vmul.f32 %v8425, %v8441
      %v8446 = vld [vmem:[%s59] sm:$0xff]
      %v8447 = vld [vmem:[%s59 + $0x8] sm:$0xff]
      %8449 = vset.pattern.permute.xlu0 0
      %8450 = vperm.xlu0 %8449, %v8446
      %v8451 = vpop.permute.xlu0 %8450
      %8454 = vset.pattern.permute.xlu0 0
      %8455 = vperm.xlu0 %8454, %v8447
      %v8456 = vpop.permute.xlu0 %8455
      %v8458 = vmul.f32 %v8442, %v8451
      %v8459 = vmul.f32 %v8443, %v8451
      %v8460 = vmul.f32 %v8444, %v8456
      %v8461 = vmul.f32 %v8445, %v8456
      %v8462 = vld [vmem:[%s61] sm:$0xff]
      %v8463 = vld [vmem:[%s61 + $0x8] sm:$0xff]
      %8465 = vset.pattern.permute.xlu0 0
      %8466 = vperm.xlu0 %8465, %v8462
      %v8467 = vpop.permute.xlu0 %8466
      %8470 = vset.pattern.permute.xlu0 0
      %8471 = vperm.xlu0 %8470, %v8463
      %v8472 = vpop.permute.xlu0 %8471
      %v8474 = vadd.f32 %v8458, %v8467
      %v8475 = vadd.f32 %v8459, %v8467
      %v8476 = vadd.f32 %v8460, %v8472
      %v8477 = vadd.f32 %v8461, %v8472
      %v8478 = vld [vmem:[%s63] sm:$0x3]
      %v8479 = vpack.c.bf16 %v8476, %v8474
      %v8480 = vpack.c.bf16 %v8477, %v8475
      %v8481 = vld [vmem:[%s65] sm:$0x7]
      %8483 = vset.pattern.permute.xlu0 0
      %8484 = vperm.xlu0 %8483, %v8481
      %v8485 = vpop.permute.xlu0 %8484
      %v8488 = vsel %vm2639, %v8478, 0
      %8490 = vmatprep.subr.bf16.mxu0 %v8480
      %8491 = vmatpush1.bf16.msra.mxu0 %v8479
      %8492 = vmatprep.subr.bf16.mxu0 0
      %8493 = vmatpush1.bf16.msra.mxu0 0
      %8494 = vmatprep.subr.bf16.mxu0 0
      %8495 = vmatpush1.bf16.msra.mxu0 0
      %8496 = vmatprep.subr.bf16.mxu0 0
      %8497 = vmatpush1.bf16.msra.mxu0 0
      %8498 = vmatprep.subr.bf16.mxu0 0
      %8499 = vmatpush1.bf16.msra.mxu0 0
      %8500 = vmatprep.subr.bf16.mxu0 0
      %8501 = vmatpush1.bf16.msra.mxu0 0
      %8502 = vmatprep.subr.bf16.mxu0 0
      %8503 = vmatpush1.bf16.msra.mxu0 0
      %8504 = vmatprep.subr.bf16.mxu0 0
      %8505 = vmatpush1.bf16.msra.mxu0 0
      %8506 = vmatprep.subr.bf16.mxu0 0
      %8507 = vmatpush1.bf16.msra.mxu0 0
      %8508 = vmatprep.subr.bf16.mxu0 0
      %8509 = vmatpush1.bf16.msra.mxu0 0
      %8510 = vmatprep.subr.bf16.mxu0 0
      %8511 = vmatpush1.bf16.msra.mxu0 0
      %8512 = vmatprep.subr.bf16.mxu0 0
      %8513 = vmatpush1.bf16.msra.mxu0 0
      %8514 = vmatprep.subr.bf16.mxu0 0
      %8515 = vmatpush1.bf16.msra.mxu0 0
      %8516 = vmatprep.subr.bf16.mxu0 0
      %8517 = vmatpush1.bf16.msra.mxu0 0
      %8518 = vmatprep.subr.bf16.mxu0 0
      %8519 = vmatpush1.bf16.msra.mxu0 0
      %8520 = vmatprep.subr.bf16.mxu0 0
      %8521 = vmatpush1.bf16.msra.mxu0 0
      %8522 = vmatprep.mubr.bf16.mxu0 0
      %8523 = vmatmul.mubr.bf16.gmra.mrb[0].mxu0 %v8488
      %v8524 = vpop.f32.mrb[0].mxu0
      %v8525 = vadd.f32 %v8485, %v8524
      %v8526 = vpop.f32.mrb[0].mxu0
      %v8527 = vadd.f32 %v8485, %v8526
      %v8528 = vpop.f32.mrb[0].mxu0
      %v8529 = vpop.f32.mrb[0].mxu0
      %8530 = vdwg.mxu0
      %v8531 = vtanh.pop %v8525
      %v8532 = vtanh.pop %v8527
      %v8535 = vcombine.low %v8531, %v8532
      %8537 = vst [vmem:[%s1047] sm:$0x77] %v8535
      %p8538 = scmp.lt.s32.totalorder %s81, 1
      %s8539 = scalar_select %p8538, %s81, 1
      %s8540 = smul.addr %s8539, 4
      %s8541 = scalar_lea.vmem %s67, %s8540
      %p8542 = scmp.lt.s32.totalorder %s81, 1
      %s8543 = scalar_select %p8542, %s81, 1
      %s8544 = smul.addr %s8543, 2
      %s8545 = smul.addr %s8544, 4
      %s8546 = scalar_lea.vmem %s69, %s8545
      // Predicated region
      $region153: #{_lambda_.1} parent=151 // pred_check
        %p8547 = pneg %p797
      $region154: #{_lambda_.1} parent=151 // pred_check_branch
        %8549 = sbr.rel (%p8547) target = $region156
      $region155: #{_lambda_.1} parent=151 // pred_region
        _
      $region156: #{_lambda_.1} parent=151 // pred_fallthru
        _
      // Predicated region
      $region157: #{_lambda_.1} parent=151 // pred_check
        %p8550 = pneg %p823
      $region158: #{_lambda_.1} parent=151 // pred_check_branch
        %8552 = sbr.rel (%p8550) target = $region160
      $region159: #{_lambda_.1} parent=151 // pred_region
        _
      $region160: #{_lambda_.1} parent=151 // pred_fallthru
        _
    $region152: #{_lambda_.1} parent=5 // pred_fallthru
      _
    %p8553 = scmp.le.s32.totalorder 2, %s76
    // Predicated region
    $region161: #{_lambda_.1} parent=5 // pred_check
      %p8554 = pneg %p8553
    $region162: #{_lambda_.1} parent=5 // pred_check_branch
      %8556 = sbr.rel (%p8554) target = $region164
    $region163: #{_lambda_.1} parent=5 // pred_region
      %s8557 = ssub.s32 %s76, 2
      // Predicated region
      $region165: #{_lambda_.1} parent=163 // pred_check
        %p8558 = pneg %p803
      $region166: #{_lambda_.1} parent=163 // pred_check_branch
        %8560 = sbr.rel (%p8558) target = $region168
      $region167: #{_lambda_.1} parent=163 // pred_region
        %p8561 = scmp.lt.s32.totalorder %s82, 1
        %s8562 = scalar_select %p8561, %s82, 1
        %s8563 = smul.addr %s8562, 4
        %s8564 = scalar_lea.vmem %s67, %s8563
      $region168: #{_lambda_.1} parent=163 // pred_fallthru
        _
      // Predicated region
      $region169: #{_lambda_.1} parent=163 // pred_check
        %p8565 = pneg %p829
      $region170: #{_lambda_.1} parent=163 // pred_check_branch
        %8567 = sbr.rel (%p8565) target = $region172
      $region171: #{_lambda_.1} parent=163 // pred_region
        %p8568 = scmp.lt.s32.totalorder %s82, 1
        %s8569 = scalar_select %p8568, %s82, 1
        %s8570 = smul.addr %s8569, 2
        %s8571 = smul.addr %s8570, 4
        %s8572 = scalar_lea.vmem %s69, %s8571
      $region172: #{_lambda_.1} parent=163 // pred_fallthru
        _
    $region164: #{_lambda_.1} parent=5 // pred_fallthru
      _
  $region6: #{_lambda_.1} parent=0 // loop_footer
    %s80 = sadd.s32 1, %s76
  $region7: #{_lambda_.1} parent=0 // loop_footer_branch
    %75 = sbr.rel target = $region3
  $region8: #{_lambda_.1} parent=0 // loop_exit
    _

</llo_original>
